<compile_context>
chip_gen: v7x
topology: tpu7x:2x2x1
jax: 0.10.0
libtpu: 0.0.40
codegen_flags: <defaults>
</compile_context>

<pallas_src>
import functools

import jax
import jax.numpy as jnp
from jax import lax
from jax.experimental import pallas as pl
from jax.experimental.pallas import tpu as pltpu

_VMEM = pl.BlockSpec(memory_space=pltpu.MemorySpace.VMEM)


# ----------------------------------------------------------------------------
# In-kernel building blocks.  All operate on channel-major slabs (C, N) with
# N = B*H*W and columns ordered (b, y, x)  ->  lane-dense matmul outputs.
# ----------------------------------------------------------------------------
def _col_coords(N, H, W):
    """Per-column (y, x) spatial coordinates for columns ordered (b, y, x)."""
    col = lax.broadcasted_iota(jnp.int32, (1, N), 1)
    if (W & (W - 1)) == 0 and (H & (H - 1)) == 0:   # powers of two: bit tricks
        xc = col & (W - 1)
        yc = (col >> (W.bit_length() - 1)) & (H - 1)
    else:
        xc = col % W
        yc = (col // W) % H
    return yc, xc


def _conv3x3_relu(a, w_ref, b_ref, H, W):
    """'same' 3x3 conv + bias + ReLU.

    a: (Cin, N) activations, N = B*H*W, columns ordered (b, y, x).
    w_ref: (3, 3, Cout, Cin) weights, b_ref: (Cout, 1) bias.
    Implemented as 9 accumulated MXU matmuls; each spatial tap is a lane
    rotation (pltpu.roll) plus an iota border mask (zero padding).
    """
    _, N = a.shape
    Cout = w_ref.shape[2]
    yc, xc = _col_coords(N, H, W)
    acc = jnp.zeros((Cout, N), jnp.float32)
    for dy in range(3):
        for dx in range(3):
            oy, ox = dy - 1, dx - 1
            shift = oy * W + ox                   # column distance of the tap
            t = a if shift == 0 else pltpu.roll(a, (-shift) % N, 1)
            conds = []
            if oy == -1:
                conds.append(yc >= 1)
            if oy == 1:
                conds.append(yc <= H - 2)
            if ox == -1:
                conds.append(xc >= 1)
            if ox == 1:
                conds.append(xc <= W - 2)
            if conds:
                m = conds[0]
                for c in conds[1:]:
                    m = jnp.logical_and(m, c)
                t = jnp.where(m, t, 0.0)          # zero padding at the borders
            acc = acc + jnp.dot(w_ref[dy, dx], t,
                                preferred_element_type=jnp.float32)
    return jnp.maximum(acc + b_ref[...], 0.0)


def _maxpool2x2(a, q_ref, W):
    """2x2 / stride-2 max pool, fused: 3 lane rotations + elementwise max and
    one matmul with the precomputed 0/1 column-selection matrix q_ref."""
    _, N = a.shape
    m = jnp.maximum(a, pltpu.roll(a, (N - 1) % N, 1))        # (y,   x+1)
    m = jnp.maximum(m, pltpu.roll(a, (N - W) % N, 1))        # (y+1, x  )
    m = jnp.maximum(m, pltpu.roll(a, (N - W - 1) % N, 1))    # (y+1, x+1)
    return jnp.dot(m, q_ref[...], preferred_element_type=jnp.float32)


def _fused_kernel(H, W, x_ref,
                  wc1_ref, bc1_ref, wc2_ref, bc2_ref, q1_ref,
                  wc3_ref, bc3_ref, wc4_ref, bc4_ref, q2_ref,
                  w1r_ref, b1_ref, w2_ref, b2_ref, o_ref):
    """Whole backbone + head; every intermediate stays resident in VMEM."""
    a = x_ref[...]                                  # (Cin0, B*H*W)
    a = _conv3x3_relu(a, wc1_ref, bc1_ref, H, W)    # (32, B*H*W)
    a = _conv3x3_relu(a, wc2_ref, bc2_ref, H, W)    # (32, B*H*W)
    a = _maxpool2x2(a, q1_ref, W)                   # (32, B*H*W/4), (b, y, x)
    H2, W2 = H // 2, W // 2
    a = _conv3x3_relu(a, wc3_ref, bc3_ref, H2, W2)  # (64, B*H2*W2)
    a = _conv3x3_relu(a, wc4_ref, bc4_ref, H2, W2)  # (64, B*H2*W2)
    a = _maxpool2x2(a, q2_ref, W2)                  # (64, P*B), cols (p, b)

    # MLP head.  PyTorch's NCHW flatten permutation was folded into w1r at
    # parameter-prep time.  nn.Dropout2d is the identity at inference.
    P = (H // 4) * (W // 4)
    B = a.shape[1] // P
    nh = w1r_ref.shape[1]
    hT = jnp.zeros((nh, B), jnp.float32)
    for p in range(P):
        hT = hT + jnp.dot(w1r_ref[p], a[:, p * B:(p + 1) * B],
                          preferred_element_type=jnp.float32)
    hT = jnp.maximum(hT + b1_ref[...], 0.0)         # (n_hidden, B)
    o = jnp.dot(w2_ref[...], hT,
                preferred_element_type=jnp.float32) + b2_ref[...]
    o_ref[...] = o.astype(o_ref.dtype)              # (2, B)


# ----------------------------------------------------------------------------
# One-time parameter preparation (all per-forward layout plumbing hoisted here)
# ----------------------------------------------------------------------------
def _pool_select(Bn, Hn, Wn, p_major):
    """0/1 matrix selecting the top-left column of every 2x2 window."""
    Hp, Wp = Hn // 2, Wn // 2
    if p_major:   # output columns ordered (p, b), p = i*Wp + j
        order = [(b, i, j) for i in range(Hp) for j in range(Wp)
                 for b in range(Bn)]
    else:         # output columns ordered (b, i, j)
        order = [(b, i, j) for b in range(Bn) for i in range(Hp)
                 for j in range(Wp)]
    rows = [b * Hn * Wn + (2 * i) * Wn + (2 * j) for (b, i, j) in order]
    nin, nout = Bn * Hn * Wn, Bn * Hp * Wp
    q = jnp.zeros((nin, nout), jnp.float32)
    return q.at[jnp.array(rows, jnp.int32), jnp.arange(nout)].set(1.0)


def prepare_params(params, batch, in_size):
    assert in_size % 4 == 0, "in_size must be divisible by 4 (two 2x2 pools)"
    H = W = in_size
    P = (H // 4) * (W // 4)
    nh = params["w1"].shape[0]

    def conv_w(w):    # PyTorch OIHW (Cout, Cin, 3, 3) -> (3, 3, Cout, Cin)
        return jnp.transpose(w, (2, 3, 0, 1)).astype(jnp.float32)

    def colv(b):      # (n,) -> (n, 1)
        return b.reshape(-1, 1).astype(jnp.float32)

    # Fold the PyTorch NCHW flatten (feature index f = c*P + p) into w1:
    # w1r[p, n, c] = w1[n, c*P + p].
    w1r = jnp.transpose(params["w1"].reshape(nh, 64, P), (2, 0, 1))

    return {
        "wc1": conv_w(params["c1w"]), "bc1": colv(params["c1b"]),
        "wc2": conv_w(params["c2w"]), "bc2": colv(params["c2b"]),
        "wc3": conv_w(params["c3w"]), "bc3": colv(params["c3b"]),
        "wc4": conv_w(params["c4w"]), "bc4": colv(params["c4b"]),
        "q1": _pool_select(batch, H, W, p_major=False),
        "q2": _pool_select(batch, H // 2, W // 2, p_major=True),
        "w1r": w1r.astype(jnp.float32), "b1": colv(params["b1"]),
        "w2": params["w2"].astype(jnp.float32), "b2": colv(params["b2"]),
    }


# ----------------------------------------------------------------------------
# Forward
# ----------------------------------------------------------------------------
def font_identification_1flow(prep, x1_nchw, x2_nchw):
    """X1, X2: (batch, channel, h, w) NCHW, like the PyTorch module."""
    B, cin, H, W = x1_nchw.shape
    x = jnp.concatenate([x1_nchw, x2_nchw], axis=1)          # (B, 2*cin, H, W)
    # channel-major slab (Cin0, B*H*W), columns ordered (b, y, x)
    x_cm = jnp.transpose(x, (1, 0, 2, 3)).reshape(2 * cin, B * H * W)

    operands = (x_cm,
                prep["wc1"], prep["bc1"], prep["wc2"], prep["bc2"], prep["q1"],
                prep["wc3"], prep["bc3"], prep["wc4"], prep["bc4"], prep["q2"],
                prep["w1r"], prep["b1"], prep["w2"], prep["b2"])

    out_t = pl.pallas_call(
        functools.partial(_fused_kernel, H, W),
        out_shape=jax.ShapeDtypeStruct((2, B), jnp.float32),
        in_specs=[_VMEM] * len(operands),
        out_specs=_VMEM,
        compiler_params=pltpu.CompilerParams(
            vmem_limit_bytes=32 * 1024 * 1024),
    )(*operands)
    return out_t.T                                            # (B, 2)


# ----------------------------------------------------------------------------
# Parameter init (matches the assumed PyTorch module layout)
# ----------------------------------------------------------------------------
def init_params(key, in_dim, in_size, n_hidden):
    cin0 = in_dim * 2                 # X1 and X2 concatenated on channels
    feature_dim = 64 * (in_size // 4) * (in_size // 4)   # get_size_feature
    ks = jax.random.split(key, 12)

    def conv_w(k, co, ci):
        return jax.random.normal(k, (co, ci, 3, 3), jnp.float32) / jnp.sqrt(9.0 * ci)

    def lin_w(k, o, i):
        return jax.random.normal(k, (o, i), jnp.float32) / jnp.sqrt(float(i))

    def bias(k, n):
        return 0.01 * jax.random.normal(k, (n,), jnp.float32)

    return {
        "c1w": conv_w(ks[0], 32, cin0), "c1b": bias(ks[1], 32),
        "c2w": conv_w(ks[2], 32, 32),   "c2b": bias(ks[3], 32),
        "c3w": conv_w(ks[4], 64, 32),   "c3b": bias(ks[5], 64),
        "c4w": conv_w(ks[6], 64, 64),   "c4b": bias(ks[7], 64),
        "w1": lin_w(ks[8], n_hidden, feature_dim), "b1": bias(ks[9], n_hidden),
        "w2": lin_w(ks[10], 2, n_hidden),          "b2": bias(ks[11], 2),
    }


# ----------------------------------------------------------------------------
# Pure-JAX reference (mirrors the PyTorch forward), high-precision matmuls
# ----------------------------------------------------------------------------
def reference_forward(params, x1, x2):
    hp = jax.lax.Precision.HIGHEST
    x = jnp.concatenate([x1, x2], axis=1)

    def conv(x, w, b):
        y = jax.lax.conv_general_dilated(
            x, w, window_strides=(1, 1), padding=((1, 1), (1, 1)),
            dimension_numbers=("NCHW", "OIHW", "NCHW"), precision=hp)
        return jax.nn.relu(y + b[None, :, None, None])

    def pool(x):
        return jax.lax.reduce_window(
            x, -jnp.inf, jax.lax.max, (1, 1, 2, 2), (1, 1, 2, 2), "VALID")

    x = conv(x, params["c1w"], params["c1b"])
    x = conv(x, params["c2w"], params["c2b"])
    x = pool(x)
    x = conv(x, params["c3w"], params["c3b"])
    x = conv(x, params["c4w"], params["c4b"])
    x = pool(x)
    f = x.reshape(x.shape[0], -1)                    # NCHW flatten
    h = jax.nn.relu(jnp.dot(f, params["w1"].T, precision=hp) + params["b1"])
    return jnp.dot(h, params["w2"].T, precision=hp) + params["b2"]


if __name__ == "__main__":
    key = jax.random.PRNGKey(0)
    kx1, kx2, kp = jax.random.split(key, 3)

    B, in_dim, in_size, n_hidden = 2, 4, 16, 32
    x1 = jax.random.normal(kx1, (B, in_dim, in_size, in_size), jnp.float32)
    x2 = jax.random.normal(kx2, (B, in_dim, in_size, in_size), jnp.float32)

    params = init_params(kp, in_dim, in_size, n_hidden)
    prep = prepare_params(params, B, in_size)     # one-time layout hoisting

    fwd = jax.jit(font_identification_1flow)
    out = jax.block_until_ready(fwd(prep, x1, x2))

    assert out.shape == (B, 2)
    assert bool(jnp.all(jnp.isfinite(out)))

    ref = reference_forward(params, x1, x2)
    # f32 accumulation everywhere; 2e-2 absorbs TPU default-precision matmul
    # rounding differences between the two code paths while still catching any
    # layout / permutation bug (those produce O(1) errors).
    assert jnp.allclose(out, ref, rtol=2e-2, atol=2e-2), (out, ref)

    print("KERNEL_OK")
</pallas_src>

<mosaic_0001>
module attributes {stable_mosaic.version = 11 : i64} {
  func.func @_fused_kernel(%arg0: memref<8x512xf32, #tpu.memory_space<vmem>>, %arg1: memref<3x3x32x8xf32, #tpu.memory_space<vmem>>, %arg2: memref<32x1xf32, #tpu.memory_space<vmem>>, %arg3: memref<3x3x32x32xf32, #tpu.memory_space<vmem>>, %arg4: memref<32x1xf32, #tpu.memory_space<vmem>>, %arg5: memref<512x128xf32, #tpu.memory_space<vmem>>, %arg6: memref<3x3x64x32xf32, #tpu.memory_space<vmem>>, %arg7: memref<64x1xf32, #tpu.memory_space<vmem>>, %arg8: memref<3x3x64x64xf32, #tpu.memory_space<vmem>>, %arg9: memref<64x1xf32, #tpu.memory_space<vmem>>, %arg10: memref<128x32xf32, #tpu.memory_space<vmem>>, %arg11: memref<16x32x64xf32, #tpu.memory_space<vmem>>, %arg12: memref<32x1xf32, #tpu.memory_space<vmem>>, %arg13: memref<2x32xf32, #tpu.memory_space<vmem>>, %arg14: memref<2x1xf32, #tpu.memory_space<vmem>>, %arg15: memref<2x2xf32, #tpu.memory_space<vmem>>) attributes {dimension_semantics = [], scalar_prefetch = 0 : i64, scratch_operands = 0 : i64, tpu.core_type = #tpu.core_type<tc>} {
    %c0 = arith.constant 0 : index
    %c0_0 = arith.constant 0 : index
    %0 = vector.load %arg0[%c0, %c0_0] : memref<8x512xf32, #tpu.memory_space<vmem>>, vector<8x512xf32>
    %1 = tpu.iota {dimensions = array<i32: 1>} : vector<1x512xi32>
    %c15_i32 = arith.constant 15 : i32
    %2 = vector.broadcast %c15_i32 : i32 to vector<1x512xi32>
    %3 = arith.andi %1, %2 : vector<1x512xi32>
    %c4_i32 = arith.constant 4 : i32
    %4 = vector.broadcast %c4_i32 : i32 to vector<1x512xi32>
    %5 = arith.shrsi %1, %4 : vector<1x512xi32>
    %c15_i32_1 = arith.constant 15 : i32
    %6 = vector.broadcast %c15_i32_1 : i32 to vector<1x512xi32>
    %7 = arith.andi %5, %6 : vector<1x512xi32>
    %cst = arith.constant 0.000000e+00 : f32
    %8 = vector.broadcast %cst : f32 to vector<32x512xf32>
    %c17_i32 = arith.constant 17 : i32
    %9 = tpu.dynamic_rotate %0 by %c17_i32 dim 1 : vector<8x512xf32>, i32 -> vector<8x512xf32>
    %c1_i32 = arith.constant 1 : i32
    %10 = vector.broadcast %c1_i32 : i32 to vector<1x512xi32>
    %11 = arith.cmpi sge, %7, %10 : vector<1x512xi32>
    %c1_i32_2 = arith.constant 1 : i32
    %12 = vector.broadcast %c1_i32_2 : i32 to vector<1x512xi32>
    %13 = arith.cmpi sge, %3, %12 : vector<1x512xi32>
    %14 = arith.andi %11, %13 : vector<1x512xi1>
    %cst_3 = arith.constant 0.000000e+00 : f32
    %15 = vector.shape_cast %14 : vector<1x512xi1> to vector<1x512xi1>
    %16 = vector.broadcast %15 : vector<1x512xi1> to vector<8x512xi1>
    %17 = vector.broadcast %cst_3 : f32 to vector<8x512xf32>
    %18 = arith.select %16, %9, %17 : vector<8x512xi1>, vector<8x512xf32>
    %c0_4 = arith.constant 0 : index
    %c0_5 = arith.constant 0 : index
    %c0_6 = arith.constant 0 : index
    %c0_7 = arith.constant 0 : index
    %19 = vector.load %arg1[%c0_4, %c0_5, %c0_6, %c0_7] : memref<3x3x32x8xf32, #tpu.memory_space<vmem>>, vector<1x1x32x8xf32>
    %20 = vector.shape_cast %19 : vector<1x1x32x8xf32> to vector<32x8xf32>
    %cst_8 = arith.constant dense<0.000000e+00> : vector<32x512xf32>
    %21 = tpu.matmul %20, %18, %cst_8 {dimension_numbers = #tpu.dot_dimension_numbers<[1], [0], [0], [1], [0, 0, 1, 1], [], []>} : vector<32x8xf32>, vector<8x512xf32>, vector<32x512xf32> -> vector<32x512xf32>
    %22 = arith.addf %8, %21 : vector<32x512xf32>
    %c16_i32 = arith.constant 16 : i32
    %23 = tpu.dynamic_rotate %0 by %c16_i32 dim 1 : vector<8x512xf32>, i32 -> vector<8x512xf32>
    %c1_i32_9 = arith.constant 1 : i32
    %24 = vector.broadcast %c1_i32_9 : i32 to vector<1x512xi32>
    %25 = arith.cmpi sge, %7, %24 : vector<1x512xi32>
    %cst_10 = arith.constant 0.000000e+00 : f32
    %26 = vector.shape_cast %25 : vector<1x512xi1> to vector<1x512xi1>
    %27 = vector.broadcast %26 : vector<1x512xi1> to vector<8x512xi1>
    %28 = vector.broadcast %cst_10 : f32 to vector<8x512xf32>
    %29 = arith.select %27, %23, %28 : vector<8x512xi1>, vector<8x512xf32>
    %c0_11 = arith.constant 0 : index
    %c1 = arith.constant 1 : index
    %c0_12 = arith.constant 0 : index
    %c0_13 = arith.constant 0 : index
    %30 = vector.load %arg1[%c0_11, %c1, %c0_12, %c0_13] : memref<3x3x32x8xf32, #tpu.memory_space<vmem>>, vector<1x1x32x8xf32>
    %31 = vector.shape_cast %30 : vector<1x1x32x8xf32> to vector<32x8xf32>
    %cst_14 = arith.constant dense<0.000000e+00> : vector<32x512xf32>
    %32 = tpu.matmul %31, %29, %cst_14 {dimension_numbers = #tpu.dot_dimension_numbers<[1], [0], [0], [1], [0, 0, 1, 1], [], []>} : vector<32x8xf32>, vector<8x512xf32>, vector<32x512xf32> -> vector<32x512xf32>
    %33 = arith.addf %22, %32 : vector<32x512xf32>
    %c15_i32_15 = arith.constant 15 : i32
    %34 = tpu.dynamic_rotate %0 by %c15_i32_15 dim 1 : vector<8x512xf32>, i32 -> vector<8x512xf32>
    %c1_i32_16 = arith.constant 1 : i32
    %35 = vector.broadcast %c1_i32_16 : i32 to vector<1x512xi32>
    %36 = arith.cmpi sge, %7, %35 : vector<1x512xi32>
    %c14_i32 = arith.constant 14 : i32
    %37 = vector.broadcast %c14_i32 : i32 to vector<1x512xi32>
    %38 = arith.cmpi sle, %3, %37 : vector<1x512xi32>
    %39 = arith.andi %36, %38 : vector<1x512xi1>
    %cst_17 = arith.constant 0.000000e+00 : f32
    %40 = vector.shape_cast %39 : vector<1x512xi1> to vector<1x512xi1>
    %41 = vector.broadcast %40 : vector<1x512xi1> to vector<8x512xi1>
    %42 = vector.broadcast %cst_17 : f32 to vector<8x512xf32>
    %43 = arith.select %41, %34, %42 : vector<8x512xi1>, vector<8x512xf32>
    %c0_18 = arith.constant 0 : index
    %c2 = arith.constant 2 : index
    %c0_19 = arith.constant 0 : index
    %c0_20 = arith.constant 0 : index
    %44 = vector.load %arg1[%c0_18, %c2, %c0_19, %c0_20] : memref<3x3x32x8xf32, #tpu.memory_space<vmem>>, vector<1x1x32x8xf32>
    %45 = vector.shape_cast %44 : vector<1x1x32x8xf32> to vector<32x8xf32>
    %cst_21 = arith.constant dense<0.000000e+00> : vector<32x512xf32>
    %46 = tpu.matmul %45, %43, %cst_21 {dimension_numbers = #tpu.dot_dimension_numbers<[1], [0], [0], [1], [0, 0, 1, 1], [], []>} : vector<32x8xf32>, vector<8x512xf32>, vector<32x512xf32> -> vector<32x512xf32>
    %47 = arith.addf %33, %46 : vector<32x512xf32>
    %c1_i32_22 = arith.constant 1 : i32
    %48 = tpu.dynamic_rotate %0 by %c1_i32_22 dim 1 : vector<8x512xf32>, i32 -> vector<8x512xf32>
    %c1_i32_23 = arith.constant 1 : i32
    %49 = vector.broadcast %c1_i32_23 : i32 to vector<1x512xi32>
    %50 = arith.cmpi sge, %3, %49 : vector<1x512xi32>
    %cst_24 = arith.constant 0.000000e+00 : f32
    %51 = vector.shape_cast %50 : vector<1x512xi1> to vector<1x512xi1>
    %52 = vector.broadcast %51 : vector<1x512xi1> to vector<8x512xi1>
    %53 = vector.broadcast %cst_24 : f32 to vector<8x512xf32>
    %54 = arith.select %52, %48, %53 : vector<8x512xi1>, vector<8x512xf32>
    %c1_25 = arith.constant 1 : index
    %c0_26 = arith.constant 0 : index
    %c0_27 = arith.constant 0 : index
    %c0_28 = arith.constant 0 : index
    %55 = vector.load %arg1[%c1_25, %c0_26, %c0_27, %c0_28] : memref<3x3x32x8xf32, #tpu.memory_space<vmem>>, vector<1x1x32x8xf32>
    %56 = vector.shape_cast %55 : vector<1x1x32x8xf32> to vector<32x8xf32>
    %cst_29 = arith.constant dense<0.000000e+00> : vector<32x512xf32>
    %57 = tpu.matmul %56, %54, %cst_29 {dimension_numbers = #tpu.dot_dimension_numbers<[1], [0], [0], [1], [0, 0, 1, 1], [], []>} : vector<32x8xf32>, vector<8x512xf32>, vector<32x512xf32> -> vector<32x512xf32>
    %58 = arith.addf %47, %57 : vector<32x512xf32>
    %c1_30 = arith.constant 1 : index
    %c1_31 = arith.constant 1 : index
    %c0_32 = arith.constant 0 : index
    %c0_33 = arith.constant 0 : index
    %59 = vector.load %arg1[%c1_30, %c1_31, %c0_32, %c0_33] : memref<3x3x32x8xf32, #tpu.memory_space<vmem>>, vector<1x1x32x8xf32>
    %60 = vector.shape_cast %59 : vector<1x1x32x8xf32> to vector<32x8xf32>
    %cst_34 = arith.constant dense<0.000000e+00> : vector<32x512xf32>
    %61 = tpu.matmul %60, %0, %cst_34 {dimension_numbers = #tpu.dot_dimension_numbers<[1], [0], [0], [1], [0, 0, 1, 1], [], []>} : vector<32x8xf32>, vector<8x512xf32>, vector<32x512xf32> -> vector<32x512xf32>
    %62 = arith.addf %58, %61 : vector<32x512xf32>
    %c511_i32 = arith.constant 511 : i32
    %63 = tpu.dynamic_rotate %0 by %c511_i32 dim 1 : vector<8x512xf32>, i32 -> vector<8x512xf32>
    %c14_i32_35 = arith.constant 14 : i32
    %64 = vector.broadcast %c14_i32_35 : i32 to vector<1x512xi32>
    %65 = arith.cmpi sle, %3, %64 : vector<1x512xi32>
    %cst_36 = arith.constant 0.000000e+00 : f32
    %66 = vector.shape_cast %65 : vector<1x512xi1> to vector<1x512xi1>
    %67 = vector.broadcast %66 : vector<1x512xi1> to vector<8x512xi1>
    %68 = vector.broadcast %cst_36 : f32 to vector<8x512xf32>
    %69 = arith.select %67, %63, %68 : vector<8x512xi1>, vector<8x512xf32>
    %c1_37 = arith.constant 1 : index
    %c2_38 = arith.constant 2 : index
    %c0_39 = arith.constant 0 : index
    %c0_40 = arith.constant 0 : index
    %70 = vector.load %arg1[%c1_37, %c2_38, %c0_39, %c0_40] : memref<3x3x32x8xf32, #tpu.memory_space<vmem>>, vector<1x1x32x8xf32>
    %71 = vector.shape_cast %70 : vector<1x1x32x8xf32> to vector<32x8xf32>
    %cst_41 = arith.constant dense<0.000000e+00> : vector<32x512xf32>
    %72 = tpu.matmul %71, %69, %cst_41 {dimension_numbers = #tpu.dot_dimension_numbers<[1], [0], [0], [1], [0, 0, 1, 1], [], []>} : vector<32x8xf32>, vector<8x512xf32>, vector<32x512xf32> -> vector<32x512xf32>
    %73 = arith.addf %62, %72 : vector<32x512xf32>
    %c497_i32 = arith.constant 497 : i32
    %74 = tpu.dynamic_rotate %0 by %c497_i32 dim 1 : vector<8x512xf32>, i32 -> vector<8x512xf32>
    %c14_i32_42 = arith.constant 14 : i32
    %75 = vector.broadcast %c14_i32_42 : i32 to vector<1x512xi32>
    %76 = arith.cmpi sle, %7, %75 : vector<1x512xi32>
    %c1_i32_43 = arith.constant 1 : i32
    %77 = vector.broadcast %c1_i32_43 : i32 to vector<1x512xi32>
    %78 = arith.cmpi sge, %3, %77 : vector<1x512xi32>
    %79 = arith.andi %76, %78 : vector<1x512xi1>
    %cst_44 = arith.constant 0.000000e+00 : f32
    %80 = vector.shape_cast %79 : vector<1x512xi1> to vector<1x512xi1>
    %81 = vector.broadcast %80 : vector<1x512xi1> to vector<8x512xi1>
    %82 = vector.broadcast %cst_44 : f32 to vector<8x512xf32>
    %83 = arith.select %81, %74, %82 : vector<8x512xi1>, vector<8x512xf32>
    %c2_45 = arith.constant 2 : index
    %c0_46 = arith.constant 0 : index
    %c0_47 = arith.constant 0 : index
    %c0_48 = arith.constant 0 : index
    %84 = vector.load %arg1[%c2_45, %c0_46, %c0_47, %c0_48] : memref<3x3x32x8xf32, #tpu.memory_space<vmem>>, vector<1x1x32x8xf32>
    %85 = vector.shape_cast %84 : vector<1x1x32x8xf32> to vector<32x8xf32>
    %cst_49 = arith.constant dense<0.000000e+00> : vector<32x512xf32>
    %86 = tpu.matmul %85, %83, %cst_49 {dimension_numbers = #tpu.dot_dimension_numbers<[1], [0], [0], [1], [0, 0, 1, 1], [], []>} : vector<32x8xf32>, vector<8x512xf32>, vector<32x512xf32> -> vector<32x512xf32>
    %87 = arith.addf %73, %86 : vector<32x512xf32>
    %c496_i32 = arith.constant 496 : i32
    %88 = tpu.dynamic_rotate %0 by %c496_i32 dim 1 : vector<8x512xf32>, i32 -> vector<8x512xf32>
    %c14_i32_50 = arith.constant 14 : i32
    %89 = vector.broadcast %c14_i32_50 : i32 to vector<1x512xi32>
    %90 = arith.cmpi sle, %7, %89 : vector<1x512xi32>
    %cst_51 = arith.constant 0.000000e+00 : f32
    %91 = vector.shape_cast %90 : vector<1x512xi1> to vector<1x512xi1>
    %92 = vector.broadcast %91 : vector<1x512xi1> to vector<8x512xi1>
    %93 = vector.broadcast %cst_51 : f32 to vector<8x512xf32>
    %94 = arith.select %92, %88, %93 : vector<8x512xi1>, vector<8x512xf32>
    %c2_52 = arith.constant 2 : index
    %c1_53 = arith.constant 1 : index
    %c0_54 = arith.constant 0 : index
    %c0_55 = arith.constant 0 : index
    %95 = vector.load %arg1[%c2_52, %c1_53, %c0_54, %c0_55] : memref<3x3x32x8xf32, #tpu.memory_space<vmem>>, vector<1x1x32x8xf32>
    %96 = vector.shape_cast %95 : vector<1x1x32x8xf32> to vector<32x8xf32>
    %cst_56 = arith.constant dense<0.000000e+00> : vector<32x512xf32>
    %97 = tpu.matmul %96, %94, %cst_56 {dimension_numbers = #tpu.dot_dimension_numbers<[1], [0], [0], [1], [0, 0, 1, 1], [], []>} : vector<32x8xf32>, vector<8x512xf32>, vector<32x512xf32> -> vector<32x512xf32>
    %98 = arith.addf %87, %97 : vector<32x512xf32>
    %c495_i32 = arith.constant 495 : i32
    %99 = tpu.dynamic_rotate %0 by %c495_i32 dim 1 : vector<8x512xf32>, i32 -> vector<8x512xf32>
    %c14_i32_57 = arith.constant 14 : i32
    %100 = vector.broadcast %c14_i32_57 : i32 to vector<1x512xi32>
    %101 = arith.cmpi sle, %7, %100 : vector<1x512xi32>
    %c14_i32_58 = arith.constant 14 : i32
    %102 = vector.broadcast %c14_i32_58 : i32 to vector<1x512xi32>
    %103 = arith.cmpi sle, %3, %102 : vector<1x512xi32>
    %104 = arith.andi %101, %103 : vector<1x512xi1>
    %cst_59 = arith.constant 0.000000e+00 : f32
    %105 = vector.shape_cast %104 : vector<1x512xi1> to vector<1x512xi1>
    %106 = vector.broadcast %105 : vector<1x512xi1> to vector<8x512xi1>
    %107 = vector.broadcast %cst_59 : f32 to vector<8x512xf32>
    %108 = arith.select %106, %99, %107 : vector<8x512xi1>, vector<8x512xf32>
    %c2_60 = arith.constant 2 : index
    %c2_61 = arith.constant 2 : index
    %c0_62 = arith.constant 0 : index
    %c0_63 = arith.constant 0 : index
    %109 = vector.load %arg1[%c2_60, %c2_61, %c0_62, %c0_63] : memref<3x3x32x8xf32, #tpu.memory_space<vmem>>, vector<1x1x32x8xf32>
    %110 = vector.shape_cast %109 : vector<1x1x32x8xf32> to vector<32x8xf32>
    %cst_64 = arith.constant dense<0.000000e+00> : vector<32x512xf32>
    %111 = tpu.matmul %110, %108, %cst_64 {dimension_numbers = #tpu.dot_dimension_numbers<[1], [0], [0], [1], [0, 0, 1, 1], [], []>} : vector<32x8xf32>, vector<8x512xf32>, vector<32x512xf32> -> vector<32x512xf32>
    %112 = arith.addf %98, %111 : vector<32x512xf32>
    %c0_65 = arith.constant 0 : index
    %c0_66 = arith.constant 0 : index
    %113 = vector.load %arg2[%c0_65, %c0_66] : memref<32x1xf32, #tpu.memory_space<vmem>>, vector<32x1xf32>
    %114 = vector.broadcast %113 : vector<32x1xf32> to vector<32x512xf32>
    %115 = arith.addf %112, %114 : vector<32x512xf32>
    %cst_67 = arith.constant 0.000000e+00 : f32
    %116 = vector.broadcast %cst_67 : f32 to vector<32x512xf32>
    %117 = arith.maximumf %115, %116 : vector<32x512xf32>
    %118 = tpu.iota {dimensions = array<i32: 1>} : vector<1x512xi32>
    %c15_i32_68 = arith.constant 15 : i32
    %119 = vector.broadcast %c15_i32_68 : i32 to vector<1x512xi32>
    %120 = arith.andi %118, %119 : vector<1x512xi32>
    %c4_i32_69 = arith.constant 4 : i32
    %121 = vector.broadcast %c4_i32_69 : i32 to vector<1x512xi32>
    %122 = arith.shrsi %118, %121 : vector<1x512xi32>
    %c15_i32_70 = arith.constant 15 : i32
    %123 = vector.broadcast %c15_i32_70 : i32 to vector<1x512xi32>
    %124 = arith.andi %122, %123 : vector<1x512xi32>
    %cst_71 = arith.constant 0.000000e+00 : f32
    %125 = vector.broadcast %cst_71 : f32 to vector<32x512xf32>
    %c17_i32_72 = arith.constant 17 : i32
    %126 = tpu.dynamic_rotate %117 by %c17_i32_72 dim 1 : vector<32x512xf32>, i32 -> vector<32x512xf32>
    %c1_i32_73 = arith.constant 1 : i32
    %127 = vector.broadcast %c1_i32_73 : i32 to vector<1x512xi32>
    %128 = arith.cmpi sge, %124, %127 : vector<1x512xi32>
    %c1_i32_74 = arith.constant 1 : i32
    %129 = vector.broadcast %c1_i32_74 : i32 to vector<1x512xi32>
    %130 = arith.cmpi sge, %120, %129 : vector<1x512xi32>
    %131 = arith.andi %128, %130 : vector<1x512xi1>
    %cst_75 = arith.constant 0.000000e+00 : f32
    %132 = vector.shape_cast %131 : vector<1x512xi1> to vector<1x512xi1>
    %133 = vector.broadcast %132 : vector<1x512xi1> to vector<32x512xi1>
    %134 = vector.broadcast %cst_75 : f32 to vector<32x512xf32>
    %135 = arith.select %133, %126, %134 : vector<32x512xi1>, vector<32x512xf32>
    %c0_76 = arith.constant 0 : index
    %c0_77 = arith.constant 0 : index
    %c0_78 = arith.constant 0 : index
    %c0_79 = arith.constant 0 : index
    %136 = vector.load %arg3[%c0_76, %c0_77, %c0_78, %c0_79] : memref<3x3x32x32xf32, #tpu.memory_space<vmem>>, vector<1x1x32x32xf32>
    %137 = vector.shape_cast %136 : vector<1x1x32x32xf32> to vector<32x32xf32>
    %cst_80 = arith.constant dense<0.000000e+00> : vector<32x512xf32>
    %138 = tpu.matmul %137, %135, %cst_80 {dimension_numbers = #tpu.dot_dimension_numbers<[1], [0], [0], [1], [0, 0, 1, 1], [], []>} : vector<32x32xf32>, vector<32x512xf32>, vector<32x512xf32> -> vector<32x512xf32>
    %139 = arith.addf %125, %138 : vector<32x512xf32>
    %c16_i32_81 = arith.constant 16 : i32
    %140 = tpu.dynamic_rotate %117 by %c16_i32_81 dim 1 : vector<32x512xf32>, i32 -> vector<32x512xf32>
    %c1_i32_82 = arith.constant 1 : i32
    %141 = vector.broadcast %c1_i32_82 : i32 to vector<1x512xi32>
    %142 = arith.cmpi sge, %124, %141 : vector<1x512xi32>
    %cst_83 = arith.constant 0.000000e+00 : f32
    %143 = vector.shape_cast %142 : vector<1x512xi1> to vector<1x512xi1>
    %144 = vector.broadcast %143 : vector<1x512xi1> to vector<32x512xi1>
    %145 = vector.broadcast %cst_83 : f32 to vector<32x512xf32>
    %146 = arith.select %144, %140, %145 : vector<32x512xi1>, vector<32x512xf32>
    %c0_84 = arith.constant 0 : index
    %c1_85 = arith.constant 1 : index
    %c0_86 = arith.constant 0 : index
    %c0_87 = arith.constant 0 : index
    %147 = vector.load %arg3[%c0_84, %c1_85, %c0_86, %c0_87] : memref<3x3x32x32xf32, #tpu.memory_space<vmem>>, vector<1x1x32x32xf32>
    %148 = vector.shape_cast %147 : vector<1x1x32x32xf32> to vector<32x32xf32>
    %cst_88 = arith.constant dense<0.000000e+00> : vector<32x512xf32>
    %149 = tpu.matmul %148, %146, %cst_88 {dimension_numbers = #tpu.dot_dimension_numbers<[1], [0], [0], [1], [0, 0, 1, 1], [], []>} : vector<32x32xf32>, vector<32x512xf32>, vector<32x512xf32> -> vector<32x512xf32>
    %150 = arith.addf %139, %149 : vector<32x512xf32>
    %c15_i32_89 = arith.constant 15 : i32
    %151 = tpu.dynamic_rotate %117 by %c15_i32_89 dim 1 : vector<32x512xf32>, i32 -> vector<32x512xf32>
    %c1_i32_90 = arith.constant 1 : i32
    %152 = vector.broadcast %c1_i32_90 : i32 to vector<1x512xi32>
    %153 = arith.cmpi sge, %124, %152 : vector<1x512xi32>
    %c14_i32_91 = arith.constant 14 : i32
    %154 = vector.broadcast %c14_i32_91 : i32 to vector<1x512xi32>
    %155 = arith.cmpi sle, %120, %154 : vector<1x512xi32>
    %156 = arith.andi %153, %155 : vector<1x512xi1>
    %cst_92 = arith.constant 0.000000e+00 : f32
    %157 = vector.shape_cast %156 : vector<1x512xi1> to vector<1x512xi1>
    %158 = vector.broadcast %157 : vector<1x512xi1> to vector<32x512xi1>
    %159 = vector.broadcast %cst_92 : f32 to vector<32x512xf32>
    %160 = arith.select %158, %151, %159 : vector<32x512xi1>, vector<32x512xf32>
    %c0_93 = arith.constant 0 : index
    %c2_94 = arith.constant 2 : index
    %c0_95 = arith.constant 0 : index
    %c0_96 = arith.constant 0 : index
    %161 = vector.load %arg3[%c0_93, %c2_94, %c0_95, %c0_96] : memref<3x3x32x32xf32, #tpu.memory_space<vmem>>, vector<1x1x32x32xf32>
    %162 = vector.shape_cast %161 : vector<1x1x32x32xf32> to vector<32x32xf32>
    %cst_97 = arith.constant dense<0.000000e+00> : vector<32x512xf32>
    %163 = tpu.matmul %162, %160, %cst_97 {dimension_numbers = #tpu.dot_dimension_numbers<[1], [0], [0], [1], [0, 0, 1, 1], [], []>} : vector<32x32xf32>, vector<32x512xf32>, vector<32x512xf32> -> vector<32x512xf32>
    %164 = arith.addf %150, %163 : vector<32x512xf32>
    %c1_i32_98 = arith.constant 1 : i32
    %165 = tpu.dynamic_rotate %117 by %c1_i32_98 dim 1 : vector<32x512xf32>, i32 -> vector<32x512xf32>
    %c1_i32_99 = arith.constant 1 : i32
    %166 = vector.broadcast %c1_i32_99 : i32 to vector<1x512xi32>
    %167 = arith.cmpi sge, %120, %166 : vector<1x512xi32>
    %cst_100 = arith.constant 0.000000e+00 : f32
    %168 = vector.shape_cast %167 : vector<1x512xi1> to vector<1x512xi1>
    %169 = vector.broadcast %168 : vector<1x512xi1> to vector<32x512xi1>
    %170 = vector.broadcast %cst_100 : f32 to vector<32x512xf32>
    %171 = arith.select %169, %165, %170 : vector<32x512xi1>, vector<32x512xf32>
    %c1_101 = arith.constant 1 : index
    %c0_102 = arith.constant 0 : index
    %c0_103 = arith.constant 0 : index
    %c0_104 = arith.constant 0 : index
    %172 = vector.load %arg3[%c1_101, %c0_102, %c0_103, %c0_104] : memref<3x3x32x32xf32, #tpu.memory_space<vmem>>, vector<1x1x32x32xf32>
    %173 = vector.shape_cast %172 : vector<1x1x32x32xf32> to vector<32x32xf32>
    %cst_105 = arith.constant dense<0.000000e+00> : vector<32x512xf32>
    %174 = tpu.matmul %173, %171, %cst_105 {dimension_numbers = #tpu.dot_dimension_numbers<[1], [0], [0], [1], [0, 0, 1, 1], [], []>} : vector<32x32xf32>, vector<32x512xf32>, vector<32x512xf32> -> vector<32x512xf32>
    %175 = arith.addf %164, %174 : vector<32x512xf32>
    %c1_106 = arith.constant 1 : index
    %c1_107 = arith.constant 1 : index
    %c0_108 = arith.constant 0 : index
    %c0_109 = arith.constant 0 : index
    %176 = vector.load %arg3[%c1_106, %c1_107, %c0_108, %c0_109] : memref<3x3x32x32xf32, #tpu.memory_space<vmem>>, vector<1x1x32x32xf32>
    %177 = vector.shape_cast %176 : vector<1x1x32x32xf32> to vector<32x32xf32>
    %cst_110 = arith.constant dense<0.000000e+00> : vector<32x512xf32>
    %178 = tpu.matmul %177, %117, %cst_110 {dimension_numbers = #tpu.dot_dimension_numbers<[1], [0], [0], [1], [0, 0, 1, 1], [], []>} : vector<32x32xf32>, vector<32x512xf32>, vector<32x512xf32> -> vector<32x512xf32>
    %179 = arith.addf %175, %178 : vector<32x512xf32>
    %c511_i32_111 = arith.constant 511 : i32
    %180 = tpu.dynamic_rotate %117 by %c511_i32_111 dim 1 : vector<32x512xf32>, i32 -> vector<32x512xf32>
    %c14_i32_112 = arith.constant 14 : i32
    %181 = vector.broadcast %c14_i32_112 : i32 to vector<1x512xi32>
    %182 = arith.cmpi sle, %120, %181 : vector<1x512xi32>
    %cst_113 = arith.constant 0.000000e+00 : f32
    %183 = vector.shape_cast %182 : vector<1x512xi1> to vector<1x512xi1>
    %184 = vector.broadcast %183 : vector<1x512xi1> to vector<32x512xi1>
    %185 = vector.broadcast %cst_113 : f32 to vector<32x512xf32>
    %186 = arith.select %184, %180, %185 : vector<32x512xi1>, vector<32x512xf32>
    %c1_114 = arith.constant 1 : index
    %c2_115 = arith.constant 2 : index
    %c0_116 = arith.constant 0 : index
    %c0_117 = arith.constant 0 : index
    %187 = vector.load %arg3[%c1_114, %c2_115, %c0_116, %c0_117] : memref<3x3x32x32xf32, #tpu.memory_space<vmem>>, vector<1x1x32x32xf32>
    %188 = vector.shape_cast %187 : vector<1x1x32x32xf32> to vector<32x32xf32>
    %cst_118 = arith.constant dense<0.000000e+00> : vector<32x512xf32>
    %189 = tpu.matmul %188, %186, %cst_118 {dimension_numbers = #tpu.dot_dimension_numbers<[1], [0], [0], [1], [0, 0, 1, 1], [], []>} : vector<32x32xf32>, vector<32x512xf32>, vector<32x512xf32> -> vector<32x512xf32>
    %190 = arith.addf %179, %189 : vector<32x512xf32>
    %c497_i32_119 = arith.constant 497 : i32
    %191 = tpu.dynamic_rotate %117 by %c497_i32_119 dim 1 : vector<32x512xf32>, i32 -> vector<32x512xf32>
    %c14_i32_120 = arith.constant 14 : i32
    %192 = vector.broadcast %c14_i32_120 : i32 to vector<1x512xi32>
    %193 = arith.cmpi sle, %124, %192 : vector<1x512xi32>
    %c1_i32_121 = arith.constant 1 : i32
    %194 = vector.broadcast %c1_i32_121 : i32 to vector<1x512xi32>
    %195 = arith.cmpi sge, %120, %194 : vector<1x512xi32>
    %196 = arith.andi %193, %195 : vector<1x512xi1>
    %cst_122 = arith.constant 0.000000e+00 : f32
    %197 = vector.shape_cast %196 : vector<1x512xi1> to vector<1x512xi1>
    %198 = vector.broadcast %197 : vector<1x512xi1> to vector<32x512xi1>
    %199 = vector.broadcast %cst_122 : f32 to vector<32x512xf32>
    %200 = arith.select %198, %191, %199 : vector<32x512xi1>, vector<32x512xf32>
    %c2_123 = arith.constant 2 : index
    %c0_124 = arith.constant 0 : index
    %c0_125 = arith.constant 0 : index
    %c0_126 = arith.constant 0 : index
    %201 = vector.load %arg3[%c2_123, %c0_124, %c0_125, %c0_126] : memref<3x3x32x32xf32, #tpu.memory_space<vmem>>, vector<1x1x32x32xf32>
    %202 = vector.shape_cast %201 : vector<1x1x32x32xf32> to vector<32x32xf32>
    %cst_127 = arith.constant dense<0.000000e+00> : vector<32x512xf32>
    %203 = tpu.matmul %202, %200, %cst_127 {dimension_numbers = #tpu.dot_dimension_numbers<[1], [0], [0], [1], [0, 0, 1, 1], [], []>} : vector<32x32xf32>, vector<32x512xf32>, vector<32x512xf32> -> vector<32x512xf32>
    %204 = arith.addf %190, %203 : vector<32x512xf32>
    %c496_i32_128 = arith.constant 496 : i32
    %205 = tpu.dynamic_rotate %117 by %c496_i32_128 dim 1 : vector<32x512xf32>, i32 -> vector<32x512xf32>
    %c14_i32_129 = arith.constant 14 : i32
    %206 = vector.broadcast %c14_i32_129 : i32 to vector<1x512xi32>
    %207 = arith.cmpi sle, %124, %206 : vector<1x512xi32>
    %cst_130 = arith.constant 0.000000e+00 : f32
    %208 = vector.shape_cast %207 : vector<1x512xi1> to vector<1x512xi1>
    %209 = vector.broadcast %208 : vector<1x512xi1> to vector<32x512xi1>
    %210 = vector.broadcast %cst_130 : f32 to vector<32x512xf32>
    %211 = arith.select %209, %205, %210 : vector<32x512xi1>, vector<32x512xf32>
    %c2_131 = arith.constant 2 : index
    %c1_132 = arith.constant 1 : index
    %c0_133 = arith.constant 0 : index
    %c0_134 = arith.constant 0 : index
    %212 = vector.load %arg3[%c2_131, %c1_132, %c0_133, %c0_134] : memref<3x3x32x32xf32, #tpu.memory_space<vmem>>, vector<1x1x32x32xf32>
    %213 = vector.shape_cast %212 : vector<1x1x32x32xf32> to vector<32x32xf32>
    %cst_135 = arith.constant dense<0.000000e+00> : vector<32x512xf32>
    %214 = tpu.matmul %213, %211, %cst_135 {dimension_numbers = #tpu.dot_dimension_numbers<[1], [0], [0], [1], [0, 0, 1, 1], [], []>} : vector<32x32xf32>, vector<32x512xf32>, vector<32x512xf32> -> vector<32x512xf32>
    %215 = arith.addf %204, %214 : vector<32x512xf32>
    %c495_i32_136 = arith.constant 495 : i32
    %216 = tpu.dynamic_rotate %117 by %c495_i32_136 dim 1 : vector<32x512xf32>, i32 -> vector<32x512xf32>
    %c14_i32_137 = arith.constant 14 : i32
    %217 = vector.broadcast %c14_i32_137 : i32 to vector<1x512xi32>
    %218 = arith.cmpi sle, %124, %217 : vector<1x512xi32>
    %c14_i32_138 = arith.constant 14 : i32
    %219 = vector.broadcast %c14_i32_138 : i32 to vector<1x512xi32>
    %220 = arith.cmpi sle, %120, %219 : vector<1x512xi32>
    %221 = arith.andi %218, %220 : vector<1x512xi1>
    %cst_139 = arith.constant 0.000000e+00 : f32
    %222 = vector.shape_cast %221 : vector<1x512xi1> to vector<1x512xi1>
    %223 = vector.broadcast %222 : vector<1x512xi1> to vector<32x512xi1>
    %224 = vector.broadcast %cst_139 : f32 to vector<32x512xf32>
    %225 = arith.select %223, %216, %224 : vector<32x512xi1>, vector<32x512xf32>
    %c2_140 = arith.constant 2 : index
    %c2_141 = arith.constant 2 : index
    %c0_142 = arith.constant 0 : index
    %c0_143 = arith.constant 0 : index
    %226 = vector.load %arg3[%c2_140, %c2_141, %c0_142, %c0_143] : memref<3x3x32x32xf32, #tpu.memory_space<vmem>>, vector<1x1x32x32xf32>
    %227 = vector.shape_cast %226 : vector<1x1x32x32xf32> to vector<32x32xf32>
    %cst_144 = arith.constant dense<0.000000e+00> : vector<32x512xf32>
    %228 = tpu.matmul %227, %225, %cst_144 {dimension_numbers = #tpu.dot_dimension_numbers<[1], [0], [0], [1], [0, 0, 1, 1], [], []>} : vector<32x32xf32>, vector<32x512xf32>, vector<32x512xf32> -> vector<32x512xf32>
    %229 = arith.addf %215, %228 : vector<32x512xf32>
    %c0_145 = arith.constant 0 : index
    %c0_146 = arith.constant 0 : index
    %230 = vector.load %arg4[%c0_145, %c0_146] : memref<32x1xf32, #tpu.memory_space<vmem>>, vector<32x1xf32>
    %231 = vector.broadcast %230 : vector<32x1xf32> to vector<32x512xf32>
    %232 = arith.addf %229, %231 : vector<32x512xf32>
    %cst_147 = arith.constant 0.000000e+00 : f32
    %233 = vector.broadcast %cst_147 : f32 to vector<32x512xf32>
    %234 = arith.maximumf %232, %233 : vector<32x512xf32>
    %c511_i32_148 = arith.constant 511 : i32
    %235 = tpu.dynamic_rotate %234 by %c511_i32_148 dim 1 : vector<32x512xf32>, i32 -> vector<32x512xf32>
    %236 = arith.maximumf %234, %235 : vector<32x512xf32>
    %c496_i32_149 = arith.constant 496 : i32
    %237 = tpu.dynamic_rotate %234 by %c496_i32_149 dim 1 : vector<32x512xf32>, i32 -> vector<32x512xf32>
    %238 = arith.maximumf %236, %237 : vector<32x512xf32>
    %c495_i32_150 = arith.constant 495 : i32
    %239 = tpu.dynamic_rotate %234 by %c495_i32_150 dim 1 : vector<32x512xf32>, i32 -> vector<32x512xf32>
    %240 = arith.maximumf %238, %239 : vector<32x512xf32>
    %c0_151 = arith.constant 0 : index
    %c0_152 = arith.constant 0 : index
    %241 = vector.load %arg5[%c0_151, %c0_152] : memref<512x128xf32, #tpu.memory_space<vmem>>, vector<512x128xf32>
    %cst_153 = arith.constant dense<0.000000e+00> : vector<32x128xf32>
    %242 = tpu.matmul %240, %241, %cst_153 {dimension_numbers = #tpu.dot_dimension_numbers<[1], [0], [0], [1], [0, 0, 1, 1], [], []>} : vector<32x512xf32>, vector<512x128xf32>, vector<32x128xf32> -> vector<32x128xf32>
    %243 = tpu.iota {dimensions = array<i32: 1>} : vector<1x128xi32>
    %c7_i32 = arith.constant 7 : i32
    %244 = vector.broadcast %c7_i32 : i32 to vector<1x128xi32>
    %245 = arith.andi %243, %244 : vector<1x128xi32>
    %c3_i32 = arith.constant 3 : i32
    %246 = vector.broadcast %c3_i32 : i32 to vector<1x128xi32>
    %247 = arith.shrsi %243, %246 : vector<1x128xi32>
    %c7_i32_154 = arith.constant 7 : i32
    %248 = vector.broadcast %c7_i32_154 : i32 to vector<1x128xi32>
    %249 = arith.andi %247, %248 : vector<1x128xi32>
    %cst_155 = arith.constant 0.000000e+00 : f32
    %250 = vector.broadcast %cst_155 : f32 to vector<64x128xf32>
    %c9_i32 = arith.constant 9 : i32
    %251 = tpu.dynamic_rotate %242 by %c9_i32 dim 1 : vector<32x128xf32>, i32 -> vector<32x128xf32>
    %c1_i32_156 = arith.constant 1 : i32
    %252 = vector.broadcast %c1_i32_156 : i32 to vector<1x128xi32>
    %253 = arith.cmpi sge, %249, %252 : vector<1x128xi32>
    %c1_i32_157 = arith.constant 1 : i32
    %254 = vector.broadcast %c1_i32_157 : i32 to vector<1x128xi32>
    %255 = arith.cmpi sge, %245, %254 : vector<1x128xi32>
    %256 = arith.andi %253, %255 : vector<1x128xi1>
    %cst_158 = arith.constant 0.000000e+00 : f32
    %257 = vector.shape_cast %256 : vector<1x128xi1> to vector<1x128xi1>
    %258 = vector.broadcast %257 : vector<1x128xi1> to vector<32x128xi1>
    %259 = vector.broadcast %cst_158 : f32 to vector<32x128xf32>
    %260 = arith.select %258, %251, %259 : vector<32x128xi1>, vector<32x128xf32>
    %c0_159 = arith.constant 0 : index
    %c0_160 = arith.constant 0 : index
    %c0_161 = arith.constant 0 : index
    %c0_162 = arith.constant 0 : index
    %261 = vector.load %arg6[%c0_159, %c0_160, %c0_161, %c0_162] : memref<3x3x64x32xf32, #tpu.memory_space<vmem>>, vector<1x1x64x32xf32>
    %262 = vector.shape_cast %261 : vector<1x1x64x32xf32> to vector<64x32xf32>
    %cst_163 = arith.constant dense<0.000000e+00> : vector<64x128xf32>
    %263 = tpu.matmul %262, %260, %cst_163 {dimension_numbers = #tpu.dot_dimension_numbers<[1], [0], [0], [1], [0, 0, 1, 1], [], []>} : vector<64x32xf32>, vector<32x128xf32>, vector<64x128xf32> -> vector<64x128xf32>
    %264 = arith.addf %250, %263 : vector<64x128xf32>
    %c8_i32 = arith.constant 8 : i32
    %265 = tpu.dynamic_rotate %242 by %c8_i32 dim 1 : vector<32x128xf32>, i32 -> vector<32x128xf32>
    %c1_i32_164 = arith.constant 1 : i32
    %266 = vector.broadcast %c1_i32_164 : i32 to vector<1x128xi32>
    %267 = arith.cmpi sge, %249, %266 : vector<1x128xi32>
    %cst_165 = arith.constant 0.000000e+00 : f32
    %268 = vector.shape_cast %267 : vector<1x128xi1> to vector<1x128xi1>
    %269 = vector.broadcast %268 : vector<1x128xi1> to vector<32x128xi1>
    %270 = vector.broadcast %cst_165 : f32 to vector<32x128xf32>
    %271 = arith.select %269, %265, %270 : vector<32x128xi1>, vector<32x128xf32>
    %c0_166 = arith.constant 0 : index
    %c1_167 = arith.constant 1 : index
    %c0_168 = arith.constant 0 : index
    %c0_169 = arith.constant 0 : index
    %272 = vector.load %arg6[%c0_166, %c1_167, %c0_168, %c0_169] : memref<3x3x64x32xf32, #tpu.memory_space<vmem>>, vector<1x1x64x32xf32>
    %273 = vector.shape_cast %272 : vector<1x1x64x32xf32> to vector<64x32xf32>
    %cst_170 = arith.constant dense<0.000000e+00> : vector<64x128xf32>
    %274 = tpu.matmul %273, %271, %cst_170 {dimension_numbers = #tpu.dot_dimension_numbers<[1], [0], [0], [1], [0, 0, 1, 1], [], []>} : vector<64x32xf32>, vector<32x128xf32>, vector<64x128xf32> -> vector<64x128xf32>
    %275 = arith.addf %264, %274 : vector<64x128xf32>
    %c7_i32_171 = arith.constant 7 : i32
    %276 = tpu.dynamic_rotate %242 by %c7_i32_171 dim 1 : vector<32x128xf32>, i32 -> vector<32x128xf32>
    %c1_i32_172 = arith.constant 1 : i32
    %277 = vector.broadcast %c1_i32_172 : i32 to vector<1x128xi32>
    %278 = arith.cmpi sge, %249, %277 : vector<1x128xi32>
    %c6_i32 = arith.constant 6 : i32
    %279 = vector.broadcast %c6_i32 : i32 to vector<1x128xi32>
    %280 = arith.cmpi sle, %245, %279 : vector<1x128xi32>
    %281 = arith.andi %278, %280 : vector<1x128xi1>
    %cst_173 = arith.constant 0.000000e+00 : f32
    %282 = vector.shape_cast %281 : vector<1x128xi1> to vector<1x128xi1>
    %283 = vector.broadcast %282 : vector<1x128xi1> to vector<32x128xi1>
    %284 = vector.broadcast %cst_173 : f32 to vector<32x128xf32>
    %285 = arith.select %283, %276, %284 : vector<32x128xi1>, vector<32x128xf32>
    %c0_174 = arith.constant 0 : index
    %c2_175 = arith.constant 2 : index
    %c0_176 = arith.constant 0 : index
    %c0_177 = arith.constant 0 : index
    %286 = vector.load %arg6[%c0_174, %c2_175, %c0_176, %c0_177] : memref<3x3x64x32xf32, #tpu.memory_space<vmem>>, vector<1x1x64x32xf32>
    %287 = vector.shape_cast %286 : vector<1x1x64x32xf32> to vector<64x32xf32>
    %cst_178 = arith.constant dense<0.000000e+00> : vector<64x128xf32>
    %288 = tpu.matmul %287, %285, %cst_178 {dimension_numbers = #tpu.dot_dimension_numbers<[1], [0], [0], [1], [0, 0, 1, 1], [], []>} : vector<64x32xf32>, vector<32x128xf32>, vector<64x128xf32> -> vector<64x128xf32>
    %289 = arith.addf %275, %288 : vector<64x128xf32>
    %c1_i32_179 = arith.constant 1 : i32
    %290 = tpu.dynamic_rotate %242 by %c1_i32_179 dim 1 : vector<32x128xf32>, i32 -> vector<32x128xf32>
    %c1_i32_180 = arith.constant 1 : i32
    %291 = vector.broadcast %c1_i32_180 : i32 to vector<1x128xi32>
    %292 = arith.cmpi sge, %245, %291 : vector<1x128xi32>
    %cst_181 = arith.constant 0.000000e+00 : f32
    %293 = vector.shape_cast %292 : vector<1x128xi1> to vector<1x128xi1>
    %294 = vector.broadcast %293 : vector<1x128xi1> to vector<32x128xi1>
    %295 = vector.broadcast %cst_181 : f32 to vector<32x128xf32>
    %296 = arith.select %294, %290, %295 : vector<32x128xi1>, vector<32x128xf32>
    %c1_182 = arith.constant 1 : index
    %c0_183 = arith.constant 0 : index
    %c0_184 = arith.constant 0 : index
    %c0_185 = arith.constant 0 : index
    %297 = vector.load %arg6[%c1_182, %c0_183, %c0_184, %c0_185] : memref<3x3x64x32xf32, #tpu.memory_space<vmem>>, vector<1x1x64x32xf32>
    %298 = vector.shape_cast %297 : vector<1x1x64x32xf32> to vector<64x32xf32>
    %cst_186 = arith.constant dense<0.000000e+00> : vector<64x128xf32>
    %299 = tpu.matmul %298, %296, %cst_186 {dimension_numbers = #tpu.dot_dimension_numbers<[1], [0], [0], [1], [0, 0, 1, 1], [], []>} : vector<64x32xf32>, vector<32x128xf32>, vector<64x128xf32> -> vector<64x128xf32>
    %300 = arith.addf %289, %299 : vector<64x128xf32>
    %c1_187 = arith.constant 1 : index
    %c1_188 = arith.constant 1 : index
    %c0_189 = arith.constant 0 : index
    %c0_190 = arith.constant 0 : index
    %301 = vector.load %arg6[%c1_187, %c1_188, %c0_189, %c0_190] : memref<3x3x64x32xf32, #tpu.memory_space<vmem>>, vector<1x1x64x32xf32>
    %302 = vector.shape_cast %301 : vector<1x1x64x32xf32> to vector<64x32xf32>
    %cst_191 = arith.constant dense<0.000000e+00> : vector<64x128xf32>
    %303 = tpu.matmul %302, %242, %cst_191 {dimension_numbers = #tpu.dot_dimension_numbers<[1], [0], [0], [1], [0, 0, 1, 1], [], []>} : vector<64x32xf32>, vector<32x128xf32>, vector<64x128xf32> -> vector<64x128xf32>
    %304 = arith.addf %300, %303 : vector<64x128xf32>
    %c127_i32 = arith.constant 127 : i32
    %305 = tpu.dynamic_rotate %242 by %c127_i32 dim 1 : vector<32x128xf32>, i32 -> vector<32x128xf32>
    %c6_i32_192 = arith.constant 6 : i32
    %306 = vector.broadcast %c6_i32_192 : i32 to vector<1x128xi32>
    %307 = arith.cmpi sle, %245, %306 : vector<1x128xi32>
    %cst_193 = arith.constant 0.000000e+00 : f32
    %308 = vector.shape_cast %307 : vector<1x128xi1> to vector<1x128xi1>
    %309 = vector.broadcast %308 : vector<1x128xi1> to vector<32x128xi1>
    %310 = vector.broadcast %cst_193 : f32 to vector<32x128xf32>
    %311 = arith.select %309, %305, %310 : vector<32x128xi1>, vector<32x128xf32>
    %c1_194 = arith.constant 1 : index
    %c2_195 = arith.constant 2 : index
    %c0_196 = arith.constant 0 : index
    %c0_197 = arith.constant 0 : index
    %312 = vector.load %arg6[%c1_194, %c2_195, %c0_196, %c0_197] : memref<3x3x64x32xf32, #tpu.memory_space<vmem>>, vector<1x1x64x32xf32>
    %313 = vector.shape_cast %312 : vector<1x1x64x32xf32> to vector<64x32xf32>
    %cst_198 = arith.constant dense<0.000000e+00> : vector<64x128xf32>
    %314 = tpu.matmul %313, %311, %cst_198 {dimension_numbers = #tpu.dot_dimension_numbers<[1], [0], [0], [1], [0, 0, 1, 1], [], []>} : vector<64x32xf32>, vector<32x128xf32>, vector<64x128xf32> -> vector<64x128xf32>
    %315 = arith.addf %304, %314 : vector<64x128xf32>
    %c121_i32 = arith.constant 121 : i32
    %316 = tpu.dynamic_rotate %242 by %c121_i32 dim 1 : vector<32x128xf32>, i32 -> vector<32x128xf32>
    %c6_i32_199 = arith.constant 6 : i32
    %317 = vector.broadcast %c6_i32_199 : i32 to vector<1x128xi32>
    %318 = arith.cmpi sle, %249, %317 : vector<1x128xi32>
    %c1_i32_200 = arith.constant 1 : i32
    %319 = vector.broadcast %c1_i32_200 : i32 to vector<1x128xi32>
    %320 = arith.cmpi sge, %245, %319 : vector<1x128xi32>
    %321 = arith.andi %318, %320 : vector<1x128xi1>
    %cst_201 = arith.constant 0.000000e+00 : f32
    %322 = vector.shape_cast %321 : vector<1x128xi1> to vector<1x128xi1>
    %323 = vector.broadcast %322 : vector<1x128xi1> to vector<32x128xi1>
    %324 = vector.broadcast %cst_201 : f32 to vector<32x128xf32>
    %325 = arith.select %323, %316, %324 : vector<32x128xi1>, vector<32x128xf32>
    %c2_202 = arith.constant 2 : index
    %c0_203 = arith.constant 0 : index
    %c0_204 = arith.constant 0 : index
    %c0_205 = arith.constant 0 : index
    %326 = vector.load %arg6[%c2_202, %c0_203, %c0_204, %c0_205] : memref<3x3x64x32xf32, #tpu.memory_space<vmem>>, vector<1x1x64x32xf32>
    %327 = vector.shape_cast %326 : vector<1x1x64x32xf32> to vector<64x32xf32>
    %cst_206 = arith.constant dense<0.000000e+00> : vector<64x128xf32>
    %328 = tpu.matmul %327, %325, %cst_206 {dimension_numbers = #tpu.dot_dimension_numbers<[1], [0], [0], [1], [0, 0, 1, 1], [], []>} : vector<64x32xf32>, vector<32x128xf32>, vector<64x128xf32> -> vector<64x128xf32>
    %329 = arith.addf %315, %328 : vector<64x128xf32>
    %c120_i32 = arith.constant 120 : i32
    %330 = tpu.dynamic_rotate %242 by %c120_i32 dim 1 : vector<32x128xf32>, i32 -> vector<32x128xf32>
    %c6_i32_207 = arith.constant 6 : i32
    %331 = vector.broadcast %c6_i32_207 : i32 to vector<1x128xi32>
    %332 = arith.cmpi sle, %249, %331 : vector<1x128xi32>
    %cst_208 = arith.constant 0.000000e+00 : f32
    %333 = vector.shape_cast %332 : vector<1x128xi1> to vector<1x128xi1>
    %334 = vector.broadcast %333 : vector<1x128xi1> to vector<32x128xi1>
    %335 = vector.broadcast %cst_208 : f32 to vector<32x128xf32>
    %336 = arith.select %334, %330, %335 : vector<32x128xi1>, vector<32x128xf32>
    %c2_209 = arith.constant 2 : index
    %c1_210 = arith.constant 1 : index
    %c0_211 = arith.constant 0 : index
    %c0_212 = arith.constant 0 : index
    %337 = vector.load %arg6[%c2_209, %c1_210, %c0_211, %c0_212] : memref<3x3x64x32xf32, #tpu.memory_space<vmem>>, vector<1x1x64x32xf32>
    %338 = vector.shape_cast %337 : vector<1x1x64x32xf32> to vector<64x32xf32>
    %cst_213 = arith.constant dense<0.000000e+00> : vector<64x128xf32>
    %339 = tpu.matmul %338, %336, %cst_213 {dimension_numbers = #tpu.dot_dimension_numbers<[1], [0], [0], [1], [0, 0, 1, 1], [], []>} : vector<64x32xf32>, vector<32x128xf32>, vector<64x128xf32> -> vector<64x128xf32>
    %340 = arith.addf %329, %339 : vector<64x128xf32>
    %c119_i32 = arith.constant 119 : i32
    %341 = tpu.dynamic_rotate %242 by %c119_i32 dim 1 : vector<32x128xf32>, i32 -> vector<32x128xf32>
    %c6_i32_214 = arith.constant 6 : i32
    %342 = vector.broadcast %c6_i32_214 : i32 to vector<1x128xi32>
    %343 = arith.cmpi sle, %249, %342 : vector<1x128xi32>
    %c6_i32_215 = arith.constant 6 : i32
    %344 = vector.broadcast %c6_i32_215 : i32 to vector<1x128xi32>
    %345 = arith.cmpi sle, %245, %344 : vector<1x128xi32>
    %346 = arith.andi %343, %345 : vector<1x128xi1>
    %cst_216 = arith.constant 0.000000e+00 : f32
    %347 = vector.shape_cast %346 : vector<1x128xi1> to vector<1x128xi1>
    %348 = vector.broadcast %347 : vector<1x128xi1> to vector<32x128xi1>
    %349 = vector.broadcast %cst_216 : f32 to vector<32x128xf32>
    %350 = arith.select %348, %341, %349 : vector<32x128xi1>, vector<32x128xf32>
    %c2_217 = arith.constant 2 : index
    %c2_218 = arith.constant 2 : index
    %c0_219 = arith.constant 0 : index
    %c0_220 = arith.constant 0 : index
    %351 = vector.load %arg6[%c2_217, %c2_218, %c0_219, %c0_220] : memref<3x3x64x32xf32, #tpu.memory_space<vmem>>, vector<1x1x64x32xf32>
    %352 = vector.shape_cast %351 : vector<1x1x64x32xf32> to vector<64x32xf32>
    %cst_221 = arith.constant dense<0.000000e+00> : vector<64x128xf32>
    %353 = tpu.matmul %352, %350, %cst_221 {dimension_numbers = #tpu.dot_dimension_numbers<[1], [0], [0], [1], [0, 0, 1, 1], [], []>} : vector<64x32xf32>, vector<32x128xf32>, vector<64x128xf32> -> vector<64x128xf32>
    %354 = arith.addf %340, %353 : vector<64x128xf32>
    %c0_222 = arith.constant 0 : index
    %c0_223 = arith.constant 0 : index
    %355 = vector.load %arg7[%c0_222, %c0_223] : memref<64x1xf32, #tpu.memory_space<vmem>>, vector<64x1xf32>
    %356 = vector.broadcast %355 : vector<64x1xf32> to vector<64x128xf32>
    %357 = arith.addf %354, %356 : vector<64x128xf32>
    %cst_224 = arith.constant 0.000000e+00 : f32
    %358 = vector.broadcast %cst_224 : f32 to vector<64x128xf32>
    %359 = arith.maximumf %357, %358 : vector<64x128xf32>
    %360 = tpu.iota {dimensions = array<i32: 1>} : vector<1x128xi32>
    %c7_i32_225 = arith.constant 7 : i32
    %361 = vector.broadcast %c7_i32_225 : i32 to vector<1x128xi32>
    %362 = arith.andi %360, %361 : vector<1x128xi32>
    %c3_i32_226 = arith.constant 3 : i32
    %363 = vector.broadcast %c3_i32_226 : i32 to vector<1x128xi32>
    %364 = arith.shrsi %360, %363 : vector<1x128xi32>
    %c7_i32_227 = arith.constant 7 : i32
    %365 = vector.broadcast %c7_i32_227 : i32 to vector<1x128xi32>
    %366 = arith.andi %364, %365 : vector<1x128xi32>
    %cst_228 = arith.constant 0.000000e+00 : f32
    %367 = vector.broadcast %cst_228 : f32 to vector<64x128xf32>
    %c9_i32_229 = arith.constant 9 : i32
    %368 = tpu.dynamic_rotate %359 by %c9_i32_229 dim 1 : vector<64x128xf32>, i32 -> vector<64x128xf32>
    %c1_i32_230 = arith.constant 1 : i32
    %369 = vector.broadcast %c1_i32_230 : i32 to vector<1x128xi32>
    %370 = arith.cmpi sge, %366, %369 : vector<1x128xi32>
    %c1_i32_231 = arith.constant 1 : i32
    %371 = vector.broadcast %c1_i32_231 : i32 to vector<1x128xi32>
    %372 = arith.cmpi sge, %362, %371 : vector<1x128xi32>
    %373 = arith.andi %370, %372 : vector<1x128xi1>
    %cst_232 = arith.constant 0.000000e+00 : f32
    %374 = vector.shape_cast %373 : vector<1x128xi1> to vector<1x128xi1>
    %375 = vector.broadcast %374 : vector<1x128xi1> to vector<64x128xi1>
    %376 = vector.broadcast %cst_232 : f32 to vector<64x128xf32>
    %377 = arith.select %375, %368, %376 : vector<64x128xi1>, vector<64x128xf32>
    %c0_233 = arith.constant 0 : index
    %c0_234 = arith.constant 0 : index
    %c0_235 = arith.constant 0 : index
    %c0_236 = arith.constant 0 : index
    %378 = vector.load %arg8[%c0_233, %c0_234, %c0_235, %c0_236] : memref<3x3x64x64xf32, #tpu.memory_space<vmem>>, vector<1x1x64x64xf32>
    %379 = vector.shape_cast %378 : vector<1x1x64x64xf32> to vector<64x64xf32>
    %cst_237 = arith.constant dense<0.000000e+00> : vector<64x128xf32>
    %380 = tpu.matmul %379, %377, %cst_237 {dimension_numbers = #tpu.dot_dimension_numbers<[1], [0], [0], [1], [0, 0, 1, 1], [], []>} : vector<64x64xf32>, vector<64x128xf32>, vector<64x128xf32> -> vector<64x128xf32>
    %381 = arith.addf %367, %380 : vector<64x128xf32>
    %c8_i32_238 = arith.constant 8 : i32
    %382 = tpu.dynamic_rotate %359 by %c8_i32_238 dim 1 : vector<64x128xf32>, i32 -> vector<64x128xf32>
    %c1_i32_239 = arith.constant 1 : i32
    %383 = vector.broadcast %c1_i32_239 : i32 to vector<1x128xi32>
    %384 = arith.cmpi sge, %366, %383 : vector<1x128xi32>
    %cst_240 = arith.constant 0.000000e+00 : f32
    %385 = vector.shape_cast %384 : vector<1x128xi1> to vector<1x128xi1>
    %386 = vector.broadcast %385 : vector<1x128xi1> to vector<64x128xi1>
    %387 = vector.broadcast %cst_240 : f32 to vector<64x128xf32>
    %388 = arith.select %386, %382, %387 : vector<64x128xi1>, vector<64x128xf32>
    %c0_241 = arith.constant 0 : index
    %c1_242 = arith.constant 1 : index
    %c0_243 = arith.constant 0 : index
    %c0_244 = arith.constant 0 : index
    %389 = vector.load %arg8[%c0_241, %c1_242, %c0_243, %c0_244] : memref<3x3x64x64xf32, #tpu.memory_space<vmem>>, vector<1x1x64x64xf32>
    %390 = vector.shape_cast %389 : vector<1x1x64x64xf32> to vector<64x64xf32>
    %cst_245 = arith.constant dense<0.000000e+00> : vector<64x128xf32>
    %391 = tpu.matmul %390, %388, %cst_245 {dimension_numbers = #tpu.dot_dimension_numbers<[1], [0], [0], [1], [0, 0, 1, 1], [], []>} : vector<64x64xf32>, vector<64x128xf32>, vector<64x128xf32> -> vector<64x128xf32>
    %392 = arith.addf %381, %391 : vector<64x128xf32>
    %c7_i32_246 = arith.constant 7 : i32
    %393 = tpu.dynamic_rotate %359 by %c7_i32_246 dim 1 : vector<64x128xf32>, i32 -> vector<64x128xf32>
    %c1_i32_247 = arith.constant 1 : i32
    %394 = vector.broadcast %c1_i32_247 : i32 to vector<1x128xi32>
    %395 = arith.cmpi sge, %366, %394 : vector<1x128xi32>
    %c6_i32_248 = arith.constant 6 : i32
    %396 = vector.broadcast %c6_i32_248 : i32 to vector<1x128xi32>
    %397 = arith.cmpi sle, %362, %396 : vector<1x128xi32>
    %398 = arith.andi %395, %397 : vector<1x128xi1>
    %cst_249 = arith.constant 0.000000e+00 : f32
    %399 = vector.shape_cast %398 : vector<1x128xi1> to vector<1x128xi1>
    %400 = vector.broadcast %399 : vector<1x128xi1> to vector<64x128xi1>
    %401 = vector.broadcast %cst_249 : f32 to vector<64x128xf32>
    %402 = arith.select %400, %393, %401 : vector<64x128xi1>, vector<64x128xf32>
    %c0_250 = arith.constant 0 : index
    %c2_251 = arith.constant 2 : index
    %c0_252 = arith.constant 0 : index
    %c0_253 = arith.constant 0 : index
    %403 = vector.load %arg8[%c0_250, %c2_251, %c0_252, %c0_253] : memref<3x3x64x64xf32, #tpu.memory_space<vmem>>, vector<1x1x64x64xf32>
    %404 = vector.shape_cast %403 : vector<1x1x64x64xf32> to vector<64x64xf32>
    %cst_254 = arith.constant dense<0.000000e+00> : vector<64x128xf32>
    %405 = tpu.matmul %404, %402, %cst_254 {dimension_numbers = #tpu.dot_dimension_numbers<[1], [0], [0], [1], [0, 0, 1, 1], [], []>} : vector<64x64xf32>, vector<64x128xf32>, vector<64x128xf32> -> vector<64x128xf32>
    %406 = arith.addf %392, %405 : vector<64x128xf32>
    %c1_i32_255 = arith.constant 1 : i32
    %407 = tpu.dynamic_rotate %359 by %c1_i32_255 dim 1 : vector<64x128xf32>, i32 -> vector<64x128xf32>
    %c1_i32_256 = arith.constant 1 : i32
    %408 = vector.broadcast %c1_i32_256 : i32 to vector<1x128xi32>
    %409 = arith.cmpi sge, %362, %408 : vector<1x128xi32>
    %cst_257 = arith.constant 0.000000e+00 : f32
    %410 = vector.shape_cast %409 : vector<1x128xi1> to vector<1x128xi1>
    %411 = vector.broadcast %410 : vector<1x128xi1> to vector<64x128xi1>
    %412 = vector.broadcast %cst_257 : f32 to vector<64x128xf32>
    %413 = arith.select %411, %407, %412 : vector<64x128xi1>, vector<64x128xf32>
    %c1_258 = arith.constant 1 : index
    %c0_259 = arith.constant 0 : index
    %c0_260 = arith.constant 0 : index
    %c0_261 = arith.constant 0 : index
    %414 = vector.load %arg8[%c1_258, %c0_259, %c0_260, %c0_261] : memref<3x3x64x64xf32, #tpu.memory_space<vmem>>, vector<1x1x64x64xf32>
    %415 = vector.shape_cast %414 : vector<1x1x64x64xf32> to vector<64x64xf32>
    %cst_262 = arith.constant dense<0.000000e+00> : vector<64x128xf32>
    %416 = tpu.matmul %415, %413, %cst_262 {dimension_numbers = #tpu.dot_dimension_numbers<[1], [0], [0], [1], [0, 0, 1, 1], [], []>} : vector<64x64xf32>, vector<64x128xf32>, vector<64x128xf32> -> vector<64x128xf32>
    %417 = arith.addf %406, %416 : vector<64x128xf32>
    %c1_263 = arith.constant 1 : index
    %c1_264 = arith.constant 1 : index
    %c0_265 = arith.constant 0 : index
    %c0_266 = arith.constant 0 : index
    %418 = vector.load %arg8[%c1_263, %c1_264, %c0_265, %c0_266] : memref<3x3x64x64xf32, #tpu.memory_space<vmem>>, vector<1x1x64x64xf32>
    %419 = vector.shape_cast %418 : vector<1x1x64x64xf32> to vector<64x64xf32>
    %cst_267 = arith.constant dense<0.000000e+00> : vector<64x128xf32>
    %420 = tpu.matmul %419, %359, %cst_267 {dimension_numbers = #tpu.dot_dimension_numbers<[1], [0], [0], [1], [0, 0, 1, 1], [], []>} : vector<64x64xf32>, vector<64x128xf32>, vector<64x128xf32> -> vector<64x128xf32>
    %421 = arith.addf %417, %420 : vector<64x128xf32>
    %c127_i32_268 = arith.constant 127 : i32
    %422 = tpu.dynamic_rotate %359 by %c127_i32_268 dim 1 : vector<64x128xf32>, i32 -> vector<64x128xf32>
    %c6_i32_269 = arith.constant 6 : i32
    %423 = vector.broadcast %c6_i32_269 : i32 to vector<1x128xi32>
    %424 = arith.cmpi sle, %362, %423 : vector<1x128xi32>
    %cst_270 = arith.constant 0.000000e+00 : f32
    %425 = vector.shape_cast %424 : vector<1x128xi1> to vector<1x128xi1>
    %426 = vector.broadcast %425 : vector<1x128xi1> to vector<64x128xi1>
    %427 = vector.broadcast %cst_270 : f32 to vector<64x128xf32>
    %428 = arith.select %426, %422, %427 : vector<64x128xi1>, vector<64x128xf32>
    %c1_271 = arith.constant 1 : index
    %c2_272 = arith.constant 2 : index
    %c0_273 = arith.constant 0 : index
    %c0_274 = arith.constant 0 : index
    %429 = vector.load %arg8[%c1_271, %c2_272, %c0_273, %c0_274] : memref<3x3x64x64xf32, #tpu.memory_space<vmem>>, vector<1x1x64x64xf32>
    %430 = vector.shape_cast %429 : vector<1x1x64x64xf32> to vector<64x64xf32>
    %cst_275 = arith.constant dense<0.000000e+00> : vector<64x128xf32>
    %431 = tpu.matmul %430, %428, %cst_275 {dimension_numbers = #tpu.dot_dimension_numbers<[1], [0], [0], [1], [0, 0, 1, 1], [], []>} : vector<64x64xf32>, vector<64x128xf32>, vector<64x128xf32> -> vector<64x128xf32>
    %432 = arith.addf %421, %431 : vector<64x128xf32>
    %c121_i32_276 = arith.constant 121 : i32
    %433 = tpu.dynamic_rotate %359 by %c121_i32_276 dim 1 : vector<64x128xf32>, i32 -> vector<64x128xf32>
    %c6_i32_277 = arith.constant 6 : i32
    %434 = vector.broadcast %c6_i32_277 : i32 to vector<1x128xi32>
    %435 = arith.cmpi sle, %366, %434 : vector<1x128xi32>
    %c1_i32_278 = arith.constant 1 : i32
    %436 = vector.broadcast %c1_i32_278 : i32 to vector<1x128xi32>
    %437 = arith.cmpi sge, %362, %436 : vector<1x128xi32>
    %438 = arith.andi %435, %437 : vector<1x128xi1>
    %cst_279 = arith.constant 0.000000e+00 : f32
    %439 = vector.shape_cast %438 : vector<1x128xi1> to vector<1x128xi1>
    %440 = vector.broadcast %439 : vector<1x128xi1> to vector<64x128xi1>
    %441 = vector.broadcast %cst_279 : f32 to vector<64x128xf32>
    %442 = arith.select %440, %433, %441 : vector<64x128xi1>, vector<64x128xf32>
    %c2_280 = arith.constant 2 : index
    %c0_281 = arith.constant 0 : index
    %c0_282 = arith.constant 0 : index
    %c0_283 = arith.constant 0 : index
    %443 = vector.load %arg8[%c2_280, %c0_281, %c0_282, %c0_283] : memref<3x3x64x64xf32, #tpu.memory_space<vmem>>, vector<1x1x64x64xf32>
    %444 = vector.shape_cast %443 : vector<1x1x64x64xf32> to vector<64x64xf32>
    %cst_284 = arith.constant dense<0.000000e+00> : vector<64x128xf32>
    %445 = tpu.matmul %444, %442, %cst_284 {dimension_numbers = #tpu.dot_dimension_numbers<[1], [0], [0], [1], [0, 0, 1, 1], [], []>} : vector<64x64xf32>, vector<64x128xf32>, vector<64x128xf32> -> vector<64x128xf32>
    %446 = arith.addf %432, %445 : vector<64x128xf32>
    %c120_i32_285 = arith.constant 120 : i32
    %447 = tpu.dynamic_rotate %359 by %c120_i32_285 dim 1 : vector<64x128xf32>, i32 -> vector<64x128xf32>
    %c6_i32_286 = arith.constant 6 : i32
    %448 = vector.broadcast %c6_i32_286 : i32 to vector<1x128xi32>
    %449 = arith.cmpi sle, %366, %448 : vector<1x128xi32>
    %cst_287 = arith.constant 0.000000e+00 : f32
    %450 = vector.shape_cast %449 : vector<1x128xi1> to vector<1x128xi1>
    %451 = vector.broadcast %450 : vector<1x128xi1> to vector<64x128xi1>
    %452 = vector.broadcast %cst_287 : f32 to vector<64x128xf32>
    %453 = arith.select %451, %447, %452 : vector<64x128xi1>, vector<64x128xf32>
    %c2_288 = arith.constant 2 : index
    %c1_289 = arith.constant 1 : index
    %c0_290 = arith.constant 0 : index
    %c0_291 = arith.constant 0 : index
    %454 = vector.load %arg8[%c2_288, %c1_289, %c0_290, %c0_291] : memref<3x3x64x64xf32, #tpu.memory_space<vmem>>, vector<1x1x64x64xf32>
    %455 = vector.shape_cast %454 : vector<1x1x64x64xf32> to vector<64x64xf32>
    %cst_292 = arith.constant dense<0.000000e+00> : vector<64x128xf32>
    %456 = tpu.matmul %455, %453, %cst_292 {dimension_numbers = #tpu.dot_dimension_numbers<[1], [0], [0], [1], [0, 0, 1, 1], [], []>} : vector<64x64xf32>, vector<64x128xf32>, vector<64x128xf32> -> vector<64x128xf32>
    %457 = arith.addf %446, %456 : vector<64x128xf32>
    %c119_i32_293 = arith.constant 119 : i32
    %458 = tpu.dynamic_rotate %359 by %c119_i32_293 dim 1 : vector<64x128xf32>, i32 -> vector<64x128xf32>
    %c6_i32_294 = arith.constant 6 : i32
    %459 = vector.broadcast %c6_i32_294 : i32 to vector<1x128xi32>
    %460 = arith.cmpi sle, %366, %459 : vector<1x128xi32>
    %c6_i32_295 = arith.constant 6 : i32
    %461 = vector.broadcast %c6_i32_295 : i32 to vector<1x128xi32>
    %462 = arith.cmpi sle, %362, %461 : vector<1x128xi32>
    %463 = arith.andi %460, %462 : vector<1x128xi1>
    %cst_296 = arith.constant 0.000000e+00 : f32
    %464 = vector.shape_cast %463 : vector<1x128xi1> to vector<1x128xi1>
    %465 = vector.broadcast %464 : vector<1x128xi1> to vector<64x128xi1>
    %466 = vector.broadcast %cst_296 : f32 to vector<64x128xf32>
    %467 = arith.select %465, %458, %466 : vector<64x128xi1>, vector<64x128xf32>
    %c2_297 = arith.constant 2 : index
    %c2_298 = arith.constant 2 : index
    %c0_299 = arith.constant 0 : index
    %c0_300 = arith.constant 0 : index
    %468 = vector.load %arg8[%c2_297, %c2_298, %c0_299, %c0_300] : memref<3x3x64x64xf32, #tpu.memory_space<vmem>>, vector<1x1x64x64xf32>
    %469 = vector.shape_cast %468 : vector<1x1x64x64xf32> to vector<64x64xf32>
    %cst_301 = arith.constant dense<0.000000e+00> : vector<64x128xf32>
    %470 = tpu.matmul %469, %467, %cst_301 {dimension_numbers = #tpu.dot_dimension_numbers<[1], [0], [0], [1], [0, 0, 1, 1], [], []>} : vector<64x64xf32>, vector<64x128xf32>, vector<64x128xf32> -> vector<64x128xf32>
    %471 = arith.addf %457, %470 : vector<64x128xf32>
    %c0_302 = arith.constant 0 : index
    %c0_303 = arith.constant 0 : index
    %472 = vector.load %arg9[%c0_302, %c0_303] : memref<64x1xf32, #tpu.memory_space<vmem>>, vector<64x1xf32>
    %473 = vector.broadcast %472 : vector<64x1xf32> to vector<64x128xf32>
    %474 = arith.addf %471, %473 : vector<64x128xf32>
    %cst_304 = arith.constant 0.000000e+00 : f32
    %475 = vector.broadcast %cst_304 : f32 to vector<64x128xf32>
    %476 = arith.maximumf %474, %475 : vector<64x128xf32>
    %c127_i32_305 = arith.constant 127 : i32
    %477 = tpu.dynamic_rotate %476 by %c127_i32_305 dim 1 : vector<64x128xf32>, i32 -> vector<64x128xf32>
    %478 = arith.maximumf %476, %477 : vector<64x128xf32>
    %c120_i32_306 = arith.constant 120 : i32
    %479 = tpu.dynamic_rotate %476 by %c120_i32_306 dim 1 : vector<64x128xf32>, i32 -> vector<64x128xf32>
    %480 = arith.maximumf %478, %479 : vector<64x128xf32>
    %c119_i32_307 = arith.constant 119 : i32
    %481 = tpu.dynamic_rotate %476 by %c119_i32_307 dim 1 : vector<64x128xf32>, i32 -> vector<64x128xf32>
    %482 = arith.maximumf %480, %481 : vector<64x128xf32>
    %c0_308 = arith.constant 0 : index
    %c0_309 = arith.constant 0 : index
    %483 = vector.load %arg10[%c0_308, %c0_309] : memref<128x32xf32, #tpu.memory_space<vmem>>, vector<128x32xf32>
    %cst_310 = arith.constant dense<0.000000e+00> : vector<64x32xf32>
    %484 = tpu.matmul %482, %483, %cst_310 {dimension_numbers = #tpu.dot_dimension_numbers<[1], [0], [0], [1], [0, 0, 1, 1], [], []>} : vector<64x128xf32>, vector<128x32xf32>, vector<64x32xf32> -> vector<64x32xf32>
    %cst_311 = arith.constant 0.000000e+00 : f32
    %485 = vector.broadcast %cst_311 : f32 to vector<32x2xf32>
    %c0_312 = arith.constant 0 : index
    %c0_313 = arith.constant 0 : index
    %c0_314 = arith.constant 0 : index
    %486 = vector.load %arg11[%c0_312, %c0_313, %c0_314] : memref<16x32x64xf32, #tpu.memory_space<vmem>>, vector<1x32x64xf32>
    %487 = vector.shape_cast %486 : vector<1x32x64xf32> to vector<32x64xf32>
    %488 = vector.extract_strided_slice %484 {offsets = [0, 0], sizes = [64, 2], strides = [1, 1]} : vector<64x32xf32> to vector<64x2xf32>
    %cst_315 = arith.constant dense<0.000000e+00> : vector<32x2xf32>
    %489 = tpu.matmul %487, %488, %cst_315 {dimension_numbers = #tpu.dot_dimension_numbers<[1], [0], [0], [1], [0, 0, 1, 1], [], []>} : vector<32x64xf32>, vector<64x2xf32>, vector<32x2xf32> -> vector<32x2xf32>
    %490 = arith.addf %485, %489 : vector<32x2xf32>
    %c1_316 = arith.constant 1 : index
    %c0_317 = arith.constant 0 : index
    %c0_318 = arith.constant 0 : index
    %491 = vector.load %arg11[%c1_316, %c0_317, %c0_318] : memref<16x32x64xf32, #tpu.memory_space<vmem>>, vector<1x32x64xf32>
    %492 = vector.shape_cast %491 : vector<1x32x64xf32> to vector<32x64xf32>
    %493 = vector.extract_strided_slice %484 {offsets = [0, 2], sizes = [64, 2], strides = [1, 1]} : vector<64x32xf32> to vector<64x2xf32>
    %cst_319 = arith.constant dense<0.000000e+00> : vector<32x2xf32>
    %494 = tpu.matmul %492, %493, %cst_319 {dimension_numbers = #tpu.dot_dimension_numbers<[1], [0], [0], [1], [0, 0, 1, 1], [], []>} : vector<32x64xf32>, vector<64x2xf32>, vector<32x2xf32> -> vector<32x2xf32>
    %495 = arith.addf %490, %494 : vector<32x2xf32>
    %c2_320 = arith.constant 2 : index
    %c0_321 = arith.constant 0 : index
    %c0_322 = arith.constant 0 : index
    %496 = vector.load %arg11[%c2_320, %c0_321, %c0_322] : memref<16x32x64xf32, #tpu.memory_space<vmem>>, vector<1x32x64xf32>
    %497 = vector.shape_cast %496 : vector<1x32x64xf32> to vector<32x64xf32>
    %498 = vector.extract_strided_slice %484 {offsets = [0, 4], sizes = [64, 2], strides = [1, 1]} : vector<64x32xf32> to vector<64x2xf32>
    %cst_323 = arith.constant dense<0.000000e+00> : vector<32x2xf32>
    %499 = tpu.matmul %497, %498, %cst_323 {dimension_numbers = #tpu.dot_dimension_numbers<[1], [0], [0], [1], [0, 0, 1, 1], [], []>} : vector<32x64xf32>, vector<64x2xf32>, vector<32x2xf32> -> vector<32x2xf32>
    %500 = arith.addf %495, %499 : vector<32x2xf32>
    %c3 = arith.constant 3 : index
    %c0_324 = arith.constant 0 : index
    %c0_325 = arith.constant 0 : index
    %501 = vector.load %arg11[%c3, %c0_324, %c0_325] : memref<16x32x64xf32, #tpu.memory_space<vmem>>, vector<1x32x64xf32>
    %502 = vector.shape_cast %501 : vector<1x32x64xf32> to vector<32x64xf32>
    %503 = vector.extract_strided_slice %484 {offsets = [0, 6], sizes = [64, 2], strides = [1, 1]} : vector<64x32xf32> to vector<64x2xf32>
    %cst_326 = arith.constant dense<0.000000e+00> : vector<32x2xf32>
    %504 = tpu.matmul %502, %503, %cst_326 {dimension_numbers = #tpu.dot_dimension_numbers<[1], [0], [0], [1], [0, 0, 1, 1], [], []>} : vector<32x64xf32>, vector<64x2xf32>, vector<32x2xf32> -> vector<32x2xf32>
    %505 = arith.addf %500, %504 : vector<32x2xf32>
    %c4 = arith.constant 4 : index
    %c0_327 = arith.constant 0 : index
    %c0_328 = arith.constant 0 : index
    %506 = vector.load %arg11[%c4, %c0_327, %c0_328] : memref<16x32x64xf32, #tpu.memory_space<vmem>>, vector<1x32x64xf32>
    %507 = vector.shape_cast %506 : vector<1x32x64xf32> to vector<32x64xf32>
    %508 = vector.extract_strided_slice %484 {offsets = [0, 8], sizes = [64, 2], strides = [1, 1]} : vector<64x32xf32> to vector<64x2xf32>
    %cst_329 = arith.constant dense<0.000000e+00> : vector<32x2xf32>
    %509 = tpu.matmul %507, %508, %cst_329 {dimension_numbers = #tpu.dot_dimension_numbers<[1], [0], [0], [1], [0, 0, 1, 1], [], []>} : vector<32x64xf32>, vector<64x2xf32>, vector<32x2xf32> -> vector<32x2xf32>
    %510 = arith.addf %505, %509 : vector<32x2xf32>
    %c5 = arith.constant 5 : index
    %c0_330 = arith.constant 0 : index
    %c0_331 = arith.constant 0 : index
    %511 = vector.load %arg11[%c5, %c0_330, %c0_331] : memref<16x32x64xf32, #tpu.memory_space<vmem>>, vector<1x32x64xf32>
    %512 = vector.shape_cast %511 : vector<1x32x64xf32> to vector<32x64xf32>
    %513 = vector.extract_strided_slice %484 {offsets = [0, 10], sizes = [64, 2], strides = [1, 1]} : vector<64x32xf32> to vector<64x2xf32>
    %cst_332 = arith.constant dense<0.000000e+00> : vector<32x2xf32>
    %514 = tpu.matmul %512, %513, %cst_332 {dimension_numbers = #tpu.dot_dimension_numbers<[1], [0], [0], [1], [0, 0, 1, 1], [], []>} : vector<32x64xf32>, vector<64x2xf32>, vector<32x2xf32> -> vector<32x2xf32>
    %515 = arith.addf %510, %514 : vector<32x2xf32>
    %c6 = arith.constant 6 : index
    %c0_333 = arith.constant 0 : index
    %c0_334 = arith.constant 0 : index
    %516 = vector.load %arg11[%c6, %c0_333, %c0_334] : memref<16x32x64xf32, #tpu.memory_space<vmem>>, vector<1x32x64xf32>
    %517 = vector.shape_cast %516 : vector<1x32x64xf32> to vector<32x64xf32>
    %518 = vector.extract_strided_slice %484 {offsets = [0, 12], sizes = [64, 2], strides = [1, 1]} : vector<64x32xf32> to vector<64x2xf32>
    %cst_335 = arith.constant dense<0.000000e+00> : vector<32x2xf32>
    %519 = tpu.matmul %517, %518, %cst_335 {dimension_numbers = #tpu.dot_dimension_numbers<[1], [0], [0], [1], [0, 0, 1, 1], [], []>} : vector<32x64xf32>, vector<64x2xf32>, vector<32x2xf32> -> vector<32x2xf32>
    %520 = arith.addf %515, %519 : vector<32x2xf32>
    %c7 = arith.constant 7 : index
    %c0_336 = arith.constant 0 : index
    %c0_337 = arith.constant 0 : index
    %521 = vector.load %arg11[%c7, %c0_336, %c0_337] : memref<16x32x64xf32, #tpu.memory_space<vmem>>, vector<1x32x64xf32>
    %522 = vector.shape_cast %521 : vector<1x32x64xf32> to vector<32x64xf32>
    %523 = vector.extract_strided_slice %484 {offsets = [0, 14], sizes = [64, 2], strides = [1, 1]} : vector<64x32xf32> to vector<64x2xf32>
    %cst_338 = arith.constant dense<0.000000e+00> : vector<32x2xf32>
    %524 = tpu.matmul %522, %523, %cst_338 {dimension_numbers = #tpu.dot_dimension_numbers<[1], [0], [0], [1], [0, 0, 1, 1], [], []>} : vector<32x64xf32>, vector<64x2xf32>, vector<32x2xf32> -> vector<32x2xf32>
    %525 = arith.addf %520, %524 : vector<32x2xf32>
    %c8 = arith.constant 8 : index
    %c0_339 = arith.constant 0 : index
    %c0_340 = arith.constant 0 : index
    %526 = vector.load %arg11[%c8, %c0_339, %c0_340] : memref<16x32x64xf32, #tpu.memory_space<vmem>>, vector<1x32x64xf32>
    %527 = vector.shape_cast %526 : vector<1x32x64xf32> to vector<32x64xf32>
    %528 = vector.extract_strided_slice %484 {offsets = [0, 16], sizes = [64, 2], strides = [1, 1]} : vector<64x32xf32> to vector<64x2xf32>
    %cst_341 = arith.constant dense<0.000000e+00> : vector<32x2xf32>
    %529 = tpu.matmul %527, %528, %cst_341 {dimension_numbers = #tpu.dot_dimension_numbers<[1], [0], [0], [1], [0, 0, 1, 1], [], []>} : vector<32x64xf32>, vector<64x2xf32>, vector<32x2xf32> -> vector<32x2xf32>
    %530 = arith.addf %525, %529 : vector<32x2xf32>
    %c9 = arith.constant 9 : index
    %c0_342 = arith.constant 0 : index
    %c0_343 = arith.constant 0 : index
    %531 = vector.load %arg11[%c9, %c0_342, %c0_343] : memref<16x32x64xf32, #tpu.memory_space<vmem>>, vector<1x32x64xf32>
    %532 = vector.shape_cast %531 : vector<1x32x64xf32> to vector<32x64xf32>
    %533 = vector.extract_strided_slice %484 {offsets = [0, 18], sizes = [64, 2], strides = [1, 1]} : vector<64x32xf32> to vector<64x2xf32>
    %cst_344 = arith.constant dense<0.000000e+00> : vector<32x2xf32>
    %534 = tpu.matmul %532, %533, %cst_344 {dimension_numbers = #tpu.dot_dimension_numbers<[1], [0], [0], [1], [0, 0, 1, 1], [], []>} : vector<32x64xf32>, vector<64x2xf32>, vector<32x2xf32> -> vector<32x2xf32>
    %535 = arith.addf %530, %534 : vector<32x2xf32>
    %c10 = arith.constant 10 : index
    %c0_345 = arith.constant 0 : index
    %c0_346 = arith.constant 0 : index
    %536 = vector.load %arg11[%c10, %c0_345, %c0_346] : memref<16x32x64xf32, #tpu.memory_space<vmem>>, vector<1x32x64xf32>
    %537 = vector.shape_cast %536 : vector<1x32x64xf32> to vector<32x64xf32>
    %538 = vector.extract_strided_slice %484 {offsets = [0, 20], sizes = [64, 2], strides = [1, 1]} : vector<64x32xf32> to vector<64x2xf32>
    %cst_347 = arith.constant dense<0.000000e+00> : vector<32x2xf32>
    %539 = tpu.matmul %537, %538, %cst_347 {dimension_numbers = #tpu.dot_dimension_numbers<[1], [0], [0], [1], [0, 0, 1, 1], [], []>} : vector<32x64xf32>, vector<64x2xf32>, vector<32x2xf32> -> vector<32x2xf32>
    %540 = arith.addf %535, %539 : vector<32x2xf32>
    %c11 = arith.constant 11 : index
    %c0_348 = arith.constant 0 : index
    %c0_349 = arith.constant 0 : index
    %541 = vector.load %arg11[%c11, %c0_348, %c0_349] : memref<16x32x64xf32, #tpu.memory_space<vmem>>, vector<1x32x64xf32>
    %542 = vector.shape_cast %541 : vector<1x32x64xf32> to vector<32x64xf32>
    %543 = vector.extract_strided_slice %484 {offsets = [0, 22], sizes = [64, 2], strides = [1, 1]} : vector<64x32xf32> to vector<64x2xf32>
    %cst_350 = arith.constant dense<0.000000e+00> : vector<32x2xf32>
    %544 = tpu.matmul %542, %543, %cst_350 {dimension_numbers = #tpu.dot_dimension_numbers<[1], [0], [0], [1], [0, 0, 1, 1], [], []>} : vector<32x64xf32>, vector<64x2xf32>, vector<32x2xf32> -> vector<32x2xf32>
    %545 = arith.addf %540, %544 : vector<32x2xf32>
    %c12 = arith.constant 12 : index
    %c0_351 = arith.constant 0 : index
    %c0_352 = arith.constant 0 : index
    %546 = vector.load %arg11[%c12, %c0_351, %c0_352] : memref<16x32x64xf32, #tpu.memory_space<vmem>>, vector<1x32x64xf32>
    %547 = vector.shape_cast %546 : vector<1x32x64xf32> to vector<32x64xf32>
    %548 = vector.extract_strided_slice %484 {offsets = [0, 24], sizes = [64, 2], strides = [1, 1]} : vector<64x32xf32> to vector<64x2xf32>
    %cst_353 = arith.constant dense<0.000000e+00> : vector<32x2xf32>
    %549 = tpu.matmul %547, %548, %cst_353 {dimension_numbers = #tpu.dot_dimension_numbers<[1], [0], [0], [1], [0, 0, 1, 1], [], []>} : vector<32x64xf32>, vector<64x2xf32>, vector<32x2xf32> -> vector<32x2xf32>
    %550 = arith.addf %545, %549 : vector<32x2xf32>
    %c13 = arith.constant 13 : index
    %c0_354 = arith.constant 0 : index
    %c0_355 = arith.constant 0 : index
    %551 = vector.load %arg11[%c13, %c0_354, %c0_355] : memref<16x32x64xf32, #tpu.memory_space<vmem>>, vector<1x32x64xf32>
    %552 = vector.shape_cast %551 : vector<1x32x64xf32> to vector<32x64xf32>
    %553 = vector.extract_strided_slice %484 {offsets = [0, 26], sizes = [64, 2], strides = [1, 1]} : vector<64x32xf32> to vector<64x2xf32>
    %cst_356 = arith.constant dense<0.000000e+00> : vector<32x2xf32>
    %554 = tpu.matmul %552, %553, %cst_356 {dimension_numbers = #tpu.dot_dimension_numbers<[1], [0], [0], [1], [0, 0, 1, 1], [], []>} : vector<32x64xf32>, vector<64x2xf32>, vector<32x2xf32> -> vector<32x2xf32>
    %555 = arith.addf %550, %554 : vector<32x2xf32>
    %c14 = arith.constant 14 : index
    %c0_357 = arith.constant 0 : index
    %c0_358 = arith.constant 0 : index
    %556 = vector.load %arg11[%c14, %c0_357, %c0_358] : memref<16x32x64xf32, #tpu.memory_space<vmem>>, vector<1x32x64xf32>
    %557 = vector.shape_cast %556 : vector<1x32x64xf32> to vector<32x64xf32>
    %558 = vector.extract_strided_slice %484 {offsets = [0, 28], sizes = [64, 2], strides = [1, 1]} : vector<64x32xf32> to vector<64x2xf32>
    %cst_359 = arith.constant dense<0.000000e+00> : vector<32x2xf32>
    %559 = tpu.matmul %557, %558, %cst_359 {dimension_numbers = #tpu.dot_dimension_numbers<[1], [0], [0], [1], [0, 0, 1, 1], [], []>} : vector<32x64xf32>, vector<64x2xf32>, vector<32x2xf32> -> vector<32x2xf32>
    %560 = arith.addf %555, %559 : vector<32x2xf32>
    %c15 = arith.constant 15 : index
    %c0_360 = arith.constant 0 : index
    %c0_361 = arith.constant 0 : index
    %561 = vector.load %arg11[%c15, %c0_360, %c0_361] : memref<16x32x64xf32, #tpu.memory_space<vmem>>, vector<1x32x64xf32>
    %562 = vector.shape_cast %561 : vector<1x32x64xf32> to vector<32x64xf32>
    %563 = vector.extract_strided_slice %484 {offsets = [0, 30], sizes = [64, 2], strides = [1, 1]} : vector<64x32xf32> to vector<64x2xf32>
    %cst_362 = arith.constant dense<0.000000e+00> : vector<32x2xf32>
    %564 = tpu.matmul %562, %563, %cst_362 {dimension_numbers = #tpu.dot_dimension_numbers<[1], [0], [0], [1], [0, 0, 1, 1], [], []>} : vector<32x64xf32>, vector<64x2xf32>, vector<32x2xf32> -> vector<32x2xf32>
    %565 = arith.addf %560, %564 : vector<32x2xf32>
    %c0_363 = arith.constant 0 : index
    %c0_364 = arith.constant 0 : index
    %566 = vector.load %arg12[%c0_363, %c0_364] : memref<32x1xf32, #tpu.memory_space<vmem>>, vector<32x1xf32>
    %567 = vector.broadcast %566 : vector<32x1xf32> to vector<32x2xf32>
    %568 = arith.addf %565, %567 : vector<32x2xf32>
    %cst_365 = arith.constant 0.000000e+00 : f32
    %569 = vector.broadcast %cst_365 : f32 to vector<32x2xf32>
    %570 = arith.maximumf %568, %569 : vector<32x2xf32>
    %c0_366 = arith.constant 0 : index
    %c0_367 = arith.constant 0 : index
    %571 = vector.load %arg13[%c0_366, %c0_367] : memref<2x32xf32, #tpu.memory_space<vmem>>, vector<2x32xf32>
    %cst_368 = arith.constant dense<0.000000e+00> : vector<2x2xf32>
    %572 = tpu.matmul %571, %570, %cst_368 {dimension_numbers = #tpu.dot_dimension_numbers<[1], [0], [0], [1], [0, 0, 1, 1], [], []>} : vector<2x32xf32>, vector<32x2xf32>, vector<2x2xf32> -> vector<2x2xf32>
    %c0_369 = arith.constant 0 : index
    %c0_370 = arith.constant 0 : index
    %573 = vector.load %arg14[%c0_369, %c0_370] : memref<2x1xf32, #tpu.memory_space<vmem>>, vector<2x1xf32>
    %574 = vector.broadcast %573 : vector<2x1xf32> to vector<2x2xf32>
    %575 = arith.addf %572, %574 : vector<2x2xf32>
    %c0_371 = arith.constant 0 : index
    %c0_372 = arith.constant 0 : index
    %576 = vector.load %arg15[%c0_371, %c0_372] : memref<2x2xf32, #tpu.memory_space<vmem>>, vector<2x2xf32>
    tpu.vector_store %arg15[%c0_371, %c0_372], %575 {strides = array<i32>} : memref<2x2xf32, #tpu.memory_space<vmem>>, vector<2x2xf32>,
    return
  }
}

</mosaic_0001>

<llo_original>
// kernel: font_identification_1flow.1
$region0: #{font_identification_1flow.1}
  #allocation0 [shape = 'u32[]', space=smem, size = 0x4, offset = 0x4, fixed_abs, tag = 'smem constant byte address 0x4 - core index']
  #allocation1 [shape = 'u32[144,128]{1,0:T(1,128)}', space=vmem, size = 0x12000, scoped, tag = 'internal scratch']
  %s0 = inlined_call_operand.vmem [shape: f32[8,512], index: 0, kind: input, shape index: {}]
  %s1 = inlined_call_operand.vmem [shape: f32[3,3,32,8], index: 1, kind: input, shape index: {}]
  %s2 = inlined_call_operand.vmem [shape: f32[32,1], index: 2, kind: input, shape index: {}]
  %s3 = inlined_call_operand.vmem [shape: f32[3,3,32,32], index: 3, kind: input, shape index: {}]
  %s4 = inlined_call_operand.vmem [shape: f32[32,1], index: 4, kind: input, shape index: {}]
  %s5 = inlined_call_operand.vmem [shape: f32[512,128], index: 5, kind: input, shape index: {}]
  %s6 = inlined_call_operand.vmem [shape: f32[3,3,64,32], index: 6, kind: input, shape index: {}]
  %s7 = inlined_call_operand.vmem [shape: f32[64,1], index: 7, kind: input, shape index: {}]
  %s8 = inlined_call_operand.vmem [shape: f32[3,3,64,64], index: 8, kind: input, shape index: {}]
  %s9 = inlined_call_operand.vmem [shape: f32[64,1], index: 9, kind: input, shape index: {}]
  %s10 = inlined_call_operand.vmem [shape: f32[128,32], index: 10, kind: input, shape index: {}]
  %s11 = inlined_call_operand.vmem [shape: f32[16,32,64], index: 11, kind: input, shape index: {}]
  %s12 = inlined_call_operand.vmem [shape: f32[32,1], index: 12, kind: input, shape index: {}]
  %s13 = inlined_call_operand.vmem [shape: f32[2,32], index: 13, kind: input, shape index: {}]
  %s14 = inlined_call_operand.vmem [shape: f32[2,1], index: 14, kind: input, shape index: {}]
  %s15 = inlined_call_operand.vmem [shape: f32[2,2], index: 15, kind: output, shape index: {}]
  %s16 = sld [smem:[#allocation0]]
  $region70: #{font_identification_1flow.1} parent=0
    _
  %s18 = ssub.s32 1, %s16
  %s19 = scalar_select 0, %s18, %s16
  // Predicated region
  $region2: #{font_identification_1flow.1} parent=0 // pred_check
    _
  $region3: #{font_identification_1flow.1} parent=0 // pred_check_branch
    %21 = sbr.rel (0) target = $region5
  $region4: #{font_identification_1flow.1} parent=0 // pred_region
    _
  $region5: #{font_identification_1flow.1} parent=0 // pred_fallthru
    _
  // Predicated region
  $region6: #{font_identification_1flow.1} parent=0 // pred_check
    _
  $region7: #{font_identification_1flow.1} parent=0 // pred_check_branch
    %23 = sbr.rel (0) target = $region9
  $region8: #{font_identification_1flow.1} parent=0 // pred_region
    _
  $region9: #{font_identification_1flow.1} parent=0 // pred_fallthru
    _
  // Predicated region
  $region10: #{font_identification_1flow.1} parent=0 // pred_check
    _
  $region11: #{font_identification_1flow.1} parent=0 // pred_check_branch
    %25 = sbr.rel (0) target = $region13
  $region12: #{font_identification_1flow.1} parent=0 // pred_region
    _
  $region13: #{font_identification_1flow.1} parent=0 // pred_fallthru
    _
  // Predicated region
  $region14: #{font_identification_1flow.1} parent=0 // pred_check
    _
  $region15: #{font_identification_1flow.1} parent=0 // pred_check_branch
    %27 = sbr.rel (0) target = $region17
  $region16: #{font_identification_1flow.1} parent=0 // pred_region
    _
  $region17: #{font_identification_1flow.1} parent=0 // pred_fallthru
    _
  // Predicated region
  $region18: #{font_identification_1flow.1} parent=0 // pred_check
    _
  $region19: #{font_identification_1flow.1} parent=0 // pred_check_branch
    %29 = sbr.rel (0) target = $region21
  $region20: #{font_identification_1flow.1} parent=0 // pred_region
    _
  $region21: #{font_identification_1flow.1} parent=0 // pred_fallthru
    _
  // Predicated region
  $region22: #{font_identification_1flow.1} parent=0 // pred_check
    _
  $region23: #{font_identification_1flow.1} parent=0 // pred_check_branch
    %31 = sbr.rel (0) target = $region25
  $region24: #{font_identification_1flow.1} parent=0 // pred_region
    _
  $region25: #{font_identification_1flow.1} parent=0 // pred_fallthru
    _
  // Predicated region
  $region26: #{font_identification_1flow.1} parent=0 // pred_check
    _
  $region27: #{font_identification_1flow.1} parent=0 // pred_check_branch
    %33 = sbr.rel (0) target = $region29
  $region28: #{font_identification_1flow.1} parent=0 // pred_region
    _
  $region29: #{font_identification_1flow.1} parent=0 // pred_fallthru
    _
  // Predicated region
  $region30: #{font_identification_1flow.1} parent=0 // pred_check
    _
  $region31: #{font_identification_1flow.1} parent=0 // pred_check_branch
    %35 = sbr.rel (0) target = $region33
  $region32: #{font_identification_1flow.1} parent=0 // pred_region
    _
  $region33: #{font_identification_1flow.1} parent=0 // pred_fallthru
    _
  // Predicated region
  $region34: #{font_identification_1flow.1} parent=0 // pred_check
    _
  $region35: #{font_identification_1flow.1} parent=0 // pred_check_branch
    %37 = sbr.rel (0) target = $region37
  $region36: #{font_identification_1flow.1} parent=0 // pred_region
    _
  $region37: #{font_identification_1flow.1} parent=0 // pred_fallthru
    _
  // Predicated region
  $region38: #{font_identification_1flow.1} parent=0 // pred_check
    _
  $region39: #{font_identification_1flow.1} parent=0 // pred_check_branch
    %39 = sbr.rel (0) target = $region41
  $region40: #{font_identification_1flow.1} parent=0 // pred_region
    _
  $region41: #{font_identification_1flow.1} parent=0 // pred_fallthru
    _
  // Predicated region
  $region42: #{font_identification_1flow.1} parent=0 // pred_check
    _
  $region43: #{font_identification_1flow.1} parent=0 // pred_check_branch
    %41 = sbr.rel (0) target = $region45
  $region44: #{font_identification_1flow.1} parent=0 // pred_region
    _
  $region45: #{font_identification_1flow.1} parent=0 // pred_fallthru
    _
  // Predicated region
  $region46: #{font_identification_1flow.1} parent=0 // pred_check
    _
  $region47: #{font_identification_1flow.1} parent=0 // pred_check_branch
    %43 = sbr.rel (0) target = $region49
  $region48: #{font_identification_1flow.1} parent=0 // pred_region
    _
  $region49: #{font_identification_1flow.1} parent=0 // pred_fallthru
    _
  // Predicated region
  $region50: #{font_identification_1flow.1} parent=0 // pred_check
    _
  $region51: #{font_identification_1flow.1} parent=0 // pred_check_branch
    %45 = sbr.rel (0) target = $region53
  $region52: #{font_identification_1flow.1} parent=0 // pred_region
    _
  $region53: #{font_identification_1flow.1} parent=0 // pred_fallthru
    _
  // Predicated region
  $region54: #{font_identification_1flow.1} parent=0 // pred_check
    _
  $region55: #{font_identification_1flow.1} parent=0 // pred_check_branch
    %47 = sbr.rel (0) target = $region57
  $region56: #{font_identification_1flow.1} parent=0 // pred_region
    _
  $region57: #{font_identification_1flow.1} parent=0 // pred_fallthru
    _
  // Predicated region
  $region58: #{font_identification_1flow.1} parent=0 // pred_check
    _
  $region59: #{font_identification_1flow.1} parent=0 // pred_check_branch
    %49 = sbr.rel (0) target = $region61
  $region60: #{font_identification_1flow.1} parent=0 // pred_region
    _
  $region61: #{font_identification_1flow.1} parent=0 // pred_fallthru
    _
  %v50 = vld [vmem:[%s0] sm:$0xff]
  %v51 = vld [vmem:[%s0 + $0x8] sm:$0xff]
  %v52 = vld [vmem:[%s0 + $0x10] sm:$0xff]
  %v53 = vld [vmem:[%s0 + $0x18] sm:$0xff]
  %v54 = vlaneseq
  %v55 = vand.u32 %v54, 127
  %v56 = vadd.s32 %v55, 128
  %v57 = vadd.s32 %v55, 256
  %v58 = vadd.s32 %v55, 384
  %v59 = vand.u32 %v55, 15
  %v60 = vand.u32 %v56, 15
  %v61 = vand.u32 %v57, 15
  %v62 = vand.u32 %v58, 15
  %v63 = vshra.s32 %v55, 4
  %v64 = vshra.s32 %v56, 4
  %v65 = vshra.s32 %v57, 4
  %v66 = vshra.s32 %v58, 4
  %v67 = vand.u32 %v63, 15
  %v68 = vand.u32 %v64, 15
  %v69 = vand.u32 %v65, 15
  %v70 = vand.u32 %v66, 15
  %71 = vrot.lane.b32.xlu0 %v50, 17
  %v72 = vpop.permute.xlu0 %71
  %73 = vrot.lane.b32.xlu0 %v51, 17
  %v74 = vpop.permute.xlu0 %73
  %75 = vrot.lane.b32.xlu0 %v52, 17
  %v76 = vpop.permute.xlu0 %75
  %77 = vrot.lane.b32.xlu0 %v53, 17
  %v78 = vpop.permute.xlu0 %77
  %vm79 = vcmp.lt.s32.totalorder %v55, 17
  %v80 = vsel %vm79, %v76, %v78
  %v81 = vsel %vm79, %v74, %v76
  %v82 = vsel %vm79, %v72, %v74
  %v83 = vsel %vm79, %v78, %v72
  %vm84 = vcmp.ge.s32.totalorder %v67, 1
  %vm85 = vcmp.ge.s32.totalorder %v68, 1
  %vm86 = vcmp.ge.s32.totalorder %v69, 1
  %vm87 = vcmp.ge.s32.totalorder %v70, 1
  %vm88 = vcmp.ge.s32.totalorder %v59, 1
  %vm89 = vcmp.ge.s32.totalorder %v60, 1
  %vm90 = vcmp.ge.s32.totalorder %v61, 1
  %vm91 = vcmp.ge.s32.totalorder %v62, 1
  %vm92 = vmand %vm84, %vm88
  %vm93 = vmand %vm85, %vm89
  %vm94 = vmand %vm86, %vm90
  %vm95 = vmand %vm87, %vm91
  %v96 = vsel %vm92, 1, 0
  %v97 = vsel %vm93, 1, 0
  %v98 = vsel %vm94, 1, 0
  %v99 = vsel %vm95, 1, 0
  %vm100 = vcmp.eq.s32.totalorder %v96, 1
  %vm101 = vcmp.eq.s32.totalorder %v97, 1
  %vm102 = vcmp.eq.s32.totalorder %v98, 1
  %vm103 = vcmp.eq.s32.totalorder %v99, 1
  %v104 = vsel %vm100, %v83, 0.0
  %v105 = vsel %vm101, %v82, 0.0
  %v106 = vsel %vm102, %v81, 0.0
  %v107 = vsel %vm103, %v80, 0.0
  %v108 = vld [vmem:[%s1] sm:$0xff]
  %v109 = vld [vmem:[%s1 + $0x8] sm:$0xff]
  %v110 = vld [vmem:[%s1 + $0x10] sm:$0xff]
  %v111 = vld [vmem:[%s1 + $0x18] sm:$0xff]
  %112 = vrot.lane.b32.xlu0 %v50, 16
  %v113 = vpop.permute.xlu0 %112
  %114 = vrot.lane.b32.xlu0 %v51, 16
  %v115 = vpop.permute.xlu0 %114
  %116 = vrot.lane.b32.xlu0 %v52, 16
  %v117 = vpop.permute.xlu0 %116
  %118 = vrot.lane.b32.xlu0 %v53, 16
  %v119 = vpop.permute.xlu0 %118
  %vm120 = vcmp.lt.s32.totalorder %v55, 16
  %v121 = vsel %vm120, %v117, %v119
  %v122 = vsel %vm120, %v115, %v117
  %v123 = vsel %vm120, %v113, %v115
  %v124 = vsel %vm120, %v119, %v113
  %v125 = vsel %vm84, 1, 0
  %v126 = vsel %vm85, 1, 0
  %v127 = vsel %vm86, 1, 0
  %v128 = vsel %vm87, 1, 0
  %vm129 = vcmp.eq.s32.totalorder %v125, 1
  %vm130 = vcmp.eq.s32.totalorder %v126, 1
  %vm131 = vcmp.eq.s32.totalorder %v127, 1
  %vm132 = vcmp.eq.s32.totalorder %v128, 1
  %v133 = vsel %vm129, %v124, 0.0
  %v134 = vsel %vm130, %v123, 0.0
  %v135 = vsel %vm131, %v122, 0.0
  %v136 = vsel %vm132, %v121, 0.0
  %s137 = scalar_lea.vmem %s1, 32
  %v138 = vld [vmem:[%s137] sm:$0xff]
  %v139 = vld [vmem:[%s137 + $0x8] sm:$0xff]
  %v140 = vld [vmem:[%s137 + $0x10] sm:$0xff]
  %v141 = vld [vmem:[%s137 + $0x18] sm:$0xff]
  %vm142 = vcmask 64512
  %v144 = vsel %vm142, %v138, 0
  %v147 = vsel %vm142, %v139, 0
  %v150 = vsel %vm142, %v140, 0
  %v153 = vsel %vm142, %v141, 0
  %155 = vmatprep.subr.mxu0 %v134
  %156 = vmatpush1.msra.mxu0 %v133
  %157 = vmatprep.subr.mxu0 0.0
  %158 = vmatpush1.msra.mxu0 0.0
  %159 = vmatprep.subr.mxu0 0.0
  %160 = vmatpush1.msra.mxu0 0.0
  %161 = vmatprep.subr.mxu0 0.0
  %162 = vmatpush1.msra.mxu0 0.0
  %163 = vmatprep.subr.mxu0 0.0
  %164 = vmatpush1.msra.mxu0 0.0
  %165 = vmatprep.subr.mxu0 0.0
  %166 = vmatpush1.msra.mxu0 0.0
  %167 = vmatprep.subr.mxu0 0.0
  %168 = vmatpush1.msra.mxu0 0.0
  %169 = vmatprep.subr.mxu0 0.0
  %170 = vmatpush1.msra.mxu0 0.0
  %171 = vmatprep.subr.mxu0 0.0
  %172 = vmatpush1.msra.mxu0 0.0
  %173 = vmatprep.subr.mxu0 0.0
  %174 = vmatpush1.msra.mxu0 0.0
  %175 = vmatprep.subr.mxu0 0.0
  %176 = vmatpush1.msra.mxu0 0.0
  %177 = vmatprep.subr.mxu0 0.0
  %178 = vmatpush1.msra.mxu0 0.0
  %179 = vmatprep.subr.mxu0 0.0
  %180 = vmatpush1.msra.mxu0 0.0
  %181 = vmatprep.subr.mxu0 0.0
  %182 = vmatpush1.msra.mxu0 0.0
  %183 = vmatprep.subr.mxu0 0.0
  %184 = vmatpush1.msra.mxu0 0.0
  %185 = vmatprep.subr.mxu0 0.0
  %186 = vmatpush1.msra.mxu0 0.0
  %187 = vmatprep.subr.mxu0 0.0
  %188 = vmatpush1.msra.mxu0 0.0
  %189 = vmatprep.subr.mxu0 0.0
  %190 = vmatpush1.msra.mxu0 0.0
  %191 = vmatprep.subr.mxu0 0.0
  %192 = vmatpush1.msra.mxu0 0.0
  %193 = vmatprep.subr.mxu0 0.0
  %194 = vmatpush1.msra.mxu0 0.0
  %195 = vmatprep.subr.mxu0 0.0
  %196 = vmatpush1.msra.mxu0 0.0
  %197 = vmatprep.subr.mxu0 0.0
  %198 = vmatpush1.msra.mxu0 0.0
  %199 = vmatprep.subr.mxu0 0.0
  %200 = vmatpush1.msra.mxu0 0.0
  %201 = vmatprep.subr.mxu0 0.0
  %202 = vmatpush1.msra.mxu0 0.0
  %203 = vmatprep.subr.mxu0 0.0
  %204 = vmatpush1.msra.mxu0 0.0
  %205 = vmatprep.subr.mxu0 0.0
  %206 = vmatpush1.msra.mxu0 0.0
  %207 = vmatprep.subr.mxu0 0.0
  %208 = vmatpush1.msra.mxu0 0.0
  %209 = vmatprep.subr.mxu0 0.0
  %210 = vmatpush1.msra.mxu0 0.0
  %211 = vmatprep.subr.mxu0 0.0
  %212 = vmatpush1.msra.mxu0 0.0
  %213 = vmatprep.subr.mxu0 0.0
  %214 = vmatpush1.msra.mxu0 0.0
  %215 = vmatprep.subr.mxu0 0.0
  %216 = vmatpush1.msra.mxu0 0.0
  %217 = vmatprep.subr.mxu0 0.0
  %218 = vmatpush1.msra.mxu0 0.0
  %219 = vmatprep.mubr.f32.mxu0 0.0
  %220 = vmatmul.mubr.f32.gmra.mrb[0].mxu0 %v144
  %v221 = vpop.f32.mrb[0].mxu0
  %v222 = vadd.f32 0.0, %v221
  %v223 = vpop.f32.mrb[0].mxu0
  %v224 = vadd.f32 0.0, %v223
  %225 = vmatprep.mubr.f32.mxu0 0.0
  %226 = vmatmul.mubr.f32.gmra.mrb[0].mxu0 %v147
  %v227 = vpop.f32.mrb[0].mxu0
  %v228 = vadd.f32 0.0, %v227
  %v229 = vpop.f32.mrb[0].mxu0
  %v230 = vadd.f32 0.0, %v229
  %231 = vmatprep.mubr.f32.mxu0 0.0
  %232 = vmatmul.mubr.f32.gmra.mrb[0].mxu0 %v150
  %v233 = vpop.f32.mrb[0].mxu0
  %v234 = vadd.f32 0.0, %v233
  %v235 = vpop.f32.mrb[0].mxu0
  %v236 = vadd.f32 0.0, %v235
  %237 = vmatprep.mubr.f32.mxu0 0.0
  %238 = vmatmul.mubr.f32.gmra.mrb[0].mxu0 %v153
  %v239 = vpop.f32.mrb[0].mxu0
  %v240 = vadd.f32 0.0, %v239
  %v241 = vpop.f32.mrb[0].mxu0
  %v242 = vadd.f32 0.0, %v241
  %243 = vdwg.mxu0
  %244 = vmatprep.subr.mxu0 %v136
  %245 = vmatpush1.msra.mxu0 %v135
  %246 = vmatprep.subr.mxu0 0.0
  %247 = vmatpush1.msra.mxu0 0.0
  %248 = vmatprep.subr.mxu0 0.0
  %249 = vmatpush1.msra.mxu0 0.0
  %250 = vmatprep.subr.mxu0 0.0
  %251 = vmatpush1.msra.mxu0 0.0
  %252 = vmatprep.subr.mxu0 0.0
  %253 = vmatpush1.msra.mxu0 0.0
  %254 = vmatprep.subr.mxu0 0.0
  %255 = vmatpush1.msra.mxu0 0.0
  %256 = vmatprep.subr.mxu0 0.0
  %257 = vmatpush1.msra.mxu0 0.0
  %258 = vmatprep.subr.mxu0 0.0
  %259 = vmatpush1.msra.mxu0 0.0
  %260 = vmatprep.subr.mxu0 0.0
  %261 = vmatpush1.msra.mxu0 0.0
  %262 = vmatprep.subr.mxu0 0.0
  %263 = vmatpush1.msra.mxu0 0.0
  %264 = vmatprep.subr.mxu0 0.0
  %265 = vmatpush1.msra.mxu0 0.0
  %266 = vmatprep.subr.mxu0 0.0
  %267 = vmatpush1.msra.mxu0 0.0
  %268 = vmatprep.subr.mxu0 0.0
  %269 = vmatpush1.msra.mxu0 0.0
  %270 = vmatprep.subr.mxu0 0.0
  %271 = vmatpush1.msra.mxu0 0.0
  %272 = vmatprep.subr.mxu0 0.0
  %273 = vmatpush1.msra.mxu0 0.0
  %274 = vmatprep.subr.mxu0 0.0
  %275 = vmatpush1.msra.mxu0 0.0
  %276 = vmatprep.subr.mxu0 0.0
  %277 = vmatpush1.msra.mxu0 0.0
  %278 = vmatprep.subr.mxu0 0.0
  %279 = vmatpush1.msra.mxu0 0.0
  %280 = vmatprep.subr.mxu0 0.0
  %281 = vmatpush1.msra.mxu0 0.0
  %282 = vmatprep.subr.mxu0 0.0
  %283 = vmatpush1.msra.mxu0 0.0
  %284 = vmatprep.subr.mxu0 0.0
  %285 = vmatpush1.msra.mxu0 0.0
  %286 = vmatprep.subr.mxu0 0.0
  %287 = vmatpush1.msra.mxu0 0.0
  %288 = vmatprep.subr.mxu0 0.0
  %289 = vmatpush1.msra.mxu0 0.0
  %290 = vmatprep.subr.mxu0 0.0
  %291 = vmatpush1.msra.mxu0 0.0
  %292 = vmatprep.subr.mxu0 0.0
  %293 = vmatpush1.msra.mxu0 0.0
  %294 = vmatprep.subr.mxu0 0.0
  %295 = vmatpush1.msra.mxu0 0.0
  %296 = vmatprep.subr.mxu0 0.0
  %297 = vmatpush1.msra.mxu0 0.0
  %298 = vmatprep.subr.mxu0 0.0
  %299 = vmatpush1.msra.mxu0 0.0
  %300 = vmatprep.subr.mxu0 0.0
  %301 = vmatpush1.msra.mxu0 0.0
  %302 = vmatprep.subr.mxu0 0.0
  %303 = vmatpush1.msra.mxu0 0.0
  %304 = vmatprep.subr.mxu0 0.0
  %305 = vmatpush1.msra.mxu0 0.0
  %306 = vmatprep.subr.mxu0 0.0
  %307 = vmatpush1.msra.mxu0 0.0
  %308 = vmatprep.mubr.f32.mxu0 0.0
  %309 = vmatmul.mubr.f32.gmra.mrb[0].mxu0 %v144
  %v310 = vpop.f32.mrb[0].mxu0
  %v311 = vadd.f32 0.0, %v310
  %v312 = vpop.f32.mrb[0].mxu0
  %v313 = vadd.f32 0.0, %v312
  %314 = vmatprep.mubr.f32.mxu0 0.0
  %315 = vmatmul.mubr.f32.gmra.mrb[0].mxu0 %v147
  %v316 = vpop.f32.mrb[0].mxu0
  %v317 = vadd.f32 0.0, %v316
  %v318 = vpop.f32.mrb[0].mxu0
  %v319 = vadd.f32 0.0, %v318
  %320 = vmatprep.mubr.f32.mxu0 0.0
  %321 = vmatmul.mubr.f32.gmra.mrb[0].mxu0 %v150
  %v322 = vpop.f32.mrb[0].mxu0
  %v323 = vadd.f32 0.0, %v322
  %v324 = vpop.f32.mrb[0].mxu0
  %v325 = vadd.f32 0.0, %v324
  %326 = vmatprep.mubr.f32.mxu0 0.0
  %327 = vmatmul.mubr.f32.gmra.mrb[0].mxu0 %v153
  %v328 = vpop.f32.mrb[0].mxu0
  %v329 = vadd.f32 0.0, %v328
  %v330 = vpop.f32.mrb[0].mxu0
  %v331 = vadd.f32 0.0, %v330
  %332 = vdwg.mxu0
  %v334 = vsel %vm142, %v108, 0
  %v337 = vsel %vm142, %v109, 0
  %v340 = vsel %vm142, %v110, 0
  %v343 = vsel %vm142, %v111, 0
  %345 = vmatprep.subr.mxu0 %v105
  %346 = vmatpush1.msra.mxu0 %v104
  %347 = vmatprep.subr.mxu0 0.0
  %348 = vmatpush1.msra.mxu0 0.0
  %349 = vmatprep.subr.mxu0 0.0
  %350 = vmatpush1.msra.mxu0 0.0
  %351 = vmatprep.subr.mxu0 0.0
  %352 = vmatpush1.msra.mxu0 0.0
  %353 = vmatprep.subr.mxu0 0.0
  %354 = vmatpush1.msra.mxu0 0.0
  %355 = vmatprep.subr.mxu0 0.0
  %356 = vmatpush1.msra.mxu0 0.0
  %357 = vmatprep.subr.mxu0 0.0
  %358 = vmatpush1.msra.mxu0 0.0
  %359 = vmatprep.subr.mxu0 0.0
  %360 = vmatpush1.msra.mxu0 0.0
  %361 = vmatprep.subr.mxu0 0.0
  %362 = vmatpush1.msra.mxu0 0.0
  %363 = vmatprep.subr.mxu0 0.0
  %364 = vmatpush1.msra.mxu0 0.0
  %365 = vmatprep.subr.mxu0 0.0
  %366 = vmatpush1.msra.mxu0 0.0
  %367 = vmatprep.subr.mxu0 0.0
  %368 = vmatpush1.msra.mxu0 0.0
  %369 = vmatprep.subr.mxu0 0.0
  %370 = vmatpush1.msra.mxu0 0.0
  %371 = vmatprep.subr.mxu0 0.0
  %372 = vmatpush1.msra.mxu0 0.0
  %373 = vmatprep.subr.mxu0 0.0
  %374 = vmatpush1.msra.mxu0 0.0
  %375 = vmatprep.subr.mxu0 0.0
  %376 = vmatpush1.msra.mxu0 0.0
  %377 = vmatprep.subr.mxu0 0.0
  %378 = vmatpush1.msra.mxu0 0.0
  %379 = vmatprep.subr.mxu0 0.0
  %380 = vmatpush1.msra.mxu0 0.0
  %381 = vmatprep.subr.mxu0 0.0
  %382 = vmatpush1.msra.mxu0 0.0
  %383 = vmatprep.subr.mxu0 0.0
  %384 = vmatpush1.msra.mxu0 0.0
  %385 = vmatprep.subr.mxu0 0.0
  %386 = vmatpush1.msra.mxu0 0.0
  %387 = vmatprep.subr.mxu0 0.0
  %388 = vmatpush1.msra.mxu0 0.0
  %389 = vmatprep.subr.mxu0 0.0
  %390 = vmatpush1.msra.mxu0 0.0
  %391 = vmatprep.subr.mxu0 0.0
  %392 = vmatpush1.msra.mxu0 0.0
  %393 = vmatprep.subr.mxu0 0.0
  %394 = vmatpush1.msra.mxu0 0.0
  %395 = vmatprep.subr.mxu0 0.0
  %396 = vmatpush1.msra.mxu0 0.0
  %397 = vmatprep.subr.mxu0 0.0
  %398 = vmatpush1.msra.mxu0 0.0
  %399 = vmatprep.subr.mxu0 0.0
  %400 = vmatpush1.msra.mxu0 0.0
  %401 = vmatprep.subr.mxu0 0.0
  %402 = vmatpush1.msra.mxu0 0.0
  %403 = vmatprep.subr.mxu0 0.0
  %404 = vmatpush1.msra.mxu0 0.0
  %405 = vmatprep.subr.mxu0 0.0
  %406 = vmatpush1.msra.mxu0 0.0
  %407 = vmatprep.subr.mxu0 0.0
  %408 = vmatpush1.msra.mxu0 0.0
  %409 = vmatprep.mubr.f32.mxu0 0.0
  %410 = vmatmul.mubr.f32.gmra.mrb[0].mxu0 %v334
  %v411 = vpop.f32.mrb[0].mxu0
  %v412 = vadd.f32 %v222, %v411
  %v413 = vpop.f32.mrb[0].mxu0
  %v414 = vadd.f32 %v224, %v413
  %415 = vmatprep.mubr.f32.mxu0 0.0
  %416 = vmatmul.mubr.f32.gmra.mrb[0].mxu0 %v337
  %v417 = vpop.f32.mrb[0].mxu0
  %v418 = vadd.f32 %v228, %v417
  %v419 = vpop.f32.mrb[0].mxu0
  %v420 = vadd.f32 %v230, %v419
  %421 = vmatprep.mubr.f32.mxu0 0.0
  %422 = vmatmul.mubr.f32.gmra.mrb[0].mxu0 %v340
  %v423 = vpop.f32.mrb[0].mxu0
  %v424 = vadd.f32 %v234, %v423
  %v425 = vpop.f32.mrb[0].mxu0
  %v426 = vadd.f32 %v236, %v425
  %427 = vmatprep.mubr.f32.mxu0 0.0
  %428 = vmatmul.mubr.f32.gmra.mrb[0].mxu0 %v343
  %v429 = vpop.f32.mrb[0].mxu0
  %v430 = vadd.f32 %v240, %v429
  %v431 = vpop.f32.mrb[0].mxu0
  %v432 = vadd.f32 %v242, %v431
  %433 = vdwg.mxu0
  %434 = vmatprep.subr.mxu0 %v107
  %435 = vmatpush1.msra.mxu0 %v106
  %436 = vmatprep.subr.mxu0 0.0
  %437 = vmatpush1.msra.mxu0 0.0
  %438 = vmatprep.subr.mxu0 0.0
  %439 = vmatpush1.msra.mxu0 0.0
  %440 = vmatprep.subr.mxu0 0.0
  %441 = vmatpush1.msra.mxu0 0.0
  %442 = vmatprep.subr.mxu0 0.0
  %443 = vmatpush1.msra.mxu0 0.0
  %444 = vmatprep.subr.mxu0 0.0
  %445 = vmatpush1.msra.mxu0 0.0
  %446 = vmatprep.subr.mxu0 0.0
  %447 = vmatpush1.msra.mxu0 0.0
  %448 = vmatprep.subr.mxu0 0.0
  %449 = vmatpush1.msra.mxu0 0.0
  %450 = vmatprep.subr.mxu0 0.0
  %451 = vmatpush1.msra.mxu0 0.0
  %452 = vmatprep.subr.mxu0 0.0
  %453 = vmatpush1.msra.mxu0 0.0
  %454 = vmatprep.subr.mxu0 0.0
  %455 = vmatpush1.msra.mxu0 0.0
  %456 = vmatprep.subr.mxu0 0.0
  %457 = vmatpush1.msra.mxu0 0.0
  %458 = vmatprep.subr.mxu0 0.0
  %459 = vmatpush1.msra.mxu0 0.0
  %460 = vmatprep.subr.mxu0 0.0
  %461 = vmatpush1.msra.mxu0 0.0
  %462 = vmatprep.subr.mxu0 0.0
  %463 = vmatpush1.msra.mxu0 0.0
  %464 = vmatprep.subr.mxu0 0.0
  %465 = vmatpush1.msra.mxu0 0.0
  %466 = vmatprep.subr.mxu0 0.0
  %467 = vmatpush1.msra.mxu0 0.0
  %468 = vmatprep.subr.mxu0 0.0
  %469 = vmatpush1.msra.mxu0 0.0
  %470 = vmatprep.subr.mxu0 0.0
  %471 = vmatpush1.msra.mxu0 0.0
  %472 = vmatprep.subr.mxu0 0.0
  %473 = vmatpush1.msra.mxu0 0.0
  %474 = vmatprep.subr.mxu0 0.0
  %475 = vmatpush1.msra.mxu0 0.0
  %476 = vmatprep.subr.mxu0 0.0
  %477 = vmatpush1.msra.mxu0 0.0
  %478 = vmatprep.subr.mxu0 0.0
  %479 = vmatpush1.msra.mxu0 0.0
  %480 = vmatprep.subr.mxu0 0.0
  %481 = vmatpush1.msra.mxu0 0.0
  %482 = vmatprep.subr.mxu0 0.0
  %483 = vmatpush1.msra.mxu0 0.0
  %484 = vmatprep.subr.mxu0 0.0
  %485 = vmatpush1.msra.mxu0 0.0
  %486 = vmatprep.subr.mxu0 0.0
  %487 = vmatpush1.msra.mxu0 0.0
  %488 = vmatprep.subr.mxu0 0.0
  %489 = vmatpush1.msra.mxu0 0.0
  %490 = vmatprep.subr.mxu0 0.0
  %491 = vmatpush1.msra.mxu0 0.0
  %492 = vmatprep.subr.mxu0 0.0
  %493 = vmatpush1.msra.mxu0 0.0
  %494 = vmatprep.subr.mxu0 0.0
  %495 = vmatpush1.msra.mxu0 0.0
  %496 = vmatprep.subr.mxu0 0.0
  %497 = vmatpush1.msra.mxu0 0.0
  %498 = vmatprep.mubr.f32.mxu0 0.0
  %499 = vmatmul.mubr.f32.gmra.mrb[0].mxu0 %v334
  %v500 = vpop.f32.mrb[0].mxu0
  %v501 = vadd.f32 %v311, %v500
  %v502 = vpop.f32.mrb[0].mxu0
  %v503 = vadd.f32 %v313, %v502
  %504 = vmatprep.mubr.f32.mxu0 0.0
  %505 = vmatmul.mubr.f32.gmra.mrb[0].mxu0 %v337
  %v506 = vpop.f32.mrb[0].mxu0
  %v507 = vadd.f32 %v317, %v506
  %v508 = vpop.f32.mrb[0].mxu0
  %v509 = vadd.f32 %v319, %v508
  %510 = vmatprep.mubr.f32.mxu0 0.0
  %511 = vmatmul.mubr.f32.gmra.mrb[0].mxu0 %v340
  %v512 = vpop.f32.mrb[0].mxu0
  %v513 = vadd.f32 %v323, %v512
  %v514 = vpop.f32.mrb[0].mxu0
  %v515 = vadd.f32 %v325, %v514
  %516 = vmatprep.mubr.f32.mxu0 0.0
  %517 = vmatmul.mubr.f32.gmra.mrb[0].mxu0 %v343
  %v518 = vpop.f32.mrb[0].mxu0
  %v519 = vadd.f32 %v329, %v518
  %v520 = vpop.f32.mrb[0].mxu0
  %v521 = vadd.f32 %v331, %v520
  %522 = vdwg.mxu0
  %523 = vrot.lane.b32.xlu0 %v50, 15
  %v524 = vpop.permute.xlu0 %523
  %525 = vrot.lane.b32.xlu0 %v51, 15
  %v526 = vpop.permute.xlu0 %525
  %527 = vrot.lane.b32.xlu0 %v52, 15
  %v528 = vpop.permute.xlu0 %527
  %529 = vrot.lane.b32.xlu0 %v53, 15
  %v530 = vpop.permute.xlu0 %529
  %vm531 = vcmp.lt.s32.totalorder %v55, 15
  %v532 = vsel %vm531, %v528, %v530
  %v533 = vsel %vm531, %v526, %v528
  %v534 = vsel %vm531, %v524, %v526
  %v535 = vsel %vm531, %v530, %v524
  %vm536 = vcmp.le.s32.totalorder %v59, 14
  %vm537 = vcmp.le.s32.totalorder %v60, 14
  %vm538 = vcmp.le.s32.totalorder %v61, 14
  %vm539 = vcmp.le.s32.totalorder %v62, 14
  %vm540 = vmand %vm84, %vm536
  %vm541 = vmand %vm85, %vm537
  %vm542 = vmand %vm86, %vm538
  %vm543 = vmand %vm87, %vm539
  %v544 = vsel %vm540, 1, 0
  %v545 = vsel %vm541, 1, 0
  %v546 = vsel %vm542, 1, 0
  %v547 = vsel %vm543, 1, 0
  %vm548 = vcmp.eq.s32.totalorder %v544, 1
  %vm549 = vcmp.eq.s32.totalorder %v545, 1
  %vm550 = vcmp.eq.s32.totalorder %v546, 1
  %vm551 = vcmp.eq.s32.totalorder %v547, 1
  %v552 = vsel %vm548, %v535, 0.0
  %v553 = vsel %vm549, %v534, 0.0
  %v554 = vsel %vm550, %v533, 0.0
  %v555 = vsel %vm551, %v532, 0.0
  %s556 = scalar_lea.vmem %s1, 64
  %v557 = vld [vmem:[%s556] sm:$0xff]
  %v558 = vld [vmem:[%s556 + $0x8] sm:$0xff]
  %v559 = vld [vmem:[%s556 + $0x10] sm:$0xff]
  %v560 = vld [vmem:[%s556 + $0x18] sm:$0xff]
  %v562 = vsel %vm142, %v557, 0
  %v565 = vsel %vm142, %v558, 0
  %v568 = vsel %vm142, %v559, 0
  %v571 = vsel %vm142, %v560, 0
  %573 = vmatprep.subr.mxu0 %v553
  %574 = vmatpush1.msra.mxu0 %v552
  %575 = vmatprep.subr.mxu0 0.0
  %576 = vmatpush1.msra.mxu0 0.0
  %577 = vmatprep.subr.mxu0 0.0
  %578 = vmatpush1.msra.mxu0 0.0
  %579 = vmatprep.subr.mxu0 0.0
  %580 = vmatpush1.msra.mxu0 0.0
  %581 = vmatprep.subr.mxu0 0.0
  %582 = vmatpush1.msra.mxu0 0.0
  %583 = vmatprep.subr.mxu0 0.0
  %584 = vmatpush1.msra.mxu0 0.0
  %585 = vmatprep.subr.mxu0 0.0
  %586 = vmatpush1.msra.mxu0 0.0
  %587 = vmatprep.subr.mxu0 0.0
  %588 = vmatpush1.msra.mxu0 0.0
  %589 = vmatprep.subr.mxu0 0.0
  %590 = vmatpush1.msra.mxu0 0.0
  %591 = vmatprep.subr.mxu0 0.0
  %592 = vmatpush1.msra.mxu0 0.0
  %593 = vmatprep.subr.mxu0 0.0
  %594 = vmatpush1.msra.mxu0 0.0
  %595 = vmatprep.subr.mxu0 0.0
  %596 = vmatpush1.msra.mxu0 0.0
  %597 = vmatprep.subr.mxu0 0.0
  %598 = vmatpush1.msra.mxu0 0.0
  %599 = vmatprep.subr.mxu0 0.0
  %600 = vmatpush1.msra.mxu0 0.0
  %601 = vmatprep.subr.mxu0 0.0
  %602 = vmatpush1.msra.mxu0 0.0
  %603 = vmatprep.subr.mxu0 0.0
  %604 = vmatpush1.msra.mxu0 0.0
  %605 = vmatprep.subr.mxu0 0.0
  %606 = vmatpush1.msra.mxu0 0.0
  %607 = vmatprep.subr.mxu0 0.0
  %608 = vmatpush1.msra.mxu0 0.0
  %609 = vmatprep.subr.mxu0 0.0
  %610 = vmatpush1.msra.mxu0 0.0
  %611 = vmatprep.subr.mxu0 0.0
  %612 = vmatpush1.msra.mxu0 0.0
  %613 = vmatprep.subr.mxu0 0.0
  %614 = vmatpush1.msra.mxu0 0.0
  %615 = vmatprep.subr.mxu0 0.0
  %616 = vmatpush1.msra.mxu0 0.0
  %617 = vmatprep.subr.mxu0 0.0
  %618 = vmatpush1.msra.mxu0 0.0
  %619 = vmatprep.subr.mxu0 0.0
  %620 = vmatpush1.msra.mxu0 0.0
  %621 = vmatprep.subr.mxu0 0.0
  %622 = vmatpush1.msra.mxu0 0.0
  %623 = vmatprep.subr.mxu0 0.0
  %624 = vmatpush1.msra.mxu0 0.0
  %625 = vmatprep.subr.mxu0 0.0
  %626 = vmatpush1.msra.mxu0 0.0
  %627 = vmatprep.subr.mxu0 0.0
  %628 = vmatpush1.msra.mxu0 0.0
  %629 = vmatprep.subr.mxu0 0.0
  %630 = vmatpush1.msra.mxu0 0.0
  %631 = vmatprep.subr.mxu0 0.0
  %632 = vmatpush1.msra.mxu0 0.0
  %633 = vmatprep.subr.mxu0 0.0
  %634 = vmatpush1.msra.mxu0 0.0
  %635 = vmatprep.subr.mxu0 0.0
  %636 = vmatpush1.msra.mxu0 0.0
  %637 = vmatprep.mubr.f32.mxu0 0.0
  %638 = vmatmul.mubr.f32.gmra.mrb[0].mxu0 %v562
  %v639 = vpop.f32.mrb[0].mxu0
  %v640 = vadd.f32 0.0, %v639
  %v641 = vpop.f32.mrb[0].mxu0
  %v642 = vadd.f32 0.0, %v641
  %643 = vmatprep.mubr.f32.mxu0 0.0
  %644 = vmatmul.mubr.f32.gmra.mrb[0].mxu0 %v565
  %v645 = vpop.f32.mrb[0].mxu0
  %v646 = vadd.f32 0.0, %v645
  %v647 = vpop.f32.mrb[0].mxu0
  %v648 = vadd.f32 0.0, %v647
  %649 = vmatprep.mubr.f32.mxu0 0.0
  %650 = vmatmul.mubr.f32.gmra.mrb[0].mxu0 %v568
  %v651 = vpop.f32.mrb[0].mxu0
  %v652 = vadd.f32 0.0, %v651
  %v653 = vpop.f32.mrb[0].mxu0
  %v654 = vadd.f32 0.0, %v653
  %655 = vmatprep.mubr.f32.mxu0 0.0
  %656 = vmatmul.mubr.f32.gmra.mrb[0].mxu0 %v571
  %v657 = vpop.f32.mrb[0].mxu0
  %v658 = vadd.f32 0.0, %v657
  %v659 = vpop.f32.mrb[0].mxu0
  %v660 = vadd.f32 0.0, %v659
  %661 = vdwg.mxu0
  %662 = vmatprep.subr.mxu0 %v555
  %663 = vmatpush1.msra.mxu0 %v554
  %664 = vmatprep.subr.mxu0 0.0
  %665 = vmatpush1.msra.mxu0 0.0
  %666 = vmatprep.subr.mxu0 0.0
  %667 = vmatpush1.msra.mxu0 0.0
  %668 = vmatprep.subr.mxu0 0.0
  %669 = vmatpush1.msra.mxu0 0.0
  %670 = vmatprep.subr.mxu0 0.0
  %671 = vmatpush1.msra.mxu0 0.0
  %672 = vmatprep.subr.mxu0 0.0
  %673 = vmatpush1.msra.mxu0 0.0
  %674 = vmatprep.subr.mxu0 0.0
  %675 = vmatpush1.msra.mxu0 0.0
  %676 = vmatprep.subr.mxu0 0.0
  %677 = vmatpush1.msra.mxu0 0.0
  %678 = vmatprep.subr.mxu0 0.0
  %679 = vmatpush1.msra.mxu0 0.0
  %680 = vmatprep.subr.mxu0 0.0
  %681 = vmatpush1.msra.mxu0 0.0
  %682 = vmatprep.subr.mxu0 0.0
  %683 = vmatpush1.msra.mxu0 0.0
  %684 = vmatprep.subr.mxu0 0.0
  %685 = vmatpush1.msra.mxu0 0.0
  %686 = vmatprep.subr.mxu0 0.0
  %687 = vmatpush1.msra.mxu0 0.0
  %688 = vmatprep.subr.mxu0 0.0
  %689 = vmatpush1.msra.mxu0 0.0
  %690 = vmatprep.subr.mxu0 0.0
  %691 = vmatpush1.msra.mxu0 0.0
  %692 = vmatprep.subr.mxu0 0.0
  %693 = vmatpush1.msra.mxu0 0.0
  %694 = vmatprep.subr.mxu0 0.0
  %695 = vmatpush1.msra.mxu0 0.0
  %696 = vmatprep.subr.mxu0 0.0
  %697 = vmatpush1.msra.mxu0 0.0
  %698 = vmatprep.subr.mxu0 0.0
  %699 = vmatpush1.msra.mxu0 0.0
  %700 = vmatprep.subr.mxu0 0.0
  %701 = vmatpush1.msra.mxu0 0.0
  %702 = vmatprep.subr.mxu0 0.0
  %703 = vmatpush1.msra.mxu0 0.0
  %704 = vmatprep.subr.mxu0 0.0
  %705 = vmatpush1.msra.mxu0 0.0
  %706 = vmatprep.subr.mxu0 0.0
  %707 = vmatpush1.msra.mxu0 0.0
  %708 = vmatprep.subr.mxu0 0.0
  %709 = vmatpush1.msra.mxu0 0.0
  %710 = vmatprep.subr.mxu0 0.0
  %711 = vmatpush1.msra.mxu0 0.0
  %712 = vmatprep.subr.mxu0 0.0
  %713 = vmatpush1.msra.mxu0 0.0
  %714 = vmatprep.subr.mxu0 0.0
  %715 = vmatpush1.msra.mxu0 0.0
  %716 = vmatprep.subr.mxu0 0.0
  %717 = vmatpush1.msra.mxu0 0.0
  %718 = vmatprep.subr.mxu0 0.0
  %719 = vmatpush1.msra.mxu0 0.0
  %720 = vmatprep.subr.mxu0 0.0
  %721 = vmatpush1.msra.mxu0 0.0
  %722 = vmatprep.subr.mxu0 0.0
  %723 = vmatpush1.msra.mxu0 0.0
  %724 = vmatprep.subr.mxu0 0.0
  %725 = vmatpush1.msra.mxu0 0.0
  %726 = vmatprep.mubr.f32.mxu0 0.0
  %727 = vmatmul.mubr.f32.gmra.mrb[0].mxu0 %v562
  %v728 = vpop.f32.mrb[0].mxu0
  %v729 = vadd.f32 0.0, %v728
  %v730 = vpop.f32.mrb[0].mxu0
  %v731 = vadd.f32 0.0, %v730
  %732 = vmatprep.mubr.f32.mxu0 0.0
  %733 = vmatmul.mubr.f32.gmra.mrb[0].mxu0 %v565
  %v734 = vpop.f32.mrb[0].mxu0
  %v735 = vadd.f32 0.0, %v734
  %v736 = vpop.f32.mrb[0].mxu0
  %v737 = vadd.f32 0.0, %v736
  %738 = vmatprep.mubr.f32.mxu0 0.0
  %739 = vmatmul.mubr.f32.gmra.mrb[0].mxu0 %v568
  %v740 = vpop.f32.mrb[0].mxu0
  %v741 = vadd.f32 0.0, %v740
  %v742 = vpop.f32.mrb[0].mxu0
  %v743 = vadd.f32 0.0, %v742
  %744 = vmatprep.mubr.f32.mxu0 0.0
  %745 = vmatmul.mubr.f32.gmra.mrb[0].mxu0 %v571
  %v746 = vpop.f32.mrb[0].mxu0
  %v747 = vadd.f32 0.0, %v746
  %v748 = vpop.f32.mrb[0].mxu0
  %v749 = vadd.f32 0.0, %v748
  %750 = vdwg.mxu0
  %v751 = vadd.f32 %v412, %v640
  %v752 = vadd.f32 %v414, %v642
  %v753 = vadd.f32 %v501, %v729
  %v754 = vadd.f32 %v503, %v731
  %v755 = vadd.f32 %v418, %v646
  %v756 = vadd.f32 %v420, %v648
  %v757 = vadd.f32 %v507, %v735
  %v758 = vadd.f32 %v509, %v737
  %v759 = vadd.f32 %v424, %v652
  %v760 = vadd.f32 %v426, %v654
  %v761 = vadd.f32 %v513, %v741
  %v762 = vadd.f32 %v515, %v743
  %v763 = vadd.f32 %v430, %v658
  %v764 = vadd.f32 %v432, %v660
  %v765 = vadd.f32 %v519, %v747
  %v766 = vadd.f32 %v521, %v749
  %767 = vrot.lane.b32.xlu0 %v50, 1
  %v768 = vpop.permute.xlu0 %767
  %769 = vrot.lane.b32.xlu0 %v51, 1
  %v770 = vpop.permute.xlu0 %769
  %771 = vrot.lane.b32.xlu0 %v52, 1
  %v772 = vpop.permute.xlu0 %771
  %773 = vrot.lane.b32.xlu0 %v53, 1
  %v774 = vpop.permute.xlu0 %773
  %vm775 = vcmp.lt.s32.totalorder %v55, 1
  %v776 = vsel %vm775, %v772, %v774
  %v777 = vsel %vm775, %v770, %v772
  %v778 = vsel %vm775, %v768, %v770
  %v779 = vsel %vm775, %v774, %v768
  %v780 = vsel %vm88, 1, 0
  %v781 = vsel %vm89, 1, 0
  %v782 = vsel %vm90, 1, 0
  %v783 = vsel %vm91, 1, 0
  %vm784 = vcmp.eq.s32.totalorder %v780, 1
  %vm785 = vcmp.eq.s32.totalorder %v781, 1
  %vm786 = vcmp.eq.s32.totalorder %v782, 1
  %vm787 = vcmp.eq.s32.totalorder %v783, 1
  %v788 = vsel %vm784, %v779, 0.0
  %v789 = vsel %vm785, %v778, 0.0
  %v790 = vsel %vm786, %v777, 0.0
  %v791 = vsel %vm787, %v776, 0.0
  %s792 = scalar_lea.vmem %s1, 96
  %v793 = vld [vmem:[%s792] sm:$0xff]
  %v794 = vld [vmem:[%s792 + $0x8] sm:$0xff]
  %v795 = vld [vmem:[%s792 + $0x10] sm:$0xff]
  %v796 = vld [vmem:[%s792 + $0x18] sm:$0xff]
  %v798 = vsel %vm142, %v793, 0
  %v801 = vsel %vm142, %v794, 0
  %v804 = vsel %vm142, %v795, 0
  %v807 = vsel %vm142, %v796, 0
  %809 = vmatprep.subr.mxu0 %v789
  %810 = vmatpush1.msra.mxu0 %v788
  %811 = vmatprep.subr.mxu0 0.0
  %812 = vmatpush1.msra.mxu0 0.0
  %813 = vmatprep.subr.mxu0 0.0
  %814 = vmatpush1.msra.mxu0 0.0
  %815 = vmatprep.subr.mxu0 0.0
  %816 = vmatpush1.msra.mxu0 0.0
  %817 = vmatprep.subr.mxu0 0.0
  %818 = vmatpush1.msra.mxu0 0.0
  %819 = vmatprep.subr.mxu0 0.0
  %820 = vmatpush1.msra.mxu0 0.0
  %821 = vmatprep.subr.mxu0 0.0
  %822 = vmatpush1.msra.mxu0 0.0
  %823 = vmatprep.subr.mxu0 0.0
  %824 = vmatpush1.msra.mxu0 0.0
  %825 = vmatprep.subr.mxu0 0.0
  %826 = vmatpush1.msra.mxu0 0.0
  %827 = vmatprep.subr.mxu0 0.0
  %828 = vmatpush1.msra.mxu0 0.0
  %829 = vmatprep.subr.mxu0 0.0
  %830 = vmatpush1.msra.mxu0 0.0
  %831 = vmatprep.subr.mxu0 0.0
  %832 = vmatpush1.msra.mxu0 0.0
  %833 = vmatprep.subr.mxu0 0.0
  %834 = vmatpush1.msra.mxu0 0.0
  %835 = vmatprep.subr.mxu0 0.0
  %836 = vmatpush1.msra.mxu0 0.0
  %837 = vmatprep.subr.mxu0 0.0
  %838 = vmatpush1.msra.mxu0 0.0
  %839 = vmatprep.subr.mxu0 0.0
  %840 = vmatpush1.msra.mxu0 0.0
  %841 = vmatprep.subr.mxu0 0.0
  %842 = vmatpush1.msra.mxu0 0.0
  %843 = vmatprep.subr.mxu0 0.0
  %844 = vmatpush1.msra.mxu0 0.0
  %845 = vmatprep.subr.mxu0 0.0
  %846 = vmatpush1.msra.mxu0 0.0
  %847 = vmatprep.subr.mxu0 0.0
  %848 = vmatpush1.msra.mxu0 0.0
  %849 = vmatprep.subr.mxu0 0.0
  %850 = vmatpush1.msra.mxu0 0.0
  %851 = vmatprep.subr.mxu0 0.0
  %852 = vmatpush1.msra.mxu0 0.0
  %853 = vmatprep.subr.mxu0 0.0
  %854 = vmatpush1.msra.mxu0 0.0
  %855 = vmatprep.subr.mxu0 0.0
  %856 = vmatpush1.msra.mxu0 0.0
  %857 = vmatprep.subr.mxu0 0.0
  %858 = vmatpush1.msra.mxu0 0.0
  %859 = vmatprep.subr.mxu0 0.0
  %860 = vmatpush1.msra.mxu0 0.0
  %861 = vmatprep.subr.mxu0 0.0
  %862 = vmatpush1.msra.mxu0 0.0
  %863 = vmatprep.subr.mxu0 0.0
  %864 = vmatpush1.msra.mxu0 0.0
  %865 = vmatprep.subr.mxu0 0.0
  %866 = vmatpush1.msra.mxu0 0.0
  %867 = vmatprep.subr.mxu0 0.0
  %868 = vmatpush1.msra.mxu0 0.0
  %869 = vmatprep.subr.mxu0 0.0
  %870 = vmatpush1.msra.mxu0 0.0
  %871 = vmatprep.subr.mxu0 0.0
  %872 = vmatpush1.msra.mxu0 0.0
  %873 = vmatprep.mubr.f32.mxu0 0.0
  %874 = vmatmul.mubr.f32.gmra.mrb[0].mxu0 %v798
  %v875 = vpop.f32.mrb[0].mxu0
  %v876 = vadd.f32 0.0, %v875
  %v877 = vpop.f32.mrb[0].mxu0
  %v878 = vadd.f32 0.0, %v877
  %879 = vmatprep.mubr.f32.mxu0 0.0
  %880 = vmatmul.mubr.f32.gmra.mrb[0].mxu0 %v801
  %v881 = vpop.f32.mrb[0].mxu0
  %v882 = vadd.f32 0.0, %v881
  %v883 = vpop.f32.mrb[0].mxu0
  %v884 = vadd.f32 0.0, %v883
  %885 = vmatprep.mubr.f32.mxu0 0.0
  %886 = vmatmul.mubr.f32.gmra.mrb[0].mxu0 %v804
  %v887 = vpop.f32.mrb[0].mxu0
  %v888 = vadd.f32 0.0, %v887
  %v889 = vpop.f32.mrb[0].mxu0
  %v890 = vadd.f32 0.0, %v889
  %891 = vmatprep.mubr.f32.mxu0 0.0
  %892 = vmatmul.mubr.f32.gmra.mrb[0].mxu0 %v807
  %v893 = vpop.f32.mrb[0].mxu0
  %v894 = vadd.f32 0.0, %v893
  %v895 = vpop.f32.mrb[0].mxu0
  %v896 = vadd.f32 0.0, %v895
  %897 = vdwg.mxu0
  %898 = vmatprep.subr.mxu0 %v791
  %899 = vmatpush1.msra.mxu0 %v790
  %900 = vmatprep.subr.mxu0 0.0
  %901 = vmatpush1.msra.mxu0 0.0
  %902 = vmatprep.subr.mxu0 0.0
  %903 = vmatpush1.msra.mxu0 0.0
  %904 = vmatprep.subr.mxu0 0.0
  %905 = vmatpush1.msra.mxu0 0.0
  %906 = vmatprep.subr.mxu0 0.0
  %907 = vmatpush1.msra.mxu0 0.0
  %908 = vmatprep.subr.mxu0 0.0
  %909 = vmatpush1.msra.mxu0 0.0
  %910 = vmatprep.subr.mxu0 0.0
  %911 = vmatpush1.msra.mxu0 0.0
  %912 = vmatprep.subr.mxu0 0.0
  %913 = vmatpush1.msra.mxu0 0.0
  %914 = vmatprep.subr.mxu0 0.0
  %915 = vmatpush1.msra.mxu0 0.0
  %916 = vmatprep.subr.mxu0 0.0
  %917 = vmatpush1.msra.mxu0 0.0
  %918 = vmatprep.subr.mxu0 0.0
  %919 = vmatpush1.msra.mxu0 0.0
  %920 = vmatprep.subr.mxu0 0.0
  %921 = vmatpush1.msra.mxu0 0.0
  %922 = vmatprep.subr.mxu0 0.0
  %923 = vmatpush1.msra.mxu0 0.0
  %924 = vmatprep.subr.mxu0 0.0
  %925 = vmatpush1.msra.mxu0 0.0
  %926 = vmatprep.subr.mxu0 0.0
  %927 = vmatpush1.msra.mxu0 0.0
  %928 = vmatprep.subr.mxu0 0.0
  %929 = vmatpush1.msra.mxu0 0.0
  %930 = vmatprep.subr.mxu0 0.0
  %931 = vmatpush1.msra.mxu0 0.0
  %932 = vmatprep.subr.mxu0 0.0
  %933 = vmatpush1.msra.mxu0 0.0
  %934 = vmatprep.subr.mxu0 0.0
  %935 = vmatpush1.msra.mxu0 0.0
  %936 = vmatprep.subr.mxu0 0.0
  %937 = vmatpush1.msra.mxu0 0.0
  %938 = vmatprep.subr.mxu0 0.0
  %939 = vmatpush1.msra.mxu0 0.0
  %940 = vmatprep.subr.mxu0 0.0
  %941 = vmatpush1.msra.mxu0 0.0
  %942 = vmatprep.subr.mxu0 0.0
  %943 = vmatpush1.msra.mxu0 0.0
  %944 = vmatprep.subr.mxu0 0.0
  %945 = vmatpush1.msra.mxu0 0.0
  %946 = vmatprep.subr.mxu0 0.0
  %947 = vmatpush1.msra.mxu0 0.0
  %948 = vmatprep.subr.mxu0 0.0
  %949 = vmatpush1.msra.mxu0 0.0
  %950 = vmatprep.subr.mxu0 0.0
  %951 = vmatpush1.msra.mxu0 0.0
  %952 = vmatprep.subr.mxu0 0.0
  %953 = vmatpush1.msra.mxu0 0.0
  %954 = vmatprep.subr.mxu0 0.0
  %955 = vmatpush1.msra.mxu0 0.0
  %956 = vmatprep.subr.mxu0 0.0
  %957 = vmatpush1.msra.mxu0 0.0
  %958 = vmatprep.subr.mxu0 0.0
  %959 = vmatpush1.msra.mxu0 0.0
  %960 = vmatprep.subr.mxu0 0.0
  %961 = vmatpush1.msra.mxu0 0.0
  %962 = vmatprep.mubr.f32.mxu0 0.0
  %963 = vmatmul.mubr.f32.gmra.mrb[0].mxu0 %v798
  %v964 = vpop.f32.mrb[0].mxu0
  %v965 = vadd.f32 0.0, %v964
  %v966 = vpop.f32.mrb[0].mxu0
  %v967 = vadd.f32 0.0, %v966
  %968 = vmatprep.mubr.f32.mxu0 0.0
  %969 = vmatmul.mubr.f32.gmra.mrb[0].mxu0 %v801
  %v970 = vpop.f32.mrb[0].mxu0
  %v971 = vadd.f32 0.0, %v970
  %v972 = vpop.f32.mrb[0].mxu0
  %v973 = vadd.f32 0.0, %v972
  %974 = vmatprep.mubr.f32.mxu0 0.0
  %975 = vmatmul.mubr.f32.gmra.mrb[0].mxu0 %v804
  %v976 = vpop.f32.mrb[0].mxu0
  %v977 = vadd.f32 0.0, %v976
  %v978 = vpop.f32.mrb[0].mxu0
  %v979 = vadd.f32 0.0, %v978
  %980 = vmatprep.mubr.f32.mxu0 0.0
  %981 = vmatmul.mubr.f32.gmra.mrb[0].mxu0 %v807
  %v982 = vpop.f32.mrb[0].mxu0
  %v983 = vadd.f32 0.0, %v982
  %v984 = vpop.f32.mrb[0].mxu0
  %v985 = vadd.f32 0.0, %v984
  %986 = vdwg.mxu0
  %v987 = vadd.f32 %v751, %v876
  %v988 = vadd.f32 %v752, %v878
  %v989 = vadd.f32 %v753, %v965
  %v990 = vadd.f32 %v754, %v967
  %v991 = vadd.f32 %v755, %v882
  %v992 = vadd.f32 %v756, %v884
  %v993 = vadd.f32 %v757, %v971
  %v994 = vadd.f32 %v758, %v973
  %v995 = vadd.f32 %v759, %v888
  %v996 = vadd.f32 %v760, %v890
  %v997 = vadd.f32 %v761, %v977
  %v998 = vadd.f32 %v762, %v979
  %v999 = vadd.f32 %v763, %v894
  %v1000 = vadd.f32 %v764, %v896
  %v1001 = vadd.f32 %v765, %v983
  %v1002 = vadd.f32 %v766, %v985
  %s1003 = scalar_lea.vmem %s1, 128
  %v1004 = vld [vmem:[%s1003] sm:$0xff]
  %v1005 = vld [vmem:[%s1003 + $0x8] sm:$0xff]
  %v1006 = vld [vmem:[%s1003 + $0x10] sm:$0xff]
  %v1007 = vld [vmem:[%s1003 + $0x18] sm:$0xff]
  %v1009 = vsel %vm142, %v1004, 0
  %v1012 = vsel %vm142, %v1005, 0
  %v1015 = vsel %vm142, %v1006, 0
  %v1018 = vsel %vm142, %v1007, 0
  %1020 = vmatprep.subr.mxu0 %v51
  %1021 = vmatpush1.msra.mxu0 %v50
  %1022 = vmatprep.subr.mxu0 0.0
  %1023 = vmatpush1.msra.mxu0 0.0
  %1024 = vmatprep.subr.mxu0 0.0
  %1025 = vmatpush1.msra.mxu0 0.0
  %1026 = vmatprep.subr.mxu0 0.0
  %1027 = vmatpush1.msra.mxu0 0.0
  %1028 = vmatprep.subr.mxu0 0.0
  %1029 = vmatpush1.msra.mxu0 0.0
  %1030 = vmatprep.subr.mxu0 0.0
  %1031 = vmatpush1.msra.mxu0 0.0
  %1032 = vmatprep.subr.mxu0 0.0
  %1033 = vmatpush1.msra.mxu0 0.0
  %1034 = vmatprep.subr.mxu0 0.0
  %1035 = vmatpush1.msra.mxu0 0.0
  %1036 = vmatprep.subr.mxu0 0.0
  %1037 = vmatpush1.msra.mxu0 0.0
  %1038 = vmatprep.subr.mxu0 0.0
  %1039 = vmatpush1.msra.mxu0 0.0
  %1040 = vmatprep.subr.mxu0 0.0
  %1041 = vmatpush1.msra.mxu0 0.0
  %1042 = vmatprep.subr.mxu0 0.0
  %1043 = vmatpush1.msra.mxu0 0.0
  %1044 = vmatprep.subr.mxu0 0.0
  %1045 = vmatpush1.msra.mxu0 0.0
  %1046 = vmatprep.subr.mxu0 0.0
  %1047 = vmatpush1.msra.mxu0 0.0
  %1048 = vmatprep.subr.mxu0 0.0
  %1049 = vmatpush1.msra.mxu0 0.0
  %1050 = vmatprep.subr.mxu0 0.0
  %1051 = vmatpush1.msra.mxu0 0.0
  %1052 = vmatprep.subr.mxu0 0.0
  %1053 = vmatpush1.msra.mxu0 0.0
  %1054 = vmatprep.subr.mxu0 0.0
  %1055 = vmatpush1.msra.mxu0 0.0
  %1056 = vmatprep.subr.mxu0 0.0
  %1057 = vmatpush1.msra.mxu0 0.0
  %1058 = vmatprep.subr.mxu0 0.0
  %1059 = vmatpush1.msra.mxu0 0.0
  %1060 = vmatprep.subr.mxu0 0.0
  %1061 = vmatpush1.msra.mxu0 0.0
  %1062 = vmatprep.subr.mxu0 0.0
  %1063 = vmatpush1.msra.mxu0 0.0
  %1064 = vmatprep.subr.mxu0 0.0
  %1065 = vmatpush1.msra.mxu0 0.0
  %1066 = vmatprep.subr.mxu0 0.0
  %1067 = vmatpush1.msra.mxu0 0.0
  %1068 = vmatprep.subr.mxu0 0.0
  %1069 = vmatpush1.msra.mxu0 0.0
  %1070 = vmatprep.subr.mxu0 0.0
  %1071 = vmatpush1.msra.mxu0 0.0
  %1072 = vmatprep.subr.mxu0 0.0
  %1073 = vmatpush1.msra.mxu0 0.0
  %1074 = vmatprep.subr.mxu0 0.0
  %1075 = vmatpush1.msra.mxu0 0.0
  %1076 = vmatprep.subr.mxu0 0.0
  %1077 = vmatpush1.msra.mxu0 0.0
  %1078 = vmatprep.subr.mxu0 0.0
  %1079 = vmatpush1.msra.mxu0 0.0
  %1080 = vmatprep.subr.mxu0 0.0
  %1081 = vmatpush1.msra.mxu0 0.0
  %1082 = vmatprep.subr.mxu0 0.0
  %1083 = vmatpush1.msra.mxu0 0.0
  %1084 = vmatprep.mubr.f32.mxu0 0.0
  %1085 = vmatmul.mubr.f32.gmra.mrb[0].mxu0 %v1009
  %v1086 = vpop.f32.mrb[0].mxu0
  %v1087 = vadd.f32 0.0, %v1086
  %v1088 = vpop.f32.mrb[0].mxu0
  %v1089 = vadd.f32 0.0, %v1088
  %1090 = vmatprep.mubr.f32.mxu0 0.0
  %1091 = vmatmul.mubr.f32.gmra.mrb[0].mxu0 %v1012
  %v1092 = vpop.f32.mrb[0].mxu0
  %v1093 = vadd.f32 0.0, %v1092
  %v1094 = vpop.f32.mrb[0].mxu0
  %v1095 = vadd.f32 0.0, %v1094
  %1096 = vmatprep.mubr.f32.mxu0 0.0
  %1097 = vmatmul.mubr.f32.gmra.mrb[0].mxu0 %v1015
  %v1098 = vpop.f32.mrb[0].mxu0
  %v1099 = vadd.f32 0.0, %v1098
  %v1100 = vpop.f32.mrb[0].mxu0
  %v1101 = vadd.f32 0.0, %v1100
  %1102 = vmatprep.mubr.f32.mxu0 0.0
  %1103 = vmatmul.mubr.f32.gmra.mrb[0].mxu0 %v1018
  %v1104 = vpop.f32.mrb[0].mxu0
  %v1105 = vadd.f32 0.0, %v1104
  %v1106 = vpop.f32.mrb[0].mxu0
  %v1107 = vadd.f32 0.0, %v1106
  %1108 = vdwg.mxu0
  %1109 = vmatprep.subr.mxu0 %v53
  %1110 = vmatpush1.msra.mxu0 %v52
  %1111 = vmatprep.subr.mxu0 0.0
  %1112 = vmatpush1.msra.mxu0 0.0
  %1113 = vmatprep.subr.mxu0 0.0
  %1114 = vmatpush1.msra.mxu0 0.0
  %1115 = vmatprep.subr.mxu0 0.0
  %1116 = vmatpush1.msra.mxu0 0.0
  %1117 = vmatprep.subr.mxu0 0.0
  %1118 = vmatpush1.msra.mxu0 0.0
  %1119 = vmatprep.subr.mxu0 0.0
  %1120 = vmatpush1.msra.mxu0 0.0
  %1121 = vmatprep.subr.mxu0 0.0
  %1122 = vmatpush1.msra.mxu0 0.0
  %1123 = vmatprep.subr.mxu0 0.0
  %1124 = vmatpush1.msra.mxu0 0.0
  %1125 = vmatprep.subr.mxu0 0.0
  %1126 = vmatpush1.msra.mxu0 0.0
  %1127 = vmatprep.subr.mxu0 0.0
  %1128 = vmatpush1.msra.mxu0 0.0
  %1129 = vmatprep.subr.mxu0 0.0
  %1130 = vmatpush1.msra.mxu0 0.0
  %1131 = vmatprep.subr.mxu0 0.0
  %1132 = vmatpush1.msra.mxu0 0.0
  %1133 = vmatprep.subr.mxu0 0.0
  %1134 = vmatpush1.msra.mxu0 0.0
  %1135 = vmatprep.subr.mxu0 0.0
  %1136 = vmatpush1.msra.mxu0 0.0
  %1137 = vmatprep.subr.mxu0 0.0
  %1138 = vmatpush1.msra.mxu0 0.0
  %1139 = vmatprep.subr.mxu0 0.0
  %1140 = vmatpush1.msra.mxu0 0.0
  %1141 = vmatprep.subr.mxu0 0.0
  %1142 = vmatpush1.msra.mxu0 0.0
  %1143 = vmatprep.subr.mxu0 0.0
  %1144 = vmatpush1.msra.mxu0 0.0
  %1145 = vmatprep.subr.mxu0 0.0
  %1146 = vmatpush1.msra.mxu0 0.0
  %1147 = vmatprep.subr.mxu0 0.0
  %1148 = vmatpush1.msra.mxu0 0.0
  %1149 = vmatprep.subr.mxu0 0.0
  %1150 = vmatpush1.msra.mxu0 0.0
  %1151 = vmatprep.subr.mxu0 0.0
  %1152 = vmatpush1.msra.mxu0 0.0
  %1153 = vmatprep.subr.mxu0 0.0
  %1154 = vmatpush1.msra.mxu0 0.0
  %1155 = vmatprep.subr.mxu0 0.0
  %1156 = vmatpush1.msra.mxu0 0.0
  %1157 = vmatprep.subr.mxu0 0.0
  %1158 = vmatpush1.msra.mxu0 0.0
  %1159 = vmatprep.subr.mxu0 0.0
  %1160 = vmatpush1.msra.mxu0 0.0
  %1161 = vmatprep.subr.mxu0 0.0
  %1162 = vmatpush1.msra.mxu0 0.0
  %1163 = vmatprep.subr.mxu0 0.0
  %1164 = vmatpush1.msra.mxu0 0.0
  %1165 = vmatprep.subr.mxu0 0.0
  %1166 = vmatpush1.msra.mxu0 0.0
  %1167 = vmatprep.subr.mxu0 0.0
  %1168 = vmatpush1.msra.mxu0 0.0
  %1169 = vmatprep.subr.mxu0 0.0
  %1170 = vmatpush1.msra.mxu0 0.0
  %1171 = vmatprep.subr.mxu0 0.0
  %1172 = vmatpush1.msra.mxu0 0.0
  %1173 = vmatprep.mubr.f32.mxu0 0.0
  %1174 = vmatmul.mubr.f32.gmra.mrb[0].mxu0 %v1009
  %v1175 = vpop.f32.mrb[0].mxu0
  %v1176 = vadd.f32 0.0, %v1175
  %v1177 = vpop.f32.mrb[0].mxu0
  %v1178 = vadd.f32 0.0, %v1177
  %1179 = vmatprep.mubr.f32.mxu0 0.0
  %1180 = vmatmul.mubr.f32.gmra.mrb[0].mxu0 %v1012
  %v1181 = vpop.f32.mrb[0].mxu0
  %v1182 = vadd.f32 0.0, %v1181
  %v1183 = vpop.f32.mrb[0].mxu0
  %v1184 = vadd.f32 0.0, %v1183
  %1185 = vmatprep.mubr.f32.mxu0 0.0
  %1186 = vmatmul.mubr.f32.gmra.mrb[0].mxu0 %v1015
  %v1187 = vpop.f32.mrb[0].mxu0
  %v1188 = vadd.f32 0.0, %v1187
  %v1189 = vpop.f32.mrb[0].mxu0
  %v1190 = vadd.f32 0.0, %v1189
  %1191 = vmatprep.mubr.f32.mxu0 0.0
  %1192 = vmatmul.mubr.f32.gmra.mrb[0].mxu0 %v1018
  %v1193 = vpop.f32.mrb[0].mxu0
  %v1194 = vadd.f32 0.0, %v1193
  %v1195 = vpop.f32.mrb[0].mxu0
  %v1196 = vadd.f32 0.0, %v1195
  %1197 = vdwg.mxu0
  %v1198 = vadd.f32 %v987, %v1087
  %v1199 = vadd.f32 %v988, %v1089
  %v1200 = vadd.f32 %v989, %v1176
  %v1201 = vadd.f32 %v990, %v1178
  %v1202 = vadd.f32 %v991, %v1093
  %v1203 = vadd.f32 %v992, %v1095
  %v1204 = vadd.f32 %v993, %v1182
  %v1205 = vadd.f32 %v994, %v1184
  %v1206 = vadd.f32 %v995, %v1099
  %v1207 = vadd.f32 %v996, %v1101
  %v1208 = vadd.f32 %v997, %v1188
  %v1209 = vadd.f32 %v998, %v1190
  %v1210 = vadd.f32 %v999, %v1105
  %v1211 = vadd.f32 %v1000, %v1107
  %v1212 = vadd.f32 %v1001, %v1194
  %v1213 = vadd.f32 %v1002, %v1196
  %1214 = vrot.lane.b32.xlu0 %v50, 127
  %v1215 = vpop.permute.xlu0 %1214
  %1216 = vrot.lane.b32.xlu0 %v51, 127
  %v1217 = vpop.permute.xlu0 %1216
  %1218 = vrot.lane.b32.xlu0 %v52, 127
  %v1219 = vpop.permute.xlu0 %1218
  %1220 = vrot.lane.b32.xlu0 %v53, 127
  %v1221 = vpop.permute.xlu0 %1220
  %vm1222 = vcmp.lt.s32.totalorder %v55, 127
  %v1223 = vsel %vm1222, %v1219, %v1221
  %v1224 = vsel %vm1222, %v1217, %v1219
  %v1225 = vsel %vm1222, %v1215, %v1217
  %v1226 = vsel %vm1222, %v1221, %v1215
  %v1227 = vsel %vm536, 1, 0
  %v1228 = vsel %vm537, 1, 0
  %v1229 = vsel %vm538, 1, 0
  %v1230 = vsel %vm539, 1, 0
  %vm1231 = vcmp.eq.s32.totalorder %v1227, 1
  %vm1232 = vcmp.eq.s32.totalorder %v1228, 1
  %vm1233 = vcmp.eq.s32.totalorder %v1229, 1
  %vm1234 = vcmp.eq.s32.totalorder %v1230, 1
  %v1235 = vsel %vm1231, %v1225, 0.0
  %v1236 = vsel %vm1232, %v1224, 0.0
  %v1237 = vsel %vm1233, %v1223, 0.0
  %v1238 = vsel %vm1234, %v1226, 0.0
  %s1239 = scalar_lea.vmem %s1, 160
  %v1240 = vld [vmem:[%s1239] sm:$0xff]
  %v1241 = vld [vmem:[%s1239 + $0x8] sm:$0xff]
  %v1242 = vld [vmem:[%s1239 + $0x10] sm:$0xff]
  %v1243 = vld [vmem:[%s1239 + $0x18] sm:$0xff]
  %v1245 = vsel %vm142, %v1240, 0
  %v1248 = vsel %vm142, %v1241, 0
  %v1251 = vsel %vm142, %v1242, 0
  %v1254 = vsel %vm142, %v1243, 0
  %1256 = vmatprep.subr.mxu0 %v1236
  %1257 = vmatpush1.msra.mxu0 %v1235
  %1258 = vmatprep.subr.mxu0 0.0
  %1259 = vmatpush1.msra.mxu0 0.0
  %1260 = vmatprep.subr.mxu0 0.0
  %1261 = vmatpush1.msra.mxu0 0.0
  %1262 = vmatprep.subr.mxu0 0.0
  %1263 = vmatpush1.msra.mxu0 0.0
  %1264 = vmatprep.subr.mxu0 0.0
  %1265 = vmatpush1.msra.mxu0 0.0
  %1266 = vmatprep.subr.mxu0 0.0
  %1267 = vmatpush1.msra.mxu0 0.0
  %1268 = vmatprep.subr.mxu0 0.0
  %1269 = vmatpush1.msra.mxu0 0.0
  %1270 = vmatprep.subr.mxu0 0.0
  %1271 = vmatpush1.msra.mxu0 0.0
  %1272 = vmatprep.subr.mxu0 0.0
  %1273 = vmatpush1.msra.mxu0 0.0
  %1274 = vmatprep.subr.mxu0 0.0
  %1275 = vmatpush1.msra.mxu0 0.0
  %1276 = vmatprep.subr.mxu0 0.0
  %1277 = vmatpush1.msra.mxu0 0.0
  %1278 = vmatprep.subr.mxu0 0.0
  %1279 = vmatpush1.msra.mxu0 0.0
  %1280 = vmatprep.subr.mxu0 0.0
  %1281 = vmatpush1.msra.mxu0 0.0
  %1282 = vmatprep.subr.mxu0 0.0
  %1283 = vmatpush1.msra.mxu0 0.0
  %1284 = vmatprep.subr.mxu0 0.0
  %1285 = vmatpush1.msra.mxu0 0.0
  %1286 = vmatprep.subr.mxu0 0.0
  %1287 = vmatpush1.msra.mxu0 0.0
  %1288 = vmatprep.subr.mxu0 0.0
  %1289 = vmatpush1.msra.mxu0 0.0
  %1290 = vmatprep.subr.mxu0 0.0
  %1291 = vmatpush1.msra.mxu0 0.0
  %1292 = vmatprep.subr.mxu0 0.0
  %1293 = vmatpush1.msra.mxu0 0.0
  %1294 = vmatprep.subr.mxu0 0.0
  %1295 = vmatpush1.msra.mxu0 0.0
  %1296 = vmatprep.subr.mxu0 0.0
  %1297 = vmatpush1.msra.mxu0 0.0
  %1298 = vmatprep.subr.mxu0 0.0
  %1299 = vmatpush1.msra.mxu0 0.0
  %1300 = vmatprep.subr.mxu0 0.0
  %1301 = vmatpush1.msra.mxu0 0.0
  %1302 = vmatprep.subr.mxu0 0.0
  %1303 = vmatpush1.msra.mxu0 0.0
  %1304 = vmatprep.subr.mxu0 0.0
  %1305 = vmatpush1.msra.mxu0 0.0
  %1306 = vmatprep.subr.mxu0 0.0
  %1307 = vmatpush1.msra.mxu0 0.0
  %1308 = vmatprep.subr.mxu0 0.0
  %1309 = vmatpush1.msra.mxu0 0.0
  %1310 = vmatprep.subr.mxu0 0.0
  %1311 = vmatpush1.msra.mxu0 0.0
  %1312 = vmatprep.subr.mxu0 0.0
  %1313 = vmatpush1.msra.mxu0 0.0
  %1314 = vmatprep.subr.mxu0 0.0
  %1315 = vmatpush1.msra.mxu0 0.0
  %1316 = vmatprep.subr.mxu0 0.0
  %1317 = vmatpush1.msra.mxu0 0.0
  %1318 = vmatprep.subr.mxu0 0.0
  %1319 = vmatpush1.msra.mxu0 0.0
  %1320 = vmatprep.mubr.f32.mxu0 0.0
  %1321 = vmatmul.mubr.f32.gmra.mrb[0].mxu0 %v1245
  %v1322 = vpop.f32.mrb[0].mxu0
  %v1323 = vadd.f32 0.0, %v1322
  %v1324 = vpop.f32.mrb[0].mxu0
  %v1325 = vadd.f32 0.0, %v1324
  %1326 = vmatprep.mubr.f32.mxu0 0.0
  %1327 = vmatmul.mubr.f32.gmra.mrb[0].mxu0 %v1248
  %v1328 = vpop.f32.mrb[0].mxu0
  %v1329 = vadd.f32 0.0, %v1328
  %v1330 = vpop.f32.mrb[0].mxu0
  %v1331 = vadd.f32 0.0, %v1330
  %1332 = vmatprep.mubr.f32.mxu0 0.0
  %1333 = vmatmul.mubr.f32.gmra.mrb[0].mxu0 %v1251
  %v1334 = vpop.f32.mrb[0].mxu0
  %v1335 = vadd.f32 0.0, %v1334
  %v1336 = vpop.f32.mrb[0].mxu0
  %v1337 = vadd.f32 0.0, %v1336
  %1338 = vmatprep.mubr.f32.mxu0 0.0
  %1339 = vmatmul.mubr.f32.gmra.mrb[0].mxu0 %v1254
  %v1340 = vpop.f32.mrb[0].mxu0
  %v1341 = vadd.f32 0.0, %v1340
  %v1342 = vpop.f32.mrb[0].mxu0
  %v1343 = vadd.f32 0.0, %v1342
  %1344 = vdwg.mxu0
  %1345 = vmatprep.subr.mxu0 %v1238
  %1346 = vmatpush1.msra.mxu0 %v1237
  %1347 = vmatprep.subr.mxu0 0.0
  %1348 = vmatpush1.msra.mxu0 0.0
  %1349 = vmatprep.subr.mxu0 0.0
  %1350 = vmatpush1.msra.mxu0 0.0
  %1351 = vmatprep.subr.mxu0 0.0
  %1352 = vmatpush1.msra.mxu0 0.0
  %1353 = vmatprep.subr.mxu0 0.0
  %1354 = vmatpush1.msra.mxu0 0.0
  %1355 = vmatprep.subr.mxu0 0.0
  %1356 = vmatpush1.msra.mxu0 0.0
  %1357 = vmatprep.subr.mxu0 0.0
  %1358 = vmatpush1.msra.mxu0 0.0
  %1359 = vmatprep.subr.mxu0 0.0
  %1360 = vmatpush1.msra.mxu0 0.0
  %1361 = vmatprep.subr.mxu0 0.0
  %1362 = vmatpush1.msra.mxu0 0.0
  %1363 = vmatprep.subr.mxu0 0.0
  %1364 = vmatpush1.msra.mxu0 0.0
  %1365 = vmatprep.subr.mxu0 0.0
  %1366 = vmatpush1.msra.mxu0 0.0
  %1367 = vmatprep.subr.mxu0 0.0
  %1368 = vmatpush1.msra.mxu0 0.0
  %1369 = vmatprep.subr.mxu0 0.0
  %1370 = vmatpush1.msra.mxu0 0.0
  %1371 = vmatprep.subr.mxu0 0.0
  %1372 = vmatpush1.msra.mxu0 0.0
  %1373 = vmatprep.subr.mxu0 0.0
  %1374 = vmatpush1.msra.mxu0 0.0
  %1375 = vmatprep.subr.mxu0 0.0
  %1376 = vmatpush1.msra.mxu0 0.0
  %1377 = vmatprep.subr.mxu0 0.0
  %1378 = vmatpush1.msra.mxu0 0.0
  %1379 = vmatprep.subr.mxu0 0.0
  %1380 = vmatpush1.msra.mxu0 0.0
  %1381 = vmatprep.subr.mxu0 0.0
  %1382 = vmatpush1.msra.mxu0 0.0
  %1383 = vmatprep.subr.mxu0 0.0
  %1384 = vmatpush1.msra.mxu0 0.0
  %1385 = vmatprep.subr.mxu0 0.0
  %1386 = vmatpush1.msra.mxu0 0.0
  %1387 = vmatprep.subr.mxu0 0.0
  %1388 = vmatpush1.msra.mxu0 0.0
  %1389 = vmatprep.subr.mxu0 0.0
  %1390 = vmatpush1.msra.mxu0 0.0
  %1391 = vmatprep.subr.mxu0 0.0
  %1392 = vmatpush1.msra.mxu0 0.0
  %1393 = vmatprep.subr.mxu0 0.0
  %1394 = vmatpush1.msra.mxu0 0.0
  %1395 = vmatprep.subr.mxu0 0.0
  %1396 = vmatpush1.msra.mxu0 0.0
  %1397 = vmatprep.subr.mxu0 0.0
  %1398 = vmatpush1.msra.mxu0 0.0
  %1399 = vmatprep.subr.mxu0 0.0
  %1400 = vmatpush1.msra.mxu0 0.0
  %1401 = vmatprep.subr.mxu0 0.0
  %1402 = vmatpush1.msra.mxu0 0.0
  %1403 = vmatprep.subr.mxu0 0.0
  %1404 = vmatpush1.msra.mxu0 0.0
  %1405 = vmatprep.subr.mxu0 0.0
  %1406 = vmatpush1.msra.mxu0 0.0
  %1407 = vmatprep.subr.mxu0 0.0
  %1408 = vmatpush1.msra.mxu0 0.0
  %1409 = vmatprep.mubr.f32.mxu0 0.0
  %1410 = vmatmul.mubr.f32.gmra.mrb[0].mxu0 %v1245
  %v1411 = vpop.f32.mrb[0].mxu0
  %v1412 = vadd.f32 0.0, %v1411
  %v1413 = vpop.f32.mrb[0].mxu0
  %v1414 = vadd.f32 0.0, %v1413
  %1415 = vmatprep.mubr.f32.mxu0 0.0
  %1416 = vmatmul.mubr.f32.gmra.mrb[0].mxu0 %v1248
  %v1417 = vpop.f32.mrb[0].mxu0
  %v1418 = vadd.f32 0.0, %v1417
  %v1419 = vpop.f32.mrb[0].mxu0
  %v1420 = vadd.f32 0.0, %v1419
  %1421 = vmatprep.mubr.f32.mxu0 0.0
  %1422 = vmatmul.mubr.f32.gmra.mrb[0].mxu0 %v1251
  %v1423 = vpop.f32.mrb[0].mxu0
  %v1424 = vadd.f32 0.0, %v1423
  %v1425 = vpop.f32.mrb[0].mxu0
  %v1426 = vadd.f32 0.0, %v1425
  %1427 = vmatprep.mubr.f32.mxu0 0.0
  %1428 = vmatmul.mubr.f32.gmra.mrb[0].mxu0 %v1254
  %v1429 = vpop.f32.mrb[0].mxu0
  %v1430 = vadd.f32 0.0, %v1429
  %v1431 = vpop.f32.mrb[0].mxu0
  %v1432 = vadd.f32 0.0, %v1431
  %1433 = vdwg.mxu0
  %v1434 = vadd.f32 %v1198, %v1323
  %v1435 = vadd.f32 %v1199, %v1325
  %v1436 = vadd.f32 %v1200, %v1412
  %v1437 = vadd.f32 %v1201, %v1414
  %v1438 = vadd.f32 %v1202, %v1329
  %v1439 = vadd.f32 %v1203, %v1331
  %v1440 = vadd.f32 %v1204, %v1418
  %v1441 = vadd.f32 %v1205, %v1420
  %v1442 = vadd.f32 %v1206, %v1335
  %v1443 = vadd.f32 %v1207, %v1337
  %v1444 = vadd.f32 %v1208, %v1424
  %v1445 = vadd.f32 %v1209, %v1426
  %v1446 = vadd.f32 %v1210, %v1341
  %v1447 = vadd.f32 %v1211, %v1343
  %v1448 = vadd.f32 %v1212, %v1430
  %v1449 = vadd.f32 %v1213, %v1432
  %1450 = vrot.lane.b32.xlu0 %v50, 113
  %v1451 = vpop.permute.xlu0 %1450
  %1452 = vrot.lane.b32.xlu0 %v51, 113
  %v1453 = vpop.permute.xlu0 %1452
  %1454 = vrot.lane.b32.xlu0 %v52, 113
  %v1455 = vpop.permute.xlu0 %1454
  %1456 = vrot.lane.b32.xlu0 %v53, 113
  %v1457 = vpop.permute.xlu0 %1456
  %vm1458 = vcmp.lt.s32.totalorder %v55, 113
  %v1459 = vsel %vm1458, %v1455, %v1457
  %v1460 = vsel %vm1458, %v1453, %v1455
  %v1461 = vsel %vm1458, %v1451, %v1453
  %v1462 = vsel %vm1458, %v1457, %v1451
  %vm1463 = vcmp.le.s32.totalorder %v67, 14
  %vm1464 = vcmp.le.s32.totalorder %v68, 14
  %vm1465 = vcmp.le.s32.totalorder %v69, 14
  %vm1466 = vcmp.le.s32.totalorder %v70, 14
  %vm1467 = vmand %vm1463, %vm88
  %vm1468 = vmand %vm1464, %vm89
  %vm1469 = vmand %vm1465, %vm90
  %vm1470 = vmand %vm1466, %vm91
  %v1471 = vsel %vm1467, 1, 0
  %v1472 = vsel %vm1468, 1, 0
  %v1473 = vsel %vm1469, 1, 0
  %v1474 = vsel %vm1470, 1, 0
  %vm1475 = vcmp.eq.s32.totalorder %v1471, 1
  %vm1476 = vcmp.eq.s32.totalorder %v1472, 1
  %vm1477 = vcmp.eq.s32.totalorder %v1473, 1
  %vm1478 = vcmp.eq.s32.totalorder %v1474, 1
  %v1479 = vsel %vm1475, %v1461, 0.0
  %v1480 = vsel %vm1476, %v1460, 0.0
  %v1481 = vsel %vm1477, %v1459, 0.0
  %v1482 = vsel %vm1478, %v1462, 0.0
  %s1483 = scalar_lea.vmem %s1, 192
  %v1484 = vld [vmem:[%s1483] sm:$0xff]
  %v1485 = vld [vmem:[%s1483 + $0x8] sm:$0xff]
  %v1486 = vld [vmem:[%s1483 + $0x10] sm:$0xff]
  %v1487 = vld [vmem:[%s1483 + $0x18] sm:$0xff]
  %v1489 = vsel %vm142, %v1484, 0
  %v1492 = vsel %vm142, %v1485, 0
  %v1495 = vsel %vm142, %v1486, 0
  %v1498 = vsel %vm142, %v1487, 0
  %1500 = vmatprep.subr.mxu0 %v1480
  %1501 = vmatpush1.msra.mxu0 %v1479
  %1502 = vmatprep.subr.mxu0 0.0
  %1503 = vmatpush1.msra.mxu0 0.0
  %1504 = vmatprep.subr.mxu0 0.0
  %1505 = vmatpush1.msra.mxu0 0.0
  %1506 = vmatprep.subr.mxu0 0.0
  %1507 = vmatpush1.msra.mxu0 0.0
  %1508 = vmatprep.subr.mxu0 0.0
  %1509 = vmatpush1.msra.mxu0 0.0
  %1510 = vmatprep.subr.mxu0 0.0
  %1511 = vmatpush1.msra.mxu0 0.0
  %1512 = vmatprep.subr.mxu0 0.0
  %1513 = vmatpush1.msra.mxu0 0.0
  %1514 = vmatprep.subr.mxu0 0.0
  %1515 = vmatpush1.msra.mxu0 0.0
  %1516 = vmatprep.subr.mxu0 0.0
  %1517 = vmatpush1.msra.mxu0 0.0
  %1518 = vmatprep.subr.mxu0 0.0
  %1519 = vmatpush1.msra.mxu0 0.0
  %1520 = vmatprep.subr.mxu0 0.0
  %1521 = vmatpush1.msra.mxu0 0.0
  %1522 = vmatprep.subr.mxu0 0.0
  %1523 = vmatpush1.msra.mxu0 0.0
  %1524 = vmatprep.subr.mxu0 0.0
  %1525 = vmatpush1.msra.mxu0 0.0
  %1526 = vmatprep.subr.mxu0 0.0
  %1527 = vmatpush1.msra.mxu0 0.0
  %1528 = vmatprep.subr.mxu0 0.0
  %1529 = vmatpush1.msra.mxu0 0.0
  %1530 = vmatprep.subr.mxu0 0.0
  %1531 = vmatpush1.msra.mxu0 0.0
  %1532 = vmatprep.subr.mxu0 0.0
  %1533 = vmatpush1.msra.mxu0 0.0
  %1534 = vmatprep.subr.mxu0 0.0
  %1535 = vmatpush1.msra.mxu0 0.0
  %1536 = vmatprep.subr.mxu0 0.0
  %1537 = vmatpush1.msra.mxu0 0.0
  %1538 = vmatprep.subr.mxu0 0.0
  %1539 = vmatpush1.msra.mxu0 0.0
  %1540 = vmatprep.subr.mxu0 0.0
  %1541 = vmatpush1.msra.mxu0 0.0
  %1542 = vmatprep.subr.mxu0 0.0
  %1543 = vmatpush1.msra.mxu0 0.0
  %1544 = vmatprep.subr.mxu0 0.0
  %1545 = vmatpush1.msra.mxu0 0.0
  %1546 = vmatprep.subr.mxu0 0.0
  %1547 = vmatpush1.msra.mxu0 0.0
  %1548 = vmatprep.subr.mxu0 0.0
  %1549 = vmatpush1.msra.mxu0 0.0
  %1550 = vmatprep.subr.mxu0 0.0
  %1551 = vmatpush1.msra.mxu0 0.0
  %1552 = vmatprep.subr.mxu0 0.0
  %1553 = vmatpush1.msra.mxu0 0.0
  %1554 = vmatprep.subr.mxu0 0.0
  %1555 = vmatpush1.msra.mxu0 0.0
  %1556 = vmatprep.subr.mxu0 0.0
  %1557 = vmatpush1.msra.mxu0 0.0
  %1558 = vmatprep.subr.mxu0 0.0
  %1559 = vmatpush1.msra.mxu0 0.0
  %1560 = vmatprep.subr.mxu0 0.0
  %1561 = vmatpush1.msra.mxu0 0.0
  %1562 = vmatprep.subr.mxu0 0.0
  %1563 = vmatpush1.msra.mxu0 0.0
  %1564 = vmatprep.mubr.f32.mxu0 0.0
  %1565 = vmatmul.mubr.f32.gmra.mrb[0].mxu0 %v1489
  %v1566 = vpop.f32.mrb[0].mxu0
  %v1567 = vadd.f32 0.0, %v1566
  %v1568 = vpop.f32.mrb[0].mxu0
  %v1569 = vadd.f32 0.0, %v1568
  %1570 = vmatprep.mubr.f32.mxu0 0.0
  %1571 = vmatmul.mubr.f32.gmra.mrb[0].mxu0 %v1492
  %v1572 = vpop.f32.mrb[0].mxu0
  %v1573 = vadd.f32 0.0, %v1572
  %v1574 = vpop.f32.mrb[0].mxu0
  %v1575 = vadd.f32 0.0, %v1574
  %1576 = vmatprep.mubr.f32.mxu0 0.0
  %1577 = vmatmul.mubr.f32.gmra.mrb[0].mxu0 %v1495
  %v1578 = vpop.f32.mrb[0].mxu0
  %v1579 = vadd.f32 0.0, %v1578
  %v1580 = vpop.f32.mrb[0].mxu0
  %v1581 = vadd.f32 0.0, %v1580
  %1582 = vmatprep.mubr.f32.mxu0 0.0
  %1583 = vmatmul.mubr.f32.gmra.mrb[0].mxu0 %v1498
  %v1584 = vpop.f32.mrb[0].mxu0
  %v1585 = vadd.f32 0.0, %v1584
  %v1586 = vpop.f32.mrb[0].mxu0
  %v1587 = vadd.f32 0.0, %v1586
  %1588 = vdwg.mxu0
  %1589 = vmatprep.subr.mxu0 %v1482
  %1590 = vmatpush1.msra.mxu0 %v1481
  %1591 = vmatprep.subr.mxu0 0.0
  %1592 = vmatpush1.msra.mxu0 0.0
  %1593 = vmatprep.subr.mxu0 0.0
  %1594 = vmatpush1.msra.mxu0 0.0
  %1595 = vmatprep.subr.mxu0 0.0
  %1596 = vmatpush1.msra.mxu0 0.0
  %1597 = vmatprep.subr.mxu0 0.0
  %1598 = vmatpush1.msra.mxu0 0.0
  %1599 = vmatprep.subr.mxu0 0.0
  %1600 = vmatpush1.msra.mxu0 0.0
  %1601 = vmatprep.subr.mxu0 0.0
  %1602 = vmatpush1.msra.mxu0 0.0
  %1603 = vmatprep.subr.mxu0 0.0
  %1604 = vmatpush1.msra.mxu0 0.0
  %1605 = vmatprep.subr.mxu0 0.0
  %1606 = vmatpush1.msra.mxu0 0.0
  %1607 = vmatprep.subr.mxu0 0.0
  %1608 = vmatpush1.msra.mxu0 0.0
  %1609 = vmatprep.subr.mxu0 0.0
  %1610 = vmatpush1.msra.mxu0 0.0
  %1611 = vmatprep.subr.mxu0 0.0
  %1612 = vmatpush1.msra.mxu0 0.0
  %1613 = vmatprep.subr.mxu0 0.0
  %1614 = vmatpush1.msra.mxu0 0.0
  %1615 = vmatprep.subr.mxu0 0.0
  %1616 = vmatpush1.msra.mxu0 0.0
  %1617 = vmatprep.subr.mxu0 0.0
  %1618 = vmatpush1.msra.mxu0 0.0
  %1619 = vmatprep.subr.mxu0 0.0
  %1620 = vmatpush1.msra.mxu0 0.0
  %1621 = vmatprep.subr.mxu0 0.0
  %1622 = vmatpush1.msra.mxu0 0.0
  %1623 = vmatprep.subr.mxu0 0.0
  %1624 = vmatpush1.msra.mxu0 0.0
  %1625 = vmatprep.subr.mxu0 0.0
  %1626 = vmatpush1.msra.mxu0 0.0
  %1627 = vmatprep.subr.mxu0 0.0
  %1628 = vmatpush1.msra.mxu0 0.0
  %1629 = vmatprep.subr.mxu0 0.0
  %1630 = vmatpush1.msra.mxu0 0.0
  %1631 = vmatprep.subr.mxu0 0.0
  %1632 = vmatpush1.msra.mxu0 0.0
  %1633 = vmatprep.subr.mxu0 0.0
  %1634 = vmatpush1.msra.mxu0 0.0
  %1635 = vmatprep.subr.mxu0 0.0
  %1636 = vmatpush1.msra.mxu0 0.0
  %1637 = vmatprep.subr.mxu0 0.0
  %1638 = vmatpush1.msra.mxu0 0.0
  %1639 = vmatprep.subr.mxu0 0.0
  %1640 = vmatpush1.msra.mxu0 0.0
  %1641 = vmatprep.subr.mxu0 0.0
  %1642 = vmatpush1.msra.mxu0 0.0
  %1643 = vmatprep.subr.mxu0 0.0
  %1644 = vmatpush1.msra.mxu0 0.0
  %1645 = vmatprep.subr.mxu0 0.0
  %1646 = vmatpush1.msra.mxu0 0.0
  %1647 = vmatprep.subr.mxu0 0.0
  %1648 = vmatpush1.msra.mxu0 0.0
  %1649 = vmatprep.subr.mxu0 0.0
  %1650 = vmatpush1.msra.mxu0 0.0
  %1651 = vmatprep.subr.mxu0 0.0
  %1652 = vmatpush1.msra.mxu0 0.0
  %1653 = vmatprep.mubr.f32.mxu0 0.0
  %1654 = vmatmul.mubr.f32.gmra.mrb[0].mxu0 %v1489
  %v1655 = vpop.f32.mrb[0].mxu0
  %v1656 = vadd.f32 0.0, %v1655
  %v1657 = vpop.f32.mrb[0].mxu0
  %v1658 = vadd.f32 0.0, %v1657
  %1659 = vmatprep.mubr.f32.mxu0 0.0
  %1660 = vmatmul.mubr.f32.gmra.mrb[0].mxu0 %v1492
  %v1661 = vpop.f32.mrb[0].mxu0
  %v1662 = vadd.f32 0.0, %v1661
  %v1663 = vpop.f32.mrb[0].mxu0
  %v1664 = vadd.f32 0.0, %v1663
  %1665 = vmatprep.mubr.f32.mxu0 0.0
  %1666 = vmatmul.mubr.f32.gmra.mrb[0].mxu0 %v1495
  %v1667 = vpop.f32.mrb[0].mxu0
  %v1668 = vadd.f32 0.0, %v1667
  %v1669 = vpop.f32.mrb[0].mxu0
  %v1670 = vadd.f32 0.0, %v1669
  %1671 = vmatprep.mubr.f32.mxu0 0.0
  %1672 = vmatmul.mubr.f32.gmra.mrb[0].mxu0 %v1498
  %v1673 = vpop.f32.mrb[0].mxu0
  %v1674 = vadd.f32 0.0, %v1673
  %v1675 = vpop.f32.mrb[0].mxu0
  %v1676 = vadd.f32 0.0, %v1675
  %1677 = vdwg.mxu0
  %v1678 = vadd.f32 %v1434, %v1567
  %v1679 = vadd.f32 %v1435, %v1569
  %v1680 = vadd.f32 %v1436, %v1656
  %v1681 = vadd.f32 %v1437, %v1658
  %v1682 = vadd.f32 %v1438, %v1573
  %v1683 = vadd.f32 %v1439, %v1575
  %v1684 = vadd.f32 %v1440, %v1662
  %v1685 = vadd.f32 %v1441, %v1664
  %v1686 = vadd.f32 %v1442, %v1579
  %v1687 = vadd.f32 %v1443, %v1581
  %v1688 = vadd.f32 %v1444, %v1668
  %v1689 = vadd.f32 %v1445, %v1670
  %v1690 = vadd.f32 %v1446, %v1585
  %v1691 = vadd.f32 %v1447, %v1587
  %v1692 = vadd.f32 %v1448, %v1674
  %v1693 = vadd.f32 %v1449, %v1676
  %1694 = vrot.lane.b32.xlu0 %v50, 112
  %v1695 = vpop.permute.xlu0 %1694
  %1696 = vrot.lane.b32.xlu0 %v51, 112
  %v1697 = vpop.permute.xlu0 %1696
  %1698 = vrot.lane.b32.xlu0 %v52, 112
  %v1699 = vpop.permute.xlu0 %1698
  %1700 = vrot.lane.b32.xlu0 %v53, 112
  %v1701 = vpop.permute.xlu0 %1700
  %vm1702 = vcmp.lt.s32.totalorder %v55, 112
  %v1703 = vsel %vm1702, %v1699, %v1701
  %v1704 = vsel %vm1702, %v1697, %v1699
  %v1705 = vsel %vm1702, %v1695, %v1697
  %v1706 = vsel %vm1702, %v1701, %v1695
  %v1707 = vsel %vm1463, 1, 0
  %v1708 = vsel %vm1464, 1, 0
  %v1709 = vsel %vm1465, 1, 0
  %v1710 = vsel %vm1466, 1, 0
  %vm1711 = vcmp.eq.s32.totalorder %v1707, 1
  %vm1712 = vcmp.eq.s32.totalorder %v1708, 1
  %vm1713 = vcmp.eq.s32.totalorder %v1709, 1
  %vm1714 = vcmp.eq.s32.totalorder %v1710, 1
  %v1715 = vsel %vm1711, %v1705, 0.0
  %v1716 = vsel %vm1712, %v1704, 0.0
  %v1717 = vsel %vm1713, %v1703, 0.0
  %v1718 = vsel %vm1714, %v1706, 0.0
  %s1719 = scalar_lea.vmem %s1, 224
  %v1720 = vld [vmem:[%s1719] sm:$0xff]
  %v1721 = vld [vmem:[%s1719 + $0x8] sm:$0xff]
  %v1722 = vld [vmem:[%s1719 + $0x10] sm:$0xff]
  %v1723 = vld [vmem:[%s1719 + $0x18] sm:$0xff]
  %v1725 = vsel %vm142, %v1720, 0
  %v1728 = vsel %vm142, %v1721, 0
  %v1731 = vsel %vm142, %v1722, 0
  %v1734 = vsel %vm142, %v1723, 0
  %1736 = vmatprep.subr.mxu0 %v1716
  %1737 = vmatpush1.msra.mxu0 %v1715
  %1738 = vmatprep.subr.mxu0 0.0
  %1739 = vmatpush1.msra.mxu0 0.0
  %1740 = vmatprep.subr.mxu0 0.0
  %1741 = vmatpush1.msra.mxu0 0.0
  %1742 = vmatprep.subr.mxu0 0.0
  %1743 = vmatpush1.msra.mxu0 0.0
  %1744 = vmatprep.subr.mxu0 0.0
  %1745 = vmatpush1.msra.mxu0 0.0
  %1746 = vmatprep.subr.mxu0 0.0
  %1747 = vmatpush1.msra.mxu0 0.0
  %1748 = vmatprep.subr.mxu0 0.0
  %1749 = vmatpush1.msra.mxu0 0.0
  %1750 = vmatprep.subr.mxu0 0.0
  %1751 = vmatpush1.msra.mxu0 0.0
  %1752 = vmatprep.subr.mxu0 0.0
  %1753 = vmatpush1.msra.mxu0 0.0
  %1754 = vmatprep.subr.mxu0 0.0
  %1755 = vmatpush1.msra.mxu0 0.0
  %1756 = vmatprep.subr.mxu0 0.0
  %1757 = vmatpush1.msra.mxu0 0.0
  %1758 = vmatprep.subr.mxu0 0.0
  %1759 = vmatpush1.msra.mxu0 0.0
  %1760 = vmatprep.subr.mxu0 0.0
  %1761 = vmatpush1.msra.mxu0 0.0
  %1762 = vmatprep.subr.mxu0 0.0
  %1763 = vmatpush1.msra.mxu0 0.0
  %1764 = vmatprep.subr.mxu0 0.0
  %1765 = vmatpush1.msra.mxu0 0.0
  %1766 = vmatprep.subr.mxu0 0.0
  %1767 = vmatpush1.msra.mxu0 0.0
  %1768 = vmatprep.subr.mxu0 0.0
  %1769 = vmatpush1.msra.mxu0 0.0
  %1770 = vmatprep.subr.mxu0 0.0
  %1771 = vmatpush1.msra.mxu0 0.0
  %1772 = vmatprep.subr.mxu0 0.0
  %1773 = vmatpush1.msra.mxu0 0.0
  %1774 = vmatprep.subr.mxu0 0.0
  %1775 = vmatpush1.msra.mxu0 0.0
  %1776 = vmatprep.subr.mxu0 0.0
  %1777 = vmatpush1.msra.mxu0 0.0
  %1778 = vmatprep.subr.mxu0 0.0
  %1779 = vmatpush1.msra.mxu0 0.0
  %1780 = vmatprep.subr.mxu0 0.0
  %1781 = vmatpush1.msra.mxu0 0.0
  %1782 = vmatprep.subr.mxu0 0.0
  %1783 = vmatpush1.msra.mxu0 0.0
  %1784 = vmatprep.subr.mxu0 0.0
  %1785 = vmatpush1.msra.mxu0 0.0
  %1786 = vmatprep.subr.mxu0 0.0
  %1787 = vmatpush1.msra.mxu0 0.0
  %1788 = vmatprep.subr.mxu0 0.0
  %1789 = vmatpush1.msra.mxu0 0.0
  %1790 = vmatprep.subr.mxu0 0.0
  %1791 = vmatpush1.msra.mxu0 0.0
  %1792 = vmatprep.subr.mxu0 0.0
  %1793 = vmatpush1.msra.mxu0 0.0
  %1794 = vmatprep.subr.mxu0 0.0
  %1795 = vmatpush1.msra.mxu0 0.0
  %1796 = vmatprep.subr.mxu0 0.0
  %1797 = vmatpush1.msra.mxu0 0.0
  %1798 = vmatprep.subr.mxu0 0.0
  %1799 = vmatpush1.msra.mxu0 0.0
  %1800 = vmatprep.mubr.f32.mxu0 0.0
  %1801 = vmatmul.mubr.f32.gmra.mrb[0].mxu0 %v1725
  %v1802 = vpop.f32.mrb[0].mxu0
  %v1803 = vadd.f32 0.0, %v1802
  %v1804 = vpop.f32.mrb[0].mxu0
  %v1805 = vadd.f32 0.0, %v1804
  %1806 = vmatprep.mubr.f32.mxu0 0.0
  %1807 = vmatmul.mubr.f32.gmra.mrb[0].mxu0 %v1728
  %v1808 = vpop.f32.mrb[0].mxu0
  %v1809 = vadd.f32 0.0, %v1808
  %v1810 = vpop.f32.mrb[0].mxu0
  %v1811 = vadd.f32 0.0, %v1810
  %1812 = vmatprep.mubr.f32.mxu0 0.0
  %1813 = vmatmul.mubr.f32.gmra.mrb[0].mxu0 %v1731
  %v1814 = vpop.f32.mrb[0].mxu0
  %v1815 = vadd.f32 0.0, %v1814
  %v1816 = vpop.f32.mrb[0].mxu0
  %v1817 = vadd.f32 0.0, %v1816
  %1818 = vmatprep.mubr.f32.mxu0 0.0
  %1819 = vmatmul.mubr.f32.gmra.mrb[0].mxu0 %v1734
  %v1820 = vpop.f32.mrb[0].mxu0
  %v1821 = vadd.f32 0.0, %v1820
  %v1822 = vpop.f32.mrb[0].mxu0
  %v1823 = vadd.f32 0.0, %v1822
  %1824 = vdwg.mxu0
  %1825 = vmatprep.subr.mxu0 %v1718
  %1826 = vmatpush1.msra.mxu0 %v1717
  %1827 = vmatprep.subr.mxu0 0.0
  %1828 = vmatpush1.msra.mxu0 0.0
  %1829 = vmatprep.subr.mxu0 0.0
  %1830 = vmatpush1.msra.mxu0 0.0
  %1831 = vmatprep.subr.mxu0 0.0
  %1832 = vmatpush1.msra.mxu0 0.0
  %1833 = vmatprep.subr.mxu0 0.0
  %1834 = vmatpush1.msra.mxu0 0.0
  %1835 = vmatprep.subr.mxu0 0.0
  %1836 = vmatpush1.msra.mxu0 0.0
  %1837 = vmatprep.subr.mxu0 0.0
  %1838 = vmatpush1.msra.mxu0 0.0
  %1839 = vmatprep.subr.mxu0 0.0
  %1840 = vmatpush1.msra.mxu0 0.0
  %1841 = vmatprep.subr.mxu0 0.0
  %1842 = vmatpush1.msra.mxu0 0.0
  %1843 = vmatprep.subr.mxu0 0.0
  %1844 = vmatpush1.msra.mxu0 0.0
  %1845 = vmatprep.subr.mxu0 0.0
  %1846 = vmatpush1.msra.mxu0 0.0
  %1847 = vmatprep.subr.mxu0 0.0
  %1848 = vmatpush1.msra.mxu0 0.0
  %1849 = vmatprep.subr.mxu0 0.0
  %1850 = vmatpush1.msra.mxu0 0.0
  %1851 = vmatprep.subr.mxu0 0.0
  %1852 = vmatpush1.msra.mxu0 0.0
  %1853 = vmatprep.subr.mxu0 0.0
  %1854 = vmatpush1.msra.mxu0 0.0
  %1855 = vmatprep.subr.mxu0 0.0
  %1856 = vmatpush1.msra.mxu0 0.0
  %1857 = vmatprep.subr.mxu0 0.0
  %1858 = vmatpush1.msra.mxu0 0.0
  %1859 = vmatprep.subr.mxu0 0.0
  %1860 = vmatpush1.msra.mxu0 0.0
  %1861 = vmatprep.subr.mxu0 0.0
  %1862 = vmatpush1.msra.mxu0 0.0
  %1863 = vmatprep.subr.mxu0 0.0
  %1864 = vmatpush1.msra.mxu0 0.0
  %1865 = vmatprep.subr.mxu0 0.0
  %1866 = vmatpush1.msra.mxu0 0.0
  %1867 = vmatprep.subr.mxu0 0.0
  %1868 = vmatpush1.msra.mxu0 0.0
  %1869 = vmatprep.subr.mxu0 0.0
  %1870 = vmatpush1.msra.mxu0 0.0
  %1871 = vmatprep.subr.mxu0 0.0
  %1872 = vmatpush1.msra.mxu0 0.0
  %1873 = vmatprep.subr.mxu0 0.0
  %1874 = vmatpush1.msra.mxu0 0.0
  %1875 = vmatprep.subr.mxu0 0.0
  %1876 = vmatpush1.msra.mxu0 0.0
  %1877 = vmatprep.subr.mxu0 0.0
  %1878 = vmatpush1.msra.mxu0 0.0
  %1879 = vmatprep.subr.mxu0 0.0
  %1880 = vmatpush1.msra.mxu0 0.0
  %1881 = vmatprep.subr.mxu0 0.0
  %1882 = vmatpush1.msra.mxu0 0.0
  %1883 = vmatprep.subr.mxu0 0.0
  %1884 = vmatpush1.msra.mxu0 0.0
  %1885 = vmatprep.subr.mxu0 0.0
  %1886 = vmatpush1.msra.mxu0 0.0
  %1887 = vmatprep.subr.mxu0 0.0
  %1888 = vmatpush1.msra.mxu0 0.0
  %1889 = vmatprep.mubr.f32.mxu0 0.0
  %1890 = vmatmul.mubr.f32.gmra.mrb[0].mxu0 %v1725
  %v1891 = vpop.f32.mrb[0].mxu0
  %v1892 = vadd.f32 0.0, %v1891
  %v1893 = vpop.f32.mrb[0].mxu0
  %v1894 = vadd.f32 0.0, %v1893
  %1895 = vmatprep.mubr.f32.mxu0 0.0
  %1896 = vmatmul.mubr.f32.gmra.mrb[0].mxu0 %v1728
  %v1897 = vpop.f32.mrb[0].mxu0
  %v1898 = vadd.f32 0.0, %v1897
  %v1899 = vpop.f32.mrb[0].mxu0
  %v1900 = vadd.f32 0.0, %v1899
  %1901 = vmatprep.mubr.f32.mxu0 0.0
  %1902 = vmatmul.mubr.f32.gmra.mrb[0].mxu0 %v1731
  %v1903 = vpop.f32.mrb[0].mxu0
  %v1904 = vadd.f32 0.0, %v1903
  %v1905 = vpop.f32.mrb[0].mxu0
  %v1906 = vadd.f32 0.0, %v1905
  %1907 = vmatprep.mubr.f32.mxu0 0.0
  %1908 = vmatmul.mubr.f32.gmra.mrb[0].mxu0 %v1734
  %v1909 = vpop.f32.mrb[0].mxu0
  %v1910 = vadd.f32 0.0, %v1909
  %v1911 = vpop.f32.mrb[0].mxu0
  %v1912 = vadd.f32 0.0, %v1911
  %1913 = vdwg.mxu0
  %v1914 = vadd.f32 %v1678, %v1803
  %v1915 = vadd.f32 %v1679, %v1805
  %v1916 = vadd.f32 %v1680, %v1892
  %v1917 = vadd.f32 %v1681, %v1894
  %v1918 = vadd.f32 %v1682, %v1809
  %v1919 = vadd.f32 %v1683, %v1811
  %v1920 = vadd.f32 %v1684, %v1898
  %v1921 = vadd.f32 %v1685, %v1900
  %v1922 = vadd.f32 %v1686, %v1815
  %v1923 = vadd.f32 %v1687, %v1817
  %v1924 = vadd.f32 %v1688, %v1904
  %v1925 = vadd.f32 %v1689, %v1906
  %v1926 = vadd.f32 %v1690, %v1821
  %v1927 = vadd.f32 %v1691, %v1823
  %v1928 = vadd.f32 %v1692, %v1910
  %v1929 = vadd.f32 %v1693, %v1912
  %1930 = vrot.lane.b32.xlu0 %v50, 111
  %v1931 = vpop.permute.xlu0 %1930
  %1932 = vrot.lane.b32.xlu0 %v51, 111
  %v1933 = vpop.permute.xlu0 %1932
  %1934 = vrot.lane.b32.xlu0 %v52, 111
  %v1935 = vpop.permute.xlu0 %1934
  %1936 = vrot.lane.b32.xlu0 %v53, 111
  %v1937 = vpop.permute.xlu0 %1936
  %vm1938 = vcmp.lt.s32.totalorder %v55, 111
  %v1939 = vsel %vm1938, %v1935, %v1937
  %v1940 = vsel %vm1938, %v1933, %v1935
  %v1941 = vsel %vm1938, %v1931, %v1933
  %v1942 = vsel %vm1938, %v1937, %v1931
  %vm1943 = vmand %vm1463, %vm536
  %vm1944 = vmand %vm1464, %vm537
  %vm1945 = vmand %vm1465, %vm538
  %vm1946 = vmand %vm1466, %vm539
  %v1947 = vsel %vm1943, 1, 0
  %v1948 = vsel %vm1944, 1, 0
  %v1949 = vsel %vm1945, 1, 0
  %v1950 = vsel %vm1946, 1, 0
  %vm1951 = vcmp.eq.s32.totalorder %v1947, 1
  %vm1952 = vcmp.eq.s32.totalorder %v1948, 1
  %vm1953 = vcmp.eq.s32.totalorder %v1949, 1
  %vm1954 = vcmp.eq.s32.totalorder %v1950, 1
  %v1955 = vsel %vm1951, %v1941, 0.0
  %v1956 = vsel %vm1952, %v1940, 0.0
  %v1957 = vsel %vm1953, %v1939, 0.0
  %v1958 = vsel %vm1954, %v1942, 0.0
  %s1959 = scalar_lea.vmem %s1, 256
  %v1960 = vld [vmem:[%s1959] sm:$0xff]
  %v1961 = vld [vmem:[%s1959 + $0x8] sm:$0xff]
  %v1962 = vld [vmem:[%s1959 + $0x10] sm:$0xff]
  %v1963 = vld [vmem:[%s1959 + $0x18] sm:$0xff]
  %v1965 = vsel %vm142, %v1960, 0
  %v1968 = vsel %vm142, %v1961, 0
  %v1971 = vsel %vm142, %v1962, 0
  %v1974 = vsel %vm142, %v1963, 0
  %1976 = vmatprep.subr.mxu0 %v1956
  %1977 = vmatpush1.msra.mxu0 %v1955
  %1978 = vmatprep.subr.mxu0 0.0
  %1979 = vmatpush1.msra.mxu0 0.0
  %1980 = vmatprep.subr.mxu0 0.0
  %1981 = vmatpush1.msra.mxu0 0.0
  %1982 = vmatprep.subr.mxu0 0.0
  %1983 = vmatpush1.msra.mxu0 0.0
  %1984 = vmatprep.subr.mxu0 0.0
  %1985 = vmatpush1.msra.mxu0 0.0
  %1986 = vmatprep.subr.mxu0 0.0
  %1987 = vmatpush1.msra.mxu0 0.0
  %1988 = vmatprep.subr.mxu0 0.0
  %1989 = vmatpush1.msra.mxu0 0.0
  %1990 = vmatprep.subr.mxu0 0.0
  %1991 = vmatpush1.msra.mxu0 0.0
  %1992 = vmatprep.subr.mxu0 0.0
  %1993 = vmatpush1.msra.mxu0 0.0
  %1994 = vmatprep.subr.mxu0 0.0
  %1995 = vmatpush1.msra.mxu0 0.0
  %1996 = vmatprep.subr.mxu0 0.0
  %1997 = vmatpush1.msra.mxu0 0.0
  %1998 = vmatprep.subr.mxu0 0.0
  %1999 = vmatpush1.msra.mxu0 0.0
  %2000 = vmatprep.subr.mxu0 0.0
  %2001 = vmatpush1.msra.mxu0 0.0
  %2002 = vmatprep.subr.mxu0 0.0
  %2003 = vmatpush1.msra.mxu0 0.0
  %2004 = vmatprep.subr.mxu0 0.0
  %2005 = vmatpush1.msra.mxu0 0.0
  %2006 = vmatprep.subr.mxu0 0.0
  %2007 = vmatpush1.msra.mxu0 0.0
  %2008 = vmatprep.subr.mxu0 0.0
  %2009 = vmatpush1.msra.mxu0 0.0
  %2010 = vmatprep.subr.mxu0 0.0
  %2011 = vmatpush1.msra.mxu0 0.0
  %2012 = vmatprep.subr.mxu0 0.0
  %2013 = vmatpush1.msra.mxu0 0.0
  %2014 = vmatprep.subr.mxu0 0.0
  %2015 = vmatpush1.msra.mxu0 0.0
  %2016 = vmatprep.subr.mxu0 0.0
  %2017 = vmatpush1.msra.mxu0 0.0
  %2018 = vmatprep.subr.mxu0 0.0
  %2019 = vmatpush1.msra.mxu0 0.0
  %2020 = vmatprep.subr.mxu0 0.0
  %2021 = vmatpush1.msra.mxu0 0.0
  %2022 = vmatprep.subr.mxu0 0.0
  %2023 = vmatpush1.msra.mxu0 0.0
  %2024 = vmatprep.subr.mxu0 0.0
  %2025 = vmatpush1.msra.mxu0 0.0
  %2026 = vmatprep.subr.mxu0 0.0
  %2027 = vmatpush1.msra.mxu0 0.0
  %2028 = vmatprep.subr.mxu0 0.0
  %2029 = vmatpush1.msra.mxu0 0.0
  %2030 = vmatprep.subr.mxu0 0.0
  %2031 = vmatpush1.msra.mxu0 0.0
  %2032 = vmatprep.subr.mxu0 0.0
  %2033 = vmatpush1.msra.mxu0 0.0
  %2034 = vmatprep.subr.mxu0 0.0
  %2035 = vmatpush1.msra.mxu0 0.0
  %2036 = vmatprep.subr.mxu0 0.0
  %2037 = vmatpush1.msra.mxu0 0.0
  %2038 = vmatprep.subr.mxu0 0.0
  %2039 = vmatpush1.msra.mxu0 0.0
  %2040 = vmatprep.mubr.f32.mxu0 0.0
  %2041 = vmatmul.mubr.f32.gmra.mrb[0].mxu0 %v1965
  %v2042 = vpop.f32.mrb[0].mxu0
  %v2043 = vadd.f32 0.0, %v2042
  %v2044 = vpop.f32.mrb[0].mxu0
  %v2045 = vadd.f32 0.0, %v2044
  %2046 = vmatprep.mubr.f32.mxu0 0.0
  %2047 = vmatmul.mubr.f32.gmra.mrb[0].mxu0 %v1968
  %v2048 = vpop.f32.mrb[0].mxu0
  %v2049 = vadd.f32 0.0, %v2048
  %v2050 = vpop.f32.mrb[0].mxu0
  %v2051 = vadd.f32 0.0, %v2050
  %2052 = vmatprep.mubr.f32.mxu0 0.0
  %2053 = vmatmul.mubr.f32.gmra.mrb[0].mxu0 %v1971
  %v2054 = vpop.f32.mrb[0].mxu0
  %v2055 = vadd.f32 0.0, %v2054
  %v2056 = vpop.f32.mrb[0].mxu0
  %v2057 = vadd.f32 0.0, %v2056
  %2058 = vmatprep.mubr.f32.mxu0 0.0
  %2059 = vmatmul.mubr.f32.gmra.mrb[0].mxu0 %v1974
  %v2060 = vpop.f32.mrb[0].mxu0
  %v2061 = vadd.f32 0.0, %v2060
  %v2062 = vpop.f32.mrb[0].mxu0
  %v2063 = vadd.f32 0.0, %v2062
  %2064 = vdwg.mxu0
  %2065 = vmatprep.subr.mxu0 %v1958
  %2066 = vmatpush1.msra.mxu0 %v1957
  %2067 = vmatprep.subr.mxu0 0.0
  %2068 = vmatpush1.msra.mxu0 0.0
  %2069 = vmatprep.subr.mxu0 0.0
  %2070 = vmatpush1.msra.mxu0 0.0
  %2071 = vmatprep.subr.mxu0 0.0
  %2072 = vmatpush1.msra.mxu0 0.0
  %2073 = vmatprep.subr.mxu0 0.0
  %2074 = vmatpush1.msra.mxu0 0.0
  %2075 = vmatprep.subr.mxu0 0.0
  %2076 = vmatpush1.msra.mxu0 0.0
  %2077 = vmatprep.subr.mxu0 0.0
  %2078 = vmatpush1.msra.mxu0 0.0
  %2079 = vmatprep.subr.mxu0 0.0
  %2080 = vmatpush1.msra.mxu0 0.0
  %2081 = vmatprep.subr.mxu0 0.0
  %2082 = vmatpush1.msra.mxu0 0.0
  %2083 = vmatprep.subr.mxu0 0.0
  %2084 = vmatpush1.msra.mxu0 0.0
  %2085 = vmatprep.subr.mxu0 0.0
  %2086 = vmatpush1.msra.mxu0 0.0
  %2087 = vmatprep.subr.mxu0 0.0
  %2088 = vmatpush1.msra.mxu0 0.0
  %2089 = vmatprep.subr.mxu0 0.0
  %2090 = vmatpush1.msra.mxu0 0.0
  %2091 = vmatprep.subr.mxu0 0.0
  %2092 = vmatpush1.msra.mxu0 0.0
  %2093 = vmatprep.subr.mxu0 0.0
  %2094 = vmatpush1.msra.mxu0 0.0
  %2095 = vmatprep.subr.mxu0 0.0
  %2096 = vmatpush1.msra.mxu0 0.0
  %2097 = vmatprep.subr.mxu0 0.0
  %2098 = vmatpush1.msra.mxu0 0.0
  %2099 = vmatprep.subr.mxu0 0.0
  %2100 = vmatpush1.msra.mxu0 0.0
  %2101 = vmatprep.subr.mxu0 0.0
  %2102 = vmatpush1.msra.mxu0 0.0
  %2103 = vmatprep.subr.mxu0 0.0
  %2104 = vmatpush1.msra.mxu0 0.0
  %2105 = vmatprep.subr.mxu0 0.0
  %2106 = vmatpush1.msra.mxu0 0.0
  %2107 = vmatprep.subr.mxu0 0.0
  %2108 = vmatpush1.msra.mxu0 0.0
  %2109 = vmatprep.subr.mxu0 0.0
  %2110 = vmatpush1.msra.mxu0 0.0
  %2111 = vmatprep.subr.mxu0 0.0
  %2112 = vmatpush1.msra.mxu0 0.0
  %2113 = vmatprep.subr.mxu0 0.0
  %2114 = vmatpush1.msra.mxu0 0.0
  %2115 = vmatprep.subr.mxu0 0.0
  %2116 = vmatpush1.msra.mxu0 0.0
  %2117 = vmatprep.subr.mxu0 0.0
  %2118 = vmatpush1.msra.mxu0 0.0
  %2119 = vmatprep.subr.mxu0 0.0
  %2120 = vmatpush1.msra.mxu0 0.0
  %2121 = vmatprep.subr.mxu0 0.0
  %2122 = vmatpush1.msra.mxu0 0.0
  %2123 = vmatprep.subr.mxu0 0.0
  %2124 = vmatpush1.msra.mxu0 0.0
  %2125 = vmatprep.subr.mxu0 0.0
  %2126 = vmatpush1.msra.mxu0 0.0
  %2127 = vmatprep.subr.mxu0 0.0
  %2128 = vmatpush1.msra.mxu0 0.0
  %2129 = vmatprep.mubr.f32.mxu0 0.0
  %2130 = vmatmul.mubr.f32.gmra.mrb[0].mxu0 %v1965
  %v2131 = vpop.f32.mrb[0].mxu0
  %v2132 = vadd.f32 0.0, %v2131
  %v2133 = vpop.f32.mrb[0].mxu0
  %v2134 = vadd.f32 0.0, %v2133
  %2135 = vmatprep.mubr.f32.mxu0 0.0
  %2136 = vmatmul.mubr.f32.gmra.mrb[0].mxu0 %v1968
  %v2137 = vpop.f32.mrb[0].mxu0
  %v2138 = vadd.f32 0.0, %v2137
  %v2139 = vpop.f32.mrb[0].mxu0
  %v2140 = vadd.f32 0.0, %v2139
  %2141 = vmatprep.mubr.f32.mxu0 0.0
  %2142 = vmatmul.mubr.f32.gmra.mrb[0].mxu0 %v1971
  %v2143 = vpop.f32.mrb[0].mxu0
  %v2144 = vadd.f32 0.0, %v2143
  %v2145 = vpop.f32.mrb[0].mxu0
  %v2146 = vadd.f32 0.0, %v2145
  %2147 = vmatprep.mubr.f32.mxu0 0.0
  %2148 = vmatmul.mubr.f32.gmra.mrb[0].mxu0 %v1974
  %v2149 = vpop.f32.mrb[0].mxu0
  %v2150 = vadd.f32 0.0, %v2149
  %v2151 = vpop.f32.mrb[0].mxu0
  %v2152 = vadd.f32 0.0, %v2151
  %2153 = vdwg.mxu0
  %v2154 = vadd.f32 %v1914, %v2043
  %v2155 = vadd.f32 %v1915, %v2045
  %v2156 = vadd.f32 %v1916, %v2132
  %v2157 = vadd.f32 %v1917, %v2134
  %v2158 = vadd.f32 %v1918, %v2049
  %v2159 = vadd.f32 %v1919, %v2051
  %v2160 = vadd.f32 %v1920, %v2138
  %v2161 = vadd.f32 %v1921, %v2140
  %v2162 = vadd.f32 %v1922, %v2055
  %v2163 = vadd.f32 %v1923, %v2057
  %v2164 = vadd.f32 %v1924, %v2144
  %v2165 = vadd.f32 %v1925, %v2146
  %v2166 = vadd.f32 %v1926, %v2061
  %v2167 = vadd.f32 %v1927, %v2063
  %v2168 = vadd.f32 %v1928, %v2150
  %v2169 = vadd.f32 %v1929, %v2152
  %v2170 = vld [vmem:[%s2] sm:$0xff]
  %v2171 = vld [vmem:[%s2 + $0x8] sm:$0xff]
  %v2172 = vld [vmem:[%s2 + $0x10] sm:$0xff]
  %v2173 = vld [vmem:[%s2 + $0x18] sm:$0xff]
  %2175 = vset.pattern.permute.xlu0 0
  %2176 = vperm.xlu0 %2175, %v2170
  %v2177 = vpop.permute.xlu0 %2176
  %2180 = vset.pattern.permute.xlu0 0
  %2181 = vperm.xlu0 %2180, %v2171
  %v2182 = vpop.permute.xlu0 %2181
  %2185 = vset.pattern.permute.xlu0 0
  %2186 = vperm.xlu0 %2185, %v2172
  %v2187 = vpop.permute.xlu0 %2186
  %2190 = vset.pattern.permute.xlu0 0
  %2191 = vperm.xlu0 %2190, %v2173
  %v2192 = vpop.permute.xlu0 %2191
  %v2194 = vadd.f32 %v2154, %v2177
  %v2195 = vadd.f32 %v2155, %v2177
  %v2196 = vadd.f32 %v2156, %v2177
  %v2197 = vadd.f32 %v2157, %v2177
  %v2198 = vadd.f32 %v2158, %v2182
  %v2199 = vadd.f32 %v2159, %v2182
  %v2200 = vadd.f32 %v2160, %v2182
  %v2201 = vadd.f32 %v2161, %v2182
  %v2202 = vadd.f32 %v2162, %v2187
  %v2203 = vadd.f32 %v2163, %v2187
  %v2204 = vadd.f32 %v2164, %v2187
  %v2205 = vadd.f32 %v2165, %v2187
  %v2206 = vadd.f32 %v2166, %v2192
  %v2207 = vadd.f32 %v2167, %v2192
  %v2208 = vadd.f32 %v2168, %v2192
  %v2209 = vadd.f32 %v2169, %v2192
  %v2210 = vmax.f32 %v2194, 0.0
  %v2211 = vmax.f32 %v2195, 0.0
  %v2212 = vmax.f32 %v2196, 0.0
  %v2213 = vmax.f32 %v2197, 0.0
  %v2214 = vmax.f32 %v2198, 0.0
  %v2215 = vmax.f32 %v2199, 0.0
  %v2216 = vmax.f32 %v2200, 0.0
  %v2217 = vmax.f32 %v2201, 0.0
  %v2218 = vmax.f32 %v2202, 0.0
  %v2219 = vmax.f32 %v2203, 0.0
  %v2220 = vmax.f32 %v2204, 0.0
  %v2221 = vmax.f32 %v2205, 0.0
  %v2222 = vmax.f32 %v2206, 0.0
  %v2223 = vmax.f32 %v2207, 0.0
  %v2224 = vmax.f32 %v2208, 0.0
  %v2225 = vmax.f32 %v2209, 0.0
  %2226 = vrot.lane.b32.xlu0 %v2210, 17
  %v2227 = vpop.permute.xlu0 %2226
  %2228 = vrot.lane.b32.xlu0 %v2214, 17
  %v2229 = vpop.permute.xlu0 %2228
  %2230 = vrot.lane.b32.xlu0 %v2218, 17
  %v2231 = vpop.permute.xlu0 %2230
  %2232 = vrot.lane.b32.xlu0 %v2222, 17
  %v2233 = vpop.permute.xlu0 %2232
  %2234 = vrot.lane.b32.xlu0 %v2211, 17
  %v2235 = vpop.permute.xlu0 %2234
  %2236 = vrot.lane.b32.xlu0 %v2215, 17
  %v2237 = vpop.permute.xlu0 %2236
  %2238 = vrot.lane.b32.xlu0 %v2219, 17
  %v2239 = vpop.permute.xlu0 %2238
  %2240 = vrot.lane.b32.xlu0 %v2223, 17
  %v2241 = vpop.permute.xlu0 %2240
  %2242 = vrot.lane.b32.xlu0 %v2212, 17
  %v2243 = vpop.permute.xlu0 %2242
  %2244 = vrot.lane.b32.xlu0 %v2216, 17
  %v2245 = vpop.permute.xlu0 %2244
  %2246 = vrot.lane.b32.xlu0 %v2220, 17
  %v2247 = vpop.permute.xlu0 %2246
  %2248 = vrot.lane.b32.xlu0 %v2224, 17
  %v2249 = vpop.permute.xlu0 %2248
  %2250 = vrot.lane.b32.xlu0 %v2213, 17
  %v2251 = vpop.permute.xlu0 %2250
  %2252 = vrot.lane.b32.xlu0 %v2217, 17
  %v2253 = vpop.permute.xlu0 %2252
  %2254 = vrot.lane.b32.xlu0 %v2221, 17
  %v2255 = vpop.permute.xlu0 %2254
  %2256 = vrot.lane.b32.xlu0 %v2225, 17
  %v2257 = vpop.permute.xlu0 %2256
  %v2258 = vsel %vm79, %v2243, %v2251
  %v2259 = vsel %vm79, %v2245, %v2253
  %v2260 = vsel %vm79, %v2247, %v2255
  %v2261 = vsel %vm79, %v2249, %v2257
  %v2262 = vsel %vm79, %v2235, %v2243
  %v2263 = vsel %vm79, %v2237, %v2245
  %v2264 = vsel %vm79, %v2239, %v2247
  %v2265 = vsel %vm79, %v2241, %v2249
  %v2266 = vsel %vm79, %v2227, %v2235
  %v2267 = vsel %vm79, %v2229, %v2237
  %v2268 = vsel %vm79, %v2231, %v2239
  %v2269 = vsel %vm79, %v2233, %v2241
  %v2270 = vsel %vm79, %v2251, %v2227
  %v2271 = vsel %vm79, %v2253, %v2229
  %v2272 = vsel %vm79, %v2255, %v2231
  %v2273 = vsel %vm79, %v2257, %v2233
  %v2274 = vsel %vm100, %v2270, 0.0
  %v2275 = vsel %vm101, %v2266, 0.0
  %v2276 = vsel %vm102, %v2262, 0.0
  %v2277 = vsel %vm103, %v2258, 0.0
  %v2278 = vsel %vm100, %v2271, 0.0
  %v2279 = vsel %vm101, %v2267, 0.0
  %v2280 = vsel %vm102, %v2263, 0.0
  %v2281 = vsel %vm103, %v2259, 0.0
  %v2282 = vsel %vm100, %v2272, 0.0
  %v2283 = vsel %vm101, %v2268, 0.0
  %v2284 = vsel %vm102, %v2264, 0.0
  %v2285 = vsel %vm103, %v2260, 0.0
  %v2286 = vsel %vm100, %v2273, 0.0
  %v2287 = vsel %vm101, %v2269, 0.0
  %v2288 = vsel %vm102, %v2265, 0.0
  %v2289 = vsel %vm103, %v2261, 0.0
  %v2290 = vld [vmem:[%s3] sm:$0xff]
  %v2291 = vld [vmem:[%s3 + $0x8] sm:$0xff]
  %v2292 = vld [vmem:[%s3 + $0x10] sm:$0xff]
  %v2293 = vld [vmem:[%s3 + $0x18] sm:$0xff]
  %2294 = vrot.lane.b32.xlu0 %v2210, 16
  %v2295 = vpop.permute.xlu0 %2294
  %2296 = vrot.lane.b32.xlu0 %v2214, 16
  %v2297 = vpop.permute.xlu0 %2296
  %2298 = vrot.lane.b32.xlu0 %v2218, 16
  %v2299 = vpop.permute.xlu0 %2298
  %2300 = vrot.lane.b32.xlu0 %v2222, 16
  %v2301 = vpop.permute.xlu0 %2300
  %2302 = vrot.lane.b32.xlu0 %v2211, 16
  %v2303 = vpop.permute.xlu0 %2302
  %2304 = vrot.lane.b32.xlu0 %v2215, 16
  %v2305 = vpop.permute.xlu0 %2304
  %2306 = vrot.lane.b32.xlu0 %v2219, 16
  %v2307 = vpop.permute.xlu0 %2306
  %2308 = vrot.lane.b32.xlu0 %v2223, 16
  %v2309 = vpop.permute.xlu0 %2308
  %2310 = vrot.lane.b32.xlu0 %v2212, 16
  %v2311 = vpop.permute.xlu0 %2310
  %2312 = vrot.lane.b32.xlu0 %v2216, 16
  %v2313 = vpop.permute.xlu0 %2312
  %2314 = vrot.lane.b32.xlu0 %v2220, 16
  %v2315 = vpop.permute.xlu0 %2314
  %2316 = vrot.lane.b32.xlu0 %v2224, 16
  %v2317 = vpop.permute.xlu0 %2316
  %2318 = vrot.lane.b32.xlu0 %v2213, 16
  %v2319 = vpop.permute.xlu0 %2318
  %2320 = vrot.lane.b32.xlu0 %v2217, 16
  %v2321 = vpop.permute.xlu0 %2320
  %2322 = vrot.lane.b32.xlu0 %v2221, 16
  %v2323 = vpop.permute.xlu0 %2322
  %2324 = vrot.lane.b32.xlu0 %v2225, 16
  %v2325 = vpop.permute.xlu0 %2324
  %v2326 = vsel %vm120, %v2311, %v2319
  %v2327 = vsel %vm120, %v2313, %v2321
  %v2328 = vsel %vm120, %v2315, %v2323
  %v2329 = vsel %vm120, %v2317, %v2325
  %v2330 = vsel %vm120, %v2303, %v2311
  %v2331 = vsel %vm120, %v2305, %v2313
  %v2332 = vsel %vm120, %v2307, %v2315
  %v2333 = vsel %vm120, %v2309, %v2317
  %v2334 = vsel %vm120, %v2295, %v2303
  %v2335 = vsel %vm120, %v2297, %v2305
  %v2336 = vsel %vm120, %v2299, %v2307
  %v2337 = vsel %vm120, %v2301, %v2309
  %v2338 = vsel %vm120, %v2319, %v2295
  %v2339 = vsel %vm120, %v2321, %v2297
  %v2340 = vsel %vm120, %v2323, %v2299
  %v2341 = vsel %vm120, %v2325, %v2301
  %v2342 = vsel %vm129, %v2338, 0.0
  %v2343 = vsel %vm130, %v2334, 0.0
  %v2344 = vsel %vm131, %v2330, 0.0
  %v2345 = vsel %vm132, %v2326, 0.0
  %v2346 = vsel %vm129, %v2339, 0.0
  %v2347 = vsel %vm130, %v2335, 0.0
  %v2348 = vsel %vm131, %v2331, 0.0
  %v2349 = vsel %vm132, %v2327, 0.0
  %v2350 = vsel %vm129, %v2340, 0.0
  %v2351 = vsel %vm130, %v2336, 0.0
  %v2352 = vsel %vm131, %v2332, 0.0
  %v2353 = vsel %vm132, %v2328, 0.0
  %v2354 = vsel %vm129, %v2341, 0.0
  %v2355 = vsel %vm130, %v2337, 0.0
  %v2356 = vsel %vm131, %v2333, 0.0
  %v2357 = vsel %vm132, %v2329, 0.0
  %s2358 = scalar_lea.vmem %s3, 32
  %v2359 = vld [vmem:[%s2358] sm:$0xff]
  %v2360 = vld [vmem:[%s2358 + $0x8] sm:$0xff]
  %v2361 = vld [vmem:[%s2358 + $0x10] sm:$0xff]
  %v2362 = vld [vmem:[%s2358 + $0x18] sm:$0xff]
  %vm2363 = vcmask 261120
  %v2365 = vsel %vm2363, %v2359, 0
  %v2368 = vsel %vm2363, %v2360, 0
  %v2371 = vsel %vm2363, %v2361, 0
  %v2374 = vsel %vm2363, %v2362, 0
  %2376 = vmatprep.subr.mxu0 %v2343
  %2377 = vmatpush1.msra.mxu0 %v2342
  %2378 = vmatprep.subr.mxu0 %v2347
  %2379 = vmatpush1.msra.mxu0 %v2346
  %2380 = vmatprep.subr.mxu0 %v2351
  %2381 = vmatpush1.msra.mxu0 %v2350
  %2382 = vmatprep.subr.mxu0 %v2355
  %2383 = vmatpush1.msra.mxu0 %v2354
  %2384 = vmatprep.subr.mxu0 0.0
  %2385 = vmatpush1.msra.mxu0 0.0
  %2386 = vmatprep.subr.mxu0 0.0
  %2387 = vmatpush1.msra.mxu0 0.0
  %2388 = vmatprep.subr.mxu0 0.0
  %2389 = vmatpush1.msra.mxu0 0.0
  %2390 = vmatprep.subr.mxu0 0.0
  %2391 = vmatpush1.msra.mxu0 0.0
  %2392 = vmatprep.subr.mxu0 0.0
  %2393 = vmatpush1.msra.mxu0 0.0
  %2394 = vmatprep.subr.mxu0 0.0
  %2395 = vmatpush1.msra.mxu0 0.0
  %2396 = vmatprep.subr.mxu0 0.0
  %2397 = vmatpush1.msra.mxu0 0.0
  %2398 = vmatprep.subr.mxu0 0.0
  %2399 = vmatpush1.msra.mxu0 0.0
  %2400 = vmatprep.subr.mxu0 0.0
  %2401 = vmatpush1.msra.mxu0 0.0
  %2402 = vmatprep.subr.mxu0 0.0
  %2403 = vmatpush1.msra.mxu0 0.0
  %2404 = vmatprep.subr.mxu0 0.0
  %2405 = vmatpush1.msra.mxu0 0.0
  %2406 = vmatprep.subr.mxu0 0.0
  %2407 = vmatpush1.msra.mxu0 0.0
  %2408 = vmatprep.subr.mxu0 0.0
  %2409 = vmatpush1.msra.mxu0 0.0
  %2410 = vmatprep.subr.mxu0 0.0
  %2411 = vmatpush1.msra.mxu0 0.0
  %2412 = vmatprep.subr.mxu0 0.0
  %2413 = vmatpush1.msra.mxu0 0.0
  %2414 = vmatprep.subr.mxu0 0.0
  %2415 = vmatpush1.msra.mxu0 0.0
  %2416 = vmatprep.subr.mxu0 0.0
  %2417 = vmatpush1.msra.mxu0 0.0
  %2418 = vmatprep.subr.mxu0 0.0
  %2419 = vmatpush1.msra.mxu0 0.0
  %2420 = vmatprep.subr.mxu0 0.0
  %2421 = vmatpush1.msra.mxu0 0.0
  %2422 = vmatprep.subr.mxu0 0.0
  %2423 = vmatpush1.msra.mxu0 0.0
  %2424 = vmatprep.subr.mxu0 0.0
  %2425 = vmatpush1.msra.mxu0 0.0
  %2426 = vmatprep.subr.mxu0 0.0
  %2427 = vmatpush1.msra.mxu0 0.0
  %2428 = vmatprep.subr.mxu0 0.0
  %2429 = vmatpush1.msra.mxu0 0.0
  %2430 = vmatprep.subr.mxu0 0.0
  %2431 = vmatpush1.msra.mxu0 0.0
  %2432 = vmatprep.subr.mxu0 0.0
  %2433 = vmatpush1.msra.mxu0 0.0
  %2434 = vmatprep.subr.mxu0 0.0
  %2435 = vmatpush1.msra.mxu0 0.0
  %2436 = vmatprep.subr.mxu0 0.0
  %2437 = vmatpush1.msra.mxu0 0.0
  %2438 = vmatprep.subr.mxu0 0.0
  %2439 = vmatpush1.msra.mxu0 0.0
  %2440 = vmatprep.mubr.f32.mxu0 0.0
  %2441 = vmatmul.mubr.f32.gmra.mrb[0].mxu0 %v2365
  %v2442 = vpop.f32.mrb[0].mxu0
  %v2443 = vadd.f32 0.0, %v2442
  %v2444 = vpop.f32.mrb[0].mxu0
  %v2445 = vadd.f32 0.0, %v2444
  %2446 = vmatprep.mubr.f32.mxu0 0.0
  %2447 = vmatmul.mubr.f32.gmra.mrb[0].mxu0 %v2368
  %v2448 = vpop.f32.mrb[0].mxu0
  %v2449 = vadd.f32 0.0, %v2448
  %v2450 = vpop.f32.mrb[0].mxu0
  %v2451 = vadd.f32 0.0, %v2450
  %2452 = vmatprep.mubr.f32.mxu0 0.0
  %2453 = vmatmul.mubr.f32.gmra.mrb[0].mxu0 %v2371
  %v2454 = vpop.f32.mrb[0].mxu0
  %v2455 = vadd.f32 0.0, %v2454
  %v2456 = vpop.f32.mrb[0].mxu0
  %v2457 = vadd.f32 0.0, %v2456
  %2458 = vmatprep.mubr.f32.mxu0 0.0
  %2459 = vmatmul.mubr.f32.gmra.mrb[0].mxu0 %v2374
  %v2460 = vpop.f32.mrb[0].mxu0
  %v2461 = vadd.f32 0.0, %v2460
  %v2462 = vpop.f32.mrb[0].mxu0
  %v2463 = vadd.f32 0.0, %v2462
  %2464 = vdwg.mxu0
  %2465 = vmatprep.subr.mxu0 %v2345
  %2466 = vmatpush1.msra.mxu0 %v2344
  %2467 = vmatprep.subr.mxu0 %v2349
  %2468 = vmatpush1.msra.mxu0 %v2348
  %2469 = vmatprep.subr.mxu0 %v2353
  %2470 = vmatpush1.msra.mxu0 %v2352
  %2471 = vmatprep.subr.mxu0 %v2357
  %2472 = vmatpush1.msra.mxu0 %v2356
  %2473 = vmatprep.subr.mxu0 0.0
  %2474 = vmatpush1.msra.mxu0 0.0
  %2475 = vmatprep.subr.mxu0 0.0
  %2476 = vmatpush1.msra.mxu0 0.0
  %2477 = vmatprep.subr.mxu0 0.0
  %2478 = vmatpush1.msra.mxu0 0.0
  %2479 = vmatprep.subr.mxu0 0.0
  %2480 = vmatpush1.msra.mxu0 0.0
  %2481 = vmatprep.subr.mxu0 0.0
  %2482 = vmatpush1.msra.mxu0 0.0
  %2483 = vmatprep.subr.mxu0 0.0
  %2484 = vmatpush1.msra.mxu0 0.0
  %2485 = vmatprep.subr.mxu0 0.0
  %2486 = vmatpush1.msra.mxu0 0.0
  %2487 = vmatprep.subr.mxu0 0.0
  %2488 = vmatpush1.msra.mxu0 0.0
  %2489 = vmatprep.subr.mxu0 0.0
  %2490 = vmatpush1.msra.mxu0 0.0
  %2491 = vmatprep.subr.mxu0 0.0
  %2492 = vmatpush1.msra.mxu0 0.0
  %2493 = vmatprep.subr.mxu0 0.0
  %2494 = vmatpush1.msra.mxu0 0.0
  %2495 = vmatprep.subr.mxu0 0.0
  %2496 = vmatpush1.msra.mxu0 0.0
  %2497 = vmatprep.subr.mxu0 0.0
  %2498 = vmatpush1.msra.mxu0 0.0
  %2499 = vmatprep.subr.mxu0 0.0
  %2500 = vmatpush1.msra.mxu0 0.0
  %2501 = vmatprep.subr.mxu0 0.0
  %2502 = vmatpush1.msra.mxu0 0.0
  %2503 = vmatprep.subr.mxu0 0.0
  %2504 = vmatpush1.msra.mxu0 0.0
  %2505 = vmatprep.subr.mxu0 0.0
  %2506 = vmatpush1.msra.mxu0 0.0
  %2507 = vmatprep.subr.mxu0 0.0
  %2508 = vmatpush1.msra.mxu0 0.0
  %2509 = vmatprep.subr.mxu0 0.0
  %2510 = vmatpush1.msra.mxu0 0.0
  %2511 = vmatprep.subr.mxu0 0.0
  %2512 = vmatpush1.msra.mxu0 0.0
  %2513 = vmatprep.subr.mxu0 0.0
  %2514 = vmatpush1.msra.mxu0 0.0
  %2515 = vmatprep.subr.mxu0 0.0
  %2516 = vmatpush1.msra.mxu0 0.0
  %2517 = vmatprep.subr.mxu0 0.0
  %2518 = vmatpush1.msra.mxu0 0.0
  %2519 = vmatprep.subr.mxu0 0.0
  %2520 = vmatpush1.msra.mxu0 0.0
  %2521 = vmatprep.subr.mxu0 0.0
  %2522 = vmatpush1.msra.mxu0 0.0
  %2523 = vmatprep.subr.mxu0 0.0
  %2524 = vmatpush1.msra.mxu0 0.0
  %2525 = vmatprep.subr.mxu0 0.0
  %2526 = vmatpush1.msra.mxu0 0.0
  %2527 = vmatprep.subr.mxu0 0.0
  %2528 = vmatpush1.msra.mxu0 0.0
  %2529 = vmatprep.mubr.f32.mxu0 0.0
  %2530 = vmatmul.mubr.f32.gmra.mrb[0].mxu0 %v2365
  %v2531 = vpop.f32.mrb[0].mxu0
  %v2532 = vadd.f32 0.0, %v2531
  %v2533 = vpop.f32.mrb[0].mxu0
  %v2534 = vadd.f32 0.0, %v2533
  %2535 = vmatprep.mubr.f32.mxu0 0.0
  %2536 = vmatmul.mubr.f32.gmra.mrb[0].mxu0 %v2368
  %v2537 = vpop.f32.mrb[0].mxu0
  %v2538 = vadd.f32 0.0, %v2537
  %v2539 = vpop.f32.mrb[0].mxu0
  %v2540 = vadd.f32 0.0, %v2539
  %2541 = vmatprep.mubr.f32.mxu0 0.0
  %2542 = vmatmul.mubr.f32.gmra.mrb[0].mxu0 %v2371
  %v2543 = vpop.f32.mrb[0].mxu0
  %v2544 = vadd.f32 0.0, %v2543
  %v2545 = vpop.f32.mrb[0].mxu0
  %v2546 = vadd.f32 0.0, %v2545
  %2547 = vmatprep.mubr.f32.mxu0 0.0
  %2548 = vmatmul.mubr.f32.gmra.mrb[0].mxu0 %v2374
  %v2549 = vpop.f32.mrb[0].mxu0
  %v2550 = vadd.f32 0.0, %v2549
  %v2551 = vpop.f32.mrb[0].mxu0
  %v2552 = vadd.f32 0.0, %v2551
  %2553 = vdwg.mxu0
  %v2555 = vsel %vm2363, %v2290, 0
  %v2558 = vsel %vm2363, %v2291, 0
  %v2561 = vsel %vm2363, %v2292, 0
  %v2564 = vsel %vm2363, %v2293, 0
  %2566 = vmatprep.subr.mxu0 %v2275
  %2567 = vmatpush1.msra.mxu0 %v2274
  %2568 = vmatprep.subr.mxu0 %v2279
  %2569 = vmatpush1.msra.mxu0 %v2278
  %2570 = vmatprep.subr.mxu0 %v2283
  %2571 = vmatpush1.msra.mxu0 %v2282
  %2572 = vmatprep.subr.mxu0 %v2287
  %2573 = vmatpush1.msra.mxu0 %v2286
  %2574 = vmatprep.subr.mxu0 0.0
  %2575 = vmatpush1.msra.mxu0 0.0
  %2576 = vmatprep.subr.mxu0 0.0
  %2577 = vmatpush1.msra.mxu0 0.0
  %2578 = vmatprep.subr.mxu0 0.0
  %2579 = vmatpush1.msra.mxu0 0.0
  %2580 = vmatprep.subr.mxu0 0.0
  %2581 = vmatpush1.msra.mxu0 0.0
  %2582 = vmatprep.subr.mxu0 0.0
  %2583 = vmatpush1.msra.mxu0 0.0
  %2584 = vmatprep.subr.mxu0 0.0
  %2585 = vmatpush1.msra.mxu0 0.0
  %2586 = vmatprep.subr.mxu0 0.0
  %2587 = vmatpush1.msra.mxu0 0.0
  %2588 = vmatprep.subr.mxu0 0.0
  %2589 = vmatpush1.msra.mxu0 0.0
  %2590 = vmatprep.subr.mxu0 0.0
  %2591 = vmatpush1.msra.mxu0 0.0
  %2592 = vmatprep.subr.mxu0 0.0
  %2593 = vmatpush1.msra.mxu0 0.0
  %2594 = vmatprep.subr.mxu0 0.0
  %2595 = vmatpush1.msra.mxu0 0.0
  %2596 = vmatprep.subr.mxu0 0.0
  %2597 = vmatpush1.msra.mxu0 0.0
  %2598 = vmatprep.subr.mxu0 0.0
  %2599 = vmatpush1.msra.mxu0 0.0
  %2600 = vmatprep.subr.mxu0 0.0
  %2601 = vmatpush1.msra.mxu0 0.0
  %2602 = vmatprep.subr.mxu0 0.0
  %2603 = vmatpush1.msra.mxu0 0.0
  %2604 = vmatprep.subr.mxu0 0.0
  %2605 = vmatpush1.msra.mxu0 0.0
  %2606 = vmatprep.subr.mxu0 0.0
  %2607 = vmatpush1.msra.mxu0 0.0
  %2608 = vmatprep.subr.mxu0 0.0
  %2609 = vmatpush1.msra.mxu0 0.0
  %2610 = vmatprep.subr.mxu0 0.0
  %2611 = vmatpush1.msra.mxu0 0.0
  %2612 = vmatprep.subr.mxu0 0.0
  %2613 = vmatpush1.msra.mxu0 0.0
  %2614 = vmatprep.subr.mxu0 0.0
  %2615 = vmatpush1.msra.mxu0 0.0
  %2616 = vmatprep.subr.mxu0 0.0
  %2617 = vmatpush1.msra.mxu0 0.0
  %2618 = vmatprep.subr.mxu0 0.0
  %2619 = vmatpush1.msra.mxu0 0.0
  %2620 = vmatprep.subr.mxu0 0.0
  %2621 = vmatpush1.msra.mxu0 0.0
  %2622 = vmatprep.subr.mxu0 0.0
  %2623 = vmatpush1.msra.mxu0 0.0
  %2624 = vmatprep.subr.mxu0 0.0
  %2625 = vmatpush1.msra.mxu0 0.0
  %2626 = vmatprep.subr.mxu0 0.0
  %2627 = vmatpush1.msra.mxu0 0.0
  %2628 = vmatprep.subr.mxu0 0.0
  %2629 = vmatpush1.msra.mxu0 0.0
  %2630 = vmatprep.mubr.f32.mxu0 0.0
  %2631 = vmatmul.mubr.f32.gmra.mrb[0].mxu0 %v2555
  %v2632 = vpop.f32.mrb[0].mxu0
  %v2633 = vadd.f32 %v2443, %v2632
  %v2634 = vpop.f32.mrb[0].mxu0
  %v2635 = vadd.f32 %v2445, %v2634
  %2636 = vmatprep.mubr.f32.mxu0 0.0
  %2637 = vmatmul.mubr.f32.gmra.mrb[0].mxu0 %v2558
  %v2638 = vpop.f32.mrb[0].mxu0
  %v2639 = vadd.f32 %v2449, %v2638
  %v2640 = vpop.f32.mrb[0].mxu0
  %v2641 = vadd.f32 %v2451, %v2640
  %2642 = vmatprep.mubr.f32.mxu0 0.0
  %2643 = vmatmul.mubr.f32.gmra.mrb[0].mxu0 %v2561
  %v2644 = vpop.f32.mrb[0].mxu0
  %v2645 = vadd.f32 %v2455, %v2644
  %v2646 = vpop.f32.mrb[0].mxu0
  %v2647 = vadd.f32 %v2457, %v2646
  %2648 = vmatprep.mubr.f32.mxu0 0.0
  %2649 = vmatmul.mubr.f32.gmra.mrb[0].mxu0 %v2564
  %v2650 = vpop.f32.mrb[0].mxu0
  %v2651 = vadd.f32 %v2461, %v2650
  %v2652 = vpop.f32.mrb[0].mxu0
  %v2653 = vadd.f32 %v2463, %v2652
  %2654 = vdwg.mxu0
  %2655 = vmatprep.subr.mxu0 %v2277
  %2656 = vmatpush1.msra.mxu0 %v2276
  %2657 = vmatprep.subr.mxu0 %v2281
  %2658 = vmatpush1.msra.mxu0 %v2280
  %2659 = vmatprep.subr.mxu0 %v2285
  %2660 = vmatpush1.msra.mxu0 %v2284
  %2661 = vmatprep.subr.mxu0 %v2289
  %2662 = vmatpush1.msra.mxu0 %v2288
  %2663 = vmatprep.subr.mxu0 0.0
  %2664 = vmatpush1.msra.mxu0 0.0
  %2665 = vmatprep.subr.mxu0 0.0
  %2666 = vmatpush1.msra.mxu0 0.0
  %2667 = vmatprep.subr.mxu0 0.0
  %2668 = vmatpush1.msra.mxu0 0.0
  %2669 = vmatprep.subr.mxu0 0.0
  %2670 = vmatpush1.msra.mxu0 0.0
  %2671 = vmatprep.subr.mxu0 0.0
  %2672 = vmatpush1.msra.mxu0 0.0
  %2673 = vmatprep.subr.mxu0 0.0
  %2674 = vmatpush1.msra.mxu0 0.0
  %2675 = vmatprep.subr.mxu0 0.0
  %2676 = vmatpush1.msra.mxu0 0.0
  %2677 = vmatprep.subr.mxu0 0.0
  %2678 = vmatpush1.msra.mxu0 0.0
  %2679 = vmatprep.subr.mxu0 0.0
  %2680 = vmatpush1.msra.mxu0 0.0
  %2681 = vmatprep.subr.mxu0 0.0
  %2682 = vmatpush1.msra.mxu0 0.0
  %2683 = vmatprep.subr.mxu0 0.0
  %2684 = vmatpush1.msra.mxu0 0.0
  %2685 = vmatprep.subr.mxu0 0.0
  %2686 = vmatpush1.msra.mxu0 0.0
  %2687 = vmatprep.subr.mxu0 0.0
  %2688 = vmatpush1.msra.mxu0 0.0
  %2689 = vmatprep.subr.mxu0 0.0
  %2690 = vmatpush1.msra.mxu0 0.0
  %2691 = vmatprep.subr.mxu0 0.0
  %2692 = vmatpush1.msra.mxu0 0.0
  %2693 = vmatprep.subr.mxu0 0.0
  %2694 = vmatpush1.msra.mxu0 0.0
  %2695 = vmatprep.subr.mxu0 0.0
  %2696 = vmatpush1.msra.mxu0 0.0
  %2697 = vmatprep.subr.mxu0 0.0
  %2698 = vmatpush1.msra.mxu0 0.0
  %2699 = vmatprep.subr.mxu0 0.0
  %2700 = vmatpush1.msra.mxu0 0.0
  %2701 = vmatprep.subr.mxu0 0.0
  %2702 = vmatpush1.msra.mxu0 0.0
  %2703 = vmatprep.subr.mxu0 0.0
  %2704 = vmatpush1.msra.mxu0 0.0
  %2705 = vmatprep.subr.mxu0 0.0
  %2706 = vmatpush1.msra.mxu0 0.0
  %2707 = vmatprep.subr.mxu0 0.0
  %2708 = vmatpush1.msra.mxu0 0.0
  %2709 = vmatprep.subr.mxu0 0.0
  %2710 = vmatpush1.msra.mxu0 0.0
  %2711 = vmatprep.subr.mxu0 0.0
  %2712 = vmatpush1.msra.mxu0 0.0
  %2713 = vmatprep.subr.mxu0 0.0
  %2714 = vmatpush1.msra.mxu0 0.0
  %2715 = vmatprep.subr.mxu0 0.0
  %2716 = vmatpush1.msra.mxu0 0.0
  %2717 = vmatprep.subr.mxu0 0.0
  %2718 = vmatpush1.msra.mxu0 0.0
  %2719 = vmatprep.mubr.f32.mxu0 0.0
  %2720 = vmatmul.mubr.f32.gmra.mrb[0].mxu0 %v2555
  %v2721 = vpop.f32.mrb[0].mxu0
  %v2722 = vadd.f32 %v2532, %v2721
  %v2723 = vpop.f32.mrb[0].mxu0
  %v2724 = vadd.f32 %v2534, %v2723
  %2725 = vmatprep.mubr.f32.mxu0 0.0
  %2726 = vmatmul.mubr.f32.gmra.mrb[0].mxu0 %v2558
  %v2727 = vpop.f32.mrb[0].mxu0
  %v2728 = vadd.f32 %v2538, %v2727
  %v2729 = vpop.f32.mrb[0].mxu0
  %v2730 = vadd.f32 %v2540, %v2729
  %2731 = vmatprep.mubr.f32.mxu0 0.0
  %2732 = vmatmul.mubr.f32.gmra.mrb[0].mxu0 %v2561
  %v2733 = vpop.f32.mrb[0].mxu0
  %v2734 = vadd.f32 %v2544, %v2733
  %v2735 = vpop.f32.mrb[0].mxu0
  %v2736 = vadd.f32 %v2546, %v2735
  %2737 = vmatprep.mubr.f32.mxu0 0.0
  %2738 = vmatmul.mubr.f32.gmra.mrb[0].mxu0 %v2564
  %v2739 = vpop.f32.mrb[0].mxu0
  %v2740 = vadd.f32 %v2550, %v2739
  %v2741 = vpop.f32.mrb[0].mxu0
  %v2742 = vadd.f32 %v2552, %v2741
  %2743 = vdwg.mxu0
  %2744 = vrot.lane.b32.xlu0 %v2210, 15
  %v2745 = vpop.permute.xlu0 %2744
  %2746 = vrot.lane.b32.xlu0 %v2214, 15
  %v2747 = vpop.permute.xlu0 %2746
  %2748 = vrot.lane.b32.xlu0 %v2218, 15
  %v2749 = vpop.permute.xlu0 %2748
  %2750 = vrot.lane.b32.xlu0 %v2222, 15
  %v2751 = vpop.permute.xlu0 %2750
  %2752 = vrot.lane.b32.xlu0 %v2211, 15
  %v2753 = vpop.permute.xlu0 %2752
  %2754 = vrot.lane.b32.xlu0 %v2215, 15
  %v2755 = vpop.permute.xlu0 %2754
  %2756 = vrot.lane.b32.xlu0 %v2219, 15
  %v2757 = vpop.permute.xlu0 %2756
  %2758 = vrot.lane.b32.xlu0 %v2223, 15
  %v2759 = vpop.permute.xlu0 %2758
  %2760 = vrot.lane.b32.xlu0 %v2212, 15
  %v2761 = vpop.permute.xlu0 %2760
  %2762 = vrot.lane.b32.xlu0 %v2216, 15
  %v2763 = vpop.permute.xlu0 %2762
  %2764 = vrot.lane.b32.xlu0 %v2220, 15
  %v2765 = vpop.permute.xlu0 %2764
  %2766 = vrot.lane.b32.xlu0 %v2224, 15
  %v2767 = vpop.permute.xlu0 %2766
  %2768 = vrot.lane.b32.xlu0 %v2213, 15
  %v2769 = vpop.permute.xlu0 %2768
  %2770 = vrot.lane.b32.xlu0 %v2217, 15
  %v2771 = vpop.permute.xlu0 %2770
  %2772 = vrot.lane.b32.xlu0 %v2221, 15
  %v2773 = vpop.permute.xlu0 %2772
  %2774 = vrot.lane.b32.xlu0 %v2225, 15
  %v2775 = vpop.permute.xlu0 %2774
  %v2776 = vsel %vm531, %v2761, %v2769
  %v2777 = vsel %vm531, %v2763, %v2771
  %v2778 = vsel %vm531, %v2765, %v2773
  %v2779 = vsel %vm531, %v2767, %v2775
  %v2780 = vsel %vm531, %v2753, %v2761
  %v2781 = vsel %vm531, %v2755, %v2763
  %v2782 = vsel %vm531, %v2757, %v2765
  %v2783 = vsel %vm531, %v2759, %v2767
  %v2784 = vsel %vm531, %v2745, %v2753
  %v2785 = vsel %vm531, %v2747, %v2755
  %v2786 = vsel %vm531, %v2749, %v2757
  %v2787 = vsel %vm531, %v2751, %v2759
  %v2788 = vsel %vm531, %v2769, %v2745
  %v2789 = vsel %vm531, %v2771, %v2747
  %v2790 = vsel %vm531, %v2773, %v2749
  %v2791 = vsel %vm531, %v2775, %v2751
  %v2792 = vsel %vm548, %v2788, 0.0
  %v2793 = vsel %vm549, %v2784, 0.0
  %v2794 = vsel %vm550, %v2780, 0.0
  %v2795 = vsel %vm551, %v2776, 0.0
  %v2796 = vsel %vm548, %v2789, 0.0
  %v2797 = vsel %vm549, %v2785, 0.0
  %v2798 = vsel %vm550, %v2781, 0.0
  %v2799 = vsel %vm551, %v2777, 0.0
  %v2800 = vsel %vm548, %v2790, 0.0
  %v2801 = vsel %vm549, %v2786, 0.0
  %v2802 = vsel %vm550, %v2782, 0.0
  %v2803 = vsel %vm551, %v2778, 0.0
  %v2804 = vsel %vm548, %v2791, 0.0
  %v2805 = vsel %vm549, %v2787, 0.0
  %v2806 = vsel %vm550, %v2783, 0.0
  %v2807 = vsel %vm551, %v2779, 0.0
  %s2808 = scalar_lea.vmem %s3, 64
  %v2809 = vld [vmem:[%s2808] sm:$0xff]
  %v2810 = vld [vmem:[%s2808 + $0x8] sm:$0xff]
  %v2811 = vld [vmem:[%s2808 + $0x10] sm:$0xff]
  %v2812 = vld [vmem:[%s2808 + $0x18] sm:$0xff]
  %v2814 = vsel %vm2363, %v2809, 0
  %v2817 = vsel %vm2363, %v2810, 0
  %v2820 = vsel %vm2363, %v2811, 0
  %v2823 = vsel %vm2363, %v2812, 0
  %2825 = vmatprep.subr.mxu0 %v2793
  %2826 = vmatpush1.msra.mxu0 %v2792
  %2827 = vmatprep.subr.mxu0 %v2797
  %2828 = vmatpush1.msra.mxu0 %v2796
  %2829 = vmatprep.subr.mxu0 %v2801
  %2830 = vmatpush1.msra.mxu0 %v2800
  %2831 = vmatprep.subr.mxu0 %v2805
  %2832 = vmatpush1.msra.mxu0 %v2804
  %2833 = vmatprep.subr.mxu0 0.0
  %2834 = vmatpush1.msra.mxu0 0.0
  %2835 = vmatprep.subr.mxu0 0.0
  %2836 = vmatpush1.msra.mxu0 0.0
  %2837 = vmatprep.subr.mxu0 0.0
  %2838 = vmatpush1.msra.mxu0 0.0
  %2839 = vmatprep.subr.mxu0 0.0
  %2840 = vmatpush1.msra.mxu0 0.0
  %2841 = vmatprep.subr.mxu0 0.0
  %2842 = vmatpush1.msra.mxu0 0.0
  %2843 = vmatprep.subr.mxu0 0.0
  %2844 = vmatpush1.msra.mxu0 0.0
  %2845 = vmatprep.subr.mxu0 0.0
  %2846 = vmatpush1.msra.mxu0 0.0
  %2847 = vmatprep.subr.mxu0 0.0
  %2848 = vmatpush1.msra.mxu0 0.0
  %2849 = vmatprep.subr.mxu0 0.0
  %2850 = vmatpush1.msra.mxu0 0.0
  %2851 = vmatprep.subr.mxu0 0.0
  %2852 = vmatpush1.msra.mxu0 0.0
  %2853 = vmatprep.subr.mxu0 0.0
  %2854 = vmatpush1.msra.mxu0 0.0
  %2855 = vmatprep.subr.mxu0 0.0
  %2856 = vmatpush1.msra.mxu0 0.0
  %2857 = vmatprep.subr.mxu0 0.0
  %2858 = vmatpush1.msra.mxu0 0.0
  %2859 = vmatprep.subr.mxu0 0.0
  %2860 = vmatpush1.msra.mxu0 0.0
  %2861 = vmatprep.subr.mxu0 0.0
  %2862 = vmatpush1.msra.mxu0 0.0
  %2863 = vmatprep.subr.mxu0 0.0
  %2864 = vmatpush1.msra.mxu0 0.0
  %2865 = vmatprep.subr.mxu0 0.0
  %2866 = vmatpush1.msra.mxu0 0.0
  %2867 = vmatprep.subr.mxu0 0.0
  %2868 = vmatpush1.msra.mxu0 0.0
  %2869 = vmatprep.subr.mxu0 0.0
  %2870 = vmatpush1.msra.mxu0 0.0
  %2871 = vmatprep.subr.mxu0 0.0
  %2872 = vmatpush1.msra.mxu0 0.0
  %2873 = vmatprep.subr.mxu0 0.0
  %2874 = vmatpush1.msra.mxu0 0.0
  %2875 = vmatprep.subr.mxu0 0.0
  %2876 = vmatpush1.msra.mxu0 0.0
  %2877 = vmatprep.subr.mxu0 0.0
  %2878 = vmatpush1.msra.mxu0 0.0
  %2879 = vmatprep.subr.mxu0 0.0
  %2880 = vmatpush1.msra.mxu0 0.0
  %2881 = vmatprep.subr.mxu0 0.0
  %2882 = vmatpush1.msra.mxu0 0.0
  %2883 = vmatprep.subr.mxu0 0.0
  %2884 = vmatpush1.msra.mxu0 0.0
  %2885 = vmatprep.subr.mxu0 0.0
  %2886 = vmatpush1.msra.mxu0 0.0
  %2887 = vmatprep.subr.mxu0 0.0
  %2888 = vmatpush1.msra.mxu0 0.0
  %2889 = vmatprep.mubr.f32.mxu0 0.0
  %2890 = vmatmul.mubr.f32.gmra.mrb[0].mxu0 %v2814
  %v2891 = vpop.f32.mrb[0].mxu0
  %v2892 = vadd.f32 0.0, %v2891
  %v2893 = vpop.f32.mrb[0].mxu0
  %v2894 = vadd.f32 0.0, %v2893
  %2895 = vmatprep.mubr.f32.mxu0 0.0
  %2896 = vmatmul.mubr.f32.gmra.mrb[0].mxu0 %v2817
  %v2897 = vpop.f32.mrb[0].mxu0
  %v2898 = vadd.f32 0.0, %v2897
  %v2899 = vpop.f32.mrb[0].mxu0
  %v2900 = vadd.f32 0.0, %v2899
  %2901 = vmatprep.mubr.f32.mxu0 0.0
  %2902 = vmatmul.mubr.f32.gmra.mrb[0].mxu0 %v2820
  %v2903 = vpop.f32.mrb[0].mxu0
  %v2904 = vadd.f32 0.0, %v2903
  %v2905 = vpop.f32.mrb[0].mxu0
  %v2906 = vadd.f32 0.0, %v2905
  %2907 = vmatprep.mubr.f32.mxu0 0.0
  %2908 = vmatmul.mubr.f32.gmra.mrb[0].mxu0 %v2823
  %v2909 = vpop.f32.mrb[0].mxu0
  %v2910 = vadd.f32 0.0, %v2909
  %v2911 = vpop.f32.mrb[0].mxu0
  %v2912 = vadd.f32 0.0, %v2911
  %2913 = vdwg.mxu0
  %2914 = vmatprep.subr.mxu0 %v2795
  %2915 = vmatpush1.msra.mxu0 %v2794
  %2916 = vmatprep.subr.mxu0 %v2799
  %2917 = vmatpush1.msra.mxu0 %v2798
  %2918 = vmatprep.subr.mxu0 %v2803
  %2919 = vmatpush1.msra.mxu0 %v2802
  %2920 = vmatprep.subr.mxu0 %v2807
  %2921 = vmatpush1.msra.mxu0 %v2806
  %2922 = vmatprep.subr.mxu0 0.0
  %2923 = vmatpush1.msra.mxu0 0.0
  %2924 = vmatprep.subr.mxu0 0.0
  %2925 = vmatpush1.msra.mxu0 0.0
  %2926 = vmatprep.subr.mxu0 0.0
  %2927 = vmatpush1.msra.mxu0 0.0
  %2928 = vmatprep.subr.mxu0 0.0
  %2929 = vmatpush1.msra.mxu0 0.0
  %2930 = vmatprep.subr.mxu0 0.0
  %2931 = vmatpush1.msra.mxu0 0.0
  %2932 = vmatprep.subr.mxu0 0.0
  %2933 = vmatpush1.msra.mxu0 0.0
  %2934 = vmatprep.subr.mxu0 0.0
  %2935 = vmatpush1.msra.mxu0 0.0
  %2936 = vmatprep.subr.mxu0 0.0
  %2937 = vmatpush1.msra.mxu0 0.0
  %2938 = vmatprep.subr.mxu0 0.0
  %2939 = vmatpush1.msra.mxu0 0.0
  %2940 = vmatprep.subr.mxu0 0.0
  %2941 = vmatpush1.msra.mxu0 0.0
  %2942 = vmatprep.subr.mxu0 0.0
  %2943 = vmatpush1.msra.mxu0 0.0
  %2944 = vmatprep.subr.mxu0 0.0
  %2945 = vmatpush1.msra.mxu0 0.0
  %2946 = vmatprep.subr.mxu0 0.0
  %2947 = vmatpush1.msra.mxu0 0.0
  %2948 = vmatprep.subr.mxu0 0.0
  %2949 = vmatpush1.msra.mxu0 0.0
  %2950 = vmatprep.subr.mxu0 0.0
  %2951 = vmatpush1.msra.mxu0 0.0
  %2952 = vmatprep.subr.mxu0 0.0
  %2953 = vmatpush1.msra.mxu0 0.0
  %2954 = vmatprep.subr.mxu0 0.0
  %2955 = vmatpush1.msra.mxu0 0.0
  %2956 = vmatprep.subr.mxu0 0.0
  %2957 = vmatpush1.msra.mxu0 0.0
  %2958 = vmatprep.subr.mxu0 0.0
  %2959 = vmatpush1.msra.mxu0 0.0
  %2960 = vmatprep.subr.mxu0 0.0
  %2961 = vmatpush1.msra.mxu0 0.0
  %2962 = vmatprep.subr.mxu0 0.0
  %2963 = vmatpush1.msra.mxu0 0.0
  %2964 = vmatprep.subr.mxu0 0.0
  %2965 = vmatpush1.msra.mxu0 0.0
  %2966 = vmatprep.subr.mxu0 0.0
  %2967 = vmatpush1.msra.mxu0 0.0
  %2968 = vmatprep.subr.mxu0 0.0
  %2969 = vmatpush1.msra.mxu0 0.0
  %2970 = vmatprep.subr.mxu0 0.0
  %2971 = vmatpush1.msra.mxu0 0.0
  %2972 = vmatprep.subr.mxu0 0.0
  %2973 = vmatpush1.msra.mxu0 0.0
  %2974 = vmatprep.subr.mxu0 0.0
  %2975 = vmatpush1.msra.mxu0 0.0
  %2976 = vmatprep.subr.mxu0 0.0
  %2977 = vmatpush1.msra.mxu0 0.0
  %2978 = vmatprep.mubr.f32.mxu0 0.0
  %2979 = vmatmul.mubr.f32.gmra.mrb[0].mxu0 %v2814
  %v2980 = vpop.f32.mrb[0].mxu0
  %v2981 = vadd.f32 0.0, %v2980
  %v2982 = vpop.f32.mrb[0].mxu0
  %v2983 = vadd.f32 0.0, %v2982
  %2984 = vmatprep.mubr.f32.mxu0 0.0
  %2985 = vmatmul.mubr.f32.gmra.mrb[0].mxu0 %v2817
  %v2986 = vpop.f32.mrb[0].mxu0
  %v2987 = vadd.f32 0.0, %v2986
  %v2988 = vpop.f32.mrb[0].mxu0
  %v2989 = vadd.f32 0.0, %v2988
  %2990 = vmatprep.mubr.f32.mxu0 0.0
  %2991 = vmatmul.mubr.f32.gmra.mrb[0].mxu0 %v2820
  %v2992 = vpop.f32.mrb[0].mxu0
  %v2993 = vadd.f32 0.0, %v2992
  %v2994 = vpop.f32.mrb[0].mxu0
  %v2995 = vadd.f32 0.0, %v2994
  %2996 = vmatprep.mubr.f32.mxu0 0.0
  %2997 = vmatmul.mubr.f32.gmra.mrb[0].mxu0 %v2823
  %v2998 = vpop.f32.mrb[0].mxu0
  %v2999 = vadd.f32 0.0, %v2998
  %v3000 = vpop.f32.mrb[0].mxu0
  %v3001 = vadd.f32 0.0, %v3000
  %3002 = vdwg.mxu0
  %v3003 = vadd.f32 %v2633, %v2892
  %v3004 = vadd.f32 %v2635, %v2894
  %v3005 = vadd.f32 %v2722, %v2981
  %v3006 = vadd.f32 %v2724, %v2983
  %v3007 = vadd.f32 %v2639, %v2898
  %v3008 = vadd.f32 %v2641, %v2900
  %v3009 = vadd.f32 %v2728, %v2987
  %v3010 = vadd.f32 %v2730, %v2989
  %v3011 = vadd.f32 %v2645, %v2904
  %v3012 = vadd.f32 %v2647, %v2906
  %v3013 = vadd.f32 %v2734, %v2993
  %v3014 = vadd.f32 %v2736, %v2995
  %v3015 = vadd.f32 %v2651, %v2910
  %v3016 = vadd.f32 %v2653, %v2912
  %v3017 = vadd.f32 %v2740, %v2999
  %v3018 = vadd.f32 %v2742, %v3001
  %3019 = vrot.lane.b32.xlu0 %v2210, 1
  %v3020 = vpop.permute.xlu0 %3019
  %3021 = vrot.lane.b32.xlu0 %v2214, 1
  %v3022 = vpop.permute.xlu0 %3021
  %3023 = vrot.lane.b32.xlu0 %v2218, 1
  %v3024 = vpop.permute.xlu0 %3023
  %3025 = vrot.lane.b32.xlu0 %v2222, 1
  %v3026 = vpop.permute.xlu0 %3025
  %3027 = vrot.lane.b32.xlu0 %v2211, 1
  %v3028 = vpop.permute.xlu0 %3027
  %3029 = vrot.lane.b32.xlu0 %v2215, 1
  %v3030 = vpop.permute.xlu0 %3029
  %3031 = vrot.lane.b32.xlu0 %v2219, 1
  %v3032 = vpop.permute.xlu0 %3031
  %3033 = vrot.lane.b32.xlu0 %v2223, 1
  %v3034 = vpop.permute.xlu0 %3033
  %3035 = vrot.lane.b32.xlu0 %v2212, 1
  %v3036 = vpop.permute.xlu0 %3035
  %3037 = vrot.lane.b32.xlu0 %v2216, 1
  %v3038 = vpop.permute.xlu0 %3037
  %3039 = vrot.lane.b32.xlu0 %v2220, 1
  %v3040 = vpop.permute.xlu0 %3039
  %3041 = vrot.lane.b32.xlu0 %v2224, 1
  %v3042 = vpop.permute.xlu0 %3041
  %3043 = vrot.lane.b32.xlu0 %v2213, 1
  %v3044 = vpop.permute.xlu0 %3043
  %3045 = vrot.lane.b32.xlu0 %v2217, 1
  %v3046 = vpop.permute.xlu0 %3045
  %3047 = vrot.lane.b32.xlu0 %v2221, 1
  %v3048 = vpop.permute.xlu0 %3047
  %3049 = vrot.lane.b32.xlu0 %v2225, 1
  %v3050 = vpop.permute.xlu0 %3049
  %v3051 = vsel %vm775, %v3036, %v3044
  %v3052 = vsel %vm775, %v3038, %v3046
  %v3053 = vsel %vm775, %v3040, %v3048
  %v3054 = vsel %vm775, %v3042, %v3050
  %v3055 = vsel %vm775, %v3028, %v3036
  %v3056 = vsel %vm775, %v3030, %v3038
  %v3057 = vsel %vm775, %v3032, %v3040
  %v3058 = vsel %vm775, %v3034, %v3042
  %v3059 = vsel %vm775, %v3020, %v3028
  %v3060 = vsel %vm775, %v3022, %v3030
  %v3061 = vsel %vm775, %v3024, %v3032
  %v3062 = vsel %vm775, %v3026, %v3034
  %v3063 = vsel %vm775, %v3044, %v3020
  %v3064 = vsel %vm775, %v3046, %v3022
  %v3065 = vsel %vm775, %v3048, %v3024
  %v3066 = vsel %vm775, %v3050, %v3026
  %v3067 = vsel %vm784, %v3063, 0.0
  %v3068 = vsel %vm785, %v3059, 0.0
  %v3069 = vsel %vm786, %v3055, 0.0
  %v3070 = vsel %vm787, %v3051, 0.0
  %v3071 = vsel %vm784, %v3064, 0.0
  %v3072 = vsel %vm785, %v3060, 0.0
  %v3073 = vsel %vm786, %v3056, 0.0
  %v3074 = vsel %vm787, %v3052, 0.0
  %v3075 = vsel %vm784, %v3065, 0.0
  %v3076 = vsel %vm785, %v3061, 0.0
  %v3077 = vsel %vm786, %v3057, 0.0
  %v3078 = vsel %vm787, %v3053, 0.0
  %v3079 = vsel %vm784, %v3066, 0.0
  %v3080 = vsel %vm785, %v3062, 0.0
  %v3081 = vsel %vm786, %v3058, 0.0
  %v3082 = vsel %vm787, %v3054, 0.0
  %s3083 = scalar_lea.vmem %s3, 96
  %v3084 = vld [vmem:[%s3083] sm:$0xff]
  %v3085 = vld [vmem:[%s3083 + $0x8] sm:$0xff]
  %v3086 = vld [vmem:[%s3083 + $0x10] sm:$0xff]
  %v3087 = vld [vmem:[%s3083 + $0x18] sm:$0xff]
  %v3089 = vsel %vm2363, %v3084, 0
  %v3092 = vsel %vm2363, %v3085, 0
  %v3095 = vsel %vm2363, %v3086, 0
  %v3098 = vsel %vm2363, %v3087, 0
  %3100 = vmatprep.subr.mxu0 %v3068
  %3101 = vmatpush1.msra.mxu0 %v3067
  %3102 = vmatprep.subr.mxu0 %v3072
  %3103 = vmatpush1.msra.mxu0 %v3071
  %3104 = vmatprep.subr.mxu0 %v3076
  %3105 = vmatpush1.msra.mxu0 %v3075
  %3106 = vmatprep.subr.mxu0 %v3080
  %3107 = vmatpush1.msra.mxu0 %v3079
  %3108 = vmatprep.subr.mxu0 0.0
  %3109 = vmatpush1.msra.mxu0 0.0
  %3110 = vmatprep.subr.mxu0 0.0
  %3111 = vmatpush1.msra.mxu0 0.0
  %3112 = vmatprep.subr.mxu0 0.0
  %3113 = vmatpush1.msra.mxu0 0.0
  %3114 = vmatprep.subr.mxu0 0.0
  %3115 = vmatpush1.msra.mxu0 0.0
  %3116 = vmatprep.subr.mxu0 0.0
  %3117 = vmatpush1.msra.mxu0 0.0
  %3118 = vmatprep.subr.mxu0 0.0
  %3119 = vmatpush1.msra.mxu0 0.0
  %3120 = vmatprep.subr.mxu0 0.0
  %3121 = vmatpush1.msra.mxu0 0.0
  %3122 = vmatprep.subr.mxu0 0.0
  %3123 = vmatpush1.msra.mxu0 0.0
  %3124 = vmatprep.subr.mxu0 0.0
  %3125 = vmatpush1.msra.mxu0 0.0
  %3126 = vmatprep.subr.mxu0 0.0
  %3127 = vmatpush1.msra.mxu0 0.0
  %3128 = vmatprep.subr.mxu0 0.0
  %3129 = vmatpush1.msra.mxu0 0.0
  %3130 = vmatprep.subr.mxu0 0.0
  %3131 = vmatpush1.msra.mxu0 0.0
  %3132 = vmatprep.subr.mxu0 0.0
  %3133 = vmatpush1.msra.mxu0 0.0
  %3134 = vmatprep.subr.mxu0 0.0
  %3135 = vmatpush1.msra.mxu0 0.0
  %3136 = vmatprep.subr.mxu0 0.0
  %3137 = vmatpush1.msra.mxu0 0.0
  %3138 = vmatprep.subr.mxu0 0.0
  %3139 = vmatpush1.msra.mxu0 0.0
  %3140 = vmatprep.subr.mxu0 0.0
  %3141 = vmatpush1.msra.mxu0 0.0
  %3142 = vmatprep.subr.mxu0 0.0
  %3143 = vmatpush1.msra.mxu0 0.0
  %3144 = vmatprep.subr.mxu0 0.0
  %3145 = vmatpush1.msra.mxu0 0.0
  %3146 = vmatprep.subr.mxu0 0.0
  %3147 = vmatpush1.msra.mxu0 0.0
  %3148 = vmatprep.subr.mxu0 0.0
  %3149 = vmatpush1.msra.mxu0 0.0
  %3150 = vmatprep.subr.mxu0 0.0
  %3151 = vmatpush1.msra.mxu0 0.0
  %3152 = vmatprep.subr.mxu0 0.0
  %3153 = vmatpush1.msra.mxu0 0.0
  %3154 = vmatprep.subr.mxu0 0.0
  %3155 = vmatpush1.msra.mxu0 0.0
  %3156 = vmatprep.subr.mxu0 0.0
  %3157 = vmatpush1.msra.mxu0 0.0
  %3158 = vmatprep.subr.mxu0 0.0
  %3159 = vmatpush1.msra.mxu0 0.0
  %3160 = vmatprep.subr.mxu0 0.0
  %3161 = vmatpush1.msra.mxu0 0.0
  %3162 = vmatprep.subr.mxu0 0.0
  %3163 = vmatpush1.msra.mxu0 0.0
  %3164 = vmatprep.mubr.f32.mxu0 0.0
  %3165 = vmatmul.mubr.f32.gmra.mrb[0].mxu0 %v3089
  %v3166 = vpop.f32.mrb[0].mxu0
  %v3167 = vadd.f32 0.0, %v3166
  %v3168 = vpop.f32.mrb[0].mxu0
  %v3169 = vadd.f32 0.0, %v3168
  %3170 = vmatprep.mubr.f32.mxu0 0.0
  %3171 = vmatmul.mubr.f32.gmra.mrb[0].mxu0 %v3092
  %v3172 = vpop.f32.mrb[0].mxu0
  %v3173 = vadd.f32 0.0, %v3172
  %v3174 = vpop.f32.mrb[0].mxu0
  %v3175 = vadd.f32 0.0, %v3174
  %3176 = vmatprep.mubr.f32.mxu0 0.0
  %3177 = vmatmul.mubr.f32.gmra.mrb[0].mxu0 %v3095
  %v3178 = vpop.f32.mrb[0].mxu0
  %v3179 = vadd.f32 0.0, %v3178
  %v3180 = vpop.f32.mrb[0].mxu0
  %v3181 = vadd.f32 0.0, %v3180
  %3182 = vmatprep.mubr.f32.mxu0 0.0
  %3183 = vmatmul.mubr.f32.gmra.mrb[0].mxu0 %v3098
  %v3184 = vpop.f32.mrb[0].mxu0
  %v3185 = vadd.f32 0.0, %v3184
  %v3186 = vpop.f32.mrb[0].mxu0
  %v3187 = vadd.f32 0.0, %v3186
  %3188 = vdwg.mxu0
  %3189 = vmatprep.subr.mxu0 %v3070
  %3190 = vmatpush1.msra.mxu0 %v3069
  %3191 = vmatprep.subr.mxu0 %v3074
  %3192 = vmatpush1.msra.mxu0 %v3073
  %3193 = vmatprep.subr.mxu0 %v3078
  %3194 = vmatpush1.msra.mxu0 %v3077
  %3195 = vmatprep.subr.mxu0 %v3082
  %3196 = vmatpush1.msra.mxu0 %v3081
  %3197 = vmatprep.subr.mxu0 0.0
  %3198 = vmatpush1.msra.mxu0 0.0
  %3199 = vmatprep.subr.mxu0 0.0
  %3200 = vmatpush1.msra.mxu0 0.0
  %3201 = vmatprep.subr.mxu0 0.0
  %3202 = vmatpush1.msra.mxu0 0.0
  %3203 = vmatprep.subr.mxu0 0.0
  %3204 = vmatpush1.msra.mxu0 0.0
  %3205 = vmatprep.subr.mxu0 0.0
  %3206 = vmatpush1.msra.mxu0 0.0
  %3207 = vmatprep.subr.mxu0 0.0
  %3208 = vmatpush1.msra.mxu0 0.0
  %3209 = vmatprep.subr.mxu0 0.0
  %3210 = vmatpush1.msra.mxu0 0.0
  %3211 = vmatprep.subr.mxu0 0.0
  %3212 = vmatpush1.msra.mxu0 0.0
  %3213 = vmatprep.subr.mxu0 0.0
  %3214 = vmatpush1.msra.mxu0 0.0
  %3215 = vmatprep.subr.mxu0 0.0
  %3216 = vmatpush1.msra.mxu0 0.0
  %3217 = vmatprep.subr.mxu0 0.0
  %3218 = vmatpush1.msra.mxu0 0.0
  %3219 = vmatprep.subr.mxu0 0.0
  %3220 = vmatpush1.msra.mxu0 0.0
  %3221 = vmatprep.subr.mxu0 0.0
  %3222 = vmatpush1.msra.mxu0 0.0
  %3223 = vmatprep.subr.mxu0 0.0
  %3224 = vmatpush1.msra.mxu0 0.0
  %3225 = vmatprep.subr.mxu0 0.0
  %3226 = vmatpush1.msra.mxu0 0.0
  %3227 = vmatprep.subr.mxu0 0.0
  %3228 = vmatpush1.msra.mxu0 0.0
  %3229 = vmatprep.subr.mxu0 0.0
  %3230 = vmatpush1.msra.mxu0 0.0
  %3231 = vmatprep.subr.mxu0 0.0
  %3232 = vmatpush1.msra.mxu0 0.0
  %3233 = vmatprep.subr.mxu0 0.0
  %3234 = vmatpush1.msra.mxu0 0.0
  %3235 = vmatprep.subr.mxu0 0.0
  %3236 = vmatpush1.msra.mxu0 0.0
  %3237 = vmatprep.subr.mxu0 0.0
  %3238 = vmatpush1.msra.mxu0 0.0
  %3239 = vmatprep.subr.mxu0 0.0
  %3240 = vmatpush1.msra.mxu0 0.0
  %3241 = vmatprep.subr.mxu0 0.0
  %3242 = vmatpush1.msra.mxu0 0.0
  %3243 = vmatprep.subr.mxu0 0.0
  %3244 = vmatpush1.msra.mxu0 0.0
  %3245 = vmatprep.subr.mxu0 0.0
  %3246 = vmatpush1.msra.mxu0 0.0
  %3247 = vmatprep.subr.mxu0 0.0
  %3248 = vmatpush1.msra.mxu0 0.0
  %3249 = vmatprep.subr.mxu0 0.0
  %3250 = vmatpush1.msra.mxu0 0.0
  %3251 = vmatprep.subr.mxu0 0.0
  %3252 = vmatpush1.msra.mxu0 0.0
  %3253 = vmatprep.mubr.f32.mxu0 0.0
  %3254 = vmatmul.mubr.f32.gmra.mrb[0].mxu0 %v3089
  %v3255 = vpop.f32.mrb[0].mxu0
  %v3256 = vadd.f32 0.0, %v3255
  %v3257 = vpop.f32.mrb[0].mxu0
  %v3258 = vadd.f32 0.0, %v3257
  %3259 = vmatprep.mubr.f32.mxu0 0.0
  %3260 = vmatmul.mubr.f32.gmra.mrb[0].mxu0 %v3092
  %v3261 = vpop.f32.mrb[0].mxu0
  %v3262 = vadd.f32 0.0, %v3261
  %v3263 = vpop.f32.mrb[0].mxu0
  %v3264 = vadd.f32 0.0, %v3263
  %3265 = vmatprep.mubr.f32.mxu0 0.0
  %3266 = vmatmul.mubr.f32.gmra.mrb[0].mxu0 %v3095
  %v3267 = vpop.f32.mrb[0].mxu0
  %v3268 = vadd.f32 0.0, %v3267
  %v3269 = vpop.f32.mrb[0].mxu0
  %v3270 = vadd.f32 0.0, %v3269
  %3271 = vmatprep.mubr.f32.mxu0 0.0
  %3272 = vmatmul.mubr.f32.gmra.mrb[0].mxu0 %v3098
  %v3273 = vpop.f32.mrb[0].mxu0
  %v3274 = vadd.f32 0.0, %v3273
  %v3275 = vpop.f32.mrb[0].mxu0
  %v3276 = vadd.f32 0.0, %v3275
  %3277 = vdwg.mxu0
  %v3278 = vadd.f32 %v3003, %v3167
  %v3279 = vadd.f32 %v3004, %v3169
  %v3280 = vadd.f32 %v3005, %v3256
  %v3281 = vadd.f32 %v3006, %v3258
  %v3282 = vadd.f32 %v3007, %v3173
  %v3283 = vadd.f32 %v3008, %v3175
  %v3284 = vadd.f32 %v3009, %v3262
  %v3285 = vadd.f32 %v3010, %v3264
  %v3286 = vadd.f32 %v3011, %v3179
  %v3287 = vadd.f32 %v3012, %v3181
  %v3288 = vadd.f32 %v3013, %v3268
  %v3289 = vadd.f32 %v3014, %v3270
  %v3290 = vadd.f32 %v3015, %v3185
  %v3291 = vadd.f32 %v3016, %v3187
  %v3292 = vadd.f32 %v3017, %v3274
  %v3293 = vadd.f32 %v3018, %v3276
  %s3294 = scalar_lea.vmem %s3, 128
  %v3295 = vld [vmem:[%s3294] sm:$0xff]
  %v3296 = vld [vmem:[%s3294 + $0x8] sm:$0xff]
  %v3297 = vld [vmem:[%s3294 + $0x10] sm:$0xff]
  %v3298 = vld [vmem:[%s3294 + $0x18] sm:$0xff]
  %v3300 = vsel %vm2363, %v3295, 0
  %v3303 = vsel %vm2363, %v3296, 0
  %v3306 = vsel %vm2363, %v3297, 0
  %v3309 = vsel %vm2363, %v3298, 0
  %3311 = vmatprep.subr.mxu0 %v2211
  %3312 = vmatpush1.msra.mxu0 %v2210
  %3313 = vmatprep.subr.mxu0 %v2215
  %3314 = vmatpush1.msra.mxu0 %v2214
  %3315 = vmatprep.subr.mxu0 %v2219
  %3316 = vmatpush1.msra.mxu0 %v2218
  %3317 = vmatprep.subr.mxu0 %v2223
  %3318 = vmatpush1.msra.mxu0 %v2222
  %3319 = vmatprep.subr.mxu0 0.0
  %3320 = vmatpush1.msra.mxu0 0.0
  %3321 = vmatprep.subr.mxu0 0.0
  %3322 = vmatpush1.msra.mxu0 0.0
  %3323 = vmatprep.subr.mxu0 0.0
  %3324 = vmatpush1.msra.mxu0 0.0
  %3325 = vmatprep.subr.mxu0 0.0
  %3326 = vmatpush1.msra.mxu0 0.0
  %3327 = vmatprep.subr.mxu0 0.0
  %3328 = vmatpush1.msra.mxu0 0.0
  %3329 = vmatprep.subr.mxu0 0.0
  %3330 = vmatpush1.msra.mxu0 0.0
  %3331 = vmatprep.subr.mxu0 0.0
  %3332 = vmatpush1.msra.mxu0 0.0
  %3333 = vmatprep.subr.mxu0 0.0
  %3334 = vmatpush1.msra.mxu0 0.0
  %3335 = vmatprep.subr.mxu0 0.0
  %3336 = vmatpush1.msra.mxu0 0.0
  %3337 = vmatprep.subr.mxu0 0.0
  %3338 = vmatpush1.msra.mxu0 0.0
  %3339 = vmatprep.subr.mxu0 0.0
  %3340 = vmatpush1.msra.mxu0 0.0
  %3341 = vmatprep.subr.mxu0 0.0
  %3342 = vmatpush1.msra.mxu0 0.0
  %3343 = vmatprep.subr.mxu0 0.0
  %3344 = vmatpush1.msra.mxu0 0.0
  %3345 = vmatprep.subr.mxu0 0.0
  %3346 = vmatpush1.msra.mxu0 0.0
  %3347 = vmatprep.subr.mxu0 0.0
  %3348 = vmatpush1.msra.mxu0 0.0
  %3349 = vmatprep.subr.mxu0 0.0
  %3350 = vmatpush1.msra.mxu0 0.0
  %3351 = vmatprep.subr.mxu0 0.0
  %3352 = vmatpush1.msra.mxu0 0.0
  %3353 = vmatprep.subr.mxu0 0.0
  %3354 = vmatpush1.msra.mxu0 0.0
  %3355 = vmatprep.subr.mxu0 0.0
  %3356 = vmatpush1.msra.mxu0 0.0
  %3357 = vmatprep.subr.mxu0 0.0
  %3358 = vmatpush1.msra.mxu0 0.0
  %3359 = vmatprep.subr.mxu0 0.0
  %3360 = vmatpush1.msra.mxu0 0.0
  %3361 = vmatprep.subr.mxu0 0.0
  %3362 = vmatpush1.msra.mxu0 0.0
  %3363 = vmatprep.subr.mxu0 0.0
  %3364 = vmatpush1.msra.mxu0 0.0
  %3365 = vmatprep.subr.mxu0 0.0
  %3366 = vmatpush1.msra.mxu0 0.0
  %3367 = vmatprep.subr.mxu0 0.0
  %3368 = vmatpush1.msra.mxu0 0.0
  %3369 = vmatprep.subr.mxu0 0.0
  %3370 = vmatpush1.msra.mxu0 0.0
  %3371 = vmatprep.subr.mxu0 0.0
  %3372 = vmatpush1.msra.mxu0 0.0
  %3373 = vmatprep.subr.mxu0 0.0
  %3374 = vmatpush1.msra.mxu0 0.0
  %3375 = vmatprep.mubr.f32.mxu0 0.0
  %3376 = vmatmul.mubr.f32.gmra.mrb[0].mxu0 %v3300
  %v3377 = vpop.f32.mrb[0].mxu0
  %v3378 = vadd.f32 0.0, %v3377
  %v3379 = vpop.f32.mrb[0].mxu0
  %v3380 = vadd.f32 0.0, %v3379
  %3381 = vmatprep.mubr.f32.mxu0 0.0
  %3382 = vmatmul.mubr.f32.gmra.mrb[0].mxu0 %v3303
  %v3383 = vpop.f32.mrb[0].mxu0
  %v3384 = vadd.f32 0.0, %v3383
  %v3385 = vpop.f32.mrb[0].mxu0
  %v3386 = vadd.f32 0.0, %v3385
  %3387 = vmatprep.mubr.f32.mxu0 0.0
  %3388 = vmatmul.mubr.f32.gmra.mrb[0].mxu0 %v3306
  %v3389 = vpop.f32.mrb[0].mxu0
  %v3390 = vadd.f32 0.0, %v3389
  %v3391 = vpop.f32.mrb[0].mxu0
  %v3392 = vadd.f32 0.0, %v3391
  %3393 = vmatprep.mubr.f32.mxu0 0.0
  %3394 = vmatmul.mubr.f32.gmra.mrb[0].mxu0 %v3309
  %v3395 = vpop.f32.mrb[0].mxu0
  %v3396 = vadd.f32 0.0, %v3395
  %v3397 = vpop.f32.mrb[0].mxu0
  %v3398 = vadd.f32 0.0, %v3397
  %3399 = vdwg.mxu0
  %3400 = vmatprep.subr.mxu0 %v2213
  %3401 = vmatpush1.msra.mxu0 %v2212
  %3402 = vmatprep.subr.mxu0 %v2217
  %3403 = vmatpush1.msra.mxu0 %v2216
  %3404 = vmatprep.subr.mxu0 %v2221
  %3405 = vmatpush1.msra.mxu0 %v2220
  %3406 = vmatprep.subr.mxu0 %v2225
  %3407 = vmatpush1.msra.mxu0 %v2224
  %3408 = vmatprep.subr.mxu0 0.0
  %3409 = vmatpush1.msra.mxu0 0.0
  %3410 = vmatprep.subr.mxu0 0.0
  %3411 = vmatpush1.msra.mxu0 0.0
  %3412 = vmatprep.subr.mxu0 0.0
  %3413 = vmatpush1.msra.mxu0 0.0
  %3414 = vmatprep.subr.mxu0 0.0
  %3415 = vmatpush1.msra.mxu0 0.0
  %3416 = vmatprep.subr.mxu0 0.0
  %3417 = vmatpush1.msra.mxu0 0.0
  %3418 = vmatprep.subr.mxu0 0.0
  %3419 = vmatpush1.msra.mxu0 0.0
  %3420 = vmatprep.subr.mxu0 0.0
  %3421 = vmatpush1.msra.mxu0 0.0
  %3422 = vmatprep.subr.mxu0 0.0
  %3423 = vmatpush1.msra.mxu0 0.0
  %3424 = vmatprep.subr.mxu0 0.0
  %3425 = vmatpush1.msra.mxu0 0.0
  %3426 = vmatprep.subr.mxu0 0.0
  %3427 = vmatpush1.msra.mxu0 0.0
  %3428 = vmatprep.subr.mxu0 0.0
  %3429 = vmatpush1.msra.mxu0 0.0
  %3430 = vmatprep.subr.mxu0 0.0
  %3431 = vmatpush1.msra.mxu0 0.0
  %3432 = vmatprep.subr.mxu0 0.0
  %3433 = vmatpush1.msra.mxu0 0.0
  %3434 = vmatprep.subr.mxu0 0.0
  %3435 = vmatpush1.msra.mxu0 0.0
  %3436 = vmatprep.subr.mxu0 0.0
  %3437 = vmatpush1.msra.mxu0 0.0
  %3438 = vmatprep.subr.mxu0 0.0
  %3439 = vmatpush1.msra.mxu0 0.0
  %3440 = vmatprep.subr.mxu0 0.0
  %3441 = vmatpush1.msra.mxu0 0.0
  %3442 = vmatprep.subr.mxu0 0.0
  %3443 = vmatpush1.msra.mxu0 0.0
  %3444 = vmatprep.subr.mxu0 0.0
  %3445 = vmatpush1.msra.mxu0 0.0
  %3446 = vmatprep.subr.mxu0 0.0
  %3447 = vmatpush1.msra.mxu0 0.0
  %3448 = vmatprep.subr.mxu0 0.0
  %3449 = vmatpush1.msra.mxu0 0.0
  %3450 = vmatprep.subr.mxu0 0.0
  %3451 = vmatpush1.msra.mxu0 0.0
  %3452 = vmatprep.subr.mxu0 0.0
  %3453 = vmatpush1.msra.mxu0 0.0
  %3454 = vmatprep.subr.mxu0 0.0
  %3455 = vmatpush1.msra.mxu0 0.0
  %3456 = vmatprep.subr.mxu0 0.0
  %3457 = vmatpush1.msra.mxu0 0.0
  %3458 = vmatprep.subr.mxu0 0.0
  %3459 = vmatpush1.msra.mxu0 0.0
  %3460 = vmatprep.subr.mxu0 0.0
  %3461 = vmatpush1.msra.mxu0 0.0
  %3462 = vmatprep.subr.mxu0 0.0
  %3463 = vmatpush1.msra.mxu0 0.0
  %3464 = vmatprep.mubr.f32.mxu0 0.0
  %3465 = vmatmul.mubr.f32.gmra.mrb[0].mxu0 %v3300
  %v3466 = vpop.f32.mrb[0].mxu0
  %v3467 = vadd.f32 0.0, %v3466
  %v3468 = vpop.f32.mrb[0].mxu0
  %v3469 = vadd.f32 0.0, %v3468
  %3470 = vmatprep.mubr.f32.mxu0 0.0
  %3471 = vmatmul.mubr.f32.gmra.mrb[0].mxu0 %v3303
  %v3472 = vpop.f32.mrb[0].mxu0
  %v3473 = vadd.f32 0.0, %v3472
  %v3474 = vpop.f32.mrb[0].mxu0
  %v3475 = vadd.f32 0.0, %v3474
  %3476 = vmatprep.mubr.f32.mxu0 0.0
  %3477 = vmatmul.mubr.f32.gmra.mrb[0].mxu0 %v3306
  %v3478 = vpop.f32.mrb[0].mxu0
  %v3479 = vadd.f32 0.0, %v3478
  %v3480 = vpop.f32.mrb[0].mxu0
  %v3481 = vadd.f32 0.0, %v3480
  %3482 = vmatprep.mubr.f32.mxu0 0.0
  %3483 = vmatmul.mubr.f32.gmra.mrb[0].mxu0 %v3309
  %v3484 = vpop.f32.mrb[0].mxu0
  %v3485 = vadd.f32 0.0, %v3484
  %v3486 = vpop.f32.mrb[0].mxu0
  %v3487 = vadd.f32 0.0, %v3486
  %3488 = vdwg.mxu0
  %v3489 = vadd.f32 %v3278, %v3378
  %v3490 = vadd.f32 %v3279, %v3380
  %v3491 = vadd.f32 %v3280, %v3467
  %v3492 = vadd.f32 %v3281, %v3469
  %v3493 = vadd.f32 %v3282, %v3384
  %v3494 = vadd.f32 %v3283, %v3386
  %v3495 = vadd.f32 %v3284, %v3473
  %v3496 = vadd.f32 %v3285, %v3475
  %v3497 = vadd.f32 %v3286, %v3390
  %v3498 = vadd.f32 %v3287, %v3392
  %v3499 = vadd.f32 %v3288, %v3479
  %v3500 = vadd.f32 %v3289, %v3481
  %v3501 = vadd.f32 %v3290, %v3396
  %v3502 = vadd.f32 %v3291, %v3398
  %v3503 = vadd.f32 %v3292, %v3485
  %v3504 = vadd.f32 %v3293, %v3487
  %3505 = vrot.lane.b32.xlu0 %v2210, 127
  %v3506 = vpop.permute.xlu0 %3505
  %3507 = vrot.lane.b32.xlu0 %v2214, 127
  %v3508 = vpop.permute.xlu0 %3507
  %3509 = vrot.lane.b32.xlu0 %v2218, 127
  %v3510 = vpop.permute.xlu0 %3509
  %3511 = vrot.lane.b32.xlu0 %v2222, 127
  %v3512 = vpop.permute.xlu0 %3511
  %3513 = vrot.lane.b32.xlu0 %v2211, 127
  %v3514 = vpop.permute.xlu0 %3513
  %3515 = vrot.lane.b32.xlu0 %v2215, 127
  %v3516 = vpop.permute.xlu0 %3515
  %3517 = vrot.lane.b32.xlu0 %v2219, 127
  %v3518 = vpop.permute.xlu0 %3517
  %3519 = vrot.lane.b32.xlu0 %v2223, 127
  %v3520 = vpop.permute.xlu0 %3519
  %3521 = vrot.lane.b32.xlu0 %v2212, 127
  %v3522 = vpop.permute.xlu0 %3521
  %3523 = vrot.lane.b32.xlu0 %v2216, 127
  %v3524 = vpop.permute.xlu0 %3523
  %3525 = vrot.lane.b32.xlu0 %v2220, 127
  %v3526 = vpop.permute.xlu0 %3525
  %3527 = vrot.lane.b32.xlu0 %v2224, 127
  %v3528 = vpop.permute.xlu0 %3527
  %3529 = vrot.lane.b32.xlu0 %v2213, 127
  %v3530 = vpop.permute.xlu0 %3529
  %3531 = vrot.lane.b32.xlu0 %v2217, 127
  %v3532 = vpop.permute.xlu0 %3531
  %3533 = vrot.lane.b32.xlu0 %v2221, 127
  %v3534 = vpop.permute.xlu0 %3533
  %3535 = vrot.lane.b32.xlu0 %v2225, 127
  %v3536 = vpop.permute.xlu0 %3535
  %v3537 = vsel %vm1222, %v3522, %v3530
  %v3538 = vsel %vm1222, %v3524, %v3532
  %v3539 = vsel %vm1222, %v3526, %v3534
  %v3540 = vsel %vm1222, %v3528, %v3536
  %v3541 = vsel %vm1222, %v3514, %v3522
  %v3542 = vsel %vm1222, %v3516, %v3524
  %v3543 = vsel %vm1222, %v3518, %v3526
  %v3544 = vsel %vm1222, %v3520, %v3528
  %v3545 = vsel %vm1222, %v3506, %v3514
  %v3546 = vsel %vm1222, %v3508, %v3516
  %v3547 = vsel %vm1222, %v3510, %v3518
  %v3548 = vsel %vm1222, %v3512, %v3520
  %v3549 = vsel %vm1222, %v3530, %v3506
  %v3550 = vsel %vm1222, %v3532, %v3508
  %v3551 = vsel %vm1222, %v3534, %v3510
  %v3552 = vsel %vm1222, %v3536, %v3512
  %v3553 = vsel %vm1231, %v3545, 0.0
  %v3554 = vsel %vm1232, %v3541, 0.0
  %v3555 = vsel %vm1233, %v3537, 0.0
  %v3556 = vsel %vm1234, %v3549, 0.0
  %v3557 = vsel %vm1231, %v3546, 0.0
  %v3558 = vsel %vm1232, %v3542, 0.0
  %v3559 = vsel %vm1233, %v3538, 0.0
  %v3560 = vsel %vm1234, %v3550, 0.0
  %v3561 = vsel %vm1231, %v3547, 0.0
  %v3562 = vsel %vm1232, %v3543, 0.0
  %v3563 = vsel %vm1233, %v3539, 0.0
  %v3564 = vsel %vm1234, %v3551, 0.0
  %v3565 = vsel %vm1231, %v3548, 0.0
  %v3566 = vsel %vm1232, %v3544, 0.0
  %v3567 = vsel %vm1233, %v3540, 0.0
  %v3568 = vsel %vm1234, %v3552, 0.0
  %s3569 = scalar_lea.vmem %s3, 160
  %v3570 = vld [vmem:[%s3569] sm:$0xff]
  %v3571 = vld [vmem:[%s3569 + $0x8] sm:$0xff]
  %v3572 = vld [vmem:[%s3569 + $0x10] sm:$0xff]
  %v3573 = vld [vmem:[%s3569 + $0x18] sm:$0xff]
  %v3575 = vsel %vm2363, %v3570, 0
  %v3578 = vsel %vm2363, %v3571, 0
  %v3581 = vsel %vm2363, %v3572, 0
  %v3584 = vsel %vm2363, %v3573, 0
  %3586 = vmatprep.subr.mxu0 %v3554
  %3587 = vmatpush1.msra.mxu0 %v3553
  %3588 = vmatprep.subr.mxu0 %v3558
  %3589 = vmatpush1.msra.mxu0 %v3557
  %3590 = vmatprep.subr.mxu0 %v3562
  %3591 = vmatpush1.msra.mxu0 %v3561
  %3592 = vmatprep.subr.mxu0 %v3566
  %3593 = vmatpush1.msra.mxu0 %v3565
  %3594 = vmatprep.subr.mxu0 0.0
  %3595 = vmatpush1.msra.mxu0 0.0
  %3596 = vmatprep.subr.mxu0 0.0
  %3597 = vmatpush1.msra.mxu0 0.0
  %3598 = vmatprep.subr.mxu0 0.0
  %3599 = vmatpush1.msra.mxu0 0.0
  %3600 = vmatprep.subr.mxu0 0.0
  %3601 = vmatpush1.msra.mxu0 0.0
  %3602 = vmatprep.subr.mxu0 0.0
  %3603 = vmatpush1.msra.mxu0 0.0
  %3604 = vmatprep.subr.mxu0 0.0
  %3605 = vmatpush1.msra.mxu0 0.0
  %3606 = vmatprep.subr.mxu0 0.0
  %3607 = vmatpush1.msra.mxu0 0.0
  %3608 = vmatprep.subr.mxu0 0.0
  %3609 = vmatpush1.msra.mxu0 0.0
  %3610 = vmatprep.subr.mxu0 0.0
  %3611 = vmatpush1.msra.mxu0 0.0
  %3612 = vmatprep.subr.mxu0 0.0
  %3613 = vmatpush1.msra.mxu0 0.0
  %3614 = vmatprep.subr.mxu0 0.0
  %3615 = vmatpush1.msra.mxu0 0.0
  %3616 = vmatprep.subr.mxu0 0.0
  %3617 = vmatpush1.msra.mxu0 0.0
  %3618 = vmatprep.subr.mxu0 0.0
  %3619 = vmatpush1.msra.mxu0 0.0
  %3620 = vmatprep.subr.mxu0 0.0
  %3621 = vmatpush1.msra.mxu0 0.0
  %3622 = vmatprep.subr.mxu0 0.0
  %3623 = vmatpush1.msra.mxu0 0.0
  %3624 = vmatprep.subr.mxu0 0.0
  %3625 = vmatpush1.msra.mxu0 0.0
  %3626 = vmatprep.subr.mxu0 0.0
  %3627 = vmatpush1.msra.mxu0 0.0
  %3628 = vmatprep.subr.mxu0 0.0
  %3629 = vmatpush1.msra.mxu0 0.0
  %3630 = vmatprep.subr.mxu0 0.0
  %3631 = vmatpush1.msra.mxu0 0.0
  %3632 = vmatprep.subr.mxu0 0.0
  %3633 = vmatpush1.msra.mxu0 0.0
  %3634 = vmatprep.subr.mxu0 0.0
  %3635 = vmatpush1.msra.mxu0 0.0
  %3636 = vmatprep.subr.mxu0 0.0
  %3637 = vmatpush1.msra.mxu0 0.0
  %3638 = vmatprep.subr.mxu0 0.0
  %3639 = vmatpush1.msra.mxu0 0.0
  %3640 = vmatprep.subr.mxu0 0.0
  %3641 = vmatpush1.msra.mxu0 0.0
  %3642 = vmatprep.subr.mxu0 0.0
  %3643 = vmatpush1.msra.mxu0 0.0
  %3644 = vmatprep.subr.mxu0 0.0
  %3645 = vmatpush1.msra.mxu0 0.0
  %3646 = vmatprep.subr.mxu0 0.0
  %3647 = vmatpush1.msra.mxu0 0.0
  %3648 = vmatprep.subr.mxu0 0.0
  %3649 = vmatpush1.msra.mxu0 0.0
  %3650 = vmatprep.mubr.f32.mxu0 0.0
  %3651 = vmatmul.mubr.f32.gmra.mrb[0].mxu0 %v3575
  %v3652 = vpop.f32.mrb[0].mxu0
  %v3653 = vadd.f32 0.0, %v3652
  %v3654 = vpop.f32.mrb[0].mxu0
  %v3655 = vadd.f32 0.0, %v3654
  %3656 = vmatprep.mubr.f32.mxu0 0.0
  %3657 = vmatmul.mubr.f32.gmra.mrb[0].mxu0 %v3578
  %v3658 = vpop.f32.mrb[0].mxu0
  %v3659 = vadd.f32 0.0, %v3658
  %v3660 = vpop.f32.mrb[0].mxu0
  %v3661 = vadd.f32 0.0, %v3660
  %3662 = vmatprep.mubr.f32.mxu0 0.0
  %3663 = vmatmul.mubr.f32.gmra.mrb[0].mxu0 %v3581
  %v3664 = vpop.f32.mrb[0].mxu0
  %v3665 = vadd.f32 0.0, %v3664
  %v3666 = vpop.f32.mrb[0].mxu0
  %v3667 = vadd.f32 0.0, %v3666
  %3668 = vmatprep.mubr.f32.mxu0 0.0
  %3669 = vmatmul.mubr.f32.gmra.mrb[0].mxu0 %v3584
  %v3670 = vpop.f32.mrb[0].mxu0
  %v3671 = vadd.f32 0.0, %v3670
  %v3672 = vpop.f32.mrb[0].mxu0
  %v3673 = vadd.f32 0.0, %v3672
  %3674 = vdwg.mxu0
  %3675 = vmatprep.subr.mxu0 %v3556
  %3676 = vmatpush1.msra.mxu0 %v3555
  %3677 = vmatprep.subr.mxu0 %v3560
  %3678 = vmatpush1.msra.mxu0 %v3559
  %3679 = vmatprep.subr.mxu0 %v3564
  %3680 = vmatpush1.msra.mxu0 %v3563
  %3681 = vmatprep.subr.mxu0 %v3568
  %3682 = vmatpush1.msra.mxu0 %v3567
  %3683 = vmatprep.subr.mxu0 0.0
  %3684 = vmatpush1.msra.mxu0 0.0
  %3685 = vmatprep.subr.mxu0 0.0
  %3686 = vmatpush1.msra.mxu0 0.0
  %3687 = vmatprep.subr.mxu0 0.0
  %3688 = vmatpush1.msra.mxu0 0.0
  %3689 = vmatprep.subr.mxu0 0.0
  %3690 = vmatpush1.msra.mxu0 0.0
  %3691 = vmatprep.subr.mxu0 0.0
  %3692 = vmatpush1.msra.mxu0 0.0
  %3693 = vmatprep.subr.mxu0 0.0
  %3694 = vmatpush1.msra.mxu0 0.0
  %3695 = vmatprep.subr.mxu0 0.0
  %3696 = vmatpush1.msra.mxu0 0.0
  %3697 = vmatprep.subr.mxu0 0.0
  %3698 = vmatpush1.msra.mxu0 0.0
  %3699 = vmatprep.subr.mxu0 0.0
  %3700 = vmatpush1.msra.mxu0 0.0
  %3701 = vmatprep.subr.mxu0 0.0
  %3702 = vmatpush1.msra.mxu0 0.0
  %3703 = vmatprep.subr.mxu0 0.0
  %3704 = vmatpush1.msra.mxu0 0.0
  %3705 = vmatprep.subr.mxu0 0.0
  %3706 = vmatpush1.msra.mxu0 0.0
  %3707 = vmatprep.subr.mxu0 0.0
  %3708 = vmatpush1.msra.mxu0 0.0
  %3709 = vmatprep.subr.mxu0 0.0
  %3710 = vmatpush1.msra.mxu0 0.0
  %3711 = vmatprep.subr.mxu0 0.0
  %3712 = vmatpush1.msra.mxu0 0.0
  %3713 = vmatprep.subr.mxu0 0.0
  %3714 = vmatpush1.msra.mxu0 0.0
  %3715 = vmatprep.subr.mxu0 0.0
  %3716 = vmatpush1.msra.mxu0 0.0
  %3717 = vmatprep.subr.mxu0 0.0
  %3718 = vmatpush1.msra.mxu0 0.0
  %3719 = vmatprep.subr.mxu0 0.0
  %3720 = vmatpush1.msra.mxu0 0.0
  %3721 = vmatprep.subr.mxu0 0.0
  %3722 = vmatpush1.msra.mxu0 0.0
  %3723 = vmatprep.subr.mxu0 0.0
  %3724 = vmatpush1.msra.mxu0 0.0
  %3725 = vmatprep.subr.mxu0 0.0
  %3726 = vmatpush1.msra.mxu0 0.0
  %3727 = vmatprep.subr.mxu0 0.0
  %3728 = vmatpush1.msra.mxu0 0.0
  %3729 = vmatprep.subr.mxu0 0.0
  %3730 = vmatpush1.msra.mxu0 0.0
  %3731 = vmatprep.subr.mxu0 0.0
  %3732 = vmatpush1.msra.mxu0 0.0
  %3733 = vmatprep.subr.mxu0 0.0
  %3734 = vmatpush1.msra.mxu0 0.0
  %3735 = vmatprep.subr.mxu0 0.0
  %3736 = vmatpush1.msra.mxu0 0.0
  %3737 = vmatprep.subr.mxu0 0.0
  %3738 = vmatpush1.msra.mxu0 0.0
  %3739 = vmatprep.mubr.f32.mxu0 0.0
  %3740 = vmatmul.mubr.f32.gmra.mrb[0].mxu0 %v3575
  %v3741 = vpop.f32.mrb[0].mxu0
  %v3742 = vadd.f32 0.0, %v3741
  %v3743 = vpop.f32.mrb[0].mxu0
  %v3744 = vadd.f32 0.0, %v3743
  %3745 = vmatprep.mubr.f32.mxu0 0.0
  %3746 = vmatmul.mubr.f32.gmra.mrb[0].mxu0 %v3578
  %v3747 = vpop.f32.mrb[0].mxu0
  %v3748 = vadd.f32 0.0, %v3747
  %v3749 = vpop.f32.mrb[0].mxu0
  %v3750 = vadd.f32 0.0, %v3749
  %3751 = vmatprep.mubr.f32.mxu0 0.0
  %3752 = vmatmul.mubr.f32.gmra.mrb[0].mxu0 %v3581
  %v3753 = vpop.f32.mrb[0].mxu0
  %v3754 = vadd.f32 0.0, %v3753
  %v3755 = vpop.f32.mrb[0].mxu0
  %v3756 = vadd.f32 0.0, %v3755
  %3757 = vmatprep.mubr.f32.mxu0 0.0
  %3758 = vmatmul.mubr.f32.gmra.mrb[0].mxu0 %v3584
  %v3759 = vpop.f32.mrb[0].mxu0
  %v3760 = vadd.f32 0.0, %v3759
  %v3761 = vpop.f32.mrb[0].mxu0
  %v3762 = vadd.f32 0.0, %v3761
  %3763 = vdwg.mxu0
  %v3764 = vadd.f32 %v3489, %v3653
  %v3765 = vadd.f32 %v3490, %v3655
  %v3766 = vadd.f32 %v3491, %v3742
  %v3767 = vadd.f32 %v3492, %v3744
  %v3768 = vadd.f32 %v3493, %v3659
  %v3769 = vadd.f32 %v3494, %v3661
  %v3770 = vadd.f32 %v3495, %v3748
  %v3771 = vadd.f32 %v3496, %v3750
  %v3772 = vadd.f32 %v3497, %v3665
  %v3773 = vadd.f32 %v3498, %v3667
  %v3774 = vadd.f32 %v3499, %v3754
  %v3775 = vadd.f32 %v3500, %v3756
  %v3776 = vadd.f32 %v3501, %v3671
  %v3777 = vadd.f32 %v3502, %v3673
  %v3778 = vadd.f32 %v3503, %v3760
  %v3779 = vadd.f32 %v3504, %v3762
  %3780 = vrot.lane.b32.xlu0 %v2210, 113
  %v3781 = vpop.permute.xlu0 %3780
  %3782 = vrot.lane.b32.xlu0 %v2214, 113
  %v3783 = vpop.permute.xlu0 %3782
  %3784 = vrot.lane.b32.xlu0 %v2218, 113
  %v3785 = vpop.permute.xlu0 %3784
  %3786 = vrot.lane.b32.xlu0 %v2222, 113
  %v3787 = vpop.permute.xlu0 %3786
  %3788 = vrot.lane.b32.xlu0 %v2211, 113
  %v3789 = vpop.permute.xlu0 %3788
  %3790 = vrot.lane.b32.xlu0 %v2215, 113
  %v3791 = vpop.permute.xlu0 %3790
  %3792 = vrot.lane.b32.xlu0 %v2219, 113
  %v3793 = vpop.permute.xlu0 %3792
  %3794 = vrot.lane.b32.xlu0 %v2223, 113
  %v3795 = vpop.permute.xlu0 %3794
  %3796 = vrot.lane.b32.xlu0 %v2212, 113
  %v3797 = vpop.permute.xlu0 %3796
  %3798 = vrot.lane.b32.xlu0 %v2216, 113
  %v3799 = vpop.permute.xlu0 %3798
  %3800 = vrot.lane.b32.xlu0 %v2220, 113
  %v3801 = vpop.permute.xlu0 %3800
  %3802 = vrot.lane.b32.xlu0 %v2224, 113
  %v3803 = vpop.permute.xlu0 %3802
  %3804 = vrot.lane.b32.xlu0 %v2213, 113
  %v3805 = vpop.permute.xlu0 %3804
  %3806 = vrot.lane.b32.xlu0 %v2217, 113
  %v3807 = vpop.permute.xlu0 %3806
  %3808 = vrot.lane.b32.xlu0 %v2221, 113
  %v3809 = vpop.permute.xlu0 %3808
  %3810 = vrot.lane.b32.xlu0 %v2225, 113
  %v3811 = vpop.permute.xlu0 %3810
  %v3812 = vsel %vm1458, %v3797, %v3805
  %v3813 = vsel %vm1458, %v3799, %v3807
  %v3814 = vsel %vm1458, %v3801, %v3809
  %v3815 = vsel %vm1458, %v3803, %v3811
  %v3816 = vsel %vm1458, %v3789, %v3797
  %v3817 = vsel %vm1458, %v3791, %v3799
  %v3818 = vsel %vm1458, %v3793, %v3801
  %v3819 = vsel %vm1458, %v3795, %v3803
  %v3820 = vsel %vm1458, %v3781, %v3789
  %v3821 = vsel %vm1458, %v3783, %v3791
  %v3822 = vsel %vm1458, %v3785, %v3793
  %v3823 = vsel %vm1458, %v3787, %v3795
  %v3824 = vsel %vm1458, %v3805, %v3781
  %v3825 = vsel %vm1458, %v3807, %v3783
  %v3826 = vsel %vm1458, %v3809, %v3785
  %v3827 = vsel %vm1458, %v3811, %v3787
  %v3828 = vsel %vm1475, %v3820, 0.0
  %v3829 = vsel %vm1476, %v3816, 0.0
  %v3830 = vsel %vm1477, %v3812, 0.0
  %v3831 = vsel %vm1478, %v3824, 0.0
  %v3832 = vsel %vm1475, %v3821, 0.0
  %v3833 = vsel %vm1476, %v3817, 0.0
  %v3834 = vsel %vm1477, %v3813, 0.0
  %v3835 = vsel %vm1478, %v3825, 0.0
  %v3836 = vsel %vm1475, %v3822, 0.0
  %v3837 = vsel %vm1476, %v3818, 0.0
  %v3838 = vsel %vm1477, %v3814, 0.0
  %v3839 = vsel %vm1478, %v3826, 0.0
  %v3840 = vsel %vm1475, %v3823, 0.0
  %v3841 = vsel %vm1476, %v3819, 0.0
  %v3842 = vsel %vm1477, %v3815, 0.0
  %v3843 = vsel %vm1478, %v3827, 0.0
  %s3844 = scalar_lea.vmem %s3, 192
  %v3845 = vld [vmem:[%s3844] sm:$0xff]
  %v3846 = vld [vmem:[%s3844 + $0x8] sm:$0xff]
  %v3847 = vld [vmem:[%s3844 + $0x10] sm:$0xff]
  %v3848 = vld [vmem:[%s3844 + $0x18] sm:$0xff]
  %v3850 = vsel %vm2363, %v3845, 0
  %v3853 = vsel %vm2363, %v3846, 0
  %v3856 = vsel %vm2363, %v3847, 0
  %v3859 = vsel %vm2363, %v3848, 0
  %3861 = vmatprep.subr.mxu0 %v3829
  %3862 = vmatpush1.msra.mxu0 %v3828
  %3863 = vmatprep.subr.mxu0 %v3833
  %3864 = vmatpush1.msra.mxu0 %v3832
  %3865 = vmatprep.subr.mxu0 %v3837
  %3866 = vmatpush1.msra.mxu0 %v3836
  %3867 = vmatprep.subr.mxu0 %v3841
  %3868 = vmatpush1.msra.mxu0 %v3840
  %3869 = vmatprep.subr.mxu0 0.0
  %3870 = vmatpush1.msra.mxu0 0.0
  %3871 = vmatprep.subr.mxu0 0.0
  %3872 = vmatpush1.msra.mxu0 0.0
  %3873 = vmatprep.subr.mxu0 0.0
  %3874 = vmatpush1.msra.mxu0 0.0
  %3875 = vmatprep.subr.mxu0 0.0
  %3876 = vmatpush1.msra.mxu0 0.0
  %3877 = vmatprep.subr.mxu0 0.0
  %3878 = vmatpush1.msra.mxu0 0.0
  %3879 = vmatprep.subr.mxu0 0.0
  %3880 = vmatpush1.msra.mxu0 0.0
  %3881 = vmatprep.subr.mxu0 0.0
  %3882 = vmatpush1.msra.mxu0 0.0
  %3883 = vmatprep.subr.mxu0 0.0
  %3884 = vmatpush1.msra.mxu0 0.0
  %3885 = vmatprep.subr.mxu0 0.0
  %3886 = vmatpush1.msra.mxu0 0.0
  %3887 = vmatprep.subr.mxu0 0.0
  %3888 = vmatpush1.msra.mxu0 0.0
  %3889 = vmatprep.subr.mxu0 0.0
  %3890 = vmatpush1.msra.mxu0 0.0
  %3891 = vmatprep.subr.mxu0 0.0
  %3892 = vmatpush1.msra.mxu0 0.0
  %3893 = vmatprep.subr.mxu0 0.0
  %3894 = vmatpush1.msra.mxu0 0.0
  %3895 = vmatprep.subr.mxu0 0.0
  %3896 = vmatpush1.msra.mxu0 0.0
  %3897 = vmatprep.subr.mxu0 0.0
  %3898 = vmatpush1.msra.mxu0 0.0
  %3899 = vmatprep.subr.mxu0 0.0
  %3900 = vmatpush1.msra.mxu0 0.0
  %3901 = vmatprep.subr.mxu0 0.0
  %3902 = vmatpush1.msra.mxu0 0.0
  %3903 = vmatprep.subr.mxu0 0.0
  %3904 = vmatpush1.msra.mxu0 0.0
  %3905 = vmatprep.subr.mxu0 0.0
  %3906 = vmatpush1.msra.mxu0 0.0
  %3907 = vmatprep.subr.mxu0 0.0
  %3908 = vmatpush1.msra.mxu0 0.0
  %3909 = vmatprep.subr.mxu0 0.0
  %3910 = vmatpush1.msra.mxu0 0.0
  %3911 = vmatprep.subr.mxu0 0.0
  %3912 = vmatpush1.msra.mxu0 0.0
  %3913 = vmatprep.subr.mxu0 0.0
  %3914 = vmatpush1.msra.mxu0 0.0
  %3915 = vmatprep.subr.mxu0 0.0
  %3916 = vmatpush1.msra.mxu0 0.0
  %3917 = vmatprep.subr.mxu0 0.0
  %3918 = vmatpush1.msra.mxu0 0.0
  %3919 = vmatprep.subr.mxu0 0.0
  %3920 = vmatpush1.msra.mxu0 0.0
  %3921 = vmatprep.subr.mxu0 0.0
  %3922 = vmatpush1.msra.mxu0 0.0
  %3923 = vmatprep.subr.mxu0 0.0
  %3924 = vmatpush1.msra.mxu0 0.0
  %3925 = vmatprep.mubr.f32.mxu0 0.0
  %3926 = vmatmul.mubr.f32.gmra.mrb[0].mxu0 %v3850
  %v3927 = vpop.f32.mrb[0].mxu0
  %v3928 = vadd.f32 0.0, %v3927
  %v3929 = vpop.f32.mrb[0].mxu0
  %v3930 = vadd.f32 0.0, %v3929
  %3931 = vmatprep.mubr.f32.mxu0 0.0
  %3932 = vmatmul.mubr.f32.gmra.mrb[0].mxu0 %v3853
  %v3933 = vpop.f32.mrb[0].mxu0
  %v3934 = vadd.f32 0.0, %v3933
  %v3935 = vpop.f32.mrb[0].mxu0
  %v3936 = vadd.f32 0.0, %v3935
  %3937 = vmatprep.mubr.f32.mxu0 0.0
  %3938 = vmatmul.mubr.f32.gmra.mrb[0].mxu0 %v3856
  %v3939 = vpop.f32.mrb[0].mxu0
  %v3940 = vadd.f32 0.0, %v3939
  %v3941 = vpop.f32.mrb[0].mxu0
  %v3942 = vadd.f32 0.0, %v3941
  %3943 = vmatprep.mubr.f32.mxu0 0.0
  %3944 = vmatmul.mubr.f32.gmra.mrb[0].mxu0 %v3859
  %v3945 = vpop.f32.mrb[0].mxu0
  %v3946 = vadd.f32 0.0, %v3945
  %v3947 = vpop.f32.mrb[0].mxu0
  %v3948 = vadd.f32 0.0, %v3947
  %3949 = vdwg.mxu0
  %3950 = vmatprep.subr.mxu0 %v3831
  %3951 = vmatpush1.msra.mxu0 %v3830
  %3952 = vmatprep.subr.mxu0 %v3835
  %3953 = vmatpush1.msra.mxu0 %v3834
  %3954 = vmatprep.subr.mxu0 %v3839
  %3955 = vmatpush1.msra.mxu0 %v3838
  %3956 = vmatprep.subr.mxu0 %v3843
  %3957 = vmatpush1.msra.mxu0 %v3842
  %3958 = vmatprep.subr.mxu0 0.0
  %3959 = vmatpush1.msra.mxu0 0.0
  %3960 = vmatprep.subr.mxu0 0.0
  %3961 = vmatpush1.msra.mxu0 0.0
  %3962 = vmatprep.subr.mxu0 0.0
  %3963 = vmatpush1.msra.mxu0 0.0
  %3964 = vmatprep.subr.mxu0 0.0
  %3965 = vmatpush1.msra.mxu0 0.0
  %3966 = vmatprep.subr.mxu0 0.0
  %3967 = vmatpush1.msra.mxu0 0.0
  %3968 = vmatprep.subr.mxu0 0.0
  %3969 = vmatpush1.msra.mxu0 0.0
  %3970 = vmatprep.subr.mxu0 0.0
  %3971 = vmatpush1.msra.mxu0 0.0
  %3972 = vmatprep.subr.mxu0 0.0
  %3973 = vmatpush1.msra.mxu0 0.0
  %3974 = vmatprep.subr.mxu0 0.0
  %3975 = vmatpush1.msra.mxu0 0.0
  %3976 = vmatprep.subr.mxu0 0.0
  %3977 = vmatpush1.msra.mxu0 0.0
  %3978 = vmatprep.subr.mxu0 0.0
  %3979 = vmatpush1.msra.mxu0 0.0
  %3980 = vmatprep.subr.mxu0 0.0
  %3981 = vmatpush1.msra.mxu0 0.0
  %3982 = vmatprep.subr.mxu0 0.0
  %3983 = vmatpush1.msra.mxu0 0.0
  %3984 = vmatprep.subr.mxu0 0.0
  %3985 = vmatpush1.msra.mxu0 0.0
  %3986 = vmatprep.subr.mxu0 0.0
  %3987 = vmatpush1.msra.mxu0 0.0
  %3988 = vmatprep.subr.mxu0 0.0
  %3989 = vmatpush1.msra.mxu0 0.0
  %3990 = vmatprep.subr.mxu0 0.0
  %3991 = vmatpush1.msra.mxu0 0.0
  %3992 = vmatprep.subr.mxu0 0.0
  %3993 = vmatpush1.msra.mxu0 0.0
  %3994 = vmatprep.subr.mxu0 0.0
  %3995 = vmatpush1.msra.mxu0 0.0
  %3996 = vmatprep.subr.mxu0 0.0
  %3997 = vmatpush1.msra.mxu0 0.0
  %3998 = vmatprep.subr.mxu0 0.0
  %3999 = vmatpush1.msra.mxu0 0.0
  %4000 = vmatprep.subr.mxu0 0.0
  %4001 = vmatpush1.msra.mxu0 0.0
  %4002 = vmatprep.subr.mxu0 0.0
  %4003 = vmatpush1.msra.mxu0 0.0
  %4004 = vmatprep.subr.mxu0 0.0
  %4005 = vmatpush1.msra.mxu0 0.0
  %4006 = vmatprep.subr.mxu0 0.0
  %4007 = vmatpush1.msra.mxu0 0.0
  %4008 = vmatprep.subr.mxu0 0.0
  %4009 = vmatpush1.msra.mxu0 0.0
  %4010 = vmatprep.subr.mxu0 0.0
  %4011 = vmatpush1.msra.mxu0 0.0
  %4012 = vmatprep.subr.mxu0 0.0
  %4013 = vmatpush1.msra.mxu0 0.0
  %4014 = vmatprep.mubr.f32.mxu0 0.0
  %4015 = vmatmul.mubr.f32.gmra.mrb[0].mxu0 %v3850
  %v4016 = vpop.f32.mrb[0].mxu0
  %v4017 = vadd.f32 0.0, %v4016
  %v4018 = vpop.f32.mrb[0].mxu0
  %v4019 = vadd.f32 0.0, %v4018
  %4020 = vmatprep.mubr.f32.mxu0 0.0
  %4021 = vmatmul.mubr.f32.gmra.mrb[0].mxu0 %v3853
  %v4022 = vpop.f32.mrb[0].mxu0
  %v4023 = vadd.f32 0.0, %v4022
  %v4024 = vpop.f32.mrb[0].mxu0
  %v4025 = vadd.f32 0.0, %v4024
  %4026 = vmatprep.mubr.f32.mxu0 0.0
  %4027 = vmatmul.mubr.f32.gmra.mrb[0].mxu0 %v3856
  %v4028 = vpop.f32.mrb[0].mxu0
  %v4029 = vadd.f32 0.0, %v4028
  %v4030 = vpop.f32.mrb[0].mxu0
  %v4031 = vadd.f32 0.0, %v4030
  %4032 = vmatprep.mubr.f32.mxu0 0.0
  %4033 = vmatmul.mubr.f32.gmra.mrb[0].mxu0 %v3859
  %v4034 = vpop.f32.mrb[0].mxu0
  %v4035 = vadd.f32 0.0, %v4034
  %v4036 = vpop.f32.mrb[0].mxu0
  %v4037 = vadd.f32 0.0, %v4036
  %4038 = vdwg.mxu0
  %v4039 = vadd.f32 %v3764, %v3928
  %v4040 = vadd.f32 %v3765, %v3930
  %v4041 = vadd.f32 %v3766, %v4017
  %v4042 = vadd.f32 %v3767, %v4019
  %v4043 = vadd.f32 %v3768, %v3934
  %v4044 = vadd.f32 %v3769, %v3936
  %v4045 = vadd.f32 %v3770, %v4023
  %v4046 = vadd.f32 %v3771, %v4025
  %v4047 = vadd.f32 %v3772, %v3940
  %v4048 = vadd.f32 %v3773, %v3942
  %v4049 = vadd.f32 %v3774, %v4029
  %v4050 = vadd.f32 %v3775, %v4031
  %v4051 = vadd.f32 %v3776, %v3946
  %v4052 = vadd.f32 %v3777, %v3948
  %v4053 = vadd.f32 %v3778, %v4035
  %v4054 = vadd.f32 %v3779, %v4037
  %4055 = vrot.lane.b32.xlu0 %v2210, 112
  %v4056 = vpop.permute.xlu0 %4055
  %4057 = vrot.lane.b32.xlu0 %v2214, 112
  %v4058 = vpop.permute.xlu0 %4057
  %4059 = vrot.lane.b32.xlu0 %v2218, 112
  %v4060 = vpop.permute.xlu0 %4059
  %4061 = vrot.lane.b32.xlu0 %v2222, 112
  %v4062 = vpop.permute.xlu0 %4061
  %4063 = vrot.lane.b32.xlu0 %v2211, 112
  %v4064 = vpop.permute.xlu0 %4063
  %4065 = vrot.lane.b32.xlu0 %v2215, 112
  %v4066 = vpop.permute.xlu0 %4065
  %4067 = vrot.lane.b32.xlu0 %v2219, 112
  %v4068 = vpop.permute.xlu0 %4067
  %4069 = vrot.lane.b32.xlu0 %v2223, 112
  %v4070 = vpop.permute.xlu0 %4069
  %4071 = vrot.lane.b32.xlu0 %v2212, 112
  %v4072 = vpop.permute.xlu0 %4071
  %4073 = vrot.lane.b32.xlu0 %v2216, 112
  %v4074 = vpop.permute.xlu0 %4073
  %4075 = vrot.lane.b32.xlu0 %v2220, 112
  %v4076 = vpop.permute.xlu0 %4075
  %4077 = vrot.lane.b32.xlu0 %v2224, 112
  %v4078 = vpop.permute.xlu0 %4077
  %4079 = vrot.lane.b32.xlu0 %v2213, 112
  %v4080 = vpop.permute.xlu0 %4079
  %4081 = vrot.lane.b32.xlu0 %v2217, 112
  %v4082 = vpop.permute.xlu0 %4081
  %4083 = vrot.lane.b32.xlu0 %v2221, 112
  %v4084 = vpop.permute.xlu0 %4083
  %4085 = vrot.lane.b32.xlu0 %v2225, 112
  %v4086 = vpop.permute.xlu0 %4085
  %v4087 = vsel %vm1702, %v4072, %v4080
  %v4088 = vsel %vm1702, %v4074, %v4082
  %v4089 = vsel %vm1702, %v4076, %v4084
  %v4090 = vsel %vm1702, %v4078, %v4086
  %v4091 = vsel %vm1702, %v4064, %v4072
  %v4092 = vsel %vm1702, %v4066, %v4074
  %v4093 = vsel %vm1702, %v4068, %v4076
  %v4094 = vsel %vm1702, %v4070, %v4078
  %v4095 = vsel %vm1702, %v4056, %v4064
  %v4096 = vsel %vm1702, %v4058, %v4066
  %v4097 = vsel %vm1702, %v4060, %v4068
  %v4098 = vsel %vm1702, %v4062, %v4070
  %v4099 = vsel %vm1702, %v4080, %v4056
  %v4100 = vsel %vm1702, %v4082, %v4058
  %v4101 = vsel %vm1702, %v4084, %v4060
  %v4102 = vsel %vm1702, %v4086, %v4062
  %v4103 = vsel %vm1711, %v4095, 0.0
  %v4104 = vsel %vm1712, %v4091, 0.0
  %v4105 = vsel %vm1713, %v4087, 0.0
  %v4106 = vsel %vm1714, %v4099, 0.0
  %v4107 = vsel %vm1711, %v4096, 0.0
  %v4108 = vsel %vm1712, %v4092, 0.0
  %v4109 = vsel %vm1713, %v4088, 0.0
  %v4110 = vsel %vm1714, %v4100, 0.0
  %v4111 = vsel %vm1711, %v4097, 0.0
  %v4112 = vsel %vm1712, %v4093, 0.0
  %v4113 = vsel %vm1713, %v4089, 0.0
  %v4114 = vsel %vm1714, %v4101, 0.0
  %v4115 = vsel %vm1711, %v4098, 0.0
  %v4116 = vsel %vm1712, %v4094, 0.0
  %v4117 = vsel %vm1713, %v4090, 0.0
  %v4118 = vsel %vm1714, %v4102, 0.0
  %s4119 = scalar_lea.vmem %s3, 224
  %v4120 = vld [vmem:[%s4119] sm:$0xff]
  %v4121 = vld [vmem:[%s4119 + $0x8] sm:$0xff]
  %v4122 = vld [vmem:[%s4119 + $0x10] sm:$0xff]
  %v4123 = vld [vmem:[%s4119 + $0x18] sm:$0xff]
  %v4125 = vsel %vm2363, %v4120, 0
  %v4128 = vsel %vm2363, %v4121, 0
  %v4131 = vsel %vm2363, %v4122, 0
  %v4134 = vsel %vm2363, %v4123, 0
  %4136 = vmatprep.subr.mxu0 %v4104
  %4137 = vmatpush1.msra.mxu0 %v4103
  %4138 = vmatprep.subr.mxu0 %v4108
  %4139 = vmatpush1.msra.mxu0 %v4107
  %4140 = vmatprep.subr.mxu0 %v4112
  %4141 = vmatpush1.msra.mxu0 %v4111
  %4142 = vmatprep.subr.mxu0 %v4116
  %4143 = vmatpush1.msra.mxu0 %v4115
  %4144 = vmatprep.subr.mxu0 0.0
  %4145 = vmatpush1.msra.mxu0 0.0
  %4146 = vmatprep.subr.mxu0 0.0
  %4147 = vmatpush1.msra.mxu0 0.0
  %4148 = vmatprep.subr.mxu0 0.0
  %4149 = vmatpush1.msra.mxu0 0.0
  %4150 = vmatprep.subr.mxu0 0.0
  %4151 = vmatpush1.msra.mxu0 0.0
  %4152 = vmatprep.subr.mxu0 0.0
  %4153 = vmatpush1.msra.mxu0 0.0
  %4154 = vmatprep.subr.mxu0 0.0
  %4155 = vmatpush1.msra.mxu0 0.0
  %4156 = vmatprep.subr.mxu0 0.0
  %4157 = vmatpush1.msra.mxu0 0.0
  %4158 = vmatprep.subr.mxu0 0.0
  %4159 = vmatpush1.msra.mxu0 0.0
  %4160 = vmatprep.subr.mxu0 0.0
  %4161 = vmatpush1.msra.mxu0 0.0
  %4162 = vmatprep.subr.mxu0 0.0
  %4163 = vmatpush1.msra.mxu0 0.0
  %4164 = vmatprep.subr.mxu0 0.0
  %4165 = vmatpush1.msra.mxu0 0.0
  %4166 = vmatprep.subr.mxu0 0.0
  %4167 = vmatpush1.msra.mxu0 0.0
  %4168 = vmatprep.subr.mxu0 0.0
  %4169 = vmatpush1.msra.mxu0 0.0
  %4170 = vmatprep.subr.mxu0 0.0
  %4171 = vmatpush1.msra.mxu0 0.0
  %4172 = vmatprep.subr.mxu0 0.0
  %4173 = vmatpush1.msra.mxu0 0.0
  %4174 = vmatprep.subr.mxu0 0.0
  %4175 = vmatpush1.msra.mxu0 0.0
  %4176 = vmatprep.subr.mxu0 0.0
  %4177 = vmatpush1.msra.mxu0 0.0
  %4178 = vmatprep.subr.mxu0 0.0
  %4179 = vmatpush1.msra.mxu0 0.0
  %4180 = vmatprep.subr.mxu0 0.0
  %4181 = vmatpush1.msra.mxu0 0.0
  %4182 = vmatprep.subr.mxu0 0.0
  %4183 = vmatpush1.msra.mxu0 0.0
  %4184 = vmatprep.subr.mxu0 0.0
  %4185 = vmatpush1.msra.mxu0 0.0
  %4186 = vmatprep.subr.mxu0 0.0
  %4187 = vmatpush1.msra.mxu0 0.0
  %4188 = vmatprep.subr.mxu0 0.0
  %4189 = vmatpush1.msra.mxu0 0.0
  %4190 = vmatprep.subr.mxu0 0.0
  %4191 = vmatpush1.msra.mxu0 0.0
  %4192 = vmatprep.subr.mxu0 0.0
  %4193 = vmatpush1.msra.mxu0 0.0
  %4194 = vmatprep.subr.mxu0 0.0
  %4195 = vmatpush1.msra.mxu0 0.0
  %4196 = vmatprep.subr.mxu0 0.0
  %4197 = vmatpush1.msra.mxu0 0.0
  %4198 = vmatprep.subr.mxu0 0.0
  %4199 = vmatpush1.msra.mxu0 0.0
  %4200 = vmatprep.mubr.f32.mxu0 0.0
  %4201 = vmatmul.mubr.f32.gmra.mrb[0].mxu0 %v4125
  %v4202 = vpop.f32.mrb[0].mxu0
  %v4203 = vadd.f32 0.0, %v4202
  %v4204 = vpop.f32.mrb[0].mxu0
  %v4205 = vadd.f32 0.0, %v4204
  %4206 = vmatprep.mubr.f32.mxu0 0.0
  %4207 = vmatmul.mubr.f32.gmra.mrb[0].mxu0 %v4128
  %v4208 = vpop.f32.mrb[0].mxu0
  %v4209 = vadd.f32 0.0, %v4208
  %v4210 = vpop.f32.mrb[0].mxu0
  %v4211 = vadd.f32 0.0, %v4210
  %4212 = vmatprep.mubr.f32.mxu0 0.0
  %4213 = vmatmul.mubr.f32.gmra.mrb[0].mxu0 %v4131
  %v4214 = vpop.f32.mrb[0].mxu0
  %v4215 = vadd.f32 0.0, %v4214
  %v4216 = vpop.f32.mrb[0].mxu0
  %v4217 = vadd.f32 0.0, %v4216
  %4218 = vmatprep.mubr.f32.mxu0 0.0
  %4219 = vmatmul.mubr.f32.gmra.mrb[0].mxu0 %v4134
  %v4220 = vpop.f32.mrb[0].mxu0
  %v4221 = vadd.f32 0.0, %v4220
  %v4222 = vpop.f32.mrb[0].mxu0
  %v4223 = vadd.f32 0.0, %v4222
  %4224 = vdwg.mxu0
  %4225 = vmatprep.subr.mxu0 %v4106
  %4226 = vmatpush1.msra.mxu0 %v4105
  %4227 = vmatprep.subr.mxu0 %v4110
  %4228 = vmatpush1.msra.mxu0 %v4109
  %4229 = vmatprep.subr.mxu0 %v4114
  %4230 = vmatpush1.msra.mxu0 %v4113
  %4231 = vmatprep.subr.mxu0 %v4118
  %4232 = vmatpush1.msra.mxu0 %v4117
  %4233 = vmatprep.subr.mxu0 0.0
  %4234 = vmatpush1.msra.mxu0 0.0
  %4235 = vmatprep.subr.mxu0 0.0
  %4236 = vmatpush1.msra.mxu0 0.0
  %4237 = vmatprep.subr.mxu0 0.0
  %4238 = vmatpush1.msra.mxu0 0.0
  %4239 = vmatprep.subr.mxu0 0.0
  %4240 = vmatpush1.msra.mxu0 0.0
  %4241 = vmatprep.subr.mxu0 0.0
  %4242 = vmatpush1.msra.mxu0 0.0
  %4243 = vmatprep.subr.mxu0 0.0
  %4244 = vmatpush1.msra.mxu0 0.0
  %4245 = vmatprep.subr.mxu0 0.0
  %4246 = vmatpush1.msra.mxu0 0.0
  %4247 = vmatprep.subr.mxu0 0.0
  %4248 = vmatpush1.msra.mxu0 0.0
  %4249 = vmatprep.subr.mxu0 0.0
  %4250 = vmatpush1.msra.mxu0 0.0
  %4251 = vmatprep.subr.mxu0 0.0
  %4252 = vmatpush1.msra.mxu0 0.0
  %4253 = vmatprep.subr.mxu0 0.0
  %4254 = vmatpush1.msra.mxu0 0.0
  %4255 = vmatprep.subr.mxu0 0.0
  %4256 = vmatpush1.msra.mxu0 0.0
  %4257 = vmatprep.subr.mxu0 0.0
  %4258 = vmatpush1.msra.mxu0 0.0
  %4259 = vmatprep.subr.mxu0 0.0
  %4260 = vmatpush1.msra.mxu0 0.0
  %4261 = vmatprep.subr.mxu0 0.0
  %4262 = vmatpush1.msra.mxu0 0.0
  %4263 = vmatprep.subr.mxu0 0.0
  %4264 = vmatpush1.msra.mxu0 0.0
  %4265 = vmatprep.subr.mxu0 0.0
  %4266 = vmatpush1.msra.mxu0 0.0
  %4267 = vmatprep.subr.mxu0 0.0
  %4268 = vmatpush1.msra.mxu0 0.0
  %4269 = vmatprep.subr.mxu0 0.0
  %4270 = vmatpush1.msra.mxu0 0.0
  %4271 = vmatprep.subr.mxu0 0.0
  %4272 = vmatpush1.msra.mxu0 0.0
  %4273 = vmatprep.subr.mxu0 0.0
  %4274 = vmatpush1.msra.mxu0 0.0
  %4275 = vmatprep.subr.mxu0 0.0
  %4276 = vmatpush1.msra.mxu0 0.0
  %4277 = vmatprep.subr.mxu0 0.0
  %4278 = vmatpush1.msra.mxu0 0.0
  %4279 = vmatprep.subr.mxu0 0.0
  %4280 = vmatpush1.msra.mxu0 0.0
  %4281 = vmatprep.subr.mxu0 0.0
  %4282 = vmatpush1.msra.mxu0 0.0
  %4283 = vmatprep.subr.mxu0 0.0
  %4284 = vmatpush1.msra.mxu0 0.0
  %4285 = vmatprep.subr.mxu0 0.0
  %4286 = vmatpush1.msra.mxu0 0.0
  %4287 = vmatprep.subr.mxu0 0.0
  %4288 = vmatpush1.msra.mxu0 0.0
  %4289 = vmatprep.mubr.f32.mxu0 0.0
  %4290 = vmatmul.mubr.f32.gmra.mrb[0].mxu0 %v4125
  %v4291 = vpop.f32.mrb[0].mxu0
  %v4292 = vadd.f32 0.0, %v4291
  %v4293 = vpop.f32.mrb[0].mxu0
  %v4294 = vadd.f32 0.0, %v4293
  %4295 = vmatprep.mubr.f32.mxu0 0.0
  %4296 = vmatmul.mubr.f32.gmra.mrb[0].mxu0 %v4128
  %v4297 = vpop.f32.mrb[0].mxu0
  %v4298 = vadd.f32 0.0, %v4297
  %v4299 = vpop.f32.mrb[0].mxu0
  %v4300 = vadd.f32 0.0, %v4299
  %4301 = vmatprep.mubr.f32.mxu0 0.0
  %4302 = vmatmul.mubr.f32.gmra.mrb[0].mxu0 %v4131
  %v4303 = vpop.f32.mrb[0].mxu0
  %v4304 = vadd.f32 0.0, %v4303
  %v4305 = vpop.f32.mrb[0].mxu0
  %v4306 = vadd.f32 0.0, %v4305
  %4307 = vmatprep.mubr.f32.mxu0 0.0
  %4308 = vmatmul.mubr.f32.gmra.mrb[0].mxu0 %v4134
  %v4309 = vpop.f32.mrb[0].mxu0
  %v4310 = vadd.f32 0.0, %v4309
  %v4311 = vpop.f32.mrb[0].mxu0
  %v4312 = vadd.f32 0.0, %v4311
  %4313 = vdwg.mxu0
  %v4314 = vadd.f32 %v4039, %v4203
  %v4315 = vadd.f32 %v4040, %v4205
  %v4316 = vadd.f32 %v4041, %v4292
  %v4317 = vadd.f32 %v4042, %v4294
  %v4318 = vadd.f32 %v4043, %v4209
  %v4319 = vadd.f32 %v4044, %v4211
  %v4320 = vadd.f32 %v4045, %v4298
  %v4321 = vadd.f32 %v4046, %v4300
  %v4322 = vadd.f32 %v4047, %v4215
  %v4323 = vadd.f32 %v4048, %v4217
  %v4324 = vadd.f32 %v4049, %v4304
  %v4325 = vadd.f32 %v4050, %v4306
  %v4326 = vadd.f32 %v4051, %v4221
  %v4327 = vadd.f32 %v4052, %v4223
  %v4328 = vadd.f32 %v4053, %v4310
  %v4329 = vadd.f32 %v4054, %v4312
  %4330 = vrot.lane.b32.xlu0 %v2210, 111
  %v4331 = vpop.permute.xlu0 %4330
  %4332 = vrot.lane.b32.xlu0 %v2214, 111
  %v4333 = vpop.permute.xlu0 %4332
  %4334 = vrot.lane.b32.xlu0 %v2218, 111
  %v4335 = vpop.permute.xlu0 %4334
  %4336 = vrot.lane.b32.xlu0 %v2222, 111
  %v4337 = vpop.permute.xlu0 %4336
  %4338 = vrot.lane.b32.xlu0 %v2211, 111
  %v4339 = vpop.permute.xlu0 %4338
  %4340 = vrot.lane.b32.xlu0 %v2215, 111
  %v4341 = vpop.permute.xlu0 %4340
  %4342 = vrot.lane.b32.xlu0 %v2219, 111
  %v4343 = vpop.permute.xlu0 %4342
  %4344 = vrot.lane.b32.xlu0 %v2223, 111
  %v4345 = vpop.permute.xlu0 %4344
  %4346 = vrot.lane.b32.xlu0 %v2212, 111
  %v4347 = vpop.permute.xlu0 %4346
  %4348 = vrot.lane.b32.xlu0 %v2216, 111
  %v4349 = vpop.permute.xlu0 %4348
  %4350 = vrot.lane.b32.xlu0 %v2220, 111
  %v4351 = vpop.permute.xlu0 %4350
  %4352 = vrot.lane.b32.xlu0 %v2224, 111
  %v4353 = vpop.permute.xlu0 %4352
  %4354 = vrot.lane.b32.xlu0 %v2213, 111
  %v4355 = vpop.permute.xlu0 %4354
  %4356 = vrot.lane.b32.xlu0 %v2217, 111
  %v4357 = vpop.permute.xlu0 %4356
  %4358 = vrot.lane.b32.xlu0 %v2221, 111
  %v4359 = vpop.permute.xlu0 %4358
  %4360 = vrot.lane.b32.xlu0 %v2225, 111
  %v4361 = vpop.permute.xlu0 %4360
  %v4362 = vsel %vm1938, %v4347, %v4355
  %v4363 = vsel %vm1938, %v4349, %v4357
  %v4364 = vsel %vm1938, %v4351, %v4359
  %v4365 = vsel %vm1938, %v4353, %v4361
  %v4366 = vsel %vm1938, %v4339, %v4347
  %v4367 = vsel %vm1938, %v4341, %v4349
  %v4368 = vsel %vm1938, %v4343, %v4351
  %v4369 = vsel %vm1938, %v4345, %v4353
  %v4370 = vsel %vm1938, %v4331, %v4339
  %v4371 = vsel %vm1938, %v4333, %v4341
  %v4372 = vsel %vm1938, %v4335, %v4343
  %v4373 = vsel %vm1938, %v4337, %v4345
  %v4374 = vsel %vm1938, %v4355, %v4331
  %v4375 = vsel %vm1938, %v4357, %v4333
  %v4376 = vsel %vm1938, %v4359, %v4335
  %v4377 = vsel %vm1938, %v4361, %v4337
  %v4378 = vsel %vm1951, %v4370, 0.0
  %v4379 = vsel %vm1952, %v4366, 0.0
  %v4380 = vsel %vm1953, %v4362, 0.0
  %v4381 = vsel %vm1954, %v4374, 0.0
  %v4382 = vsel %vm1951, %v4371, 0.0
  %v4383 = vsel %vm1952, %v4367, 0.0
  %v4384 = vsel %vm1953, %v4363, 0.0
  %v4385 = vsel %vm1954, %v4375, 0.0
  %v4386 = vsel %vm1951, %v4372, 0.0
  %v4387 = vsel %vm1952, %v4368, 0.0
  %v4388 = vsel %vm1953, %v4364, 0.0
  %v4389 = vsel %vm1954, %v4376, 0.0
  %v4390 = vsel %vm1951, %v4373, 0.0
  %v4391 = vsel %vm1952, %v4369, 0.0
  %v4392 = vsel %vm1953, %v4365, 0.0
  %v4393 = vsel %vm1954, %v4377, 0.0
  %s4394 = scalar_lea.vmem %s3, 256
  %v4395 = vld [vmem:[%s4394] sm:$0xff]
  %v4396 = vld [vmem:[%s4394 + $0x8] sm:$0xff]
  %v4397 = vld [vmem:[%s4394 + $0x10] sm:$0xff]
  %v4398 = vld [vmem:[%s4394 + $0x18] sm:$0xff]
  %v4400 = vsel %vm2363, %v4395, 0
  %v4403 = vsel %vm2363, %v4396, 0
  %v4406 = vsel %vm2363, %v4397, 0
  %v4409 = vsel %vm2363, %v4398, 0
  %4411 = vmatprep.subr.mxu0 %v4379
  %4412 = vmatpush1.msra.mxu0 %v4378
  %4413 = vmatprep.subr.mxu0 %v4383
  %4414 = vmatpush1.msra.mxu0 %v4382
  %4415 = vmatprep.subr.mxu0 %v4387
  %4416 = vmatpush1.msra.mxu0 %v4386
  %4417 = vmatprep.subr.mxu0 %v4391
  %4418 = vmatpush1.msra.mxu0 %v4390
  %4419 = vmatprep.subr.mxu0 0.0
  %4420 = vmatpush1.msra.mxu0 0.0
  %4421 = vmatprep.subr.mxu0 0.0
  %4422 = vmatpush1.msra.mxu0 0.0
  %4423 = vmatprep.subr.mxu0 0.0
  %4424 = vmatpush1.msra.mxu0 0.0
  %4425 = vmatprep.subr.mxu0 0.0
  %4426 = vmatpush1.msra.mxu0 0.0
  %4427 = vmatprep.subr.mxu0 0.0
  %4428 = vmatpush1.msra.mxu0 0.0
  %4429 = vmatprep.subr.mxu0 0.0
  %4430 = vmatpush1.msra.mxu0 0.0
  %4431 = vmatprep.subr.mxu0 0.0
  %4432 = vmatpush1.msra.mxu0 0.0
  %4433 = vmatprep.subr.mxu0 0.0
  %4434 = vmatpush1.msra.mxu0 0.0
  %4435 = vmatprep.subr.mxu0 0.0
  %4436 = vmatpush1.msra.mxu0 0.0
  %4437 = vmatprep.subr.mxu0 0.0
  %4438 = vmatpush1.msra.mxu0 0.0
  %4439 = vmatprep.subr.mxu0 0.0
  %4440 = vmatpush1.msra.mxu0 0.0
  %4441 = vmatprep.subr.mxu0 0.0
  %4442 = vmatpush1.msra.mxu0 0.0
  %4443 = vmatprep.subr.mxu0 0.0
  %4444 = vmatpush1.msra.mxu0 0.0
  %4445 = vmatprep.subr.mxu0 0.0
  %4446 = vmatpush1.msra.mxu0 0.0
  %4447 = vmatprep.subr.mxu0 0.0
  %4448 = vmatpush1.msra.mxu0 0.0
  %4449 = vmatprep.subr.mxu0 0.0
  %4450 = vmatpush1.msra.mxu0 0.0
  %4451 = vmatprep.subr.mxu0 0.0
  %4452 = vmatpush1.msra.mxu0 0.0
  %4453 = vmatprep.subr.mxu0 0.0
  %4454 = vmatpush1.msra.mxu0 0.0
  %4455 = vmatprep.subr.mxu0 0.0
  %4456 = vmatpush1.msra.mxu0 0.0
  %4457 = vmatprep.subr.mxu0 0.0
  %4458 = vmatpush1.msra.mxu0 0.0
  %4459 = vmatprep.subr.mxu0 0.0
  %4460 = vmatpush1.msra.mxu0 0.0
  %4461 = vmatprep.subr.mxu0 0.0
  %4462 = vmatpush1.msra.mxu0 0.0
  %4463 = vmatprep.subr.mxu0 0.0
  %4464 = vmatpush1.msra.mxu0 0.0
  %4465 = vmatprep.subr.mxu0 0.0
  %4466 = vmatpush1.msra.mxu0 0.0
  %4467 = vmatprep.subr.mxu0 0.0
  %4468 = vmatpush1.msra.mxu0 0.0
  %4469 = vmatprep.subr.mxu0 0.0
  %4470 = vmatpush1.msra.mxu0 0.0
  %4471 = vmatprep.subr.mxu0 0.0
  %4472 = vmatpush1.msra.mxu0 0.0
  %4473 = vmatprep.subr.mxu0 0.0
  %4474 = vmatpush1.msra.mxu0 0.0
  %4475 = vmatprep.mubr.f32.mxu0 0.0
  %4476 = vmatmul.mubr.f32.gmra.mrb[0].mxu0 %v4400
  %v4477 = vpop.f32.mrb[0].mxu0
  %v4478 = vadd.f32 0.0, %v4477
  %v4479 = vpop.f32.mrb[0].mxu0
  %v4480 = vadd.f32 0.0, %v4479
  %4481 = vmatprep.mubr.f32.mxu0 0.0
  %4482 = vmatmul.mubr.f32.gmra.mrb[0].mxu0 %v4403
  %v4483 = vpop.f32.mrb[0].mxu0
  %v4484 = vadd.f32 0.0, %v4483
  %v4485 = vpop.f32.mrb[0].mxu0
  %v4486 = vadd.f32 0.0, %v4485
  %4487 = vmatprep.mubr.f32.mxu0 0.0
  %4488 = vmatmul.mubr.f32.gmra.mrb[0].mxu0 %v4406
  %v4489 = vpop.f32.mrb[0].mxu0
  %v4490 = vadd.f32 0.0, %v4489
  %v4491 = vpop.f32.mrb[0].mxu0
  %v4492 = vadd.f32 0.0, %v4491
  %4493 = vmatprep.mubr.f32.mxu0 0.0
  %4494 = vmatmul.mubr.f32.gmra.mrb[0].mxu0 %v4409
  %v4495 = vpop.f32.mrb[0].mxu0
  %v4496 = vadd.f32 0.0, %v4495
  %v4497 = vpop.f32.mrb[0].mxu0
  %v4498 = vadd.f32 0.0, %v4497
  %4499 = vdwg.mxu0
  %4500 = vmatprep.subr.mxu0 %v4381
  %4501 = vmatpush1.msra.mxu0 %v4380
  %4502 = vmatprep.subr.mxu0 %v4385
  %4503 = vmatpush1.msra.mxu0 %v4384
  %4504 = vmatprep.subr.mxu0 %v4389
  %4505 = vmatpush1.msra.mxu0 %v4388
  %4506 = vmatprep.subr.mxu0 %v4393
  %4507 = vmatpush1.msra.mxu0 %v4392
  %4508 = vmatprep.subr.mxu0 0.0
  %4509 = vmatpush1.msra.mxu0 0.0
  %4510 = vmatprep.subr.mxu0 0.0
  %4511 = vmatpush1.msra.mxu0 0.0
  %4512 = vmatprep.subr.mxu0 0.0
  %4513 = vmatpush1.msra.mxu0 0.0
  %4514 = vmatprep.subr.mxu0 0.0
  %4515 = vmatpush1.msra.mxu0 0.0
  %4516 = vmatprep.subr.mxu0 0.0
  %4517 = vmatpush1.msra.mxu0 0.0
  %4518 = vmatprep.subr.mxu0 0.0
  %4519 = vmatpush1.msra.mxu0 0.0
  %4520 = vmatprep.subr.mxu0 0.0
  %4521 = vmatpush1.msra.mxu0 0.0
  %4522 = vmatprep.subr.mxu0 0.0
  %4523 = vmatpush1.msra.mxu0 0.0
  %4524 = vmatprep.subr.mxu0 0.0
  %4525 = vmatpush1.msra.mxu0 0.0
  %4526 = vmatprep.subr.mxu0 0.0
  %4527 = vmatpush1.msra.mxu0 0.0
  %4528 = vmatprep.subr.mxu0 0.0
  %4529 = vmatpush1.msra.mxu0 0.0
  %4530 = vmatprep.subr.mxu0 0.0
  %4531 = vmatpush1.msra.mxu0 0.0
  %4532 = vmatprep.subr.mxu0 0.0
  %4533 = vmatpush1.msra.mxu0 0.0
  %4534 = vmatprep.subr.mxu0 0.0
  %4535 = vmatpush1.msra.mxu0 0.0
  %4536 = vmatprep.subr.mxu0 0.0
  %4537 = vmatpush1.msra.mxu0 0.0
  %4538 = vmatprep.subr.mxu0 0.0
  %4539 = vmatpush1.msra.mxu0 0.0
  %4540 = vmatprep.subr.mxu0 0.0
  %4541 = vmatpush1.msra.mxu0 0.0
  %4542 = vmatprep.subr.mxu0 0.0
  %4543 = vmatpush1.msra.mxu0 0.0
  %4544 = vmatprep.subr.mxu0 0.0
  %4545 = vmatpush1.msra.mxu0 0.0
  %4546 = vmatprep.subr.mxu0 0.0
  %4547 = vmatpush1.msra.mxu0 0.0
  %4548 = vmatprep.subr.mxu0 0.0
  %4549 = vmatpush1.msra.mxu0 0.0
  %4550 = vmatprep.subr.mxu0 0.0
  %4551 = vmatpush1.msra.mxu0 0.0
  %4552 = vmatprep.subr.mxu0 0.0
  %4553 = vmatpush1.msra.mxu0 0.0
  %4554 = vmatprep.subr.mxu0 0.0
  %4555 = vmatpush1.msra.mxu0 0.0
  %4556 = vmatprep.subr.mxu0 0.0
  %4557 = vmatpush1.msra.mxu0 0.0
  %4558 = vmatprep.subr.mxu0 0.0
  %4559 = vmatpush1.msra.mxu0 0.0
  %4560 = vmatprep.subr.mxu0 0.0
  %4561 = vmatpush1.msra.mxu0 0.0
  %4562 = vmatprep.subr.mxu0 0.0
  %4563 = vmatpush1.msra.mxu0 0.0
  %4564 = vmatprep.mubr.f32.mxu0 0.0
  %4565 = vmatmul.mubr.f32.gmra.mrb[0].mxu0 %v4400
  %v4566 = vpop.f32.mrb[0].mxu0
  %v4567 = vadd.f32 0.0, %v4566
  %v4568 = vpop.f32.mrb[0].mxu0
  %v4569 = vadd.f32 0.0, %v4568
  %4570 = vmatprep.mubr.f32.mxu0 0.0
  %4571 = vmatmul.mubr.f32.gmra.mrb[0].mxu0 %v4403
  %v4572 = vpop.f32.mrb[0].mxu0
  %v4573 = vadd.f32 0.0, %v4572
  %v4574 = vpop.f32.mrb[0].mxu0
  %v4575 = vadd.f32 0.0, %v4574
  %4576 = vmatprep.mubr.f32.mxu0 0.0
  %4577 = vmatmul.mubr.f32.gmra.mrb[0].mxu0 %v4406
  %v4578 = vpop.f32.mrb[0].mxu0
  %v4579 = vadd.f32 0.0, %v4578
  %v4580 = vpop.f32.mrb[0].mxu0
  %v4581 = vadd.f32 0.0, %v4580
  %4582 = vmatprep.mubr.f32.mxu0 0.0
  %4583 = vmatmul.mubr.f32.gmra.mrb[0].mxu0 %v4409
  %v4584 = vpop.f32.mrb[0].mxu0
  %v4585 = vadd.f32 0.0, %v4584
  %v4586 = vpop.f32.mrb[0].mxu0
  %v4587 = vadd.f32 0.0, %v4586
  %4588 = vdwg.mxu0
  %v4589 = vadd.f32 %v4314, %v4478
  %v4590 = vadd.f32 %v4315, %v4480
  %v4591 = vadd.f32 %v4316, %v4567
  %v4592 = vadd.f32 %v4317, %v4569
  %v4593 = vadd.f32 %v4318, %v4484
  %v4594 = vadd.f32 %v4319, %v4486
  %v4595 = vadd.f32 %v4320, %v4573
  %v4596 = vadd.f32 %v4321, %v4575
  %v4597 = vadd.f32 %v4322, %v4490
  %v4598 = vadd.f32 %v4323, %v4492
  %v4599 = vadd.f32 %v4324, %v4579
  %v4600 = vadd.f32 %v4325, %v4581
  %v4601 = vadd.f32 %v4326, %v4496
  %v4602 = vadd.f32 %v4327, %v4498
  %v4603 = vadd.f32 %v4328, %v4585
  %v4604 = vadd.f32 %v4329, %v4587
  %v4605 = vld [vmem:[%s4] sm:$0xff]
  %v4606 = vld [vmem:[%s4 + $0x8] sm:$0xff]
  %v4607 = vld [vmem:[%s4 + $0x10] sm:$0xff]
  %v4608 = vld [vmem:[%s4 + $0x18] sm:$0xff]
  %4610 = vset.pattern.permute.xlu0 0
  %4611 = vperm.xlu0 %4610, %v4605
  %v4612 = vpop.permute.xlu0 %4611
  %4615 = vset.pattern.permute.xlu0 0
  %4616 = vperm.xlu0 %4615, %v4606
  %v4617 = vpop.permute.xlu0 %4616
  %4620 = vset.pattern.permute.xlu0 0
  %4621 = vperm.xlu0 %4620, %v4607
  %v4622 = vpop.permute.xlu0 %4621
  %4625 = vset.pattern.permute.xlu0 0
  %4626 = vperm.xlu0 %4625, %v4608
  %v4627 = vpop.permute.xlu0 %4626
  %v4629 = vadd.f32 %v4589, %v4612
  %v4630 = vadd.f32 %v4590, %v4612
  %v4631 = vadd.f32 %v4591, %v4612
  %v4632 = vadd.f32 %v4592, %v4612
  %v4633 = vadd.f32 %v4593, %v4617
  %v4634 = vadd.f32 %v4594, %v4617
  %v4635 = vadd.f32 %v4595, %v4617
  %v4636 = vadd.f32 %v4596, %v4617
  %v4637 = vadd.f32 %v4597, %v4622
  %v4638 = vadd.f32 %v4598, %v4622
  %v4639 = vadd.f32 %v4599, %v4622
  %v4640 = vadd.f32 %v4600, %v4622
  %v4641 = vadd.f32 %v4601, %v4627
  %v4642 = vadd.f32 %v4602, %v4627
  %v4643 = vadd.f32 %v4603, %v4627
  %v4644 = vadd.f32 %v4604, %v4627
  %v4645 = vmax.f32 %v4629, 0.0
  %v4646 = vmax.f32 %v4630, 0.0
  %v4647 = vmax.f32 %v4631, 0.0
  %v4648 = vmax.f32 %v4632, 0.0
  %v4649 = vmax.f32 %v4633, 0.0
  %v4650 = vmax.f32 %v4634, 0.0
  %v4651 = vmax.f32 %v4635, 0.0
  %v4652 = vmax.f32 %v4636, 0.0
  %v4653 = vmax.f32 %v4637, 0.0
  %v4654 = vmax.f32 %v4638, 0.0
  %v4655 = vmax.f32 %v4639, 0.0
  %v4656 = vmax.f32 %v4640, 0.0
  %v4657 = vmax.f32 %v4641, 0.0
  %v4658 = vmax.f32 %v4642, 0.0
  %v4659 = vmax.f32 %v4643, 0.0
  %v4660 = vmax.f32 %v4644, 0.0
  %4661 = vrot.lane.b32.xlu0 %v4645, 127
  %v4662 = vpop.permute.xlu0 %4661
  %4663 = vrot.lane.b32.xlu0 %v4649, 127
  %v4664 = vpop.permute.xlu0 %4663
  %4665 = vrot.lane.b32.xlu0 %v4653, 127
  %v4666 = vpop.permute.xlu0 %4665
  %4667 = vrot.lane.b32.xlu0 %v4657, 127
  %v4668 = vpop.permute.xlu0 %4667
  %4669 = vrot.lane.b32.xlu0 %v4646, 127
  %v4670 = vpop.permute.xlu0 %4669
  %4671 = vrot.lane.b32.xlu0 %v4650, 127
  %v4672 = vpop.permute.xlu0 %4671
  %4673 = vrot.lane.b32.xlu0 %v4654, 127
  %v4674 = vpop.permute.xlu0 %4673
  %4675 = vrot.lane.b32.xlu0 %v4658, 127
  %v4676 = vpop.permute.xlu0 %4675
  %4677 = vrot.lane.b32.xlu0 %v4647, 127
  %v4678 = vpop.permute.xlu0 %4677
  %4679 = vrot.lane.b32.xlu0 %v4651, 127
  %v4680 = vpop.permute.xlu0 %4679
  %4681 = vrot.lane.b32.xlu0 %v4655, 127
  %v4682 = vpop.permute.xlu0 %4681
  %4683 = vrot.lane.b32.xlu0 %v4659, 127
  %v4684 = vpop.permute.xlu0 %4683
  %4685 = vrot.lane.b32.xlu0 %v4648, 127
  %v4686 = vpop.permute.xlu0 %4685
  %4687 = vrot.lane.b32.xlu0 %v4652, 127
  %v4688 = vpop.permute.xlu0 %4687
  %4689 = vrot.lane.b32.xlu0 %v4656, 127
  %v4690 = vpop.permute.xlu0 %4689
  %4691 = vrot.lane.b32.xlu0 %v4660, 127
  %v4692 = vpop.permute.xlu0 %4691
  %v4693 = vsel %vm1222, %v4678, %v4686
  %v4694 = vsel %vm1222, %v4680, %v4688
  %v4695 = vsel %vm1222, %v4682, %v4690
  %v4696 = vsel %vm1222, %v4684, %v4692
  %v4697 = vsel %vm1222, %v4670, %v4678
  %v4698 = vsel %vm1222, %v4672, %v4680
  %v4699 = vsel %vm1222, %v4674, %v4682
  %v4700 = vsel %vm1222, %v4676, %v4684
  %v4701 = vsel %vm1222, %v4662, %v4670
  %v4702 = vsel %vm1222, %v4664, %v4672
  %v4703 = vsel %vm1222, %v4666, %v4674
  %v4704 = vsel %vm1222, %v4668, %v4676
  %v4705 = vsel %vm1222, %v4686, %v4662
  %v4706 = vsel %vm1222, %v4688, %v4664
  %v4707 = vsel %vm1222, %v4690, %v4666
  %v4708 = vsel %vm1222, %v4692, %v4668
  %v4709 = vmax.f32 %v4645, %v4701
  %v4710 = vmax.f32 %v4646, %v4697
  %v4711 = vmax.f32 %v4647, %v4693
  %v4712 = vmax.f32 %v4648, %v4705
  %v4713 = vmax.f32 %v4649, %v4702
  %v4714 = vmax.f32 %v4650, %v4698
  %v4715 = vmax.f32 %v4651, %v4694
  %v4716 = vmax.f32 %v4652, %v4706
  %v4717 = vmax.f32 %v4653, %v4703
  %v4718 = vmax.f32 %v4654, %v4699
  %v4719 = vmax.f32 %v4655, %v4695
  %v4720 = vmax.f32 %v4656, %v4707
  %v4721 = vmax.f32 %v4657, %v4704
  %v4722 = vmax.f32 %v4658, %v4700
  %v4723 = vmax.f32 %v4659, %v4696
  %v4724 = vmax.f32 %v4660, %v4708
  %4725 = vrot.lane.b32.xlu0 %v4645, 112
  %v4726 = vpop.permute.xlu0 %4725
  %4727 = vrot.lane.b32.xlu0 %v4649, 112
  %v4728 = vpop.permute.xlu0 %4727
  %4729 = vrot.lane.b32.xlu0 %v4653, 112
  %v4730 = vpop.permute.xlu0 %4729
  %4731 = vrot.lane.b32.xlu0 %v4657, 112
  %v4732 = vpop.permute.xlu0 %4731
  %4733 = vrot.lane.b32.xlu0 %v4646, 112
  %v4734 = vpop.permute.xlu0 %4733
  %4735 = vrot.lane.b32.xlu0 %v4650, 112
  %v4736 = vpop.permute.xlu0 %4735
  %4737 = vrot.lane.b32.xlu0 %v4654, 112
  %v4738 = vpop.permute.xlu0 %4737
  %4739 = vrot.lane.b32.xlu0 %v4658, 112
  %v4740 = vpop.permute.xlu0 %4739
  %4741 = vrot.lane.b32.xlu0 %v4647, 112
  %v4742 = vpop.permute.xlu0 %4741
  %4743 = vrot.lane.b32.xlu0 %v4651, 112
  %v4744 = vpop.permute.xlu0 %4743
  %4745 = vrot.lane.b32.xlu0 %v4655, 112
  %v4746 = vpop.permute.xlu0 %4745
  %4747 = vrot.lane.b32.xlu0 %v4659, 112
  %v4748 = vpop.permute.xlu0 %4747
  %4749 = vrot.lane.b32.xlu0 %v4648, 112
  %v4750 = vpop.permute.xlu0 %4749
  %4751 = vrot.lane.b32.xlu0 %v4652, 112
  %v4752 = vpop.permute.xlu0 %4751
  %4753 = vrot.lane.b32.xlu0 %v4656, 112
  %v4754 = vpop.permute.xlu0 %4753
  %4755 = vrot.lane.b32.xlu0 %v4660, 112
  %v4756 = vpop.permute.xlu0 %4755
  %v4757 = vsel %vm1702, %v4742, %v4750
  %v4758 = vsel %vm1702, %v4744, %v4752
  %v4759 = vsel %vm1702, %v4746, %v4754
  %v4760 = vsel %vm1702, %v4748, %v4756
  %v4761 = vsel %vm1702, %v4734, %v4742
  %v4762 = vsel %vm1702, %v4736, %v4744
  %v4763 = vsel %vm1702, %v4738, %v4746
  %v4764 = vsel %vm1702, %v4740, %v4748
  %v4765 = vsel %vm1702, %v4726, %v4734
  %v4766 = vsel %vm1702, %v4728, %v4736
  %v4767 = vsel %vm1702, %v4730, %v4738
  %v4768 = vsel %vm1702, %v4732, %v4740
  %v4769 = vsel %vm1702, %v4750, %v4726
  %v4770 = vsel %vm1702, %v4752, %v4728
  %v4771 = vsel %vm1702, %v4754, %v4730
  %v4772 = vsel %vm1702, %v4756, %v4732
  %v4773 = vmax.f32 %v4709, %v4765
  %v4774 = vmax.f32 %v4710, %v4761
  %v4775 = vmax.f32 %v4711, %v4757
  %v4776 = vmax.f32 %v4712, %v4769
  %v4777 = vmax.f32 %v4713, %v4766
  %v4778 = vmax.f32 %v4714, %v4762
  %v4779 = vmax.f32 %v4715, %v4758
  %v4780 = vmax.f32 %v4716, %v4770
  %v4781 = vmax.f32 %v4717, %v4767
  %v4782 = vmax.f32 %v4718, %v4763
  %v4783 = vmax.f32 %v4719, %v4759
  %v4784 = vmax.f32 %v4720, %v4771
  %v4785 = vmax.f32 %v4721, %v4768
  %v4786 = vmax.f32 %v4722, %v4764
  %v4787 = vmax.f32 %v4723, %v4760
  %v4788 = vmax.f32 %v4724, %v4772
  %4789 = vrot.lane.b32.xlu0 %v4645, 111
  %v4790 = vpop.permute.xlu0 %4789
  %4791 = vrot.lane.b32.xlu0 %v4649, 111
  %v4792 = vpop.permute.xlu0 %4791
  %4793 = vrot.lane.b32.xlu0 %v4653, 111
  %v4794 = vpop.permute.xlu0 %4793
  %4795 = vrot.lane.b32.xlu0 %v4657, 111
  %v4796 = vpop.permute.xlu0 %4795
  %4797 = vrot.lane.b32.xlu0 %v4646, 111
  %v4798 = vpop.permute.xlu0 %4797
  %4799 = vrot.lane.b32.xlu0 %v4650, 111
  %v4800 = vpop.permute.xlu0 %4799
  %4801 = vrot.lane.b32.xlu0 %v4654, 111
  %v4802 = vpop.permute.xlu0 %4801
  %4803 = vrot.lane.b32.xlu0 %v4658, 111
  %v4804 = vpop.permute.xlu0 %4803
  %4805 = vrot.lane.b32.xlu0 %v4647, 111
  %v4806 = vpop.permute.xlu0 %4805
  %4807 = vrot.lane.b32.xlu0 %v4651, 111
  %v4808 = vpop.permute.xlu0 %4807
  %4809 = vrot.lane.b32.xlu0 %v4655, 111
  %v4810 = vpop.permute.xlu0 %4809
  %4811 = vrot.lane.b32.xlu0 %v4659, 111
  %v4812 = vpop.permute.xlu0 %4811
  %4813 = vrot.lane.b32.xlu0 %v4648, 111
  %v4814 = vpop.permute.xlu0 %4813
  %4815 = vrot.lane.b32.xlu0 %v4652, 111
  %v4816 = vpop.permute.xlu0 %4815
  %4817 = vrot.lane.b32.xlu0 %v4656, 111
  %v4818 = vpop.permute.xlu0 %4817
  %4819 = vrot.lane.b32.xlu0 %v4660, 111
  %v4820 = vpop.permute.xlu0 %4819
  %v4821 = vsel %vm1938, %v4806, %v4814
  %v4822 = vsel %vm1938, %v4808, %v4816
  %v4823 = vsel %vm1938, %v4810, %v4818
  %v4824 = vsel %vm1938, %v4812, %v4820
  %v4825 = vsel %vm1938, %v4798, %v4806
  %v4826 = vsel %vm1938, %v4800, %v4808
  %v4827 = vsel %vm1938, %v4802, %v4810
  %v4828 = vsel %vm1938, %v4804, %v4812
  %v4829 = vsel %vm1938, %v4790, %v4798
  %v4830 = vsel %vm1938, %v4792, %v4800
  %v4831 = vsel %vm1938, %v4794, %v4802
  %v4832 = vsel %vm1938, %v4796, %v4804
  %v4833 = vsel %vm1938, %v4814, %v4790
  %v4834 = vsel %vm1938, %v4816, %v4792
  %v4835 = vsel %vm1938, %v4818, %v4794
  %v4836 = vsel %vm1938, %v4820, %v4796
  %v4837 = vmax.f32 %v4773, %v4829
  %v4838 = vmax.f32 %v4774, %v4825
  %v4839 = vmax.f32 %v4775, %v4821
  %v4840 = vmax.f32 %v4776, %v4833
  %v4841 = vmax.f32 %v4777, %v4830
  %v4842 = vmax.f32 %v4778, %v4826
  %v4843 = vmax.f32 %v4779, %v4822
  %v4844 = vmax.f32 %v4780, %v4834
  %v4845 = vmax.f32 %v4781, %v4831
  %v4846 = vmax.f32 %v4782, %v4827
  %v4847 = vmax.f32 %v4783, %v4823
  %v4848 = vmax.f32 %v4784, %v4835
  %v4849 = vmax.f32 %v4785, %v4832
  %v4850 = vmax.f32 %v4786, %v4828
  %v4851 = vmax.f32 %v4787, %v4824
  %v4852 = vmax.f32 %v4788, %v4836
  %v4853 = vld [vmem:[%s5] sm:$0xff]
  %v4854 = vld [vmem:[%s5 + $0x8] sm:$0xff]
  %v4855 = vld [vmem:[%s5 + $0x10] sm:$0xff]
  %v4856 = vld [vmem:[%s5 + $0x18] sm:$0xff]
  %v4857 = vld [vmem:[%s5 + $0x20] sm:$0xff]
  %v4858 = vld [vmem:[%s5 + $0x28] sm:$0xff]
  %v4859 = vld [vmem:[%s5 + $0x30] sm:$0xff]
  %v4860 = vld [vmem:[%s5 + $0x38] sm:$0xff]
  %v4861 = vld [vmem:[%s5 + $0x40] sm:$0xff]
  %v4862 = vld [vmem:[%s5 + $0x48] sm:$0xff]
  %v4863 = vld [vmem:[%s5 + $0x50] sm:$0xff]
  %v4864 = vld [vmem:[%s5 + $0x58] sm:$0xff]
  %v4865 = vld [vmem:[%s5 + $0x60] sm:$0xff]
  %v4866 = vld [vmem:[%s5 + $0x68] sm:$0xff]
  %v4867 = vld [vmem:[%s5 + $0x70] sm:$0xff]
  %v4868 = vld [vmem:[%s5 + $0x78] sm:$0xff]
  %v4869 = vld [vmem:[%s5 + $0x80] sm:$0xff]
  %v4870 = vld [vmem:[%s5 + $0x88] sm:$0xff]
  %v4871 = vld [vmem:[%s5 + $0x90] sm:$0xff]
  %v4872 = vld [vmem:[%s5 + $0x98] sm:$0xff]
  %v4873 = vld [vmem:[%s5 + $0xa0] sm:$0xff]
  %v4874 = vld [vmem:[%s5 + $0xa8] sm:$0xff]
  %v4875 = vld [vmem:[%s5 + $0xb0] sm:$0xff]
  %v4876 = vld [vmem:[%s5 + $0xb8] sm:$0xff]
  %v4877 = vld [vmem:[%s5 + $0xc0] sm:$0xff]
  %v4878 = vld [vmem:[%s5 + $0xc8] sm:$0xff]
  %v4879 = vld [vmem:[%s5 + $0xd0] sm:$0xff]
  %v4880 = vld [vmem:[%s5 + $0xd8] sm:$0xff]
  %v4881 = vld [vmem:[%s5 + $0xe0] sm:$0xff]
  %v4882 = vld [vmem:[%s5 + $0xe8] sm:$0xff]
  %v4883 = vld [vmem:[%s5 + $0xf0] sm:$0xff]
  %v4884 = vld [vmem:[%s5 + $0xf8] sm:$0xff]
  %v4885 = vld [vmem:[%s5 + $0x100] sm:$0xff]
  %v4886 = vld [vmem:[%s5 + $0x108] sm:$0xff]
  %v4887 = vld [vmem:[%s5 + $0x110] sm:$0xff]
  %v4888 = vld [vmem:[%s5 + $0x118] sm:$0xff]
  %v4889 = vld [vmem:[%s5 + $0x120] sm:$0xff]
  %v4890 = vld [vmem:[%s5 + $0x128] sm:$0xff]
  %v4891 = vld [vmem:[%s5 + $0x130] sm:$0xff]
  %v4892 = vld [vmem:[%s5 + $0x138] sm:$0xff]
  %v4893 = vld [vmem:[%s5 + $0x140] sm:$0xff]
  %v4894 = vld [vmem:[%s5 + $0x148] sm:$0xff]
  %v4895 = vld [vmem:[%s5 + $0x150] sm:$0xff]
  %v4896 = vld [vmem:[%s5 + $0x158] sm:$0xff]
  %v4897 = vld [vmem:[%s5 + $0x160] sm:$0xff]
  %v4898 = vld [vmem:[%s5 + $0x168] sm:$0xff]
  %v4899 = vld [vmem:[%s5 + $0x170] sm:$0xff]
  %v4900 = vld [vmem:[%s5 + $0x178] sm:$0xff]
  %v4901 = vld [vmem:[%s5 + $0x180] sm:$0xff]
  %v4902 = vld [vmem:[%s5 + $0x188] sm:$0xff]
  %v4903 = vld [vmem:[%s5 + $0x190] sm:$0xff]
  %v4904 = vld [vmem:[%s5 + $0x198] sm:$0xff]
  %v4905 = vld [vmem:[%s5 + $0x1a0] sm:$0xff]
  %v4906 = vld [vmem:[%s5 + $0x1a8] sm:$0xff]
  %v4907 = vld [vmem:[%s5 + $0x1b0] sm:$0xff]
  %v4908 = vld [vmem:[%s5 + $0x1b8] sm:$0xff]
  %v4909 = vld [vmem:[%s5 + $0x1c0] sm:$0xff]
  %v4910 = vld [vmem:[%s5 + $0x1c8] sm:$0xff]
  %v4911 = vld [vmem:[%s5 + $0x1d0] sm:$0xff]
  %v4912 = vld [vmem:[%s5 + $0x1d8] sm:$0xff]
  %v4913 = vld [vmem:[%s5 + $0x1e0] sm:$0xff]
  %v4914 = vld [vmem:[%s5 + $0x1e8] sm:$0xff]
  %v4915 = vld [vmem:[%s5 + $0x1f0] sm:$0xff]
  %v4916 = vld [vmem:[%s5 + $0x1f8] sm:$0xff]
  %4917 = vmatprep.subr.mxu0 0.0
  %4918 = vmatpush1.msra.mxu0 %v4853
  %4919 = vmatprep.subr.mxu0 0.0
  %4920 = vmatpush1.msra.mxu0 %v4854
  %4921 = vmatprep.subr.mxu0 0.0
  %4922 = vmatpush1.msra.mxu0 %v4855
  %4923 = vmatprep.subr.mxu0 0.0
  %4924 = vmatpush1.msra.mxu0 %v4856
  %4925 = vmatprep.subr.mxu0 0.0
  %4926 = vmatpush1.msra.mxu0 %v4857
  %4927 = vmatprep.subr.mxu0 0.0
  %4928 = vmatpush1.msra.mxu0 %v4858
  %4929 = vmatprep.subr.mxu0 0.0
  %4930 = vmatpush1.msra.mxu0 %v4859
  %4931 = vmatprep.subr.mxu0 0.0
  %4932 = vmatpush1.msra.mxu0 %v4860
  %4933 = vmatprep.subr.mxu0 0.0
  %4934 = vmatpush1.msra.mxu0 %v4861
  %4935 = vmatprep.subr.mxu0 0.0
  %4936 = vmatpush1.msra.mxu0 %v4862
  %4937 = vmatprep.subr.mxu0 0.0
  %4938 = vmatpush1.msra.mxu0 %v4863
  %4939 = vmatprep.subr.mxu0 0.0
  %4940 = vmatpush1.msra.mxu0 %v4864
  %4941 = vmatprep.subr.mxu0 0.0
  %4942 = vmatpush1.msra.mxu0 %v4865
  %4943 = vmatprep.subr.mxu0 0.0
  %4944 = vmatpush1.msra.mxu0 %v4866
  %4945 = vmatprep.subr.mxu0 0.0
  %4946 = vmatpush1.msra.mxu0 %v4867
  %4947 = vmatprep.subr.mxu0 0.0
  %4948 = vmatpush1.msra.mxu0 %v4868
  %4949 = vmatprep.subr.mxu0 0.0
  %4950 = vmatpush1.msra.mxu0 %v4869
  %4951 = vmatprep.subr.mxu0 0.0
  %4952 = vmatpush1.msra.mxu0 %v4870
  %4953 = vmatprep.subr.mxu0 0.0
  %4954 = vmatpush1.msra.mxu0 %v4871
  %4955 = vmatprep.subr.mxu0 0.0
  %4956 = vmatpush1.msra.mxu0 %v4872
  %4957 = vmatprep.subr.mxu0 0.0
  %4958 = vmatpush1.msra.mxu0 %v4873
  %4959 = vmatprep.subr.mxu0 0.0
  %4960 = vmatpush1.msra.mxu0 %v4874
  %4961 = vmatprep.subr.mxu0 0.0
  %4962 = vmatpush1.msra.mxu0 %v4875
  %4963 = vmatprep.subr.mxu0 0.0
  %4964 = vmatpush1.msra.mxu0 %v4876
  %4965 = vmatprep.subr.mxu0 0.0
  %4966 = vmatpush1.msra.mxu0 %v4877
  %4967 = vmatprep.subr.mxu0 0.0
  %4968 = vmatpush1.msra.mxu0 %v4878
  %4969 = vmatprep.subr.mxu0 0.0
  %4970 = vmatpush1.msra.mxu0 %v4879
  %4971 = vmatprep.subr.mxu0 0.0
  %4972 = vmatpush1.msra.mxu0 %v4880
  %4973 = vmatprep.subr.mxu0 0.0
  %4974 = vmatpush1.msra.mxu0 %v4881
  %4975 = vmatprep.subr.mxu0 0.0
  %4976 = vmatpush1.msra.mxu0 %v4882
  %4977 = vmatprep.subr.mxu0 0.0
  %4978 = vmatpush1.msra.mxu0 %v4883
  %4979 = vmatprep.subr.mxu0 0.0
  %4980 = vmatpush1.msra.mxu0 %v4884
  %4981 = vmatprep.mubr.f32.mxu0 %v4838
  %4982 = vmatmul.mubr.f32.gmra.mrb[0].mxu0 %v4837
  %v4983 = vpop.f32.mrb[0].mxu0
  %v4984 = vadd.f32 0.0, %v4983
  %v4985 = vpop.f32.mrb[0].mxu0
  %4986 = vmatprep.mubr.f32.mxu0 %v4842
  %4987 = vmatmul.mubr.f32.gmra.mrb[0].mxu0 %v4841
  %v4988 = vpop.f32.mrb[0].mxu0
  %v4989 = vadd.f32 0.0, %v4988
  %v4990 = vpop.f32.mrb[0].mxu0
  %4991 = vmatprep.mubr.f32.mxu0 %v4846
  %4992 = vmatmul.mubr.f32.gmra.mrb[0].mxu0 %v4845
  %v4993 = vpop.f32.mrb[0].mxu0
  %v4994 = vadd.f32 0.0, %v4993
  %v4995 = vpop.f32.mrb[0].mxu0
  %4996 = vmatprep.mubr.f32.mxu0 %v4850
  %4997 = vmatmul.mubr.f32.gmra.mrb[0].mxu0 %v4849
  %v4998 = vpop.f32.mrb[0].mxu0
  %v4999 = vadd.f32 0.0, %v4998
  %v5000 = vpop.f32.mrb[0].mxu0
  %5001 = vdwg.mxu0
  %5002 = vmatprep.subr.mxu0 0.0
  %5003 = vmatpush1.msra.mxu0 %v4885
  %5004 = vmatprep.subr.mxu0 0.0
  %5005 = vmatpush1.msra.mxu0 %v4886
  %5006 = vmatprep.subr.mxu0 0.0
  %5007 = vmatpush1.msra.mxu0 %v4887
  %5008 = vmatprep.subr.mxu0 0.0
  %5009 = vmatpush1.msra.mxu0 %v4888
  %5010 = vmatprep.subr.mxu0 0.0
  %5011 = vmatpush1.msra.mxu0 %v4889
  %5012 = vmatprep.subr.mxu0 0.0
  %5013 = vmatpush1.msra.mxu0 %v4890
  %5014 = vmatprep.subr.mxu0 0.0
  %5015 = vmatpush1.msra.mxu0 %v4891
  %5016 = vmatprep.subr.mxu0 0.0
  %5017 = vmatpush1.msra.mxu0 %v4892
  %5018 = vmatprep.subr.mxu0 0.0
  %5019 = vmatpush1.msra.mxu0 %v4893
  %5020 = vmatprep.subr.mxu0 0.0
  %5021 = vmatpush1.msra.mxu0 %v4894
  %5022 = vmatprep.subr.mxu0 0.0
  %5023 = vmatpush1.msra.mxu0 %v4895
  %5024 = vmatprep.subr.mxu0 0.0
  %5025 = vmatpush1.msra.mxu0 %v4896
  %5026 = vmatprep.subr.mxu0 0.0
  %5027 = vmatpush1.msra.mxu0 %v4897
  %5028 = vmatprep.subr.mxu0 0.0
  %5029 = vmatpush1.msra.mxu0 %v4898
  %5030 = vmatprep.subr.mxu0 0.0
  %5031 = vmatpush1.msra.mxu0 %v4899
  %5032 = vmatprep.subr.mxu0 0.0
  %5033 = vmatpush1.msra.mxu0 %v4900
  %5034 = vmatprep.subr.mxu0 0.0
  %5035 = vmatpush1.msra.mxu0 %v4901
  %5036 = vmatprep.subr.mxu0 0.0
  %5037 = vmatpush1.msra.mxu0 %v4902
  %5038 = vmatprep.subr.mxu0 0.0
  %5039 = vmatpush1.msra.mxu0 %v4903
  %5040 = vmatprep.subr.mxu0 0.0
  %5041 = vmatpush1.msra.mxu0 %v4904
  %5042 = vmatprep.subr.mxu0 0.0
  %5043 = vmatpush1.msra.mxu0 %v4905
  %5044 = vmatprep.subr.mxu0 0.0
  %5045 = vmatpush1.msra.mxu0 %v4906
  %5046 = vmatprep.subr.mxu0 0.0
  %5047 = vmatpush1.msra.mxu0 %v4907
  %5048 = vmatprep.subr.mxu0 0.0
  %5049 = vmatpush1.msra.mxu0 %v4908
  %5050 = vmatprep.subr.mxu0 0.0
  %5051 = vmatpush1.msra.mxu0 %v4909
  %5052 = vmatprep.subr.mxu0 0.0
  %5053 = vmatpush1.msra.mxu0 %v4910
  %5054 = vmatprep.subr.mxu0 0.0
  %5055 = vmatpush1.msra.mxu0 %v4911
  %5056 = vmatprep.subr.mxu0 0.0
  %5057 = vmatpush1.msra.mxu0 %v4912
  %5058 = vmatprep.subr.mxu0 0.0
  %5059 = vmatpush1.msra.mxu0 %v4913
  %5060 = vmatprep.subr.mxu0 0.0
  %5061 = vmatpush1.msra.mxu0 %v4914
  %5062 = vmatprep.subr.mxu0 0.0
  %5063 = vmatpush1.msra.mxu0 %v4915
  %5064 = vmatprep.subr.mxu0 0.0
  %5065 = vmatpush1.msra.mxu0 %v4916
  %5066 = vmatprep.mubr.f32.mxu0 %v4840
  %5067 = vmatmul.mubr.f32.gmra.mrb[0].mxu0 %v4839
  %v5068 = vpop.f32.mrb[0].mxu0
  %v5069 = vadd.f32 %v4984, %v5068
  %v5070 = vpop.f32.mrb[0].mxu0
  %5071 = vmatprep.mubr.f32.mxu0 %v4844
  %5072 = vmatmul.mubr.f32.gmra.mrb[0].mxu0 %v4843
  %v5073 = vpop.f32.mrb[0].mxu0
  %v5074 = vadd.f32 %v4989, %v5073
  %v5075 = vpop.f32.mrb[0].mxu0
  %5076 = vmatprep.mubr.f32.mxu0 %v4848
  %5077 = vmatmul.mubr.f32.gmra.mrb[0].mxu0 %v4847
  %v5078 = vpop.f32.mrb[0].mxu0
  %v5079 = vadd.f32 %v4994, %v5078
  %v5080 = vpop.f32.mrb[0].mxu0
  %5081 = vmatprep.mubr.f32.mxu0 %v4852
  %5082 = vmatmul.mubr.f32.gmra.mrb[0].mxu0 %v4851
  %v5083 = vpop.f32.mrb[0].mxu0
  %v5084 = vadd.f32 %v4999, %v5083
  %v5085 = vpop.f32.mrb[0].mxu0
  %5086 = vdwg.mxu0
  %v5087 = vand.u32 %v55, 7
  %v5088 = vshra.s32 %v55, 3
  %v5089 = vand.u32 %v5088, 7
  %5090 = vrot.lane.b32.xlu0 %v5069, 9
  %v5091 = vpop.permute.xlu0 %5090
  %5092 = vrot.lane.b32.xlu0 %v5074, 9
  %v5093 = vpop.permute.xlu0 %5092
  %5094 = vrot.lane.b32.xlu0 %v5079, 9
  %v5095 = vpop.permute.xlu0 %5094
  %5096 = vrot.lane.b32.xlu0 %v5084, 9
  %v5097 = vpop.permute.xlu0 %5096
  %vm5098 = vcmp.ge.s32.totalorder %v5089, 1
  %vm5099 = vcmp.ge.s32.totalorder %v5087, 1
  %vm5100 = vmand %vm5098, %vm5099
  %v5101 = vsel %vm5100, 1, 0
  %vm5102 = vcmp.eq.s32.totalorder %v5101, 1
  %v5103 = vsel %vm5102, %v5091, 0.0
  %v5104 = vsel %vm5102, %v5093, 0.0
  %v5105 = vsel %vm5102, %v5095, 0.0
  %v5106 = vsel %vm5102, %v5097, 0.0
  %v5107 = vld [vmem:[%s6] sm:$0xff]
  %v5108 = vld [vmem:[%s6 + $0x8] sm:$0xff]
  %v5109 = vld [vmem:[%s6 + $0x10] sm:$0xff]
  %v5110 = vld [vmem:[%s6 + $0x18] sm:$0xff]
  %v5111 = vld [vmem:[%s6 + $0x20] sm:$0xff]
  %v5112 = vld [vmem:[%s6 + $0x28] sm:$0xff]
  %v5113 = vld [vmem:[%s6 + $0x30] sm:$0xff]
  %v5114 = vld [vmem:[%s6 + $0x38] sm:$0xff]
  %5115 = vrot.lane.b32.xlu0 %v5069, 8
  %v5116 = vpop.permute.xlu0 %5115
  %5117 = vrot.lane.b32.xlu0 %v5074, 8
  %v5118 = vpop.permute.xlu0 %5117
  %5119 = vrot.lane.b32.xlu0 %v5079, 8
  %v5120 = vpop.permute.xlu0 %5119
  %5121 = vrot.lane.b32.xlu0 %v5084, 8
  %v5122 = vpop.permute.xlu0 %5121
  %v5123 = vsel %vm5098, 1, 0
  %vm5124 = vcmp.eq.s32.totalorder %v5123, 1
  %v5125 = vsel %vm5124, %v5116, 0.0
  %v5126 = vsel %vm5124, %v5118, 0.0
  %v5127 = vsel %vm5124, %v5120, 0.0
  %v5128 = vsel %vm5124, %v5122, 0.0
  %s5129 = scalar_lea.vmem %s6, 64
  %v5130 = vld [vmem:[%s5129] sm:$0xff]
  %v5131 = vld [vmem:[%s5129 + $0x8] sm:$0xff]
  %v5132 = vld [vmem:[%s5129 + $0x10] sm:$0xff]
  %v5133 = vld [vmem:[%s5129 + $0x18] sm:$0xff]
  %v5134 = vld [vmem:[%s5129 + $0x20] sm:$0xff]
  %v5135 = vld [vmem:[%s5129 + $0x28] sm:$0xff]
  %v5136 = vld [vmem:[%s5129 + $0x30] sm:$0xff]
  %v5137 = vld [vmem:[%s5129 + $0x38] sm:$0xff]
  %v5139 = vsel %vm2363, %v5130, 0
  %v5142 = vsel %vm2363, %v5131, 0
  %v5145 = vsel %vm2363, %v5132, 0
  %v5148 = vsel %vm2363, %v5133, 0
  %v5151 = vsel %vm2363, %v5134, 0
  %v5154 = vsel %vm2363, %v5135, 0
  %v5157 = vsel %vm2363, %v5136, 0
  %v5160 = vsel %vm2363, %v5137, 0
  %5162 = vmatprep.subr.mxu0 0.0
  %5163 = vmatpush1.msra.mxu0 %v5125
  %5164 = vmatprep.subr.mxu0 0.0
  %5165 = vmatpush1.msra.mxu0 %v5126
  %5166 = vmatprep.subr.mxu0 0.0
  %5167 = vmatpush1.msra.mxu0 %v5127
  %5168 = vmatprep.subr.mxu0 0.0
  %5169 = vmatpush1.msra.mxu0 %v5128
  %5170 = vmatprep.subr.mxu0 0.0
  %5171 = vmatpush1.msra.mxu0 0.0
  %5172 = vmatprep.subr.mxu0 0.0
  %5173 = vmatpush1.msra.mxu0 0.0
  %5174 = vmatprep.subr.mxu0 0.0
  %5175 = vmatpush1.msra.mxu0 0.0
  %5176 = vmatprep.subr.mxu0 0.0
  %5177 = vmatpush1.msra.mxu0 0.0
  %5178 = vmatprep.subr.mxu0 0.0
  %5179 = vmatpush1.msra.mxu0 0.0
  %5180 = vmatprep.subr.mxu0 0.0
  %5181 = vmatpush1.msra.mxu0 0.0
  %5182 = vmatprep.subr.mxu0 0.0
  %5183 = vmatpush1.msra.mxu0 0.0
  %5184 = vmatprep.subr.mxu0 0.0
  %5185 = vmatpush1.msra.mxu0 0.0
  %5186 = vmatprep.subr.mxu0 0.0
  %5187 = vmatpush1.msra.mxu0 0.0
  %5188 = vmatprep.subr.mxu0 0.0
  %5189 = vmatpush1.msra.mxu0 0.0
  %5190 = vmatprep.subr.mxu0 0.0
  %5191 = vmatpush1.msra.mxu0 0.0
  %5192 = vmatprep.subr.mxu0 0.0
  %5193 = vmatpush1.msra.mxu0 0.0
  %5194 = vmatprep.subr.mxu0 0.0
  %5195 = vmatpush1.msra.mxu0 0.0
  %5196 = vmatprep.subr.mxu0 0.0
  %5197 = vmatpush1.msra.mxu0 0.0
  %5198 = vmatprep.subr.mxu0 0.0
  %5199 = vmatpush1.msra.mxu0 0.0
  %5200 = vmatprep.subr.mxu0 0.0
  %5201 = vmatpush1.msra.mxu0 0.0
  %5202 = vmatprep.subr.mxu0 0.0
  %5203 = vmatpush1.msra.mxu0 0.0
  %5204 = vmatprep.subr.mxu0 0.0
  %5205 = vmatpush1.msra.mxu0 0.0
  %5206 = vmatprep.subr.mxu0 0.0
  %5207 = vmatpush1.msra.mxu0 0.0
  %5208 = vmatprep.subr.mxu0 0.0
  %5209 = vmatpush1.msra.mxu0 0.0
  %5210 = vmatprep.subr.mxu0 0.0
  %5211 = vmatpush1.msra.mxu0 0.0
  %5212 = vmatprep.subr.mxu0 0.0
  %5213 = vmatpush1.msra.mxu0 0.0
  %5214 = vmatprep.subr.mxu0 0.0
  %5215 = vmatpush1.msra.mxu0 0.0
  %5216 = vmatprep.subr.mxu0 0.0
  %5217 = vmatpush1.msra.mxu0 0.0
  %5218 = vmatprep.subr.mxu0 0.0
  %5219 = vmatpush1.msra.mxu0 0.0
  %5220 = vmatprep.subr.mxu0 0.0
  %5221 = vmatpush1.msra.mxu0 0.0
  %5222 = vmatprep.subr.mxu0 0.0
  %5223 = vmatpush1.msra.mxu0 0.0
  %5224 = vmatprep.subr.mxu0 0.0
  %5225 = vmatpush1.msra.mxu0 0.0
  %5226 = vmatprep.mubr.f32.mxu0 0.0
  %5227 = vmatmul.mubr.f32.gmra.mrb[0].mxu0 %v5139
  %v5228 = vpop.f32.mrb[0].mxu0
  %v5229 = vadd.f32 0.0, %v5228
  %v5230 = vpop.f32.mrb[0].mxu0
  %5231 = vmatprep.mubr.f32.mxu0 0.0
  %5232 = vmatmul.mubr.f32.gmra.mrb[0].mxu0 %v5142
  %v5233 = vpop.f32.mrb[0].mxu0
  %v5234 = vadd.f32 0.0, %v5233
  %v5235 = vpop.f32.mrb[0].mxu0
  %5236 = vmatprep.mubr.f32.mxu0 0.0
  %5237 = vmatmul.mubr.f32.gmra.mrb[0].mxu0 %v5145
  %v5238 = vpop.f32.mrb[0].mxu0
  %v5239 = vadd.f32 0.0, %v5238
  %v5240 = vpop.f32.mrb[0].mxu0
  %5241 = vmatprep.mubr.f32.mxu0 0.0
  %5242 = vmatmul.mubr.f32.gmra.mrb[0].mxu0 %v5148
  %v5243 = vpop.f32.mrb[0].mxu0
  %v5244 = vadd.f32 0.0, %v5243
  %v5245 = vpop.f32.mrb[0].mxu0
  %5246 = vmatprep.mubr.f32.mxu0 0.0
  %5247 = vmatmul.mubr.f32.gmra.mrb[0].mxu0 %v5151
  %v5248 = vpop.f32.mrb[0].mxu0
  %v5249 = vadd.f32 0.0, %v5248
  %v5250 = vpop.f32.mrb[0].mxu0
  %5251 = vmatprep.mubr.f32.mxu0 0.0
  %5252 = vmatmul.mubr.f32.gmra.mrb[0].mxu0 %v5154
  %v5253 = vpop.f32.mrb[0].mxu0
  %v5254 = vadd.f32 0.0, %v5253
  %v5255 = vpop.f32.mrb[0].mxu0
  %5256 = vmatprep.mubr.f32.mxu0 0.0
  %5257 = vmatmul.mubr.f32.gmra.mrb[0].mxu0 %v5157
  %v5258 = vpop.f32.mrb[0].mxu0
  %v5259 = vadd.f32 0.0, %v5258
  %v5260 = vpop.f32.mrb[0].mxu0
  %5261 = vmatprep.mubr.f32.mxu0 0.0
  %5262 = vmatmul.mubr.f32.gmra.mrb[0].mxu0 %v5160
  %v5263 = vpop.f32.mrb[0].mxu0
  %v5264 = vadd.f32 0.0, %v5263
  %v5265 = vpop.f32.mrb[0].mxu0
  %5266 = vdwg.mxu0
  %v5268 = vsel %vm2363, %v5107, 0
  %v5271 = vsel %vm2363, %v5108, 0
  %v5274 = vsel %vm2363, %v5109, 0
  %v5277 = vsel %vm2363, %v5110, 0
  %v5280 = vsel %vm2363, %v5111, 0
  %v5283 = vsel %vm2363, %v5112, 0
  %v5286 = vsel %vm2363, %v5113, 0
  %v5289 = vsel %vm2363, %v5114, 0
  %5291 = vmatprep.subr.mxu0 0.0
  %5292 = vmatpush1.msra.mxu0 %v5103
  %5293 = vmatprep.subr.mxu0 0.0
  %5294 = vmatpush1.msra.mxu0 %v5104
  %5295 = vmatprep.subr.mxu0 0.0
  %5296 = vmatpush1.msra.mxu0 %v5105
  %5297 = vmatprep.subr.mxu0 0.0
  %5298 = vmatpush1.msra.mxu0 %v5106
  %5299 = vmatprep.subr.mxu0 0.0
  %5300 = vmatpush1.msra.mxu0 0.0
  %5301 = vmatprep.subr.mxu0 0.0
  %5302 = vmatpush1.msra.mxu0 0.0
  %5303 = vmatprep.subr.mxu0 0.0
  %5304 = vmatpush1.msra.mxu0 0.0
  %5305 = vmatprep.subr.mxu0 0.0
  %5306 = vmatpush1.msra.mxu0 0.0
  %5307 = vmatprep.subr.mxu0 0.0
  %5308 = vmatpush1.msra.mxu0 0.0
  %5309 = vmatprep.subr.mxu0 0.0
  %5310 = vmatpush1.msra.mxu0 0.0
  %5311 = vmatprep.subr.mxu0 0.0
  %5312 = vmatpush1.msra.mxu0 0.0
  %5313 = vmatprep.subr.mxu0 0.0
  %5314 = vmatpush1.msra.mxu0 0.0
  %5315 = vmatprep.subr.mxu0 0.0
  %5316 = vmatpush1.msra.mxu0 0.0
  %5317 = vmatprep.subr.mxu0 0.0
  %5318 = vmatpush1.msra.mxu0 0.0
  %5319 = vmatprep.subr.mxu0 0.0
  %5320 = vmatpush1.msra.mxu0 0.0
  %5321 = vmatprep.subr.mxu0 0.0
  %5322 = vmatpush1.msra.mxu0 0.0
  %5323 = vmatprep.subr.mxu0 0.0
  %5324 = vmatpush1.msra.mxu0 0.0
  %5325 = vmatprep.subr.mxu0 0.0
  %5326 = vmatpush1.msra.mxu0 0.0
  %5327 = vmatprep.subr.mxu0 0.0
  %5328 = vmatpush1.msra.mxu0 0.0
  %5329 = vmatprep.subr.mxu0 0.0
  %5330 = vmatpush1.msra.mxu0 0.0
  %5331 = vmatprep.subr.mxu0 0.0
  %5332 = vmatpush1.msra.mxu0 0.0
  %5333 = vmatprep.subr.mxu0 0.0
  %5334 = vmatpush1.msra.mxu0 0.0
  %5335 = vmatprep.subr.mxu0 0.0
  %5336 = vmatpush1.msra.mxu0 0.0
  %5337 = vmatprep.subr.mxu0 0.0
  %5338 = vmatpush1.msra.mxu0 0.0
  %5339 = vmatprep.subr.mxu0 0.0
  %5340 = vmatpush1.msra.mxu0 0.0
  %5341 = vmatprep.subr.mxu0 0.0
  %5342 = vmatpush1.msra.mxu0 0.0
  %5343 = vmatprep.subr.mxu0 0.0
  %5344 = vmatpush1.msra.mxu0 0.0
  %5345 = vmatprep.subr.mxu0 0.0
  %5346 = vmatpush1.msra.mxu0 0.0
  %5347 = vmatprep.subr.mxu0 0.0
  %5348 = vmatpush1.msra.mxu0 0.0
  %5349 = vmatprep.subr.mxu0 0.0
  %5350 = vmatpush1.msra.mxu0 0.0
  %5351 = vmatprep.subr.mxu0 0.0
  %5352 = vmatpush1.msra.mxu0 0.0
  %5353 = vmatprep.subr.mxu0 0.0
  %5354 = vmatpush1.msra.mxu0 0.0
  %5355 = vmatprep.mubr.f32.mxu0 0.0
  %5356 = vmatmul.mubr.f32.gmra.mrb[0].mxu0 %v5268
  %v5357 = vpop.f32.mrb[0].mxu0
  %v5358 = vadd.f32 %v5229, %v5357
  %v5359 = vpop.f32.mrb[0].mxu0
  %5360 = vmatprep.mubr.f32.mxu0 0.0
  %5361 = vmatmul.mubr.f32.gmra.mrb[0].mxu0 %v5271
  %v5362 = vpop.f32.mrb[0].mxu0
  %v5363 = vadd.f32 %v5234, %v5362
  %v5364 = vpop.f32.mrb[0].mxu0
  %5365 = vmatprep.mubr.f32.mxu0 0.0
  %5366 = vmatmul.mubr.f32.gmra.mrb[0].mxu0 %v5274
  %v5367 = vpop.f32.mrb[0].mxu0
  %v5368 = vadd.f32 %v5239, %v5367
  %v5369 = vpop.f32.mrb[0].mxu0
  %5370 = vmatprep.mubr.f32.mxu0 0.0
  %5371 = vmatmul.mubr.f32.gmra.mrb[0].mxu0 %v5277
  %v5372 = vpop.f32.mrb[0].mxu0
  %v5373 = vadd.f32 %v5244, %v5372
  %v5374 = vpop.f32.mrb[0].mxu0
  %5375 = vmatprep.mubr.f32.mxu0 0.0
  %5376 = vmatmul.mubr.f32.gmra.mrb[0].mxu0 %v5280
  %v5377 = vpop.f32.mrb[0].mxu0
  %v5378 = vadd.f32 %v5249, %v5377
  %v5379 = vpop.f32.mrb[0].mxu0
  %5380 = vmatprep.mubr.f32.mxu0 0.0
  %5381 = vmatmul.mubr.f32.gmra.mrb[0].mxu0 %v5283
  %v5382 = vpop.f32.mrb[0].mxu0
  %v5383 = vadd.f32 %v5254, %v5382
  %v5384 = vpop.f32.mrb[0].mxu0
  %5385 = vmatprep.mubr.f32.mxu0 0.0
  %5386 = vmatmul.mubr.f32.gmra.mrb[0].mxu0 %v5286
  %v5387 = vpop.f32.mrb[0].mxu0
  %v5388 = vadd.f32 %v5259, %v5387
  %v5389 = vpop.f32.mrb[0].mxu0
  %5390 = vmatprep.mubr.f32.mxu0 0.0
  %5391 = vmatmul.mubr.f32.gmra.mrb[0].mxu0 %v5289
  %v5392 = vpop.f32.mrb[0].mxu0
  %v5393 = vadd.f32 %v5264, %v5392
  %v5394 = vpop.f32.mrb[0].mxu0
  %5395 = vdwg.mxu0
  %5396 = vrot.lane.b32.xlu0 %v5069, 7
  %v5397 = vpop.permute.xlu0 %5396
  %5398 = vrot.lane.b32.xlu0 %v5074, 7
  %v5399 = vpop.permute.xlu0 %5398
  %5400 = vrot.lane.b32.xlu0 %v5079, 7
  %v5401 = vpop.permute.xlu0 %5400
  %5402 = vrot.lane.b32.xlu0 %v5084, 7
  %v5403 = vpop.permute.xlu0 %5402
  %vm5404 = vcmp.le.s32.totalorder %v5087, 6
  %vm5405 = vmand %vm5098, %vm5404
  %v5406 = vsel %vm5405, 1, 0
  %vm5407 = vcmp.eq.s32.totalorder %v5406, 1
  %v5408 = vsel %vm5407, %v5397, 0.0
  %v5409 = vsel %vm5407, %v5399, 0.0
  %v5410 = vsel %vm5407, %v5401, 0.0
  %v5411 = vsel %vm5407, %v5403, 0.0
  %s5412 = scalar_lea.vmem %s6, 128
  %v5413 = vld [vmem:[%s5412] sm:$0xff]
  %v5414 = vld [vmem:[%s5412 + $0x8] sm:$0xff]
  %v5415 = vld [vmem:[%s5412 + $0x10] sm:$0xff]
  %v5416 = vld [vmem:[%s5412 + $0x18] sm:$0xff]
  %v5417 = vld [vmem:[%s5412 + $0x20] sm:$0xff]
  %v5418 = vld [vmem:[%s5412 + $0x28] sm:$0xff]
  %v5419 = vld [vmem:[%s5412 + $0x30] sm:$0xff]
  %v5420 = vld [vmem:[%s5412 + $0x38] sm:$0xff]
  %v5422 = vsel %vm2363, %v5413, 0
  %v5425 = vsel %vm2363, %v5414, 0
  %v5428 = vsel %vm2363, %v5415, 0
  %v5431 = vsel %vm2363, %v5416, 0
  %v5434 = vsel %vm2363, %v5417, 0
  %v5437 = vsel %vm2363, %v5418, 0
  %v5440 = vsel %vm2363, %v5419, 0
  %v5443 = vsel %vm2363, %v5420, 0
  %5445 = vmatprep.subr.mxu0 0.0
  %5446 = vmatpush1.msra.mxu0 %v5408
  %5447 = vmatprep.subr.mxu0 0.0
  %5448 = vmatpush1.msra.mxu0 %v5409
  %5449 = vmatprep.subr.mxu0 0.0
  %5450 = vmatpush1.msra.mxu0 %v5410
  %5451 = vmatprep.subr.mxu0 0.0
  %5452 = vmatpush1.msra.mxu0 %v5411
  %5453 = vmatprep.subr.mxu0 0.0
  %5454 = vmatpush1.msra.mxu0 0.0
  %5455 = vmatprep.subr.mxu0 0.0
  %5456 = vmatpush1.msra.mxu0 0.0
  %5457 = vmatprep.subr.mxu0 0.0
  %5458 = vmatpush1.msra.mxu0 0.0
  %5459 = vmatprep.subr.mxu0 0.0
  %5460 = vmatpush1.msra.mxu0 0.0
  %5461 = vmatprep.subr.mxu0 0.0
  %5462 = vmatpush1.msra.mxu0 0.0
  %5463 = vmatprep.subr.mxu0 0.0
  %5464 = vmatpush1.msra.mxu0 0.0
  %5465 = vmatprep.subr.mxu0 0.0
  %5466 = vmatpush1.msra.mxu0 0.0
  %5467 = vmatprep.subr.mxu0 0.0
  %5468 = vmatpush1.msra.mxu0 0.0
  %5469 = vmatprep.subr.mxu0 0.0
  %5470 = vmatpush1.msra.mxu0 0.0
  %5471 = vmatprep.subr.mxu0 0.0
  %5472 = vmatpush1.msra.mxu0 0.0
  %5473 = vmatprep.subr.mxu0 0.0
  %5474 = vmatpush1.msra.mxu0 0.0
  %5475 = vmatprep.subr.mxu0 0.0
  %5476 = vmatpush1.msra.mxu0 0.0
  %5477 = vmatprep.subr.mxu0 0.0
  %5478 = vmatpush1.msra.mxu0 0.0
  %5479 = vmatprep.subr.mxu0 0.0
  %5480 = vmatpush1.msra.mxu0 0.0
  %5481 = vmatprep.subr.mxu0 0.0
  %5482 = vmatpush1.msra.mxu0 0.0
  %5483 = vmatprep.subr.mxu0 0.0
  %5484 = vmatpush1.msra.mxu0 0.0
  %5485 = vmatprep.subr.mxu0 0.0
  %5486 = vmatpush1.msra.mxu0 0.0
  %5487 = vmatprep.subr.mxu0 0.0
  %5488 = vmatpush1.msra.mxu0 0.0
  %5489 = vmatprep.subr.mxu0 0.0
  %5490 = vmatpush1.msra.mxu0 0.0
  %5491 = vmatprep.subr.mxu0 0.0
  %5492 = vmatpush1.msra.mxu0 0.0
  %5493 = vmatprep.subr.mxu0 0.0
  %5494 = vmatpush1.msra.mxu0 0.0
  %5495 = vmatprep.subr.mxu0 0.0
  %5496 = vmatpush1.msra.mxu0 0.0
  %5497 = vmatprep.subr.mxu0 0.0
  %5498 = vmatpush1.msra.mxu0 0.0
  %5499 = vmatprep.subr.mxu0 0.0
  %5500 = vmatpush1.msra.mxu0 0.0
  %5501 = vmatprep.subr.mxu0 0.0
  %5502 = vmatpush1.msra.mxu0 0.0
  %5503 = vmatprep.subr.mxu0 0.0
  %5504 = vmatpush1.msra.mxu0 0.0
  %5505 = vmatprep.subr.mxu0 0.0
  %5506 = vmatpush1.msra.mxu0 0.0
  %5507 = vmatprep.subr.mxu0 0.0
  %5508 = vmatpush1.msra.mxu0 0.0
  %5509 = vmatprep.mubr.f32.mxu0 0.0
  %5510 = vmatmul.mubr.f32.gmra.mrb[0].mxu0 %v5422
  %v5511 = vpop.f32.mrb[0].mxu0
  %v5512 = vadd.f32 0.0, %v5511
  %v5513 = vpop.f32.mrb[0].mxu0
  %5514 = vmatprep.mubr.f32.mxu0 0.0
  %5515 = vmatmul.mubr.f32.gmra.mrb[0].mxu0 %v5425
  %v5516 = vpop.f32.mrb[0].mxu0
  %v5517 = vadd.f32 0.0, %v5516
  %v5518 = vpop.f32.mrb[0].mxu0
  %5519 = vmatprep.mubr.f32.mxu0 0.0
  %5520 = vmatmul.mubr.f32.gmra.mrb[0].mxu0 %v5428
  %v5521 = vpop.f32.mrb[0].mxu0
  %v5522 = vadd.f32 0.0, %v5521
  %v5523 = vpop.f32.mrb[0].mxu0
  %5524 = vmatprep.mubr.f32.mxu0 0.0
  %5525 = vmatmul.mubr.f32.gmra.mrb[0].mxu0 %v5431
  %v5526 = vpop.f32.mrb[0].mxu0
  %v5527 = vadd.f32 0.0, %v5526
  %v5528 = vpop.f32.mrb[0].mxu0
  %5529 = vmatprep.mubr.f32.mxu0 0.0
  %5530 = vmatmul.mubr.f32.gmra.mrb[0].mxu0 %v5434
  %v5531 = vpop.f32.mrb[0].mxu0
  %v5532 = vadd.f32 0.0, %v5531
  %v5533 = vpop.f32.mrb[0].mxu0
  %5534 = vmatprep.mubr.f32.mxu0 0.0
  %5535 = vmatmul.mubr.f32.gmra.mrb[0].mxu0 %v5437
  %v5536 = vpop.f32.mrb[0].mxu0
  %v5537 = vadd.f32 0.0, %v5536
  %v5538 = vpop.f32.mrb[0].mxu0
  %5539 = vmatprep.mubr.f32.mxu0 0.0
  %5540 = vmatmul.mubr.f32.gmra.mrb[0].mxu0 %v5440
  %v5541 = vpop.f32.mrb[0].mxu0
  %v5542 = vadd.f32 0.0, %v5541
  %v5543 = vpop.f32.mrb[0].mxu0
  %5544 = vmatprep.mubr.f32.mxu0 0.0
  %5545 = vmatmul.mubr.f32.gmra.mrb[0].mxu0 %v5443
  %v5546 = vpop.f32.mrb[0].mxu0
  %v5547 = vadd.f32 0.0, %v5546
  %v5548 = vpop.f32.mrb[0].mxu0
  %5549 = vdwg.mxu0
  %v5550 = vadd.f32 %v5358, %v5512
  %v5551 = vadd.f32 %v5363, %v5517
  %v5552 = vadd.f32 %v5368, %v5522
  %v5553 = vadd.f32 %v5373, %v5527
  %v5554 = vadd.f32 %v5378, %v5532
  %v5555 = vadd.f32 %v5383, %v5537
  %v5556 = vadd.f32 %v5388, %v5542
  %v5557 = vadd.f32 %v5393, %v5547
  %5558 = vrot.lane.b32.xlu0 %v5069, 1
  %v5559 = vpop.permute.xlu0 %5558
  %5560 = vrot.lane.b32.xlu0 %v5074, 1
  %v5561 = vpop.permute.xlu0 %5560
  %5562 = vrot.lane.b32.xlu0 %v5079, 1
  %v5563 = vpop.permute.xlu0 %5562
  %5564 = vrot.lane.b32.xlu0 %v5084, 1
  %v5565 = vpop.permute.xlu0 %5564
  %v5566 = vsel %vm5099, 1, 0
  %vm5567 = vcmp.eq.s32.totalorder %v5566, 1
  %v5568 = vsel %vm5567, %v5559, 0.0
  %v5569 = vsel %vm5567, %v5561, 0.0
  %v5570 = vsel %vm5567, %v5563, 0.0
  %v5571 = vsel %vm5567, %v5565, 0.0
  %s5572 = scalar_lea.vmem %s6, 192
  %v5573 = vld [vmem:[%s5572] sm:$0xff]
  %v5574 = vld [vmem:[%s5572 + $0x8] sm:$0xff]
  %v5575 = vld [vmem:[%s5572 + $0x10] sm:$0xff]
  %v5576 = vld [vmem:[%s5572 + $0x18] sm:$0xff]
  %v5577 = vld [vmem:[%s5572 + $0x20] sm:$0xff]
  %v5578 = vld [vmem:[%s5572 + $0x28] sm:$0xff]
  %v5579 = vld [vmem:[%s5572 + $0x30] sm:$0xff]
  %v5580 = vld [vmem:[%s5572 + $0x38] sm:$0xff]
  %v5582 = vsel %vm2363, %v5573, 0
  %v5585 = vsel %vm2363, %v5574, 0
  %v5588 = vsel %vm2363, %v5575, 0
  %v5591 = vsel %vm2363, %v5576, 0
  %v5594 = vsel %vm2363, %v5577, 0
  %v5597 = vsel %vm2363, %v5578, 0
  %v5600 = vsel %vm2363, %v5579, 0
  %v5603 = vsel %vm2363, %v5580, 0
  %5605 = vmatprep.subr.mxu0 0.0
  %5606 = vmatpush1.msra.mxu0 %v5568
  %5607 = vmatprep.subr.mxu0 0.0
  %5608 = vmatpush1.msra.mxu0 %v5569
  %5609 = vmatprep.subr.mxu0 0.0
  %5610 = vmatpush1.msra.mxu0 %v5570
  %5611 = vmatprep.subr.mxu0 0.0
  %5612 = vmatpush1.msra.mxu0 %v5571
  %5613 = vmatprep.subr.mxu0 0.0
  %5614 = vmatpush1.msra.mxu0 0.0
  %5615 = vmatprep.subr.mxu0 0.0
  %5616 = vmatpush1.msra.mxu0 0.0
  %5617 = vmatprep.subr.mxu0 0.0
  %5618 = vmatpush1.msra.mxu0 0.0
  %5619 = vmatprep.subr.mxu0 0.0
  %5620 = vmatpush1.msra.mxu0 0.0
  %5621 = vmatprep.subr.mxu0 0.0
  %5622 = vmatpush1.msra.mxu0 0.0
  %5623 = vmatprep.subr.mxu0 0.0
  %5624 = vmatpush1.msra.mxu0 0.0
  %5625 = vmatprep.subr.mxu0 0.0
  %5626 = vmatpush1.msra.mxu0 0.0
  %5627 = vmatprep.subr.mxu0 0.0
  %5628 = vmatpush1.msra.mxu0 0.0
  %5629 = vmatprep.subr.mxu0 0.0
  %5630 = vmatpush1.msra.mxu0 0.0
  %5631 = vmatprep.subr.mxu0 0.0
  %5632 = vmatpush1.msra.mxu0 0.0
  %5633 = vmatprep.subr.mxu0 0.0
  %5634 = vmatpush1.msra.mxu0 0.0
  %5635 = vmatprep.subr.mxu0 0.0
  %5636 = vmatpush1.msra.mxu0 0.0
  %5637 = vmatprep.subr.mxu0 0.0
  %5638 = vmatpush1.msra.mxu0 0.0
  %5639 = vmatprep.subr.mxu0 0.0
  %5640 = vmatpush1.msra.mxu0 0.0
  %5641 = vmatprep.subr.mxu0 0.0
  %5642 = vmatpush1.msra.mxu0 0.0
  %5643 = vmatprep.subr.mxu0 0.0
  %5644 = vmatpush1.msra.mxu0 0.0
  %5645 = vmatprep.subr.mxu0 0.0
  %5646 = vmatpush1.msra.mxu0 0.0
  %5647 = vmatprep.subr.mxu0 0.0
  %5648 = vmatpush1.msra.mxu0 0.0
  %5649 = vmatprep.subr.mxu0 0.0
  %5650 = vmatpush1.msra.mxu0 0.0
  %5651 = vmatprep.subr.mxu0 0.0
  %5652 = vmatpush1.msra.mxu0 0.0
  %5653 = vmatprep.subr.mxu0 0.0
  %5654 = vmatpush1.msra.mxu0 0.0
  %5655 = vmatprep.subr.mxu0 0.0
  %5656 = vmatpush1.msra.mxu0 0.0
  %5657 = vmatprep.subr.mxu0 0.0
  %5658 = vmatpush1.msra.mxu0 0.0
  %5659 = vmatprep.subr.mxu0 0.0
  %5660 = vmatpush1.msra.mxu0 0.0
  %5661 = vmatprep.subr.mxu0 0.0
  %5662 = vmatpush1.msra.mxu0 0.0
  %5663 = vmatprep.subr.mxu0 0.0
  %5664 = vmatpush1.msra.mxu0 0.0
  %5665 = vmatprep.subr.mxu0 0.0
  %5666 = vmatpush1.msra.mxu0 0.0
  %5667 = vmatprep.subr.mxu0 0.0
  %5668 = vmatpush1.msra.mxu0 0.0
  %5669 = vmatprep.mubr.f32.mxu0 0.0
  %5670 = vmatmul.mubr.f32.gmra.mrb[0].mxu0 %v5582
  %v5671 = vpop.f32.mrb[0].mxu0
  %v5672 = vadd.f32 0.0, %v5671
  %v5673 = vpop.f32.mrb[0].mxu0
  %5674 = vmatprep.mubr.f32.mxu0 0.0
  %5675 = vmatmul.mubr.f32.gmra.mrb[0].mxu0 %v5585
  %v5676 = vpop.f32.mrb[0].mxu0
  %v5677 = vadd.f32 0.0, %v5676
  %v5678 = vpop.f32.mrb[0].mxu0
  %5679 = vmatprep.mubr.f32.mxu0 0.0
  %5680 = vmatmul.mubr.f32.gmra.mrb[0].mxu0 %v5588
  %v5681 = vpop.f32.mrb[0].mxu0
  %v5682 = vadd.f32 0.0, %v5681
  %v5683 = vpop.f32.mrb[0].mxu0
  %5684 = vmatprep.mubr.f32.mxu0 0.0
  %5685 = vmatmul.mubr.f32.gmra.mrb[0].mxu0 %v5591
  %v5686 = vpop.f32.mrb[0].mxu0
  %v5687 = vadd.f32 0.0, %v5686
  %v5688 = vpop.f32.mrb[0].mxu0
  %5689 = vmatprep.mubr.f32.mxu0 0.0
  %5690 = vmatmul.mubr.f32.gmra.mrb[0].mxu0 %v5594
  %v5691 = vpop.f32.mrb[0].mxu0
  %v5692 = vadd.f32 0.0, %v5691
  %v5693 = vpop.f32.mrb[0].mxu0
  %5694 = vmatprep.mubr.f32.mxu0 0.0
  %5695 = vmatmul.mubr.f32.gmra.mrb[0].mxu0 %v5597
  %v5696 = vpop.f32.mrb[0].mxu0
  %v5697 = vadd.f32 0.0, %v5696
  %v5698 = vpop.f32.mrb[0].mxu0
  %5699 = vmatprep.mubr.f32.mxu0 0.0
  %5700 = vmatmul.mubr.f32.gmra.mrb[0].mxu0 %v5600
  %v5701 = vpop.f32.mrb[0].mxu0
  %v5702 = vadd.f32 0.0, %v5701
  %v5703 = vpop.f32.mrb[0].mxu0
  %5704 = vmatprep.mubr.f32.mxu0 0.0
  %5705 = vmatmul.mubr.f32.gmra.mrb[0].mxu0 %v5603
  %v5706 = vpop.f32.mrb[0].mxu0
  %v5707 = vadd.f32 0.0, %v5706
  %v5708 = vpop.f32.mrb[0].mxu0
  %5709 = vdwg.mxu0
  %v5710 = vadd.f32 %v5550, %v5672
  %v5711 = vadd.f32 %v5551, %v5677
  %v5712 = vadd.f32 %v5552, %v5682
  %v5713 = vadd.f32 %v5553, %v5687
  %v5714 = vadd.f32 %v5554, %v5692
  %v5715 = vadd.f32 %v5555, %v5697
  %v5716 = vadd.f32 %v5556, %v5702
  %v5717 = vadd.f32 %v5557, %v5707
  %s5718 = scalar_lea.vmem %s6, 256
  %v5719 = vld [vmem:[%s5718] sm:$0xff]
  %v5720 = vld [vmem:[%s5718 + $0x8] sm:$0xff]
  %v5721 = vld [vmem:[%s5718 + $0x10] sm:$0xff]
  %v5722 = vld [vmem:[%s5718 + $0x18] sm:$0xff]
  %v5723 = vld [vmem:[%s5718 + $0x20] sm:$0xff]
  %v5724 = vld [vmem:[%s5718 + $0x28] sm:$0xff]
  %v5725 = vld [vmem:[%s5718 + $0x30] sm:$0xff]
  %v5726 = vld [vmem:[%s5718 + $0x38] sm:$0xff]
  %v5728 = vsel %vm2363, %v5719, 0
  %v5731 = vsel %vm2363, %v5720, 0
  %v5734 = vsel %vm2363, %v5721, 0
  %v5737 = vsel %vm2363, %v5722, 0
  %v5740 = vsel %vm2363, %v5723, 0
  %v5743 = vsel %vm2363, %v5724, 0
  %v5746 = vsel %vm2363, %v5725, 0
  %v5749 = vsel %vm2363, %v5726, 0
  %5751 = vmatprep.subr.mxu0 0.0
  %5752 = vmatpush1.msra.mxu0 %v5069
  %5753 = vmatprep.subr.mxu0 0.0
  %5754 = vmatpush1.msra.mxu0 %v5074
  %5755 = vmatprep.subr.mxu0 0.0
  %5756 = vmatpush1.msra.mxu0 %v5079
  %5757 = vmatprep.subr.mxu0 0.0
  %5758 = vmatpush1.msra.mxu0 %v5084
  %5759 = vmatprep.subr.mxu0 0.0
  %5760 = vmatpush1.msra.mxu0 0.0
  %5761 = vmatprep.subr.mxu0 0.0
  %5762 = vmatpush1.msra.mxu0 0.0
  %5763 = vmatprep.subr.mxu0 0.0
  %5764 = vmatpush1.msra.mxu0 0.0
  %5765 = vmatprep.subr.mxu0 0.0
  %5766 = vmatpush1.msra.mxu0 0.0
  %5767 = vmatprep.subr.mxu0 0.0
  %5768 = vmatpush1.msra.mxu0 0.0
  %5769 = vmatprep.subr.mxu0 0.0
  %5770 = vmatpush1.msra.mxu0 0.0
  %5771 = vmatprep.subr.mxu0 0.0
  %5772 = vmatpush1.msra.mxu0 0.0
  %5773 = vmatprep.subr.mxu0 0.0
  %5774 = vmatpush1.msra.mxu0 0.0
  %5775 = vmatprep.subr.mxu0 0.0
  %5776 = vmatpush1.msra.mxu0 0.0
  %5777 = vmatprep.subr.mxu0 0.0
  %5778 = vmatpush1.msra.mxu0 0.0
  %5779 = vmatprep.subr.mxu0 0.0
  %5780 = vmatpush1.msra.mxu0 0.0
  %5781 = vmatprep.subr.mxu0 0.0
  %5782 = vmatpush1.msra.mxu0 0.0
  %5783 = vmatprep.subr.mxu0 0.0
  %5784 = vmatpush1.msra.mxu0 0.0
  %5785 = vmatprep.subr.mxu0 0.0
  %5786 = vmatpush1.msra.mxu0 0.0
  %5787 = vmatprep.subr.mxu0 0.0
  %5788 = vmatpush1.msra.mxu0 0.0
  %5789 = vmatprep.subr.mxu0 0.0
  %5790 = vmatpush1.msra.mxu0 0.0
  %5791 = vmatprep.subr.mxu0 0.0
  %5792 = vmatpush1.msra.mxu0 0.0
  %5793 = vmatprep.subr.mxu0 0.0
  %5794 = vmatpush1.msra.mxu0 0.0
  %5795 = vmatprep.subr.mxu0 0.0
  %5796 = vmatpush1.msra.mxu0 0.0
  %5797 = vmatprep.subr.mxu0 0.0
  %5798 = vmatpush1.msra.mxu0 0.0
  %5799 = vmatprep.subr.mxu0 0.0
  %5800 = vmatpush1.msra.mxu0 0.0
  %5801 = vmatprep.subr.mxu0 0.0
  %5802 = vmatpush1.msra.mxu0 0.0
  %5803 = vmatprep.subr.mxu0 0.0
  %5804 = vmatpush1.msra.mxu0 0.0
  %5805 = vmatprep.subr.mxu0 0.0
  %5806 = vmatpush1.msra.mxu0 0.0
  %5807 = vmatprep.subr.mxu0 0.0
  %5808 = vmatpush1.msra.mxu0 0.0
  %5809 = vmatprep.subr.mxu0 0.0
  %5810 = vmatpush1.msra.mxu0 0.0
  %5811 = vmatprep.subr.mxu0 0.0
  %5812 = vmatpush1.msra.mxu0 0.0
  %5813 = vmatprep.subr.mxu0 0.0
  %5814 = vmatpush1.msra.mxu0 0.0
  %5815 = vmatprep.mubr.f32.mxu0 0.0
  %5816 = vmatmul.mubr.f32.gmra.mrb[0].mxu0 %v5728
  %v5817 = vpop.f32.mrb[0].mxu0
  %v5818 = vadd.f32 0.0, %v5817
  %v5819 = vpop.f32.mrb[0].mxu0
  %5820 = vmatprep.mubr.f32.mxu0 0.0
  %5821 = vmatmul.mubr.f32.gmra.mrb[0].mxu0 %v5731
  %v5822 = vpop.f32.mrb[0].mxu0
  %v5823 = vadd.f32 0.0, %v5822
  %v5824 = vpop.f32.mrb[0].mxu0
  %5825 = vmatprep.mubr.f32.mxu0 0.0
  %5826 = vmatmul.mubr.f32.gmra.mrb[0].mxu0 %v5734
  %v5827 = vpop.f32.mrb[0].mxu0
  %v5828 = vadd.f32 0.0, %v5827
  %v5829 = vpop.f32.mrb[0].mxu0
  %5830 = vmatprep.mubr.f32.mxu0 0.0
  %5831 = vmatmul.mubr.f32.gmra.mrb[0].mxu0 %v5737
  %v5832 = vpop.f32.mrb[0].mxu0
  %v5833 = vadd.f32 0.0, %v5832
  %v5834 = vpop.f32.mrb[0].mxu0
  %5835 = vmatprep.mubr.f32.mxu0 0.0
  %5836 = vmatmul.mubr.f32.gmra.mrb[0].mxu0 %v5740
  %v5837 = vpop.f32.mrb[0].mxu0
  %v5838 = vadd.f32 0.0, %v5837
  %v5839 = vpop.f32.mrb[0].mxu0
  %5840 = vmatprep.mubr.f32.mxu0 0.0
  %5841 = vmatmul.mubr.f32.gmra.mrb[0].mxu0 %v5743
  %v5842 = vpop.f32.mrb[0].mxu0
  %v5843 = vadd.f32 0.0, %v5842
  %v5844 = vpop.f32.mrb[0].mxu0
  %5845 = vmatprep.mubr.f32.mxu0 0.0
  %5846 = vmatmul.mubr.f32.gmra.mrb[0].mxu0 %v5746
  %v5847 = vpop.f32.mrb[0].mxu0
  %v5848 = vadd.f32 0.0, %v5847
  %v5849 = vpop.f32.mrb[0].mxu0
  %5850 = vmatprep.mubr.f32.mxu0 0.0
  %5851 = vmatmul.mubr.f32.gmra.mrb[0].mxu0 %v5749
  %v5852 = vpop.f32.mrb[0].mxu0
  %v5853 = vadd.f32 0.0, %v5852
  %v5854 = vpop.f32.mrb[0].mxu0
  %5855 = vdwg.mxu0
  %v5856 = vadd.f32 %v5710, %v5818
  %v5857 = vadd.f32 %v5711, %v5823
  %v5858 = vadd.f32 %v5712, %v5828
  %v5859 = vadd.f32 %v5713, %v5833
  %v5860 = vadd.f32 %v5714, %v5838
  %v5861 = vadd.f32 %v5715, %v5843
  %v5862 = vadd.f32 %v5716, %v5848
  %v5863 = vadd.f32 %v5717, %v5853
  %5864 = vrot.lane.b32.xlu0 %v5069, 127
  %v5865 = vpop.permute.xlu0 %5864
  %5866 = vrot.lane.b32.xlu0 %v5074, 127
  %v5867 = vpop.permute.xlu0 %5866
  %5868 = vrot.lane.b32.xlu0 %v5079, 127
  %v5869 = vpop.permute.xlu0 %5868
  %5870 = vrot.lane.b32.xlu0 %v5084, 127
  %v5871 = vpop.permute.xlu0 %5870
  %v5872 = vsel %vm5404, 1, 0
  %vm5873 = vcmp.eq.s32.totalorder %v5872, 1
  %v5874 = vsel %vm5873, %v5865, 0.0
  %v5875 = vsel %vm5873, %v5867, 0.0
  %v5876 = vsel %vm5873, %v5869, 0.0
  %v5877 = vsel %vm5873, %v5871, 0.0
  %s5878 = scalar_lea.vmem %s6, 320
  %v5879 = vld [vmem:[%s5878] sm:$0xff]
  %v5880 = vld [vmem:[%s5878 + $0x8] sm:$0xff]
  %v5881 = vld [vmem:[%s5878 + $0x10] sm:$0xff]
  %v5882 = vld [vmem:[%s5878 + $0x18] sm:$0xff]
  %v5883 = vld [vmem:[%s5878 + $0x20] sm:$0xff]
  %v5884 = vld [vmem:[%s5878 + $0x28] sm:$0xff]
  %v5885 = vld [vmem:[%s5878 + $0x30] sm:$0xff]
  %v5886 = vld [vmem:[%s5878 + $0x38] sm:$0xff]
  %v5888 = vsel %vm2363, %v5879, 0
  %v5891 = vsel %vm2363, %v5880, 0
  %v5894 = vsel %vm2363, %v5881, 0
  %v5897 = vsel %vm2363, %v5882, 0
  %v5900 = vsel %vm2363, %v5883, 0
  %v5903 = vsel %vm2363, %v5884, 0
  %v5906 = vsel %vm2363, %v5885, 0
  %v5909 = vsel %vm2363, %v5886, 0
  %5911 = vmatprep.subr.mxu0 0.0
  %5912 = vmatpush1.msra.mxu0 %v5874
  %5913 = vmatprep.subr.mxu0 0.0
  %5914 = vmatpush1.msra.mxu0 %v5875
  %5915 = vmatprep.subr.mxu0 0.0
  %5916 = vmatpush1.msra.mxu0 %v5876
  %5917 = vmatprep.subr.mxu0 0.0
  %5918 = vmatpush1.msra.mxu0 %v5877
  %5919 = vmatprep.subr.mxu0 0.0
  %5920 = vmatpush1.msra.mxu0 0.0
  %5921 = vmatprep.subr.mxu0 0.0
  %5922 = vmatpush1.msra.mxu0 0.0
  %5923 = vmatprep.subr.mxu0 0.0
  %5924 = vmatpush1.msra.mxu0 0.0
  %5925 = vmatprep.subr.mxu0 0.0
  %5926 = vmatpush1.msra.mxu0 0.0
  %5927 = vmatprep.subr.mxu0 0.0
  %5928 = vmatpush1.msra.mxu0 0.0
  %5929 = vmatprep.subr.mxu0 0.0
  %5930 = vmatpush1.msra.mxu0 0.0
  %5931 = vmatprep.subr.mxu0 0.0
  %5932 = vmatpush1.msra.mxu0 0.0
  %5933 = vmatprep.subr.mxu0 0.0
  %5934 = vmatpush1.msra.mxu0 0.0
  %5935 = vmatprep.subr.mxu0 0.0
  %5936 = vmatpush1.msra.mxu0 0.0
  %5937 = vmatprep.subr.mxu0 0.0
  %5938 = vmatpush1.msra.mxu0 0.0
  %5939 = vmatprep.subr.mxu0 0.0
  %5940 = vmatpush1.msra.mxu0 0.0
  %5941 = vmatprep.subr.mxu0 0.0
  %5942 = vmatpush1.msra.mxu0 0.0
  %5943 = vmatprep.subr.mxu0 0.0
  %5944 = vmatpush1.msra.mxu0 0.0
  %5945 = vmatprep.subr.mxu0 0.0
  %5946 = vmatpush1.msra.mxu0 0.0
  %5947 = vmatprep.subr.mxu0 0.0
  %5948 = vmatpush1.msra.mxu0 0.0
  %5949 = vmatprep.subr.mxu0 0.0
  %5950 = vmatpush1.msra.mxu0 0.0
  %5951 = vmatprep.subr.mxu0 0.0
  %5952 = vmatpush1.msra.mxu0 0.0
  %5953 = vmatprep.subr.mxu0 0.0
  %5954 = vmatpush1.msra.mxu0 0.0
  %5955 = vmatprep.subr.mxu0 0.0
  %5956 = vmatpush1.msra.mxu0 0.0
  %5957 = vmatprep.subr.mxu0 0.0
  %5958 = vmatpush1.msra.mxu0 0.0
  %5959 = vmatprep.subr.mxu0 0.0
  %5960 = vmatpush1.msra.mxu0 0.0
  %5961 = vmatprep.subr.mxu0 0.0
  %5962 = vmatpush1.msra.mxu0 0.0
  %5963 = vmatprep.subr.mxu0 0.0
  %5964 = vmatpush1.msra.mxu0 0.0
  %5965 = vmatprep.subr.mxu0 0.0
  %5966 = vmatpush1.msra.mxu0 0.0
  %5967 = vmatprep.subr.mxu0 0.0
  %5968 = vmatpush1.msra.mxu0 0.0
  %5969 = vmatprep.subr.mxu0 0.0
  %5970 = vmatpush1.msra.mxu0 0.0
  %5971 = vmatprep.subr.mxu0 0.0
  %5972 = vmatpush1.msra.mxu0 0.0
  %5973 = vmatprep.subr.mxu0 0.0
  %5974 = vmatpush1.msra.mxu0 0.0
  %5975 = vmatprep.mubr.f32.mxu0 0.0
  %5976 = vmatmul.mubr.f32.gmra.mrb[0].mxu0 %v5888
  %v5977 = vpop.f32.mrb[0].mxu0
  %v5978 = vadd.f32 0.0, %v5977
  %v5979 = vpop.f32.mrb[0].mxu0
  %5980 = vmatprep.mubr.f32.mxu0 0.0
  %5981 = vmatmul.mubr.f32.gmra.mrb[0].mxu0 %v5891
  %v5982 = vpop.f32.mrb[0].mxu0
  %v5983 = vadd.f32 0.0, %v5982
  %v5984 = vpop.f32.mrb[0].mxu0
  %5985 = vmatprep.mubr.f32.mxu0 0.0
  %5986 = vmatmul.mubr.f32.gmra.mrb[0].mxu0 %v5894
  %v5987 = vpop.f32.mrb[0].mxu0
  %v5988 = vadd.f32 0.0, %v5987
  %v5989 = vpop.f32.mrb[0].mxu0
  %5990 = vmatprep.mubr.f32.mxu0 0.0
  %5991 = vmatmul.mubr.f32.gmra.mrb[0].mxu0 %v5897
  %v5992 = vpop.f32.mrb[0].mxu0
  %v5993 = vadd.f32 0.0, %v5992
  %v5994 = vpop.f32.mrb[0].mxu0
  %5995 = vmatprep.mubr.f32.mxu0 0.0
  %5996 = vmatmul.mubr.f32.gmra.mrb[0].mxu0 %v5900
  %v5997 = vpop.f32.mrb[0].mxu0
  %v5998 = vadd.f32 0.0, %v5997
  %v5999 = vpop.f32.mrb[0].mxu0
  %6000 = vmatprep.mubr.f32.mxu0 0.0
  %6001 = vmatmul.mubr.f32.gmra.mrb[0].mxu0 %v5903
  %v6002 = vpop.f32.mrb[0].mxu0
  %v6003 = vadd.f32 0.0, %v6002
  %v6004 = vpop.f32.mrb[0].mxu0
  %6005 = vmatprep.mubr.f32.mxu0 0.0
  %6006 = vmatmul.mubr.f32.gmra.mrb[0].mxu0 %v5906
  %v6007 = vpop.f32.mrb[0].mxu0
  %v6008 = vadd.f32 0.0, %v6007
  %v6009 = vpop.f32.mrb[0].mxu0
  %6010 = vmatprep.mubr.f32.mxu0 0.0
  %6011 = vmatmul.mubr.f32.gmra.mrb[0].mxu0 %v5909
  %v6012 = vpop.f32.mrb[0].mxu0
  %v6013 = vadd.f32 0.0, %v6012
  %v6014 = vpop.f32.mrb[0].mxu0
  %6015 = vdwg.mxu0
  %v6016 = vadd.f32 %v5856, %v5978
  %v6017 = vadd.f32 %v5857, %v5983
  %v6018 = vadd.f32 %v5858, %v5988
  %v6019 = vadd.f32 %v5859, %v5993
  %v6020 = vadd.f32 %v5860, %v5998
  %v6021 = vadd.f32 %v5861, %v6003
  %v6022 = vadd.f32 %v5862, %v6008
  %v6023 = vadd.f32 %v5863, %v6013
  %6024 = vrot.lane.b32.xlu0 %v5069, 121
  %v6025 = vpop.permute.xlu0 %6024
  %6026 = vrot.lane.b32.xlu0 %v5074, 121
  %v6027 = vpop.permute.xlu0 %6026
  %6028 = vrot.lane.b32.xlu0 %v5079, 121
  %v6029 = vpop.permute.xlu0 %6028
  %6030 = vrot.lane.b32.xlu0 %v5084, 121
  %v6031 = vpop.permute.xlu0 %6030
  %vm6032 = vcmp.le.s32.totalorder %v5089, 6
  %vm6033 = vmand %vm6032, %vm5099
  %v6034 = vsel %vm6033, 1, 0
  %vm6035 = vcmp.eq.s32.totalorder %v6034, 1
  %v6036 = vsel %vm6035, %v6025, 0.0
  %v6037 = vsel %vm6035, %v6027, 0.0
  %v6038 = vsel %vm6035, %v6029, 0.0
  %v6039 = vsel %vm6035, %v6031, 0.0
  %s6040 = scalar_lea.vmem %s6, 384
  %v6041 = vld [vmem:[%s6040] sm:$0xff]
  %v6042 = vld [vmem:[%s6040 + $0x8] sm:$0xff]
  %v6043 = vld [vmem:[%s6040 + $0x10] sm:$0xff]
  %v6044 = vld [vmem:[%s6040 + $0x18] sm:$0xff]
  %v6045 = vld [vmem:[%s6040 + $0x20] sm:$0xff]
  %v6046 = vld [vmem:[%s6040 + $0x28] sm:$0xff]
  %v6047 = vld [vmem:[%s6040 + $0x30] sm:$0xff]
  %v6048 = vld [vmem:[%s6040 + $0x38] sm:$0xff]
  %v6050 = vsel %vm2363, %v6041, 0
  %v6053 = vsel %vm2363, %v6042, 0
  %v6056 = vsel %vm2363, %v6043, 0
  %v6059 = vsel %vm2363, %v6044, 0
  %v6062 = vsel %vm2363, %v6045, 0
  %v6065 = vsel %vm2363, %v6046, 0
  %v6068 = vsel %vm2363, %v6047, 0
  %v6071 = vsel %vm2363, %v6048, 0
  %6073 = vmatprep.subr.mxu0 0.0
  %6074 = vmatpush1.msra.mxu0 %v6036
  %6075 = vmatprep.subr.mxu0 0.0
  %6076 = vmatpush1.msra.mxu0 %v6037
  %6077 = vmatprep.subr.mxu0 0.0
  %6078 = vmatpush1.msra.mxu0 %v6038
  %6079 = vmatprep.subr.mxu0 0.0
  %6080 = vmatpush1.msra.mxu0 %v6039
  %6081 = vmatprep.subr.mxu0 0.0
  %6082 = vmatpush1.msra.mxu0 0.0
  %6083 = vmatprep.subr.mxu0 0.0
  %6084 = vmatpush1.msra.mxu0 0.0
  %6085 = vmatprep.subr.mxu0 0.0
  %6086 = vmatpush1.msra.mxu0 0.0
  %6087 = vmatprep.subr.mxu0 0.0
  %6088 = vmatpush1.msra.mxu0 0.0
  %6089 = vmatprep.subr.mxu0 0.0
  %6090 = vmatpush1.msra.mxu0 0.0
  %6091 = vmatprep.subr.mxu0 0.0
  %6092 = vmatpush1.msra.mxu0 0.0
  %6093 = vmatprep.subr.mxu0 0.0
  %6094 = vmatpush1.msra.mxu0 0.0
  %6095 = vmatprep.subr.mxu0 0.0
  %6096 = vmatpush1.msra.mxu0 0.0
  %6097 = vmatprep.subr.mxu0 0.0
  %6098 = vmatpush1.msra.mxu0 0.0
  %6099 = vmatprep.subr.mxu0 0.0
  %6100 = vmatpush1.msra.mxu0 0.0
  %6101 = vmatprep.subr.mxu0 0.0
  %6102 = vmatpush1.msra.mxu0 0.0
  %6103 = vmatprep.subr.mxu0 0.0
  %6104 = vmatpush1.msra.mxu0 0.0
  %6105 = vmatprep.subr.mxu0 0.0
  %6106 = vmatpush1.msra.mxu0 0.0
  %6107 = vmatprep.subr.mxu0 0.0
  %6108 = vmatpush1.msra.mxu0 0.0
  %6109 = vmatprep.subr.mxu0 0.0
  %6110 = vmatpush1.msra.mxu0 0.0
  %6111 = vmatprep.subr.mxu0 0.0
  %6112 = vmatpush1.msra.mxu0 0.0
  %6113 = vmatprep.subr.mxu0 0.0
  %6114 = vmatpush1.msra.mxu0 0.0
  %6115 = vmatprep.subr.mxu0 0.0
  %6116 = vmatpush1.msra.mxu0 0.0
  %6117 = vmatprep.subr.mxu0 0.0
  %6118 = vmatpush1.msra.mxu0 0.0
  %6119 = vmatprep.subr.mxu0 0.0
  %6120 = vmatpush1.msra.mxu0 0.0
  %6121 = vmatprep.subr.mxu0 0.0
  %6122 = vmatpush1.msra.mxu0 0.0
  %6123 = vmatprep.subr.mxu0 0.0
  %6124 = vmatpush1.msra.mxu0 0.0
  %6125 = vmatprep.subr.mxu0 0.0
  %6126 = vmatpush1.msra.mxu0 0.0
  %6127 = vmatprep.subr.mxu0 0.0
  %6128 = vmatpush1.msra.mxu0 0.0
  %6129 = vmatprep.subr.mxu0 0.0
  %6130 = vmatpush1.msra.mxu0 0.0
  %6131 = vmatprep.subr.mxu0 0.0
  %6132 = vmatpush1.msra.mxu0 0.0
  %6133 = vmatprep.subr.mxu0 0.0
  %6134 = vmatpush1.msra.mxu0 0.0
  %6135 = vmatprep.subr.mxu0 0.0
  %6136 = vmatpush1.msra.mxu0 0.0
  %6137 = vmatprep.mubr.f32.mxu0 0.0
  %6138 = vmatmul.mubr.f32.gmra.mrb[0].mxu0 %v6050
  %v6139 = vpop.f32.mrb[0].mxu0
  %v6140 = vadd.f32 0.0, %v6139
  %v6141 = vpop.f32.mrb[0].mxu0
  %6142 = vmatprep.mubr.f32.mxu0 0.0
  %6143 = vmatmul.mubr.f32.gmra.mrb[0].mxu0 %v6053
  %v6144 = vpop.f32.mrb[0].mxu0
  %v6145 = vadd.f32 0.0, %v6144
  %v6146 = vpop.f32.mrb[0].mxu0
  %6147 = vmatprep.mubr.f32.mxu0 0.0
  %6148 = vmatmul.mubr.f32.gmra.mrb[0].mxu0 %v6056
  %v6149 = vpop.f32.mrb[0].mxu0
  %v6150 = vadd.f32 0.0, %v6149
  %v6151 = vpop.f32.mrb[0].mxu0
  %6152 = vmatprep.mubr.f32.mxu0 0.0
  %6153 = vmatmul.mubr.f32.gmra.mrb[0].mxu0 %v6059
  %v6154 = vpop.f32.mrb[0].mxu0
  %v6155 = vadd.f32 0.0, %v6154
  %v6156 = vpop.f32.mrb[0].mxu0
  %6157 = vmatprep.mubr.f32.mxu0 0.0
  %6158 = vmatmul.mubr.f32.gmra.mrb[0].mxu0 %v6062
  %v6159 = vpop.f32.mrb[0].mxu0
  %v6160 = vadd.f32 0.0, %v6159
  %v6161 = vpop.f32.mrb[0].mxu0
  %6162 = vmatprep.mubr.f32.mxu0 0.0
  %6163 = vmatmul.mubr.f32.gmra.mrb[0].mxu0 %v6065
  %v6164 = vpop.f32.mrb[0].mxu0
  %v6165 = vadd.f32 0.0, %v6164
  %v6166 = vpop.f32.mrb[0].mxu0
  %6167 = vmatprep.mubr.f32.mxu0 0.0
  %6168 = vmatmul.mubr.f32.gmra.mrb[0].mxu0 %v6068
  %v6169 = vpop.f32.mrb[0].mxu0
  %v6170 = vadd.f32 0.0, %v6169
  %v6171 = vpop.f32.mrb[0].mxu0
  %6172 = vmatprep.mubr.f32.mxu0 0.0
  %6173 = vmatmul.mubr.f32.gmra.mrb[0].mxu0 %v6071
  %v6174 = vpop.f32.mrb[0].mxu0
  %v6175 = vadd.f32 0.0, %v6174
  %v6176 = vpop.f32.mrb[0].mxu0
  %6177 = vdwg.mxu0
  %v6178 = vadd.f32 %v6016, %v6140
  %v6179 = vadd.f32 %v6017, %v6145
  %v6180 = vadd.f32 %v6018, %v6150
  %v6181 = vadd.f32 %v6019, %v6155
  %v6182 = vadd.f32 %v6020, %v6160
  %v6183 = vadd.f32 %v6021, %v6165
  %v6184 = vadd.f32 %v6022, %v6170
  %v6185 = vadd.f32 %v6023, %v6175
  %6186 = vrot.lane.b32.xlu0 %v5069, 120
  %v6187 = vpop.permute.xlu0 %6186
  %6188 = vrot.lane.b32.xlu0 %v5074, 120
  %v6189 = vpop.permute.xlu0 %6188
  %6190 = vrot.lane.b32.xlu0 %v5079, 120
  %v6191 = vpop.permute.xlu0 %6190
  %6192 = vrot.lane.b32.xlu0 %v5084, 120
  %v6193 = vpop.permute.xlu0 %6192
  %v6194 = vsel %vm6032, 1, 0
  %vm6195 = vcmp.eq.s32.totalorder %v6194, 1
  %v6196 = vsel %vm6195, %v6187, 0.0
  %v6197 = vsel %vm6195, %v6189, 0.0
  %v6198 = vsel %vm6195, %v6191, 0.0
  %v6199 = vsel %vm6195, %v6193, 0.0
  %s6200 = scalar_lea.vmem %s6, 448
  %v6201 = vld [vmem:[%s6200] sm:$0xff]
  %v6202 = vld [vmem:[%s6200 + $0x8] sm:$0xff]
  %v6203 = vld [vmem:[%s6200 + $0x10] sm:$0xff]
  %v6204 = vld [vmem:[%s6200 + $0x18] sm:$0xff]
  %v6205 = vld [vmem:[%s6200 + $0x20] sm:$0xff]
  %v6206 = vld [vmem:[%s6200 + $0x28] sm:$0xff]
  %v6207 = vld [vmem:[%s6200 + $0x30] sm:$0xff]
  %v6208 = vld [vmem:[%s6200 + $0x38] sm:$0xff]
  %v6210 = vsel %vm2363, %v6201, 0
  %v6213 = vsel %vm2363, %v6202, 0
  %v6216 = vsel %vm2363, %v6203, 0
  %v6219 = vsel %vm2363, %v6204, 0
  %v6222 = vsel %vm2363, %v6205, 0
  %v6225 = vsel %vm2363, %v6206, 0
  %v6228 = vsel %vm2363, %v6207, 0
  %v6231 = vsel %vm2363, %v6208, 0
  %6233 = vmatprep.subr.mxu0 0.0
  %6234 = vmatpush1.msra.mxu0 %v6196
  %6235 = vmatprep.subr.mxu0 0.0
  %6236 = vmatpush1.msra.mxu0 %v6197
  %6237 = vmatprep.subr.mxu0 0.0
  %6238 = vmatpush1.msra.mxu0 %v6198
  %6239 = vmatprep.subr.mxu0 0.0
  %6240 = vmatpush1.msra.mxu0 %v6199
  %6241 = vmatprep.subr.mxu0 0.0
  %6242 = vmatpush1.msra.mxu0 0.0
  %6243 = vmatprep.subr.mxu0 0.0
  %6244 = vmatpush1.msra.mxu0 0.0
  %6245 = vmatprep.subr.mxu0 0.0
  %6246 = vmatpush1.msra.mxu0 0.0
  %6247 = vmatprep.subr.mxu0 0.0
  %6248 = vmatpush1.msra.mxu0 0.0
  %6249 = vmatprep.subr.mxu0 0.0
  %6250 = vmatpush1.msra.mxu0 0.0
  %6251 = vmatprep.subr.mxu0 0.0
  %6252 = vmatpush1.msra.mxu0 0.0
  %6253 = vmatprep.subr.mxu0 0.0
  %6254 = vmatpush1.msra.mxu0 0.0
  %6255 = vmatprep.subr.mxu0 0.0
  %6256 = vmatpush1.msra.mxu0 0.0
  %6257 = vmatprep.subr.mxu0 0.0
  %6258 = vmatpush1.msra.mxu0 0.0
  %6259 = vmatprep.subr.mxu0 0.0
  %6260 = vmatpush1.msra.mxu0 0.0
  %6261 = vmatprep.subr.mxu0 0.0
  %6262 = vmatpush1.msra.mxu0 0.0
  %6263 = vmatprep.subr.mxu0 0.0
  %6264 = vmatpush1.msra.mxu0 0.0
  %6265 = vmatprep.subr.mxu0 0.0
  %6266 = vmatpush1.msra.mxu0 0.0
  %6267 = vmatprep.subr.mxu0 0.0
  %6268 = vmatpush1.msra.mxu0 0.0
  %6269 = vmatprep.subr.mxu0 0.0
  %6270 = vmatpush1.msra.mxu0 0.0
  %6271 = vmatprep.subr.mxu0 0.0
  %6272 = vmatpush1.msra.mxu0 0.0
  %6273 = vmatprep.subr.mxu0 0.0
  %6274 = vmatpush1.msra.mxu0 0.0
  %6275 = vmatprep.subr.mxu0 0.0
  %6276 = vmatpush1.msra.mxu0 0.0
  %6277 = vmatprep.subr.mxu0 0.0
  %6278 = vmatpush1.msra.mxu0 0.0
  %6279 = vmatprep.subr.mxu0 0.0
  %6280 = vmatpush1.msra.mxu0 0.0
  %6281 = vmatprep.subr.mxu0 0.0
  %6282 = vmatpush1.msra.mxu0 0.0
  %6283 = vmatprep.subr.mxu0 0.0
  %6284 = vmatpush1.msra.mxu0 0.0
  %6285 = vmatprep.subr.mxu0 0.0
  %6286 = vmatpush1.msra.mxu0 0.0
  %6287 = vmatprep.subr.mxu0 0.0
  %6288 = vmatpush1.msra.mxu0 0.0
  %6289 = vmatprep.subr.mxu0 0.0
  %6290 = vmatpush1.msra.mxu0 0.0
  %6291 = vmatprep.subr.mxu0 0.0
  %6292 = vmatpush1.msra.mxu0 0.0
  %6293 = vmatprep.subr.mxu0 0.0
  %6294 = vmatpush1.msra.mxu0 0.0
  %6295 = vmatprep.subr.mxu0 0.0
  %6296 = vmatpush1.msra.mxu0 0.0
  %6297 = vmatprep.mubr.f32.mxu0 0.0
  %6298 = vmatmul.mubr.f32.gmra.mrb[0].mxu0 %v6210
  %v6299 = vpop.f32.mrb[0].mxu0
  %v6300 = vadd.f32 0.0, %v6299
  %v6301 = vpop.f32.mrb[0].mxu0
  %6302 = vmatprep.mubr.f32.mxu0 0.0
  %6303 = vmatmul.mubr.f32.gmra.mrb[0].mxu0 %v6213
  %v6304 = vpop.f32.mrb[0].mxu0
  %v6305 = vadd.f32 0.0, %v6304
  %v6306 = vpop.f32.mrb[0].mxu0
  %6307 = vmatprep.mubr.f32.mxu0 0.0
  %6308 = vmatmul.mubr.f32.gmra.mrb[0].mxu0 %v6216
  %v6309 = vpop.f32.mrb[0].mxu0
  %v6310 = vadd.f32 0.0, %v6309
  %v6311 = vpop.f32.mrb[0].mxu0
  %6312 = vmatprep.mubr.f32.mxu0 0.0
  %6313 = vmatmul.mubr.f32.gmra.mrb[0].mxu0 %v6219
  %v6314 = vpop.f32.mrb[0].mxu0
  %v6315 = vadd.f32 0.0, %v6314
  %v6316 = vpop.f32.mrb[0].mxu0
  %6317 = vmatprep.mubr.f32.mxu0 0.0
  %6318 = vmatmul.mubr.f32.gmra.mrb[0].mxu0 %v6222
  %v6319 = vpop.f32.mrb[0].mxu0
  %v6320 = vadd.f32 0.0, %v6319
  %v6321 = vpop.f32.mrb[0].mxu0
  %6322 = vmatprep.mubr.f32.mxu0 0.0
  %6323 = vmatmul.mubr.f32.gmra.mrb[0].mxu0 %v6225
  %v6324 = vpop.f32.mrb[0].mxu0
  %v6325 = vadd.f32 0.0, %v6324
  %v6326 = vpop.f32.mrb[0].mxu0
  %6327 = vmatprep.mubr.f32.mxu0 0.0
  %6328 = vmatmul.mubr.f32.gmra.mrb[0].mxu0 %v6228
  %v6329 = vpop.f32.mrb[0].mxu0
  %v6330 = vadd.f32 0.0, %v6329
  %v6331 = vpop.f32.mrb[0].mxu0
  %6332 = vmatprep.mubr.f32.mxu0 0.0
  %6333 = vmatmul.mubr.f32.gmra.mrb[0].mxu0 %v6231
  %v6334 = vpop.f32.mrb[0].mxu0
  %v6335 = vadd.f32 0.0, %v6334
  %v6336 = vpop.f32.mrb[0].mxu0
  %6337 = vdwg.mxu0
  %v6338 = vadd.f32 %v6178, %v6300
  %v6339 = vadd.f32 %v6179, %v6305
  %v6340 = vadd.f32 %v6180, %v6310
  %v6341 = vadd.f32 %v6181, %v6315
  %v6342 = vadd.f32 %v6182, %v6320
  %v6343 = vadd.f32 %v6183, %v6325
  %v6344 = vadd.f32 %v6184, %v6330
  %v6345 = vadd.f32 %v6185, %v6335
  %6346 = vrot.lane.b32.xlu0 %v5069, 119
  %v6347 = vpop.permute.xlu0 %6346
  %6348 = vrot.lane.b32.xlu0 %v5074, 119
  %v6349 = vpop.permute.xlu0 %6348
  %6350 = vrot.lane.b32.xlu0 %v5079, 119
  %v6351 = vpop.permute.xlu0 %6350
  %6352 = vrot.lane.b32.xlu0 %v5084, 119
  %v6353 = vpop.permute.xlu0 %6352
  %vm6354 = vmand %vm6032, %vm5404
  %v6355 = vsel %vm6354, 1, 0
  %vm6356 = vcmp.eq.s32.totalorder %v6355, 1
  %v6357 = vsel %vm6356, %v6347, 0.0
  %v6358 = vsel %vm6356, %v6349, 0.0
  %v6359 = vsel %vm6356, %v6351, 0.0
  %v6360 = vsel %vm6356, %v6353, 0.0
  %s6361 = scalar_lea.vmem %s6, 512
  %v6362 = vld [vmem:[%s6361] sm:$0xff]
  %v6363 = vld [vmem:[%s6361 + $0x8] sm:$0xff]
  %v6364 = vld [vmem:[%s6361 + $0x10] sm:$0xff]
  %v6365 = vld [vmem:[%s6361 + $0x18] sm:$0xff]
  %v6366 = vld [vmem:[%s6361 + $0x20] sm:$0xff]
  %v6367 = vld [vmem:[%s6361 + $0x28] sm:$0xff]
  %v6368 = vld [vmem:[%s6361 + $0x30] sm:$0xff]
  %v6369 = vld [vmem:[%s6361 + $0x38] sm:$0xff]
  %v6371 = vsel %vm2363, %v6362, 0
  %v6374 = vsel %vm2363, %v6363, 0
  %v6377 = vsel %vm2363, %v6364, 0
  %v6380 = vsel %vm2363, %v6365, 0
  %v6383 = vsel %vm2363, %v6366, 0
  %v6386 = vsel %vm2363, %v6367, 0
  %v6389 = vsel %vm2363, %v6368, 0
  %v6392 = vsel %vm2363, %v6369, 0
  %6394 = vmatprep.subr.mxu0 0.0
  %6395 = vmatpush1.msra.mxu0 %v6357
  %6396 = vmatprep.subr.mxu0 0.0
  %6397 = vmatpush1.msra.mxu0 %v6358
  %6398 = vmatprep.subr.mxu0 0.0
  %6399 = vmatpush1.msra.mxu0 %v6359
  %6400 = vmatprep.subr.mxu0 0.0
  %6401 = vmatpush1.msra.mxu0 %v6360
  %6402 = vmatprep.subr.mxu0 0.0
  %6403 = vmatpush1.msra.mxu0 0.0
  %6404 = vmatprep.subr.mxu0 0.0
  %6405 = vmatpush1.msra.mxu0 0.0
  %6406 = vmatprep.subr.mxu0 0.0
  %6407 = vmatpush1.msra.mxu0 0.0
  %6408 = vmatprep.subr.mxu0 0.0
  %6409 = vmatpush1.msra.mxu0 0.0
  %6410 = vmatprep.subr.mxu0 0.0
  %6411 = vmatpush1.msra.mxu0 0.0
  %6412 = vmatprep.subr.mxu0 0.0
  %6413 = vmatpush1.msra.mxu0 0.0
  %6414 = vmatprep.subr.mxu0 0.0
  %6415 = vmatpush1.msra.mxu0 0.0
  %6416 = vmatprep.subr.mxu0 0.0
  %6417 = vmatpush1.msra.mxu0 0.0
  %6418 = vmatprep.subr.mxu0 0.0
  %6419 = vmatpush1.msra.mxu0 0.0
  %6420 = vmatprep.subr.mxu0 0.0
  %6421 = vmatpush1.msra.mxu0 0.0
  %6422 = vmatprep.subr.mxu0 0.0
  %6423 = vmatpush1.msra.mxu0 0.0
  %6424 = vmatprep.subr.mxu0 0.0
  %6425 = vmatpush1.msra.mxu0 0.0
  %6426 = vmatprep.subr.mxu0 0.0
  %6427 = vmatpush1.msra.mxu0 0.0
  %6428 = vmatprep.subr.mxu0 0.0
  %6429 = vmatpush1.msra.mxu0 0.0
  %6430 = vmatprep.subr.mxu0 0.0
  %6431 = vmatpush1.msra.mxu0 0.0
  %6432 = vmatprep.subr.mxu0 0.0
  %6433 = vmatpush1.msra.mxu0 0.0
  %6434 = vmatprep.subr.mxu0 0.0
  %6435 = vmatpush1.msra.mxu0 0.0
  %6436 = vmatprep.subr.mxu0 0.0
  %6437 = vmatpush1.msra.mxu0 0.0
  %6438 = vmatprep.subr.mxu0 0.0
  %6439 = vmatpush1.msra.mxu0 0.0
  %6440 = vmatprep.subr.mxu0 0.0
  %6441 = vmatpush1.msra.mxu0 0.0
  %6442 = vmatprep.subr.mxu0 0.0
  %6443 = vmatpush1.msra.mxu0 0.0
  %6444 = vmatprep.subr.mxu0 0.0
  %6445 = vmatpush1.msra.mxu0 0.0
  %6446 = vmatprep.subr.mxu0 0.0
  %6447 = vmatpush1.msra.mxu0 0.0
  %6448 = vmatprep.subr.mxu0 0.0
  %6449 = vmatpush1.msra.mxu0 0.0
  %6450 = vmatprep.subr.mxu0 0.0
  %6451 = vmatpush1.msra.mxu0 0.0
  %6452 = vmatprep.subr.mxu0 0.0
  %6453 = vmatpush1.msra.mxu0 0.0
  %6454 = vmatprep.subr.mxu0 0.0
  %6455 = vmatpush1.msra.mxu0 0.0
  %6456 = vmatprep.subr.mxu0 0.0
  %6457 = vmatpush1.msra.mxu0 0.0
  %6458 = vmatprep.mubr.f32.mxu0 0.0
  %6459 = vmatmul.mubr.f32.gmra.mrb[0].mxu0 %v6371
  %v6460 = vpop.f32.mrb[0].mxu0
  %v6461 = vadd.f32 0.0, %v6460
  %v6462 = vpop.f32.mrb[0].mxu0
  %6463 = vmatprep.mubr.f32.mxu0 0.0
  %6464 = vmatmul.mubr.f32.gmra.mrb[0].mxu0 %v6374
  %v6465 = vpop.f32.mrb[0].mxu0
  %v6466 = vadd.f32 0.0, %v6465
  %v6467 = vpop.f32.mrb[0].mxu0
  %6468 = vmatprep.mubr.f32.mxu0 0.0
  %6469 = vmatmul.mubr.f32.gmra.mrb[0].mxu0 %v6377
  %v6470 = vpop.f32.mrb[0].mxu0
  %v6471 = vadd.f32 0.0, %v6470
  %v6472 = vpop.f32.mrb[0].mxu0
  %6473 = vmatprep.mubr.f32.mxu0 0.0
  %6474 = vmatmul.mubr.f32.gmra.mrb[0].mxu0 %v6380
  %v6475 = vpop.f32.mrb[0].mxu0
  %v6476 = vadd.f32 0.0, %v6475
  %v6477 = vpop.f32.mrb[0].mxu0
  %6478 = vmatprep.mubr.f32.mxu0 0.0
  %6479 = vmatmul.mubr.f32.gmra.mrb[0].mxu0 %v6383
  %v6480 = vpop.f32.mrb[0].mxu0
  %v6481 = vadd.f32 0.0, %v6480
  %v6482 = vpop.f32.mrb[0].mxu0
  %6483 = vmatprep.mubr.f32.mxu0 0.0
  %6484 = vmatmul.mubr.f32.gmra.mrb[0].mxu0 %v6386
  %v6485 = vpop.f32.mrb[0].mxu0
  %v6486 = vadd.f32 0.0, %v6485
  %v6487 = vpop.f32.mrb[0].mxu0
  %6488 = vmatprep.mubr.f32.mxu0 0.0
  %6489 = vmatmul.mubr.f32.gmra.mrb[0].mxu0 %v6389
  %v6490 = vpop.f32.mrb[0].mxu0
  %v6491 = vadd.f32 0.0, %v6490
  %v6492 = vpop.f32.mrb[0].mxu0
  %6493 = vmatprep.mubr.f32.mxu0 0.0
  %6494 = vmatmul.mubr.f32.gmra.mrb[0].mxu0 %v6392
  %v6495 = vpop.f32.mrb[0].mxu0
  %v6496 = vadd.f32 0.0, %v6495
  %v6497 = vpop.f32.mrb[0].mxu0
  %6498 = vdwg.mxu0
  %v6499 = vadd.f32 %v6338, %v6461
  %v6500 = vadd.f32 %v6339, %v6466
  %v6501 = vadd.f32 %v6340, %v6471
  %v6502 = vadd.f32 %v6341, %v6476
  %v6503 = vadd.f32 %v6342, %v6481
  %v6504 = vadd.f32 %v6343, %v6486
  %v6505 = vadd.f32 %v6344, %v6491
  %v6506 = vadd.f32 %v6345, %v6496
  %v6507 = vld [vmem:[%s7] sm:$0xff]
  %v6508 = vld [vmem:[%s7 + $0x8] sm:$0xff]
  %v6509 = vld [vmem:[%s7 + $0x10] sm:$0xff]
  %v6510 = vld [vmem:[%s7 + $0x18] sm:$0xff]
  %v6511 = vld [vmem:[%s7 + $0x20] sm:$0xff]
  %v6512 = vld [vmem:[%s7 + $0x28] sm:$0xff]
  %v6513 = vld [vmem:[%s7 + $0x30] sm:$0xff]
  %v6514 = vld [vmem:[%s7 + $0x38] sm:$0xff]
  %6516 = vset.pattern.permute.xlu0 0
  %6517 = vperm.xlu0 %6516, %v6507
  %v6518 = vpop.permute.xlu0 %6517
  %6521 = vset.pattern.permute.xlu0 0
  %6522 = vperm.xlu0 %6521, %v6508
  %v6523 = vpop.permute.xlu0 %6522
  %6526 = vset.pattern.permute.xlu0 0
  %6527 = vperm.xlu0 %6526, %v6509
  %v6528 = vpop.permute.xlu0 %6527
  %6531 = vset.pattern.permute.xlu0 0
  %6532 = vperm.xlu0 %6531, %v6510
  %v6533 = vpop.permute.xlu0 %6532
  %6536 = vset.pattern.permute.xlu0 0
  %6537 = vperm.xlu0 %6536, %v6511
  %v6538 = vpop.permute.xlu0 %6537
  %6541 = vset.pattern.permute.xlu0 0
  %6542 = vperm.xlu0 %6541, %v6512
  %v6543 = vpop.permute.xlu0 %6542
  %6546 = vset.pattern.permute.xlu0 0
  %6547 = vperm.xlu0 %6546, %v6513
  %v6548 = vpop.permute.xlu0 %6547
  %6551 = vset.pattern.permute.xlu0 0
  %6552 = vperm.xlu0 %6551, %v6514
  %v6553 = vpop.permute.xlu0 %6552
  %v6555 = vadd.f32 %v6499, %v6518
  %v6556 = vadd.f32 %v6500, %v6523
  %v6557 = vadd.f32 %v6501, %v6528
  %v6558 = vadd.f32 %v6502, %v6533
  %v6559 = vadd.f32 %v6503, %v6538
  %v6560 = vadd.f32 %v6504, %v6543
  %v6561 = vadd.f32 %v6505, %v6548
  %v6562 = vadd.f32 %v6506, %v6553
  %v6563 = vmax.f32 %v6555, 0.0
  %v6564 = vmax.f32 %v6556, 0.0
  %v6565 = vmax.f32 %v6557, 0.0
  %v6566 = vmax.f32 %v6558, 0.0
  %v6567 = vmax.f32 %v6559, 0.0
  %v6568 = vmax.f32 %v6560, 0.0
  %v6569 = vmax.f32 %v6561, 0.0
  %v6570 = vmax.f32 %v6562, 0.0
  %6571 = vrot.lane.b32.xlu0 %v6563, 9
  %v6572 = vpop.permute.xlu0 %6571
  %6573 = vrot.lane.b32.xlu0 %v6564, 9
  %v6574 = vpop.permute.xlu0 %6573
  %6575 = vrot.lane.b32.xlu0 %v6565, 9
  %v6576 = vpop.permute.xlu0 %6575
  %6577 = vrot.lane.b32.xlu0 %v6566, 9
  %v6578 = vpop.permute.xlu0 %6577
  %6579 = vrot.lane.b32.xlu0 %v6567, 9
  %v6580 = vpop.permute.xlu0 %6579
  %6581 = vrot.lane.b32.xlu0 %v6568, 9
  %v6582 = vpop.permute.xlu0 %6581
  %6583 = vrot.lane.b32.xlu0 %v6569, 9
  %v6584 = vpop.permute.xlu0 %6583
  %6585 = vrot.lane.b32.xlu0 %v6570, 9
  %v6586 = vpop.permute.xlu0 %6585
  %v6587 = vsel %vm5102, %v6572, 0.0
  %v6588 = vsel %vm5102, %v6574, 0.0
  %v6589 = vsel %vm5102, %v6576, 0.0
  %v6590 = vsel %vm5102, %v6578, 0.0
  %v6591 = vsel %vm5102, %v6580, 0.0
  %v6592 = vsel %vm5102, %v6582, 0.0
  %v6593 = vsel %vm5102, %v6584, 0.0
  %v6594 = vsel %vm5102, %v6586, 0.0
  %v6595 = vld [vmem:[%s8] sm:$0xff]
  %v6596 = vld [vmem:[%s8 + $0x8] sm:$0xff]
  %v6597 = vld [vmem:[%s8 + $0x10] sm:$0xff]
  %v6598 = vld [vmem:[%s8 + $0x18] sm:$0xff]
  %v6599 = vld [vmem:[%s8 + $0x20] sm:$0xff]
  %v6600 = vld [vmem:[%s8 + $0x28] sm:$0xff]
  %v6601 = vld [vmem:[%s8 + $0x30] sm:$0xff]
  %v6602 = vld [vmem:[%s8 + $0x38] sm:$0xff]
  %6603 = vrot.lane.b32.xlu0 %v6563, 8
  %v6604 = vpop.permute.xlu0 %6603
  %6605 = vrot.lane.b32.xlu0 %v6564, 8
  %v6606 = vpop.permute.xlu0 %6605
  %6607 = vrot.lane.b32.xlu0 %v6565, 8
  %v6608 = vpop.permute.xlu0 %6607
  %6609 = vrot.lane.b32.xlu0 %v6566, 8
  %v6610 = vpop.permute.xlu0 %6609
  %6611 = vrot.lane.b32.xlu0 %v6567, 8
  %v6612 = vpop.permute.xlu0 %6611
  %6613 = vrot.lane.b32.xlu0 %v6568, 8
  %v6614 = vpop.permute.xlu0 %6613
  %6615 = vrot.lane.b32.xlu0 %v6569, 8
  %v6616 = vpop.permute.xlu0 %6615
  %6617 = vrot.lane.b32.xlu0 %v6570, 8
  %v6618 = vpop.permute.xlu0 %6617
  %v6619 = vsel %vm5124, %v6604, 0.0
  %v6620 = vsel %vm5124, %v6606, 0.0
  %v6621 = vsel %vm5124, %v6608, 0.0
  %v6622 = vsel %vm5124, %v6610, 0.0
  %v6623 = vsel %vm5124, %v6612, 0.0
  %v6624 = vsel %vm5124, %v6614, 0.0
  %v6625 = vsel %vm5124, %v6616, 0.0
  %v6626 = vsel %vm5124, %v6618, 0.0
  %s6627 = scalar_lea.vmem %s8, 64
  %v6628 = vld [vmem:[%s6627] sm:$0xff]
  %v6629 = vld [vmem:[%s6627 + $0x8] sm:$0xff]
  %v6630 = vld [vmem:[%s6627 + $0x10] sm:$0xff]
  %v6631 = vld [vmem:[%s6627 + $0x18] sm:$0xff]
  %v6632 = vld [vmem:[%s6627 + $0x20] sm:$0xff]
  %v6633 = vld [vmem:[%s6627 + $0x28] sm:$0xff]
  %v6634 = vld [vmem:[%s6627 + $0x30] sm:$0xff]
  %v6635 = vld [vmem:[%s6627 + $0x38] sm:$0xff]
  %vm6636 = vcmask 523264
  %v6638 = vsel %vm6636, %v6628, 0
  %v6641 = vsel %vm6636, %v6629, 0
  %v6644 = vsel %vm6636, %v6630, 0
  %v6647 = vsel %vm6636, %v6631, 0
  %v6650 = vsel %vm6636, %v6632, 0
  %v6653 = vsel %vm6636, %v6633, 0
  %v6656 = vsel %vm6636, %v6634, 0
  %v6659 = vsel %vm6636, %v6635, 0
  %6661 = vmatprep.subr.mxu0 0.0
  %6662 = vmatpush1.msra.mxu0 %v6619
  %6663 = vmatprep.subr.mxu0 0.0
  %6664 = vmatpush1.msra.mxu0 %v6620
  %6665 = vmatprep.subr.mxu0 0.0
  %6666 = vmatpush1.msra.mxu0 %v6621
  %6667 = vmatprep.subr.mxu0 0.0
  %6668 = vmatpush1.msra.mxu0 %v6622
  %6669 = vmatprep.subr.mxu0 0.0
  %6670 = vmatpush1.msra.mxu0 %v6623
  %6671 = vmatprep.subr.mxu0 0.0
  %6672 = vmatpush1.msra.mxu0 %v6624
  %6673 = vmatprep.subr.mxu0 0.0
  %6674 = vmatpush1.msra.mxu0 %v6625
  %6675 = vmatprep.subr.mxu0 0.0
  %6676 = vmatpush1.msra.mxu0 %v6626
  %6677 = vmatprep.subr.mxu0 0.0
  %6678 = vmatpush1.msra.mxu0 0.0
  %6679 = vmatprep.subr.mxu0 0.0
  %6680 = vmatpush1.msra.mxu0 0.0
  %6681 = vmatprep.subr.mxu0 0.0
  %6682 = vmatpush1.msra.mxu0 0.0
  %6683 = vmatprep.subr.mxu0 0.0
  %6684 = vmatpush1.msra.mxu0 0.0
  %6685 = vmatprep.subr.mxu0 0.0
  %6686 = vmatpush1.msra.mxu0 0.0
  %6687 = vmatprep.subr.mxu0 0.0
  %6688 = vmatpush1.msra.mxu0 0.0
  %6689 = vmatprep.subr.mxu0 0.0
  %6690 = vmatpush1.msra.mxu0 0.0
  %6691 = vmatprep.subr.mxu0 0.0
  %6692 = vmatpush1.msra.mxu0 0.0
  %6693 = vmatprep.subr.mxu0 0.0
  %6694 = vmatpush1.msra.mxu0 0.0
  %6695 = vmatprep.subr.mxu0 0.0
  %6696 = vmatpush1.msra.mxu0 0.0
  %6697 = vmatprep.subr.mxu0 0.0
  %6698 = vmatpush1.msra.mxu0 0.0
  %6699 = vmatprep.subr.mxu0 0.0
  %6700 = vmatpush1.msra.mxu0 0.0
  %6701 = vmatprep.subr.mxu0 0.0
  %6702 = vmatpush1.msra.mxu0 0.0
  %6703 = vmatprep.subr.mxu0 0.0
  %6704 = vmatpush1.msra.mxu0 0.0
  %6705 = vmatprep.subr.mxu0 0.0
  %6706 = vmatpush1.msra.mxu0 0.0
  %6707 = vmatprep.subr.mxu0 0.0
  %6708 = vmatpush1.msra.mxu0 0.0
  %6709 = vmatprep.subr.mxu0 0.0
  %6710 = vmatpush1.msra.mxu0 0.0
  %6711 = vmatprep.subr.mxu0 0.0
  %6712 = vmatpush1.msra.mxu0 0.0
  %6713 = vmatprep.subr.mxu0 0.0
  %6714 = vmatpush1.msra.mxu0 0.0
  %6715 = vmatprep.subr.mxu0 0.0
  %6716 = vmatpush1.msra.mxu0 0.0
  %6717 = vmatprep.subr.mxu0 0.0
  %6718 = vmatpush1.msra.mxu0 0.0
  %6719 = vmatprep.subr.mxu0 0.0
  %6720 = vmatpush1.msra.mxu0 0.0
  %6721 = vmatprep.subr.mxu0 0.0
  %6722 = vmatpush1.msra.mxu0 0.0
  %6723 = vmatprep.subr.mxu0 0.0
  %6724 = vmatpush1.msra.mxu0 0.0
  %6725 = vmatprep.mubr.f32.mxu0 0.0
  %6726 = vmatmul.mubr.f32.gmra.mrb[0].mxu0 %v6638
  %v6727 = vpop.f32.mrb[0].mxu0
  %v6728 = vadd.f32 0.0, %v6727
  %v6729 = vpop.f32.mrb[0].mxu0
  %6730 = vmatprep.mubr.f32.mxu0 0.0
  %6731 = vmatmul.mubr.f32.gmra.mrb[0].mxu0 %v6641
  %v6732 = vpop.f32.mrb[0].mxu0
  %v6733 = vadd.f32 0.0, %v6732
  %v6734 = vpop.f32.mrb[0].mxu0
  %6735 = vmatprep.mubr.f32.mxu0 0.0
  %6736 = vmatmul.mubr.f32.gmra.mrb[0].mxu0 %v6644
  %v6737 = vpop.f32.mrb[0].mxu0
  %v6738 = vadd.f32 0.0, %v6737
  %v6739 = vpop.f32.mrb[0].mxu0
  %6740 = vmatprep.mubr.f32.mxu0 0.0
  %6741 = vmatmul.mubr.f32.gmra.mrb[0].mxu0 %v6647
  %v6742 = vpop.f32.mrb[0].mxu0
  %v6743 = vadd.f32 0.0, %v6742
  %v6744 = vpop.f32.mrb[0].mxu0
  %6745 = vmatprep.mubr.f32.mxu0 0.0
  %6746 = vmatmul.mubr.f32.gmra.mrb[0].mxu0 %v6650
  %v6747 = vpop.f32.mrb[0].mxu0
  %v6748 = vadd.f32 0.0, %v6747
  %v6749 = vpop.f32.mrb[0].mxu0
  %6750 = vmatprep.mubr.f32.mxu0 0.0
  %6751 = vmatmul.mubr.f32.gmra.mrb[0].mxu0 %v6653
  %v6752 = vpop.f32.mrb[0].mxu0
  %v6753 = vadd.f32 0.0, %v6752
  %v6754 = vpop.f32.mrb[0].mxu0
  %6755 = vmatprep.mubr.f32.mxu0 0.0
  %6756 = vmatmul.mubr.f32.gmra.mrb[0].mxu0 %v6656
  %v6757 = vpop.f32.mrb[0].mxu0
  %v6758 = vadd.f32 0.0, %v6757
  %v6759 = vpop.f32.mrb[0].mxu0
  %6760 = vmatprep.mubr.f32.mxu0 0.0
  %6761 = vmatmul.mubr.f32.gmra.mrb[0].mxu0 %v6659
  %v6762 = vpop.f32.mrb[0].mxu0
  %v6763 = vadd.f32 0.0, %v6762
  %v6764 = vpop.f32.mrb[0].mxu0
  %6765 = vdwg.mxu0
  %v6767 = vsel %vm6636, %v6595, 0
  %v6770 = vsel %vm6636, %v6596, 0
  %v6773 = vsel %vm6636, %v6597, 0
  %v6776 = vsel %vm6636, %v6598, 0
  %v6779 = vsel %vm6636, %v6599, 0
  %v6782 = vsel %vm6636, %v6600, 0
  %v6785 = vsel %vm6636, %v6601, 0
  %v6788 = vsel %vm6636, %v6602, 0
  %6790 = vmatprep.subr.mxu0 0.0
  %6791 = vmatpush1.msra.mxu0 %v6587
  %6792 = vmatprep.subr.mxu0 0.0
  %6793 = vmatpush1.msra.mxu0 %v6588
  %6794 = vmatprep.subr.mxu0 0.0
  %6795 = vmatpush1.msra.mxu0 %v6589
  %6796 = vmatprep.subr.mxu0 0.0
  %6797 = vmatpush1.msra.mxu0 %v6590
  %6798 = vmatprep.subr.mxu0 0.0
  %6799 = vmatpush1.msra.mxu0 %v6591
  %6800 = vmatprep.subr.mxu0 0.0
  %6801 = vmatpush1.msra.mxu0 %v6592
  %6802 = vmatprep.subr.mxu0 0.0
  %6803 = vmatpush1.msra.mxu0 %v6593
  %6804 = vmatprep.subr.mxu0 0.0
  %6805 = vmatpush1.msra.mxu0 %v6594
  %6806 = vmatprep.subr.mxu0 0.0
  %6807 = vmatpush1.msra.mxu0 0.0
  %6808 = vmatprep.subr.mxu0 0.0
  %6809 = vmatpush1.msra.mxu0 0.0
  %6810 = vmatprep.subr.mxu0 0.0
  %6811 = vmatpush1.msra.mxu0 0.0
  %6812 = vmatprep.subr.mxu0 0.0
  %6813 = vmatpush1.msra.mxu0 0.0
  %6814 = vmatprep.subr.mxu0 0.0
  %6815 = vmatpush1.msra.mxu0 0.0
  %6816 = vmatprep.subr.mxu0 0.0
  %6817 = vmatpush1.msra.mxu0 0.0
  %6818 = vmatprep.subr.mxu0 0.0
  %6819 = vmatpush1.msra.mxu0 0.0
  %6820 = vmatprep.subr.mxu0 0.0
  %6821 = vmatpush1.msra.mxu0 0.0
  %6822 = vmatprep.subr.mxu0 0.0
  %6823 = vmatpush1.msra.mxu0 0.0
  %6824 = vmatprep.subr.mxu0 0.0
  %6825 = vmatpush1.msra.mxu0 0.0
  %6826 = vmatprep.subr.mxu0 0.0
  %6827 = vmatpush1.msra.mxu0 0.0
  %6828 = vmatprep.subr.mxu0 0.0
  %6829 = vmatpush1.msra.mxu0 0.0
  %6830 = vmatprep.subr.mxu0 0.0
  %6831 = vmatpush1.msra.mxu0 0.0
  %6832 = vmatprep.subr.mxu0 0.0
  %6833 = vmatpush1.msra.mxu0 0.0
  %6834 = vmatprep.subr.mxu0 0.0
  %6835 = vmatpush1.msra.mxu0 0.0
  %6836 = vmatprep.subr.mxu0 0.0
  %6837 = vmatpush1.msra.mxu0 0.0
  %6838 = vmatprep.subr.mxu0 0.0
  %6839 = vmatpush1.msra.mxu0 0.0
  %6840 = vmatprep.subr.mxu0 0.0
  %6841 = vmatpush1.msra.mxu0 0.0
  %6842 = vmatprep.subr.mxu0 0.0
  %6843 = vmatpush1.msra.mxu0 0.0
  %6844 = vmatprep.subr.mxu0 0.0
  %6845 = vmatpush1.msra.mxu0 0.0
  %6846 = vmatprep.subr.mxu0 0.0
  %6847 = vmatpush1.msra.mxu0 0.0
  %6848 = vmatprep.subr.mxu0 0.0
  %6849 = vmatpush1.msra.mxu0 0.0
  %6850 = vmatprep.subr.mxu0 0.0
  %6851 = vmatpush1.msra.mxu0 0.0
  %6852 = vmatprep.subr.mxu0 0.0
  %6853 = vmatpush1.msra.mxu0 0.0
  %6854 = vmatprep.mubr.f32.mxu0 0.0
  %6855 = vmatmul.mubr.f32.gmra.mrb[0].mxu0 %v6767
  %v6856 = vpop.f32.mrb[0].mxu0
  %v6857 = vadd.f32 %v6728, %v6856
  %v6858 = vpop.f32.mrb[0].mxu0
  %6859 = vmatprep.mubr.f32.mxu0 0.0
  %6860 = vmatmul.mubr.f32.gmra.mrb[0].mxu0 %v6770
  %v6861 = vpop.f32.mrb[0].mxu0
  %v6862 = vadd.f32 %v6733, %v6861
  %v6863 = vpop.f32.mrb[0].mxu0
  %6864 = vmatprep.mubr.f32.mxu0 0.0
  %6865 = vmatmul.mubr.f32.gmra.mrb[0].mxu0 %v6773
  %v6866 = vpop.f32.mrb[0].mxu0
  %v6867 = vadd.f32 %v6738, %v6866
  %v6868 = vpop.f32.mrb[0].mxu0
  %6869 = vmatprep.mubr.f32.mxu0 0.0
  %6870 = vmatmul.mubr.f32.gmra.mrb[0].mxu0 %v6776
  %v6871 = vpop.f32.mrb[0].mxu0
  %v6872 = vadd.f32 %v6743, %v6871
  %v6873 = vpop.f32.mrb[0].mxu0
  %6874 = vmatprep.mubr.f32.mxu0 0.0
  %6875 = vmatmul.mubr.f32.gmra.mrb[0].mxu0 %v6779
  %v6876 = vpop.f32.mrb[0].mxu0
  %v6877 = vadd.f32 %v6748, %v6876
  %v6878 = vpop.f32.mrb[0].mxu0
  %6879 = vmatprep.mubr.f32.mxu0 0.0
  %6880 = vmatmul.mubr.f32.gmra.mrb[0].mxu0 %v6782
  %v6881 = vpop.f32.mrb[0].mxu0
  %v6882 = vadd.f32 %v6753, %v6881
  %v6883 = vpop.f32.mrb[0].mxu0
  %6884 = vmatprep.mubr.f32.mxu0 0.0
  %6885 = vmatmul.mubr.f32.gmra.mrb[0].mxu0 %v6785
  %v6886 = vpop.f32.mrb[0].mxu0
  %v6887 = vadd.f32 %v6758, %v6886
  %v6888 = vpop.f32.mrb[0].mxu0
  %6889 = vmatprep.mubr.f32.mxu0 0.0
  %6890 = vmatmul.mubr.f32.gmra.mrb[0].mxu0 %v6788
  %v6891 = vpop.f32.mrb[0].mxu0
  %v6892 = vadd.f32 %v6763, %v6891
  %v6893 = vpop.f32.mrb[0].mxu0
  %6894 = vdwg.mxu0
  %6895 = vrot.lane.b32.xlu0 %v6563, 7
  %v6896 = vpop.permute.xlu0 %6895
  %6897 = vrot.lane.b32.xlu0 %v6564, 7
  %v6898 = vpop.permute.xlu0 %6897
  %6899 = vrot.lane.b32.xlu0 %v6565, 7
  %v6900 = vpop.permute.xlu0 %6899
  %6901 = vrot.lane.b32.xlu0 %v6566, 7
  %v6902 = vpop.permute.xlu0 %6901
  %6903 = vrot.lane.b32.xlu0 %v6567, 7
  %v6904 = vpop.permute.xlu0 %6903
  %6905 = vrot.lane.b32.xlu0 %v6568, 7
  %v6906 = vpop.permute.xlu0 %6905
  %6907 = vrot.lane.b32.xlu0 %v6569, 7
  %v6908 = vpop.permute.xlu0 %6907
  %6909 = vrot.lane.b32.xlu0 %v6570, 7
  %v6910 = vpop.permute.xlu0 %6909
  %v6911 = vsel %vm5407, %v6896, 0.0
  %v6912 = vsel %vm5407, %v6898, 0.0
  %v6913 = vsel %vm5407, %v6900, 0.0
  %v6914 = vsel %vm5407, %v6902, 0.0
  %v6915 = vsel %vm5407, %v6904, 0.0
  %v6916 = vsel %vm5407, %v6906, 0.0
  %v6917 = vsel %vm5407, %v6908, 0.0
  %v6918 = vsel %vm5407, %v6910, 0.0
  %s6919 = scalar_lea.vmem %s8, 128
  %v6920 = vld [vmem:[%s6919] sm:$0xff]
  %v6921 = vld [vmem:[%s6919 + $0x8] sm:$0xff]
  %v6922 = vld [vmem:[%s6919 + $0x10] sm:$0xff]
  %v6923 = vld [vmem:[%s6919 + $0x18] sm:$0xff]
  %v6924 = vld [vmem:[%s6919 + $0x20] sm:$0xff]
  %v6925 = vld [vmem:[%s6919 + $0x28] sm:$0xff]
  %v6926 = vld [vmem:[%s6919 + $0x30] sm:$0xff]
  %v6927 = vld [vmem:[%s6919 + $0x38] sm:$0xff]
  %v6929 = vsel %vm6636, %v6920, 0
  %v6932 = vsel %vm6636, %v6921, 0
  %v6935 = vsel %vm6636, %v6922, 0
  %v6938 = vsel %vm6636, %v6923, 0
  %v6941 = vsel %vm6636, %v6924, 0
  %v6944 = vsel %vm6636, %v6925, 0
  %v6947 = vsel %vm6636, %v6926, 0
  %v6950 = vsel %vm6636, %v6927, 0
  %6952 = vmatprep.subr.mxu0 0.0
  %6953 = vmatpush1.msra.mxu0 %v6911
  %6954 = vmatprep.subr.mxu0 0.0
  %6955 = vmatpush1.msra.mxu0 %v6912
  %6956 = vmatprep.subr.mxu0 0.0
  %6957 = vmatpush1.msra.mxu0 %v6913
  %6958 = vmatprep.subr.mxu0 0.0
  %6959 = vmatpush1.msra.mxu0 %v6914
  %6960 = vmatprep.subr.mxu0 0.0
  %6961 = vmatpush1.msra.mxu0 %v6915
  %6962 = vmatprep.subr.mxu0 0.0
  %6963 = vmatpush1.msra.mxu0 %v6916
  %6964 = vmatprep.subr.mxu0 0.0
  %6965 = vmatpush1.msra.mxu0 %v6917
  %6966 = vmatprep.subr.mxu0 0.0
  %6967 = vmatpush1.msra.mxu0 %v6918
  %6968 = vmatprep.subr.mxu0 0.0
  %6969 = vmatpush1.msra.mxu0 0.0
  %6970 = vmatprep.subr.mxu0 0.0
  %6971 = vmatpush1.msra.mxu0 0.0
  %6972 = vmatprep.subr.mxu0 0.0
  %6973 = vmatpush1.msra.mxu0 0.0
  %6974 = vmatprep.subr.mxu0 0.0
  %6975 = vmatpush1.msra.mxu0 0.0
  %6976 = vmatprep.subr.mxu0 0.0
  %6977 = vmatpush1.msra.mxu0 0.0
  %6978 = vmatprep.subr.mxu0 0.0
  %6979 = vmatpush1.msra.mxu0 0.0
  %6980 = vmatprep.subr.mxu0 0.0
  %6981 = vmatpush1.msra.mxu0 0.0
  %6982 = vmatprep.subr.mxu0 0.0
  %6983 = vmatpush1.msra.mxu0 0.0
  %6984 = vmatprep.subr.mxu0 0.0
  %6985 = vmatpush1.msra.mxu0 0.0
  %6986 = vmatprep.subr.mxu0 0.0
  %6987 = vmatpush1.msra.mxu0 0.0
  %6988 = vmatprep.subr.mxu0 0.0
  %6989 = vmatpush1.msra.mxu0 0.0
  %6990 = vmatprep.subr.mxu0 0.0
  %6991 = vmatpush1.msra.mxu0 0.0
  %6992 = vmatprep.subr.mxu0 0.0
  %6993 = vmatpush1.msra.mxu0 0.0
  %6994 = vmatprep.subr.mxu0 0.0
  %6995 = vmatpush1.msra.mxu0 0.0
  %6996 = vmatprep.subr.mxu0 0.0
  %6997 = vmatpush1.msra.mxu0 0.0
  %6998 = vmatprep.subr.mxu0 0.0
  %6999 = vmatpush1.msra.mxu0 0.0
  %7000 = vmatprep.subr.mxu0 0.0
  %7001 = vmatpush1.msra.mxu0 0.0
  %7002 = vmatprep.subr.mxu0 0.0
  %7003 = vmatpush1.msra.mxu0 0.0
  %7004 = vmatprep.subr.mxu0 0.0
  %7005 = vmatpush1.msra.mxu0 0.0
  %7006 = vmatprep.subr.mxu0 0.0
  %7007 = vmatpush1.msra.mxu0 0.0
  %7008 = vmatprep.subr.mxu0 0.0
  %7009 = vmatpush1.msra.mxu0 0.0
  %7010 = vmatprep.subr.mxu0 0.0
  %7011 = vmatpush1.msra.mxu0 0.0
  %7012 = vmatprep.subr.mxu0 0.0
  %7013 = vmatpush1.msra.mxu0 0.0
  %7014 = vmatprep.subr.mxu0 0.0
  %7015 = vmatpush1.msra.mxu0 0.0
  %7016 = vmatprep.mubr.f32.mxu0 0.0
  %7017 = vmatmul.mubr.f32.gmra.mrb[0].mxu0 %v6929
  %v7018 = vpop.f32.mrb[0].mxu0
  %v7019 = vadd.f32 0.0, %v7018
  %v7020 = vpop.f32.mrb[0].mxu0
  %7021 = vmatprep.mubr.f32.mxu0 0.0
  %7022 = vmatmul.mubr.f32.gmra.mrb[0].mxu0 %v6932
  %v7023 = vpop.f32.mrb[0].mxu0
  %v7024 = vadd.f32 0.0, %v7023
  %v7025 = vpop.f32.mrb[0].mxu0
  %7026 = vmatprep.mubr.f32.mxu0 0.0
  %7027 = vmatmul.mubr.f32.gmra.mrb[0].mxu0 %v6935
  %v7028 = vpop.f32.mrb[0].mxu0
  %v7029 = vadd.f32 0.0, %v7028
  %v7030 = vpop.f32.mrb[0].mxu0
  %7031 = vmatprep.mubr.f32.mxu0 0.0
  %7032 = vmatmul.mubr.f32.gmra.mrb[0].mxu0 %v6938
  %v7033 = vpop.f32.mrb[0].mxu0
  %v7034 = vadd.f32 0.0, %v7033
  %v7035 = vpop.f32.mrb[0].mxu0
  %7036 = vmatprep.mubr.f32.mxu0 0.0
  %7037 = vmatmul.mubr.f32.gmra.mrb[0].mxu0 %v6941
  %v7038 = vpop.f32.mrb[0].mxu0
  %v7039 = vadd.f32 0.0, %v7038
  %v7040 = vpop.f32.mrb[0].mxu0
  %7041 = vmatprep.mubr.f32.mxu0 0.0
  %7042 = vmatmul.mubr.f32.gmra.mrb[0].mxu0 %v6944
  %v7043 = vpop.f32.mrb[0].mxu0
  %v7044 = vadd.f32 0.0, %v7043
  %v7045 = vpop.f32.mrb[0].mxu0
  %7046 = vmatprep.mubr.f32.mxu0 0.0
  %7047 = vmatmul.mubr.f32.gmra.mrb[0].mxu0 %v6947
  %v7048 = vpop.f32.mrb[0].mxu0
  %v7049 = vadd.f32 0.0, %v7048
  %v7050 = vpop.f32.mrb[0].mxu0
  %7051 = vmatprep.mubr.f32.mxu0 0.0
  %7052 = vmatmul.mubr.f32.gmra.mrb[0].mxu0 %v6950
  %v7053 = vpop.f32.mrb[0].mxu0
  %v7054 = vadd.f32 0.0, %v7053
  %v7055 = vpop.f32.mrb[0].mxu0
  %7056 = vdwg.mxu0
  %v7057 = vadd.f32 %v6857, %v7019
  %v7058 = vadd.f32 %v6862, %v7024
  %v7059 = vadd.f32 %v6867, %v7029
  %v7060 = vadd.f32 %v6872, %v7034
  %v7061 = vadd.f32 %v6877, %v7039
  %v7062 = vadd.f32 %v6882, %v7044
  %v7063 = vadd.f32 %v6887, %v7049
  %v7064 = vadd.f32 %v6892, %v7054
  %7065 = vrot.lane.b32.xlu0 %v6563, 1
  %v7066 = vpop.permute.xlu0 %7065
  %7067 = vrot.lane.b32.xlu0 %v6564, 1
  %v7068 = vpop.permute.xlu0 %7067
  %7069 = vrot.lane.b32.xlu0 %v6565, 1
  %v7070 = vpop.permute.xlu0 %7069
  %7071 = vrot.lane.b32.xlu0 %v6566, 1
  %v7072 = vpop.permute.xlu0 %7071
  %7073 = vrot.lane.b32.xlu0 %v6567, 1
  %v7074 = vpop.permute.xlu0 %7073
  %7075 = vrot.lane.b32.xlu0 %v6568, 1
  %v7076 = vpop.permute.xlu0 %7075
  %7077 = vrot.lane.b32.xlu0 %v6569, 1
  %v7078 = vpop.permute.xlu0 %7077
  %7079 = vrot.lane.b32.xlu0 %v6570, 1
  %v7080 = vpop.permute.xlu0 %7079
  %v7081 = vsel %vm5567, %v7066, 0.0
  %v7082 = vsel %vm5567, %v7068, 0.0
  %v7083 = vsel %vm5567, %v7070, 0.0
  %v7084 = vsel %vm5567, %v7072, 0.0
  %v7085 = vsel %vm5567, %v7074, 0.0
  %v7086 = vsel %vm5567, %v7076, 0.0
  %v7087 = vsel %vm5567, %v7078, 0.0
  %v7088 = vsel %vm5567, %v7080, 0.0
  %s7089 = scalar_lea.vmem %s8, 192
  %v7090 = vld [vmem:[%s7089] sm:$0xff]
  %v7091 = vld [vmem:[%s7089 + $0x8] sm:$0xff]
  %v7092 = vld [vmem:[%s7089 + $0x10] sm:$0xff]
  %v7093 = vld [vmem:[%s7089 + $0x18] sm:$0xff]
  %v7094 = vld [vmem:[%s7089 + $0x20] sm:$0xff]
  %v7095 = vld [vmem:[%s7089 + $0x28] sm:$0xff]
  %v7096 = vld [vmem:[%s7089 + $0x30] sm:$0xff]
  %v7097 = vld [vmem:[%s7089 + $0x38] sm:$0xff]
  %v7099 = vsel %vm6636, %v7090, 0
  %v7102 = vsel %vm6636, %v7091, 0
  %v7105 = vsel %vm6636, %v7092, 0
  %v7108 = vsel %vm6636, %v7093, 0
  %v7111 = vsel %vm6636, %v7094, 0
  %v7114 = vsel %vm6636, %v7095, 0
  %v7117 = vsel %vm6636, %v7096, 0
  %v7120 = vsel %vm6636, %v7097, 0
  %7122 = vmatprep.subr.mxu0 0.0
  %7123 = vmatpush1.msra.mxu0 %v7081
  %7124 = vmatprep.subr.mxu0 0.0
  %7125 = vmatpush1.msra.mxu0 %v7082
  %7126 = vmatprep.subr.mxu0 0.0
  %7127 = vmatpush1.msra.mxu0 %v7083
  %7128 = vmatprep.subr.mxu0 0.0
  %7129 = vmatpush1.msra.mxu0 %v7084
  %7130 = vmatprep.subr.mxu0 0.0
  %7131 = vmatpush1.msra.mxu0 %v7085
  %7132 = vmatprep.subr.mxu0 0.0
  %7133 = vmatpush1.msra.mxu0 %v7086
  %7134 = vmatprep.subr.mxu0 0.0
  %7135 = vmatpush1.msra.mxu0 %v7087
  %7136 = vmatprep.subr.mxu0 0.0
  %7137 = vmatpush1.msra.mxu0 %v7088
  %7138 = vmatprep.subr.mxu0 0.0
  %7139 = vmatpush1.msra.mxu0 0.0
  %7140 = vmatprep.subr.mxu0 0.0
  %7141 = vmatpush1.msra.mxu0 0.0
  %7142 = vmatprep.subr.mxu0 0.0
  %7143 = vmatpush1.msra.mxu0 0.0
  %7144 = vmatprep.subr.mxu0 0.0
  %7145 = vmatpush1.msra.mxu0 0.0
  %7146 = vmatprep.subr.mxu0 0.0
  %7147 = vmatpush1.msra.mxu0 0.0
  %7148 = vmatprep.subr.mxu0 0.0
  %7149 = vmatpush1.msra.mxu0 0.0
  %7150 = vmatprep.subr.mxu0 0.0
  %7151 = vmatpush1.msra.mxu0 0.0
  %7152 = vmatprep.subr.mxu0 0.0
  %7153 = vmatpush1.msra.mxu0 0.0
  %7154 = vmatprep.subr.mxu0 0.0
  %7155 = vmatpush1.msra.mxu0 0.0
  %7156 = vmatprep.subr.mxu0 0.0
  %7157 = vmatpush1.msra.mxu0 0.0
  %7158 = vmatprep.subr.mxu0 0.0
  %7159 = vmatpush1.msra.mxu0 0.0
  %7160 = vmatprep.subr.mxu0 0.0
  %7161 = vmatpush1.msra.mxu0 0.0
  %7162 = vmatprep.subr.mxu0 0.0
  %7163 = vmatpush1.msra.mxu0 0.0
  %7164 = vmatprep.subr.mxu0 0.0
  %7165 = vmatpush1.msra.mxu0 0.0
  %7166 = vmatprep.subr.mxu0 0.0
  %7167 = vmatpush1.msra.mxu0 0.0
  %7168 = vmatprep.subr.mxu0 0.0
  %7169 = vmatpush1.msra.mxu0 0.0
  %7170 = vmatprep.subr.mxu0 0.0
  %7171 = vmatpush1.msra.mxu0 0.0
  %7172 = vmatprep.subr.mxu0 0.0
  %7173 = vmatpush1.msra.mxu0 0.0
  %7174 = vmatprep.subr.mxu0 0.0
  %7175 = vmatpush1.msra.mxu0 0.0
  %7176 = vmatprep.subr.mxu0 0.0
  %7177 = vmatpush1.msra.mxu0 0.0
  %7178 = vmatprep.subr.mxu0 0.0
  %7179 = vmatpush1.msra.mxu0 0.0
  %7180 = vmatprep.subr.mxu0 0.0
  %7181 = vmatpush1.msra.mxu0 0.0
  %7182 = vmatprep.subr.mxu0 0.0
  %7183 = vmatpush1.msra.mxu0 0.0
  %7184 = vmatprep.subr.mxu0 0.0
  %7185 = vmatpush1.msra.mxu0 0.0
  %7186 = vmatprep.mubr.f32.mxu0 0.0
  %7187 = vmatmul.mubr.f32.gmra.mrb[0].mxu0 %v7099
  %v7188 = vpop.f32.mrb[0].mxu0
  %v7189 = vadd.f32 0.0, %v7188
  %v7190 = vpop.f32.mrb[0].mxu0
  %7191 = vmatprep.mubr.f32.mxu0 0.0
  %7192 = vmatmul.mubr.f32.gmra.mrb[0].mxu0 %v7102
  %v7193 = vpop.f32.mrb[0].mxu0
  %v7194 = vadd.f32 0.0, %v7193
  %v7195 = vpop.f32.mrb[0].mxu0
  %7196 = vmatprep.mubr.f32.mxu0 0.0
  %7197 = vmatmul.mubr.f32.gmra.mrb[0].mxu0 %v7105
  %v7198 = vpop.f32.mrb[0].mxu0
  %v7199 = vadd.f32 0.0, %v7198
  %v7200 = vpop.f32.mrb[0].mxu0
  %7201 = vmatprep.mubr.f32.mxu0 0.0
  %7202 = vmatmul.mubr.f32.gmra.mrb[0].mxu0 %v7108
  %v7203 = vpop.f32.mrb[0].mxu0
  %v7204 = vadd.f32 0.0, %v7203
  %v7205 = vpop.f32.mrb[0].mxu0
  %7206 = vmatprep.mubr.f32.mxu0 0.0
  %7207 = vmatmul.mubr.f32.gmra.mrb[0].mxu0 %v7111
  %v7208 = vpop.f32.mrb[0].mxu0
  %v7209 = vadd.f32 0.0, %v7208
  %v7210 = vpop.f32.mrb[0].mxu0
  %7211 = vmatprep.mubr.f32.mxu0 0.0
  %7212 = vmatmul.mubr.f32.gmra.mrb[0].mxu0 %v7114
  %v7213 = vpop.f32.mrb[0].mxu0
  %v7214 = vadd.f32 0.0, %v7213
  %v7215 = vpop.f32.mrb[0].mxu0
  %7216 = vmatprep.mubr.f32.mxu0 0.0
  %7217 = vmatmul.mubr.f32.gmra.mrb[0].mxu0 %v7117
  %v7218 = vpop.f32.mrb[0].mxu0
  %v7219 = vadd.f32 0.0, %v7218
  %v7220 = vpop.f32.mrb[0].mxu0
  %7221 = vmatprep.mubr.f32.mxu0 0.0
  %7222 = vmatmul.mubr.f32.gmra.mrb[0].mxu0 %v7120
  %v7223 = vpop.f32.mrb[0].mxu0
  %v7224 = vadd.f32 0.0, %v7223
  %v7225 = vpop.f32.mrb[0].mxu0
  %7226 = vdwg.mxu0
  %v7227 = vadd.f32 %v7057, %v7189
  %v7228 = vadd.f32 %v7058, %v7194
  %v7229 = vadd.f32 %v7059, %v7199
  %v7230 = vadd.f32 %v7060, %v7204
  %v7231 = vadd.f32 %v7061, %v7209
  %v7232 = vadd.f32 %v7062, %v7214
  %v7233 = vadd.f32 %v7063, %v7219
  %v7234 = vadd.f32 %v7064, %v7224
  %s7235 = scalar_lea.vmem %s8, 256
  %v7236 = vld [vmem:[%s7235] sm:$0xff]
  %v7237 = vld [vmem:[%s7235 + $0x8] sm:$0xff]
  %v7238 = vld [vmem:[%s7235 + $0x10] sm:$0xff]
  %v7239 = vld [vmem:[%s7235 + $0x18] sm:$0xff]
  %v7240 = vld [vmem:[%s7235 + $0x20] sm:$0xff]
  %v7241 = vld [vmem:[%s7235 + $0x28] sm:$0xff]
  %v7242 = vld [vmem:[%s7235 + $0x30] sm:$0xff]
  %v7243 = vld [vmem:[%s7235 + $0x38] sm:$0xff]
  %v7245 = vsel %vm6636, %v7236, 0
  %v7248 = vsel %vm6636, %v7237, 0
  %v7251 = vsel %vm6636, %v7238, 0
  %v7254 = vsel %vm6636, %v7239, 0
  %v7257 = vsel %vm6636, %v7240, 0
  %v7260 = vsel %vm6636, %v7241, 0
  %v7263 = vsel %vm6636, %v7242, 0
  %v7266 = vsel %vm6636, %v7243, 0
  %7268 = vmatprep.subr.mxu0 0.0
  %7269 = vmatpush1.msra.mxu0 %v6563
  %7270 = vmatprep.subr.mxu0 0.0
  %7271 = vmatpush1.msra.mxu0 %v6564
  %7272 = vmatprep.subr.mxu0 0.0
  %7273 = vmatpush1.msra.mxu0 %v6565
  %7274 = vmatprep.subr.mxu0 0.0
  %7275 = vmatpush1.msra.mxu0 %v6566
  %7276 = vmatprep.subr.mxu0 0.0
  %7277 = vmatpush1.msra.mxu0 %v6567
  %7278 = vmatprep.subr.mxu0 0.0
  %7279 = vmatpush1.msra.mxu0 %v6568
  %7280 = vmatprep.subr.mxu0 0.0
  %7281 = vmatpush1.msra.mxu0 %v6569
  %7282 = vmatprep.subr.mxu0 0.0
  %7283 = vmatpush1.msra.mxu0 %v6570
  %7284 = vmatprep.subr.mxu0 0.0
  %7285 = vmatpush1.msra.mxu0 0.0
  %7286 = vmatprep.subr.mxu0 0.0
  %7287 = vmatpush1.msra.mxu0 0.0
  %7288 = vmatprep.subr.mxu0 0.0
  %7289 = vmatpush1.msra.mxu0 0.0
  %7290 = vmatprep.subr.mxu0 0.0
  %7291 = vmatpush1.msra.mxu0 0.0
  %7292 = vmatprep.subr.mxu0 0.0
  %7293 = vmatpush1.msra.mxu0 0.0
  %7294 = vmatprep.subr.mxu0 0.0
  %7295 = vmatpush1.msra.mxu0 0.0
  %7296 = vmatprep.subr.mxu0 0.0
  %7297 = vmatpush1.msra.mxu0 0.0
  %7298 = vmatprep.subr.mxu0 0.0
  %7299 = vmatpush1.msra.mxu0 0.0
  %7300 = vmatprep.subr.mxu0 0.0
  %7301 = vmatpush1.msra.mxu0 0.0
  %7302 = vmatprep.subr.mxu0 0.0
  %7303 = vmatpush1.msra.mxu0 0.0
  %7304 = vmatprep.subr.mxu0 0.0
  %7305 = vmatpush1.msra.mxu0 0.0
  %7306 = vmatprep.subr.mxu0 0.0
  %7307 = vmatpush1.msra.mxu0 0.0
  %7308 = vmatprep.subr.mxu0 0.0
  %7309 = vmatpush1.msra.mxu0 0.0
  %7310 = vmatprep.subr.mxu0 0.0
  %7311 = vmatpush1.msra.mxu0 0.0
  %7312 = vmatprep.subr.mxu0 0.0
  %7313 = vmatpush1.msra.mxu0 0.0
  %7314 = vmatprep.subr.mxu0 0.0
  %7315 = vmatpush1.msra.mxu0 0.0
  %7316 = vmatprep.subr.mxu0 0.0
  %7317 = vmatpush1.msra.mxu0 0.0
  %7318 = vmatprep.subr.mxu0 0.0
  %7319 = vmatpush1.msra.mxu0 0.0
  %7320 = vmatprep.subr.mxu0 0.0
  %7321 = vmatpush1.msra.mxu0 0.0
  %7322 = vmatprep.subr.mxu0 0.0
  %7323 = vmatpush1.msra.mxu0 0.0
  %7324 = vmatprep.subr.mxu0 0.0
  %7325 = vmatpush1.msra.mxu0 0.0
  %7326 = vmatprep.subr.mxu0 0.0
  %7327 = vmatpush1.msra.mxu0 0.0
  %7328 = vmatprep.subr.mxu0 0.0
  %7329 = vmatpush1.msra.mxu0 0.0
  %7330 = vmatprep.subr.mxu0 0.0
  %7331 = vmatpush1.msra.mxu0 0.0
  %7332 = vmatprep.mubr.f32.mxu0 0.0
  %7333 = vmatmul.mubr.f32.gmra.mrb[0].mxu0 %v7245
  %v7334 = vpop.f32.mrb[0].mxu0
  %v7335 = vadd.f32 0.0, %v7334
  %v7336 = vpop.f32.mrb[0].mxu0
  %7337 = vmatprep.mubr.f32.mxu0 0.0
  %7338 = vmatmul.mubr.f32.gmra.mrb[0].mxu0 %v7248
  %v7339 = vpop.f32.mrb[0].mxu0
  %v7340 = vadd.f32 0.0, %v7339
  %v7341 = vpop.f32.mrb[0].mxu0
  %7342 = vmatprep.mubr.f32.mxu0 0.0
  %7343 = vmatmul.mubr.f32.gmra.mrb[0].mxu0 %v7251
  %v7344 = vpop.f32.mrb[0].mxu0
  %v7345 = vadd.f32 0.0, %v7344
  %v7346 = vpop.f32.mrb[0].mxu0
  %7347 = vmatprep.mubr.f32.mxu0 0.0
  %7348 = vmatmul.mubr.f32.gmra.mrb[0].mxu0 %v7254
  %v7349 = vpop.f32.mrb[0].mxu0
  %v7350 = vadd.f32 0.0, %v7349
  %v7351 = vpop.f32.mrb[0].mxu0
  %7352 = vmatprep.mubr.f32.mxu0 0.0
  %7353 = vmatmul.mubr.f32.gmra.mrb[0].mxu0 %v7257
  %v7354 = vpop.f32.mrb[0].mxu0
  %v7355 = vadd.f32 0.0, %v7354
  %v7356 = vpop.f32.mrb[0].mxu0
  %7357 = vmatprep.mubr.f32.mxu0 0.0
  %7358 = vmatmul.mubr.f32.gmra.mrb[0].mxu0 %v7260
  %v7359 = vpop.f32.mrb[0].mxu0
  %v7360 = vadd.f32 0.0, %v7359
  %v7361 = vpop.f32.mrb[0].mxu0
  %7362 = vmatprep.mubr.f32.mxu0 0.0
  %7363 = vmatmul.mubr.f32.gmra.mrb[0].mxu0 %v7263
  %v7364 = vpop.f32.mrb[0].mxu0
  %v7365 = vadd.f32 0.0, %v7364
  %v7366 = vpop.f32.mrb[0].mxu0
  %7367 = vmatprep.mubr.f32.mxu0 0.0
  %7368 = vmatmul.mubr.f32.gmra.mrb[0].mxu0 %v7266
  %v7369 = vpop.f32.mrb[0].mxu0
  %v7370 = vadd.f32 0.0, %v7369
  %v7371 = vpop.f32.mrb[0].mxu0
  %7372 = vdwg.mxu0
  %v7373 = vadd.f32 %v7227, %v7335
  %v7374 = vadd.f32 %v7228, %v7340
  %v7375 = vadd.f32 %v7229, %v7345
  %v7376 = vadd.f32 %v7230, %v7350
  %v7377 = vadd.f32 %v7231, %v7355
  %v7378 = vadd.f32 %v7232, %v7360
  %v7379 = vadd.f32 %v7233, %v7365
  %v7380 = vadd.f32 %v7234, %v7370
  %7381 = vrot.lane.b32.xlu0 %v6563, 127
  %v7382 = vpop.permute.xlu0 %7381
  %7383 = vrot.lane.b32.xlu0 %v6564, 127
  %v7384 = vpop.permute.xlu0 %7383
  %7385 = vrot.lane.b32.xlu0 %v6565, 127
  %v7386 = vpop.permute.xlu0 %7385
  %7387 = vrot.lane.b32.xlu0 %v6566, 127
  %v7388 = vpop.permute.xlu0 %7387
  %7389 = vrot.lane.b32.xlu0 %v6567, 127
  %v7390 = vpop.permute.xlu0 %7389
  %7391 = vrot.lane.b32.xlu0 %v6568, 127
  %v7392 = vpop.permute.xlu0 %7391
  %7393 = vrot.lane.b32.xlu0 %v6569, 127
  %v7394 = vpop.permute.xlu0 %7393
  %7395 = vrot.lane.b32.xlu0 %v6570, 127
  %v7396 = vpop.permute.xlu0 %7395
  %v7397 = vsel %vm5873, %v7382, 0.0
  %v7398 = vsel %vm5873, %v7384, 0.0
  %v7399 = vsel %vm5873, %v7386, 0.0
  %v7400 = vsel %vm5873, %v7388, 0.0
  %v7401 = vsel %vm5873, %v7390, 0.0
  %v7402 = vsel %vm5873, %v7392, 0.0
  %v7403 = vsel %vm5873, %v7394, 0.0
  %v7404 = vsel %vm5873, %v7396, 0.0
  %s7405 = scalar_lea.vmem %s8, 320
  %v7406 = vld [vmem:[%s7405] sm:$0xff]
  %v7407 = vld [vmem:[%s7405 + $0x8] sm:$0xff]
  %v7408 = vld [vmem:[%s7405 + $0x10] sm:$0xff]
  %v7409 = vld [vmem:[%s7405 + $0x18] sm:$0xff]
  %v7410 = vld [vmem:[%s7405 + $0x20] sm:$0xff]
  %v7411 = vld [vmem:[%s7405 + $0x28] sm:$0xff]
  %v7412 = vld [vmem:[%s7405 + $0x30] sm:$0xff]
  %v7413 = vld [vmem:[%s7405 + $0x38] sm:$0xff]
  %v7415 = vsel %vm6636, %v7406, 0
  %v7418 = vsel %vm6636, %v7407, 0
  %v7421 = vsel %vm6636, %v7408, 0
  %v7424 = vsel %vm6636, %v7409, 0
  %v7427 = vsel %vm6636, %v7410, 0
  %v7430 = vsel %vm6636, %v7411, 0
  %v7433 = vsel %vm6636, %v7412, 0
  %v7436 = vsel %vm6636, %v7413, 0
  %7438 = vmatprep.subr.mxu0 0.0
  %7439 = vmatpush1.msra.mxu0 %v7397
  %7440 = vmatprep.subr.mxu0 0.0
  %7441 = vmatpush1.msra.mxu0 %v7398
  %7442 = vmatprep.subr.mxu0 0.0
  %7443 = vmatpush1.msra.mxu0 %v7399
  %7444 = vmatprep.subr.mxu0 0.0
  %7445 = vmatpush1.msra.mxu0 %v7400
  %7446 = vmatprep.subr.mxu0 0.0
  %7447 = vmatpush1.msra.mxu0 %v7401
  %7448 = vmatprep.subr.mxu0 0.0
  %7449 = vmatpush1.msra.mxu0 %v7402
  %7450 = vmatprep.subr.mxu0 0.0
  %7451 = vmatpush1.msra.mxu0 %v7403
  %7452 = vmatprep.subr.mxu0 0.0
  %7453 = vmatpush1.msra.mxu0 %v7404
  %7454 = vmatprep.subr.mxu0 0.0
  %7455 = vmatpush1.msra.mxu0 0.0
  %7456 = vmatprep.subr.mxu0 0.0
  %7457 = vmatpush1.msra.mxu0 0.0
  %7458 = vmatprep.subr.mxu0 0.0
  %7459 = vmatpush1.msra.mxu0 0.0
  %7460 = vmatprep.subr.mxu0 0.0
  %7461 = vmatpush1.msra.mxu0 0.0
  %7462 = vmatprep.subr.mxu0 0.0
  %7463 = vmatpush1.msra.mxu0 0.0
  %7464 = vmatprep.subr.mxu0 0.0
  %7465 = vmatpush1.msra.mxu0 0.0
  %7466 = vmatprep.subr.mxu0 0.0
  %7467 = vmatpush1.msra.mxu0 0.0
  %7468 = vmatprep.subr.mxu0 0.0
  %7469 = vmatpush1.msra.mxu0 0.0
  %7470 = vmatprep.subr.mxu0 0.0
  %7471 = vmatpush1.msra.mxu0 0.0
  %7472 = vmatprep.subr.mxu0 0.0
  %7473 = vmatpush1.msra.mxu0 0.0
  %7474 = vmatprep.subr.mxu0 0.0
  %7475 = vmatpush1.msra.mxu0 0.0
  %7476 = vmatprep.subr.mxu0 0.0
  %7477 = vmatpush1.msra.mxu0 0.0
  %7478 = vmatprep.subr.mxu0 0.0
  %7479 = vmatpush1.msra.mxu0 0.0
  %7480 = vmatprep.subr.mxu0 0.0
  %7481 = vmatpush1.msra.mxu0 0.0
  %7482 = vmatprep.subr.mxu0 0.0
  %7483 = vmatpush1.msra.mxu0 0.0
  %7484 = vmatprep.subr.mxu0 0.0
  %7485 = vmatpush1.msra.mxu0 0.0
  %7486 = vmatprep.subr.mxu0 0.0
  %7487 = vmatpush1.msra.mxu0 0.0
  %7488 = vmatprep.subr.mxu0 0.0
  %7489 = vmatpush1.msra.mxu0 0.0
  %7490 = vmatprep.subr.mxu0 0.0
  %7491 = vmatpush1.msra.mxu0 0.0
  %7492 = vmatprep.subr.mxu0 0.0
  %7493 = vmatpush1.msra.mxu0 0.0
  %7494 = vmatprep.subr.mxu0 0.0
  %7495 = vmatpush1.msra.mxu0 0.0
  %7496 = vmatprep.subr.mxu0 0.0
  %7497 = vmatpush1.msra.mxu0 0.0
  %7498 = vmatprep.subr.mxu0 0.0
  %7499 = vmatpush1.msra.mxu0 0.0
  %7500 = vmatprep.subr.mxu0 0.0
  %7501 = vmatpush1.msra.mxu0 0.0
  %7502 = vmatprep.mubr.f32.mxu0 0.0
  %7503 = vmatmul.mubr.f32.gmra.mrb[0].mxu0 %v7415
  %v7504 = vpop.f32.mrb[0].mxu0
  %v7505 = vadd.f32 0.0, %v7504
  %v7506 = vpop.f32.mrb[0].mxu0
  %7507 = vmatprep.mubr.f32.mxu0 0.0
  %7508 = vmatmul.mubr.f32.gmra.mrb[0].mxu0 %v7418
  %v7509 = vpop.f32.mrb[0].mxu0
  %v7510 = vadd.f32 0.0, %v7509
  %v7511 = vpop.f32.mrb[0].mxu0
  %7512 = vmatprep.mubr.f32.mxu0 0.0
  %7513 = vmatmul.mubr.f32.gmra.mrb[0].mxu0 %v7421
  %v7514 = vpop.f32.mrb[0].mxu0
  %v7515 = vadd.f32 0.0, %v7514
  %v7516 = vpop.f32.mrb[0].mxu0
  %7517 = vmatprep.mubr.f32.mxu0 0.0
  %7518 = vmatmul.mubr.f32.gmra.mrb[0].mxu0 %v7424
  %v7519 = vpop.f32.mrb[0].mxu0
  %v7520 = vadd.f32 0.0, %v7519
  %v7521 = vpop.f32.mrb[0].mxu0
  %7522 = vmatprep.mubr.f32.mxu0 0.0
  %7523 = vmatmul.mubr.f32.gmra.mrb[0].mxu0 %v7427
  %v7524 = vpop.f32.mrb[0].mxu0
  %v7525 = vadd.f32 0.0, %v7524
  %v7526 = vpop.f32.mrb[0].mxu0
  %7527 = vmatprep.mubr.f32.mxu0 0.0
  %7528 = vmatmul.mubr.f32.gmra.mrb[0].mxu0 %v7430
  %v7529 = vpop.f32.mrb[0].mxu0
  %v7530 = vadd.f32 0.0, %v7529
  %v7531 = vpop.f32.mrb[0].mxu0
  %7532 = vmatprep.mubr.f32.mxu0 0.0
  %7533 = vmatmul.mubr.f32.gmra.mrb[0].mxu0 %v7433
  %v7534 = vpop.f32.mrb[0].mxu0
  %v7535 = vadd.f32 0.0, %v7534
  %v7536 = vpop.f32.mrb[0].mxu0
  %7537 = vmatprep.mubr.f32.mxu0 0.0
  %7538 = vmatmul.mubr.f32.gmra.mrb[0].mxu0 %v7436
  %v7539 = vpop.f32.mrb[0].mxu0
  %v7540 = vadd.f32 0.0, %v7539
  %v7541 = vpop.f32.mrb[0].mxu0
  %7542 = vdwg.mxu0
  %v7543 = vadd.f32 %v7373, %v7505
  %v7544 = vadd.f32 %v7374, %v7510
  %v7545 = vadd.f32 %v7375, %v7515
  %v7546 = vadd.f32 %v7376, %v7520
  %v7547 = vadd.f32 %v7377, %v7525
  %v7548 = vadd.f32 %v7378, %v7530
  %v7549 = vadd.f32 %v7379, %v7535
  %v7550 = vadd.f32 %v7380, %v7540
  %7551 = vrot.lane.b32.xlu0 %v6563, 121
  %v7552 = vpop.permute.xlu0 %7551
  %7553 = vrot.lane.b32.xlu0 %v6564, 121
  %v7554 = vpop.permute.xlu0 %7553
  %7555 = vrot.lane.b32.xlu0 %v6565, 121
  %v7556 = vpop.permute.xlu0 %7555
  %7557 = vrot.lane.b32.xlu0 %v6566, 121
  %v7558 = vpop.permute.xlu0 %7557
  %7559 = vrot.lane.b32.xlu0 %v6567, 121
  %v7560 = vpop.permute.xlu0 %7559
  %7561 = vrot.lane.b32.xlu0 %v6568, 121
  %v7562 = vpop.permute.xlu0 %7561
  %7563 = vrot.lane.b32.xlu0 %v6569, 121
  %v7564 = vpop.permute.xlu0 %7563
  %7565 = vrot.lane.b32.xlu0 %v6570, 121
  %v7566 = vpop.permute.xlu0 %7565
  %v7567 = vsel %vm6035, %v7552, 0.0
  %v7568 = vsel %vm6035, %v7554, 0.0
  %v7569 = vsel %vm6035, %v7556, 0.0
  %v7570 = vsel %vm6035, %v7558, 0.0
  %v7571 = vsel %vm6035, %v7560, 0.0
  %v7572 = vsel %vm6035, %v7562, 0.0
  %v7573 = vsel %vm6035, %v7564, 0.0
  %v7574 = vsel %vm6035, %v7566, 0.0
  %s7575 = scalar_lea.vmem %s8, 384
  %v7576 = vld [vmem:[%s7575] sm:$0xff]
  %v7577 = vld [vmem:[%s7575 + $0x8] sm:$0xff]
  %v7578 = vld [vmem:[%s7575 + $0x10] sm:$0xff]
  %v7579 = vld [vmem:[%s7575 + $0x18] sm:$0xff]
  %v7580 = vld [vmem:[%s7575 + $0x20] sm:$0xff]
  %v7581 = vld [vmem:[%s7575 + $0x28] sm:$0xff]
  %v7582 = vld [vmem:[%s7575 + $0x30] sm:$0xff]
  %v7583 = vld [vmem:[%s7575 + $0x38] sm:$0xff]
  %v7585 = vsel %vm6636, %v7576, 0
  %v7588 = vsel %vm6636, %v7577, 0
  %v7591 = vsel %vm6636, %v7578, 0
  %v7594 = vsel %vm6636, %v7579, 0
  %v7597 = vsel %vm6636, %v7580, 0
  %v7600 = vsel %vm6636, %v7581, 0
  %v7603 = vsel %vm6636, %v7582, 0
  %v7606 = vsel %vm6636, %v7583, 0
  %7608 = vmatprep.subr.mxu0 0.0
  %7609 = vmatpush1.msra.mxu0 %v7567
  %7610 = vmatprep.subr.mxu0 0.0
  %7611 = vmatpush1.msra.mxu0 %v7568
  %7612 = vmatprep.subr.mxu0 0.0
  %7613 = vmatpush1.msra.mxu0 %v7569
  %7614 = vmatprep.subr.mxu0 0.0
  %7615 = vmatpush1.msra.mxu0 %v7570
  %7616 = vmatprep.subr.mxu0 0.0
  %7617 = vmatpush1.msra.mxu0 %v7571
  %7618 = vmatprep.subr.mxu0 0.0
  %7619 = vmatpush1.msra.mxu0 %v7572
  %7620 = vmatprep.subr.mxu0 0.0
  %7621 = vmatpush1.msra.mxu0 %v7573
  %7622 = vmatprep.subr.mxu0 0.0
  %7623 = vmatpush1.msra.mxu0 %v7574
  %7624 = vmatprep.subr.mxu0 0.0
  %7625 = vmatpush1.msra.mxu0 0.0
  %7626 = vmatprep.subr.mxu0 0.0
  %7627 = vmatpush1.msra.mxu0 0.0
  %7628 = vmatprep.subr.mxu0 0.0
  %7629 = vmatpush1.msra.mxu0 0.0
  %7630 = vmatprep.subr.mxu0 0.0
  %7631 = vmatpush1.msra.mxu0 0.0
  %7632 = vmatprep.subr.mxu0 0.0
  %7633 = vmatpush1.msra.mxu0 0.0
  %7634 = vmatprep.subr.mxu0 0.0
  %7635 = vmatpush1.msra.mxu0 0.0
  %7636 = vmatprep.subr.mxu0 0.0
  %7637 = vmatpush1.msra.mxu0 0.0
  %7638 = vmatprep.subr.mxu0 0.0
  %7639 = vmatpush1.msra.mxu0 0.0
  %7640 = vmatprep.subr.mxu0 0.0
  %7641 = vmatpush1.msra.mxu0 0.0
  %7642 = vmatprep.subr.mxu0 0.0
  %7643 = vmatpush1.msra.mxu0 0.0
  %7644 = vmatprep.subr.mxu0 0.0
  %7645 = vmatpush1.msra.mxu0 0.0
  %7646 = vmatprep.subr.mxu0 0.0
  %7647 = vmatpush1.msra.mxu0 0.0
  %7648 = vmatprep.subr.mxu0 0.0
  %7649 = vmatpush1.msra.mxu0 0.0
  %7650 = vmatprep.subr.mxu0 0.0
  %7651 = vmatpush1.msra.mxu0 0.0
  %7652 = vmatprep.subr.mxu0 0.0
  %7653 = vmatpush1.msra.mxu0 0.0
  %7654 = vmatprep.subr.mxu0 0.0
  %7655 = vmatpush1.msra.mxu0 0.0
  %7656 = vmatprep.subr.mxu0 0.0
  %7657 = vmatpush1.msra.mxu0 0.0
  %7658 = vmatprep.subr.mxu0 0.0
  %7659 = vmatpush1.msra.mxu0 0.0
  %7660 = vmatprep.subr.mxu0 0.0
  %7661 = vmatpush1.msra.mxu0 0.0
  %7662 = vmatprep.subr.mxu0 0.0
  %7663 = vmatpush1.msra.mxu0 0.0
  %7664 = vmatprep.subr.mxu0 0.0
  %7665 = vmatpush1.msra.mxu0 0.0
  %7666 = vmatprep.subr.mxu0 0.0
  %7667 = vmatpush1.msra.mxu0 0.0
  %7668 = vmatprep.subr.mxu0 0.0
  %7669 = vmatpush1.msra.mxu0 0.0
  %7670 = vmatprep.subr.mxu0 0.0
  %7671 = vmatpush1.msra.mxu0 0.0
  %7672 = vmatprep.mubr.f32.mxu0 0.0
  %7673 = vmatmul.mubr.f32.gmra.mrb[0].mxu0 %v7585
  %v7674 = vpop.f32.mrb[0].mxu0
  %v7675 = vadd.f32 0.0, %v7674
  %v7676 = vpop.f32.mrb[0].mxu0
  %7677 = vmatprep.mubr.f32.mxu0 0.0
  %7678 = vmatmul.mubr.f32.gmra.mrb[0].mxu0 %v7588
  %v7679 = vpop.f32.mrb[0].mxu0
  %v7680 = vadd.f32 0.0, %v7679
  %v7681 = vpop.f32.mrb[0].mxu0
  %7682 = vmatprep.mubr.f32.mxu0 0.0
  %7683 = vmatmul.mubr.f32.gmra.mrb[0].mxu0 %v7591
  %v7684 = vpop.f32.mrb[0].mxu0
  %v7685 = vadd.f32 0.0, %v7684
  %v7686 = vpop.f32.mrb[0].mxu0
  %7687 = vmatprep.mubr.f32.mxu0 0.0
  %7688 = vmatmul.mubr.f32.gmra.mrb[0].mxu0 %v7594
  %v7689 = vpop.f32.mrb[0].mxu0
  %v7690 = vadd.f32 0.0, %v7689
  %v7691 = vpop.f32.mrb[0].mxu0
  %7692 = vmatprep.mubr.f32.mxu0 0.0
  %7693 = vmatmul.mubr.f32.gmra.mrb[0].mxu0 %v7597
  %v7694 = vpop.f32.mrb[0].mxu0
  %v7695 = vadd.f32 0.0, %v7694
  %v7696 = vpop.f32.mrb[0].mxu0
  %7697 = vmatprep.mubr.f32.mxu0 0.0
  %7698 = vmatmul.mubr.f32.gmra.mrb[0].mxu0 %v7600
  %v7699 = vpop.f32.mrb[0].mxu0
  %v7700 = vadd.f32 0.0, %v7699
  %v7701 = vpop.f32.mrb[0].mxu0
  %7702 = vmatprep.mubr.f32.mxu0 0.0
  %7703 = vmatmul.mubr.f32.gmra.mrb[0].mxu0 %v7603
  %v7704 = vpop.f32.mrb[0].mxu0
  %v7705 = vadd.f32 0.0, %v7704
  %v7706 = vpop.f32.mrb[0].mxu0
  %7707 = vmatprep.mubr.f32.mxu0 0.0
  %7708 = vmatmul.mubr.f32.gmra.mrb[0].mxu0 %v7606
  %v7709 = vpop.f32.mrb[0].mxu0
  %v7710 = vadd.f32 0.0, %v7709
  %v7711 = vpop.f32.mrb[0].mxu0
  %7712 = vdwg.mxu0
  %v7713 = vadd.f32 %v7543, %v7675
  %v7714 = vadd.f32 %v7544, %v7680
  %v7715 = vadd.f32 %v7545, %v7685
  %v7716 = vadd.f32 %v7546, %v7690
  %v7717 = vadd.f32 %v7547, %v7695
  %v7718 = vadd.f32 %v7548, %v7700
  %v7719 = vadd.f32 %v7549, %v7705
  %v7720 = vadd.f32 %v7550, %v7710
  %7721 = vrot.lane.b32.xlu0 %v6563, 120
  %v7722 = vpop.permute.xlu0 %7721
  %7723 = vrot.lane.b32.xlu0 %v6564, 120
  %v7724 = vpop.permute.xlu0 %7723
  %7725 = vrot.lane.b32.xlu0 %v6565, 120
  %v7726 = vpop.permute.xlu0 %7725
  %7727 = vrot.lane.b32.xlu0 %v6566, 120
  %v7728 = vpop.permute.xlu0 %7727
  %7729 = vrot.lane.b32.xlu0 %v6567, 120
  %v7730 = vpop.permute.xlu0 %7729
  %7731 = vrot.lane.b32.xlu0 %v6568, 120
  %v7732 = vpop.permute.xlu0 %7731
  %7733 = vrot.lane.b32.xlu0 %v6569, 120
  %v7734 = vpop.permute.xlu0 %7733
  %7735 = vrot.lane.b32.xlu0 %v6570, 120
  %v7736 = vpop.permute.xlu0 %7735
  %v7737 = vsel %vm6195, %v7722, 0.0
  %v7738 = vsel %vm6195, %v7724, 0.0
  %v7739 = vsel %vm6195, %v7726, 0.0
  %v7740 = vsel %vm6195, %v7728, 0.0
  %v7741 = vsel %vm6195, %v7730, 0.0
  %v7742 = vsel %vm6195, %v7732, 0.0
  %v7743 = vsel %vm6195, %v7734, 0.0
  %v7744 = vsel %vm6195, %v7736, 0.0
  %s7745 = scalar_lea.vmem %s8, 448
  %v7746 = vld [vmem:[%s7745] sm:$0xff]
  %v7747 = vld [vmem:[%s7745 + $0x8] sm:$0xff]
  %v7748 = vld [vmem:[%s7745 + $0x10] sm:$0xff]
  %v7749 = vld [vmem:[%s7745 + $0x18] sm:$0xff]
  %v7750 = vld [vmem:[%s7745 + $0x20] sm:$0xff]
  %v7751 = vld [vmem:[%s7745 + $0x28] sm:$0xff]
  %v7752 = vld [vmem:[%s7745 + $0x30] sm:$0xff]
  %v7753 = vld [vmem:[%s7745 + $0x38] sm:$0xff]
  %v7755 = vsel %vm6636, %v7746, 0
  %v7758 = vsel %vm6636, %v7747, 0
  %v7761 = vsel %vm6636, %v7748, 0
  %v7764 = vsel %vm6636, %v7749, 0
  %v7767 = vsel %vm6636, %v7750, 0
  %v7770 = vsel %vm6636, %v7751, 0
  %v7773 = vsel %vm6636, %v7752, 0
  %v7776 = vsel %vm6636, %v7753, 0
  %7778 = vmatprep.subr.mxu0 0.0
  %7779 = vmatpush1.msra.mxu0 %v7737
  %7780 = vmatprep.subr.mxu0 0.0
  %7781 = vmatpush1.msra.mxu0 %v7738
  %7782 = vmatprep.subr.mxu0 0.0
  %7783 = vmatpush1.msra.mxu0 %v7739
  %7784 = vmatprep.subr.mxu0 0.0
  %7785 = vmatpush1.msra.mxu0 %v7740
  %7786 = vmatprep.subr.mxu0 0.0
  %7787 = vmatpush1.msra.mxu0 %v7741
  %7788 = vmatprep.subr.mxu0 0.0
  %7789 = vmatpush1.msra.mxu0 %v7742
  %7790 = vmatprep.subr.mxu0 0.0
  %7791 = vmatpush1.msra.mxu0 %v7743
  %7792 = vmatprep.subr.mxu0 0.0
  %7793 = vmatpush1.msra.mxu0 %v7744
  %7794 = vmatprep.subr.mxu0 0.0
  %7795 = vmatpush1.msra.mxu0 0.0
  %7796 = vmatprep.subr.mxu0 0.0
  %7797 = vmatpush1.msra.mxu0 0.0
  %7798 = vmatprep.subr.mxu0 0.0
  %7799 = vmatpush1.msra.mxu0 0.0
  %7800 = vmatprep.subr.mxu0 0.0
  %7801 = vmatpush1.msra.mxu0 0.0
  %7802 = vmatprep.subr.mxu0 0.0
  %7803 = vmatpush1.msra.mxu0 0.0
  %7804 = vmatprep.subr.mxu0 0.0
  %7805 = vmatpush1.msra.mxu0 0.0
  %7806 = vmatprep.subr.mxu0 0.0
  %7807 = vmatpush1.msra.mxu0 0.0
  %7808 = vmatprep.subr.mxu0 0.0
  %7809 = vmatpush1.msra.mxu0 0.0
  %7810 = vmatprep.subr.mxu0 0.0
  %7811 = vmatpush1.msra.mxu0 0.0
  %7812 = vmatprep.subr.mxu0 0.0
  %7813 = vmatpush1.msra.mxu0 0.0
  %7814 = vmatprep.subr.mxu0 0.0
  %7815 = vmatpush1.msra.mxu0 0.0
  %7816 = vmatprep.subr.mxu0 0.0
  %7817 = vmatpush1.msra.mxu0 0.0
  %7818 = vmatprep.subr.mxu0 0.0
  %7819 = vmatpush1.msra.mxu0 0.0
  %7820 = vmatprep.subr.mxu0 0.0
  %7821 = vmatpush1.msra.mxu0 0.0
  %7822 = vmatprep.subr.mxu0 0.0
  %7823 = vmatpush1.msra.mxu0 0.0
  %7824 = vmatprep.subr.mxu0 0.0
  %7825 = vmatpush1.msra.mxu0 0.0
  %7826 = vmatprep.subr.mxu0 0.0
  %7827 = vmatpush1.msra.mxu0 0.0
  %7828 = vmatprep.subr.mxu0 0.0
  %7829 = vmatpush1.msra.mxu0 0.0
  %7830 = vmatprep.subr.mxu0 0.0
  %7831 = vmatpush1.msra.mxu0 0.0
  %7832 = vmatprep.subr.mxu0 0.0
  %7833 = vmatpush1.msra.mxu0 0.0
  %7834 = vmatprep.subr.mxu0 0.0
  %7835 = vmatpush1.msra.mxu0 0.0
  %7836 = vmatprep.subr.mxu0 0.0
  %7837 = vmatpush1.msra.mxu0 0.0
  %7838 = vmatprep.subr.mxu0 0.0
  %7839 = vmatpush1.msra.mxu0 0.0
  %7840 = vmatprep.subr.mxu0 0.0
  %7841 = vmatpush1.msra.mxu0 0.0
  %7842 = vmatprep.mubr.f32.mxu0 0.0
  %7843 = vmatmul.mubr.f32.gmra.mrb[0].mxu0 %v7755
  %v7844 = vpop.f32.mrb[0].mxu0
  %v7845 = vadd.f32 0.0, %v7844
  %v7846 = vpop.f32.mrb[0].mxu0
  %7847 = vmatprep.mubr.f32.mxu0 0.0
  %7848 = vmatmul.mubr.f32.gmra.mrb[0].mxu0 %v7758
  %v7849 = vpop.f32.mrb[0].mxu0
  %v7850 = vadd.f32 0.0, %v7849
  %v7851 = vpop.f32.mrb[0].mxu0
  %7852 = vmatprep.mubr.f32.mxu0 0.0
  %7853 = vmatmul.mubr.f32.gmra.mrb[0].mxu0 %v7761
  %v7854 = vpop.f32.mrb[0].mxu0
  %v7855 = vadd.f32 0.0, %v7854
  %v7856 = vpop.f32.mrb[0].mxu0
  %7857 = vmatprep.mubr.f32.mxu0 0.0
  %7858 = vmatmul.mubr.f32.gmra.mrb[0].mxu0 %v7764
  %v7859 = vpop.f32.mrb[0].mxu0
  %v7860 = vadd.f32 0.0, %v7859
  %v7861 = vpop.f32.mrb[0].mxu0
  %7862 = vmatprep.mubr.f32.mxu0 0.0
  %7863 = vmatmul.mubr.f32.gmra.mrb[0].mxu0 %v7767
  %v7864 = vpop.f32.mrb[0].mxu0
  %v7865 = vadd.f32 0.0, %v7864
  %v7866 = vpop.f32.mrb[0].mxu0
  %7867 = vmatprep.mubr.f32.mxu0 0.0
  %7868 = vmatmul.mubr.f32.gmra.mrb[0].mxu0 %v7770
  %v7869 = vpop.f32.mrb[0].mxu0
  %v7870 = vadd.f32 0.0, %v7869
  %v7871 = vpop.f32.mrb[0].mxu0
  %7872 = vmatprep.mubr.f32.mxu0 0.0
  %7873 = vmatmul.mubr.f32.gmra.mrb[0].mxu0 %v7773
  %v7874 = vpop.f32.mrb[0].mxu0
  %v7875 = vadd.f32 0.0, %v7874
  %v7876 = vpop.f32.mrb[0].mxu0
  %7877 = vmatprep.mubr.f32.mxu0 0.0
  %7878 = vmatmul.mubr.f32.gmra.mrb[0].mxu0 %v7776
  %v7879 = vpop.f32.mrb[0].mxu0
  %v7880 = vadd.f32 0.0, %v7879
  %v7881 = vpop.f32.mrb[0].mxu0
  %7882 = vdwg.mxu0
  %v7883 = vadd.f32 %v7713, %v7845
  %v7884 = vadd.f32 %v7714, %v7850
  %v7885 = vadd.f32 %v7715, %v7855
  %v7886 = vadd.f32 %v7716, %v7860
  %v7887 = vadd.f32 %v7717, %v7865
  %v7888 = vadd.f32 %v7718, %v7870
  %v7889 = vadd.f32 %v7719, %v7875
  %v7890 = vadd.f32 %v7720, %v7880
  %7891 = vrot.lane.b32.xlu0 %v6563, 119
  %v7892 = vpop.permute.xlu0 %7891
  %7893 = vrot.lane.b32.xlu0 %v6564, 119
  %v7894 = vpop.permute.xlu0 %7893
  %7895 = vrot.lane.b32.xlu0 %v6565, 119
  %v7896 = vpop.permute.xlu0 %7895
  %7897 = vrot.lane.b32.xlu0 %v6566, 119
  %v7898 = vpop.permute.xlu0 %7897
  %7899 = vrot.lane.b32.xlu0 %v6567, 119
  %v7900 = vpop.permute.xlu0 %7899
  %7901 = vrot.lane.b32.xlu0 %v6568, 119
  %v7902 = vpop.permute.xlu0 %7901
  %7903 = vrot.lane.b32.xlu0 %v6569, 119
  %v7904 = vpop.permute.xlu0 %7903
  %7905 = vrot.lane.b32.xlu0 %v6570, 119
  %v7906 = vpop.permute.xlu0 %7905
  %v7907 = vsel %vm6356, %v7892, 0.0
  %v7908 = vsel %vm6356, %v7894, 0.0
  %v7909 = vsel %vm6356, %v7896, 0.0
  %v7910 = vsel %vm6356, %v7898, 0.0
  %v7911 = vsel %vm6356, %v7900, 0.0
  %v7912 = vsel %vm6356, %v7902, 0.0
  %v7913 = vsel %vm6356, %v7904, 0.0
  %v7914 = vsel %vm6356, %v7906, 0.0
  %s7915 = scalar_lea.vmem %s8, 512
  %v7916 = vld [vmem:[%s7915] sm:$0xff]
  %v7917 = vld [vmem:[%s7915 + $0x8] sm:$0xff]
  %v7918 = vld [vmem:[%s7915 + $0x10] sm:$0xff]
  %v7919 = vld [vmem:[%s7915 + $0x18] sm:$0xff]
  %v7920 = vld [vmem:[%s7915 + $0x20] sm:$0xff]
  %v7921 = vld [vmem:[%s7915 + $0x28] sm:$0xff]
  %v7922 = vld [vmem:[%s7915 + $0x30] sm:$0xff]
  %v7923 = vld [vmem:[%s7915 + $0x38] sm:$0xff]
  %v7925 = vsel %vm6636, %v7916, 0
  %v7928 = vsel %vm6636, %v7917, 0
  %v7931 = vsel %vm6636, %v7918, 0
  %v7934 = vsel %vm6636, %v7919, 0
  %v7937 = vsel %vm6636, %v7920, 0
  %v7940 = vsel %vm6636, %v7921, 0
  %v7943 = vsel %vm6636, %v7922, 0
  %v7946 = vsel %vm6636, %v7923, 0
  %7948 = vmatprep.subr.mxu0 0.0
  %7949 = vmatpush1.msra.mxu0 %v7907
  %7950 = vmatprep.subr.mxu0 0.0
  %7951 = vmatpush1.msra.mxu0 %v7908
  %7952 = vmatprep.subr.mxu0 0.0
  %7953 = vmatpush1.msra.mxu0 %v7909
  %7954 = vmatprep.subr.mxu0 0.0
  %7955 = vmatpush1.msra.mxu0 %v7910
  %7956 = vmatprep.subr.mxu0 0.0
  %7957 = vmatpush1.msra.mxu0 %v7911
  %7958 = vmatprep.subr.mxu0 0.0
  %7959 = vmatpush1.msra.mxu0 %v7912
  %7960 = vmatprep.subr.mxu0 0.0
  %7961 = vmatpush1.msra.mxu0 %v7913
  %7962 = vmatprep.subr.mxu0 0.0
  %7963 = vmatpush1.msra.mxu0 %v7914
  %7964 = vmatprep.subr.mxu0 0.0
  %7965 = vmatpush1.msra.mxu0 0.0
  %7966 = vmatprep.subr.mxu0 0.0
  %7967 = vmatpush1.msra.mxu0 0.0
  %7968 = vmatprep.subr.mxu0 0.0
  %7969 = vmatpush1.msra.mxu0 0.0
  %7970 = vmatprep.subr.mxu0 0.0
  %7971 = vmatpush1.msra.mxu0 0.0
  %7972 = vmatprep.subr.mxu0 0.0
  %7973 = vmatpush1.msra.mxu0 0.0
  %7974 = vmatprep.subr.mxu0 0.0
  %7975 = vmatpush1.msra.mxu0 0.0
  %7976 = vmatprep.subr.mxu0 0.0
  %7977 = vmatpush1.msra.mxu0 0.0
  %7978 = vmatprep.subr.mxu0 0.0
  %7979 = vmatpush1.msra.mxu0 0.0
  %7980 = vmatprep.subr.mxu0 0.0
  %7981 = vmatpush1.msra.mxu0 0.0
  %7982 = vmatprep.subr.mxu0 0.0
  %7983 = vmatpush1.msra.mxu0 0.0
  %7984 = vmatprep.subr.mxu0 0.0
  %7985 = vmatpush1.msra.mxu0 0.0
  %7986 = vmatprep.subr.mxu0 0.0
  %7987 = vmatpush1.msra.mxu0 0.0
  %7988 = vmatprep.subr.mxu0 0.0
  %7989 = vmatpush1.msra.mxu0 0.0
  %7990 = vmatprep.subr.mxu0 0.0
  %7991 = vmatpush1.msra.mxu0 0.0
  %7992 = vmatprep.subr.mxu0 0.0
  %7993 = vmatpush1.msra.mxu0 0.0
  %7994 = vmatprep.subr.mxu0 0.0
  %7995 = vmatpush1.msra.mxu0 0.0
  %7996 = vmatprep.subr.mxu0 0.0
  %7997 = vmatpush1.msra.mxu0 0.0
  %7998 = vmatprep.subr.mxu0 0.0
  %7999 = vmatpush1.msra.mxu0 0.0
  %8000 = vmatprep.subr.mxu0 0.0
  %8001 = vmatpush1.msra.mxu0 0.0
  %8002 = vmatprep.subr.mxu0 0.0
  %8003 = vmatpush1.msra.mxu0 0.0
  %8004 = vmatprep.subr.mxu0 0.0
  %8005 = vmatpush1.msra.mxu0 0.0
  %8006 = vmatprep.subr.mxu0 0.0
  %8007 = vmatpush1.msra.mxu0 0.0
  %8008 = vmatprep.subr.mxu0 0.0
  %8009 = vmatpush1.msra.mxu0 0.0
  %8010 = vmatprep.subr.mxu0 0.0
  %8011 = vmatpush1.msra.mxu0 0.0
  %8012 = vmatprep.mubr.f32.mxu0 0.0
  %8013 = vmatmul.mubr.f32.gmra.mrb[0].mxu0 %v7925
  %v8014 = vpop.f32.mrb[0].mxu0
  %v8015 = vadd.f32 0.0, %v8014
  %v8016 = vpop.f32.mrb[0].mxu0
  %8017 = vmatprep.mubr.f32.mxu0 0.0
  %8018 = vmatmul.mubr.f32.gmra.mrb[0].mxu0 %v7928
  %v8019 = vpop.f32.mrb[0].mxu0
  %v8020 = vadd.f32 0.0, %v8019
  %v8021 = vpop.f32.mrb[0].mxu0
  %8022 = vmatprep.mubr.f32.mxu0 0.0
  %8023 = vmatmul.mubr.f32.gmra.mrb[0].mxu0 %v7931
  %v8024 = vpop.f32.mrb[0].mxu0
  %v8025 = vadd.f32 0.0, %v8024
  %v8026 = vpop.f32.mrb[0].mxu0
  %8027 = vmatprep.mubr.f32.mxu0 0.0
  %8028 = vmatmul.mubr.f32.gmra.mrb[0].mxu0 %v7934
  %v8029 = vpop.f32.mrb[0].mxu0
  %v8030 = vadd.f32 0.0, %v8029
  %v8031 = vpop.f32.mrb[0].mxu0
  %8032 = vmatprep.mubr.f32.mxu0 0.0
  %8033 = vmatmul.mubr.f32.gmra.mrb[0].mxu0 %v7937
  %v8034 = vpop.f32.mrb[0].mxu0
  %v8035 = vadd.f32 0.0, %v8034
  %v8036 = vpop.f32.mrb[0].mxu0
  %8037 = vmatprep.mubr.f32.mxu0 0.0
  %8038 = vmatmul.mubr.f32.gmra.mrb[0].mxu0 %v7940
  %v8039 = vpop.f32.mrb[0].mxu0
  %v8040 = vadd.f32 0.0, %v8039
  %v8041 = vpop.f32.mrb[0].mxu0
  %8042 = vmatprep.mubr.f32.mxu0 0.0
  %8043 = vmatmul.mubr.f32.gmra.mrb[0].mxu0 %v7943
  %v8044 = vpop.f32.mrb[0].mxu0
  %v8045 = vadd.f32 0.0, %v8044
  %v8046 = vpop.f32.mrb[0].mxu0
  %8047 = vmatprep.mubr.f32.mxu0 0.0
  %8048 = vmatmul.mubr.f32.gmra.mrb[0].mxu0 %v7946
  %v8049 = vpop.f32.mrb[0].mxu0
  %v8050 = vadd.f32 0.0, %v8049
  %v8051 = vpop.f32.mrb[0].mxu0
  %8052 = vdwg.mxu0
  %v8053 = vadd.f32 %v7883, %v8015
  %v8054 = vadd.f32 %v7884, %v8020
  %v8055 = vadd.f32 %v7885, %v8025
  %v8056 = vadd.f32 %v7886, %v8030
  %v8057 = vadd.f32 %v7887, %v8035
  %v8058 = vadd.f32 %v7888, %v8040
  %v8059 = vadd.f32 %v7889, %v8045
  %v8060 = vadd.f32 %v7890, %v8050
  %v8061 = vld [vmem:[%s9] sm:$0xff]
  %v8062 = vld [vmem:[%s9 + $0x8] sm:$0xff]
  %v8063 = vld [vmem:[%s9 + $0x10] sm:$0xff]
  %v8064 = vld [vmem:[%s9 + $0x18] sm:$0xff]
  %v8065 = vld [vmem:[%s9 + $0x20] sm:$0xff]
  %v8066 = vld [vmem:[%s9 + $0x28] sm:$0xff]
  %v8067 = vld [vmem:[%s9 + $0x30] sm:$0xff]
  %v8068 = vld [vmem:[%s9 + $0x38] sm:$0xff]
  %8070 = vset.pattern.permute.xlu0 0
  %8071 = vperm.xlu0 %8070, %v8061
  %v8072 = vpop.permute.xlu0 %8071
  %8075 = vset.pattern.permute.xlu0 0
  %8076 = vperm.xlu0 %8075, %v8062
  %v8077 = vpop.permute.xlu0 %8076
  %8080 = vset.pattern.permute.xlu0 0
  %8081 = vperm.xlu0 %8080, %v8063
  %v8082 = vpop.permute.xlu0 %8081
  %8085 = vset.pattern.permute.xlu0 0
  %8086 = vperm.xlu0 %8085, %v8064
  %v8087 = vpop.permute.xlu0 %8086
  %8090 = vset.pattern.permute.xlu0 0
  %8091 = vperm.xlu0 %8090, %v8065
  %v8092 = vpop.permute.xlu0 %8091
  %8095 = vset.pattern.permute.xlu0 0
  %8096 = vperm.xlu0 %8095, %v8066
  %v8097 = vpop.permute.xlu0 %8096
  %8100 = vset.pattern.permute.xlu0 0
  %8101 = vperm.xlu0 %8100, %v8067
  %v8102 = vpop.permute.xlu0 %8101
  %8105 = vset.pattern.permute.xlu0 0
  %8106 = vperm.xlu0 %8105, %v8068
  %v8107 = vpop.permute.xlu0 %8106
  %v8109 = vadd.f32 %v8053, %v8072
  %v8110 = vadd.f32 %v8054, %v8077
  %v8111 = vadd.f32 %v8055, %v8082
  %v8112 = vadd.f32 %v8056, %v8087
  %v8113 = vadd.f32 %v8057, %v8092
  %v8114 = vadd.f32 %v8058, %v8097
  %v8115 = vadd.f32 %v8059, %v8102
  %v8116 = vadd.f32 %v8060, %v8107
  %v8117 = vmax.f32 %v8109, 0.0
  %v8118 = vmax.f32 %v8110, 0.0
  %v8119 = vmax.f32 %v8111, 0.0
  %v8120 = vmax.f32 %v8112, 0.0
  %v8121 = vmax.f32 %v8113, 0.0
  %v8122 = vmax.f32 %v8114, 0.0
  %v8123 = vmax.f32 %v8115, 0.0
  %v8124 = vmax.f32 %v8116, 0.0
  %8125 = vrot.lane.b32.xlu0 %v8117, 127
  %v8126 = vpop.permute.xlu0 %8125
  %8127 = vrot.lane.b32.xlu0 %v8118, 127
  %v8128 = vpop.permute.xlu0 %8127
  %8129 = vrot.lane.b32.xlu0 %v8119, 127
  %v8130 = vpop.permute.xlu0 %8129
  %8131 = vrot.lane.b32.xlu0 %v8120, 127
  %v8132 = vpop.permute.xlu0 %8131
  %8133 = vrot.lane.b32.xlu0 %v8121, 127
  %v8134 = vpop.permute.xlu0 %8133
  %8135 = vrot.lane.b32.xlu0 %v8122, 127
  %v8136 = vpop.permute.xlu0 %8135
  %8137 = vrot.lane.b32.xlu0 %v8123, 127
  %v8138 = vpop.permute.xlu0 %8137
  %8139 = vrot.lane.b32.xlu0 %v8124, 127
  %v8140 = vpop.permute.xlu0 %8139
  %v8141 = vmax.f32 %v8117, %v8126
  %v8142 = vmax.f32 %v8118, %v8128
  %v8143 = vmax.f32 %v8119, %v8130
  %v8144 = vmax.f32 %v8120, %v8132
  %v8145 = vmax.f32 %v8121, %v8134
  %v8146 = vmax.f32 %v8122, %v8136
  %v8147 = vmax.f32 %v8123, %v8138
  %v8148 = vmax.f32 %v8124, %v8140
  %8149 = vrot.lane.b32.xlu0 %v8117, 120
  %v8150 = vpop.permute.xlu0 %8149
  %8151 = vrot.lane.b32.xlu0 %v8118, 120
  %v8152 = vpop.permute.xlu0 %8151
  %8153 = vrot.lane.b32.xlu0 %v8119, 120
  %v8154 = vpop.permute.xlu0 %8153
  %8155 = vrot.lane.b32.xlu0 %v8120, 120
  %v8156 = vpop.permute.xlu0 %8155
  %8157 = vrot.lane.b32.xlu0 %v8121, 120
  %v8158 = vpop.permute.xlu0 %8157
  %8159 = vrot.lane.b32.xlu0 %v8122, 120
  %v8160 = vpop.permute.xlu0 %8159
  %8161 = vrot.lane.b32.xlu0 %v8123, 120
  %v8162 = vpop.permute.xlu0 %8161
  %8163 = vrot.lane.b32.xlu0 %v8124, 120
  %v8164 = vpop.permute.xlu0 %8163
  %v8165 = vmax.f32 %v8141, %v8150
  %v8166 = vmax.f32 %v8142, %v8152
  %v8167 = vmax.f32 %v8143, %v8154
  %v8168 = vmax.f32 %v8144, %v8156
  %v8169 = vmax.f32 %v8145, %v8158
  %v8170 = vmax.f32 %v8146, %v8160
  %v8171 = vmax.f32 %v8147, %v8162
  %v8172 = vmax.f32 %v8148, %v8164
  %8173 = vrot.lane.b32.xlu0 %v8117, 119
  %v8174 = vpop.permute.xlu0 %8173
  %8175 = vrot.lane.b32.xlu0 %v8118, 119
  %v8176 = vpop.permute.xlu0 %8175
  %8177 = vrot.lane.b32.xlu0 %v8119, 119
  %v8178 = vpop.permute.xlu0 %8177
  %8179 = vrot.lane.b32.xlu0 %v8120, 119
  %v8180 = vpop.permute.xlu0 %8179
  %8181 = vrot.lane.b32.xlu0 %v8121, 119
  %v8182 = vpop.permute.xlu0 %8181
  %8183 = vrot.lane.b32.xlu0 %v8122, 119
  %v8184 = vpop.permute.xlu0 %8183
  %8185 = vrot.lane.b32.xlu0 %v8123, 119
  %v8186 = vpop.permute.xlu0 %8185
  %8187 = vrot.lane.b32.xlu0 %v8124, 119
  %v8188 = vpop.permute.xlu0 %8187
  %v8189 = vmax.f32 %v8165, %v8174
  %v8190 = vmax.f32 %v8166, %v8176
  %v8191 = vmax.f32 %v8167, %v8178
  %v8192 = vmax.f32 %v8168, %v8180
  %v8193 = vmax.f32 %v8169, %v8182
  %v8194 = vmax.f32 %v8170, %v8184
  %v8195 = vmax.f32 %v8171, %v8186
  %v8196 = vmax.f32 %v8172, %v8188
  %v8197 = vld [vmem:[%s10] sm:$0xff]
  %v8198 = vld [vmem:[%s10 + $0x8] sm:$0xff]
  %v8199 = vld [vmem:[%s10 + $0x10] sm:$0xff]
  %v8200 = vld [vmem:[%s10 + $0x18] sm:$0xff]
  %v8201 = vld [vmem:[%s10 + $0x20] sm:$0xff]
  %v8202 = vld [vmem:[%s10 + $0x28] sm:$0xff]
  %v8203 = vld [vmem:[%s10 + $0x30] sm:$0xff]
  %v8204 = vld [vmem:[%s10 + $0x38] sm:$0xff]
  %v8205 = vld [vmem:[%s10 + $0x40] sm:$0xff]
  %v8206 = vld [vmem:[%s10 + $0x48] sm:$0xff]
  %v8207 = vld [vmem:[%s10 + $0x50] sm:$0xff]
  %v8208 = vld [vmem:[%s10 + $0x58] sm:$0xff]
  %v8209 = vld [vmem:[%s10 + $0x60] sm:$0xff]
  %v8210 = vld [vmem:[%s10 + $0x68] sm:$0xff]
  %v8211 = vld [vmem:[%s10 + $0x70] sm:$0xff]
  %v8212 = vld [vmem:[%s10 + $0x78] sm:$0xff]
  %8213 = vmatprep.subr.mxu0 0.0
  %8214 = vmatpush1.msra.mxu0 %v8197
  %8215 = vmatprep.subr.mxu0 0.0
  %8216 = vmatpush1.msra.mxu0 %v8198
  %8217 = vmatprep.subr.mxu0 0.0
  %8218 = vmatpush1.msra.mxu0 %v8199
  %8219 = vmatprep.subr.mxu0 0.0
  %8220 = vmatpush1.msra.mxu0 %v8200
  %8221 = vmatprep.subr.mxu0 0.0
  %8222 = vmatpush1.msra.mxu0 %v8201
  %8223 = vmatprep.subr.mxu0 0.0
  %8224 = vmatpush1.msra.mxu0 %v8202
  %8225 = vmatprep.subr.mxu0 0.0
  %8226 = vmatpush1.msra.mxu0 %v8203
  %8227 = vmatprep.subr.mxu0 0.0
  %8228 = vmatpush1.msra.mxu0 %v8204
  %8229 = vmatprep.subr.mxu0 0.0
  %8230 = vmatpush1.msra.mxu0 %v8205
  %8231 = vmatprep.subr.mxu0 0.0
  %8232 = vmatpush1.msra.mxu0 %v8206
  %8233 = vmatprep.subr.mxu0 0.0
  %8234 = vmatpush1.msra.mxu0 %v8207
  %8235 = vmatprep.subr.mxu0 0.0
  %8236 = vmatpush1.msra.mxu0 %v8208
  %8237 = vmatprep.subr.mxu0 0.0
  %8238 = vmatpush1.msra.mxu0 %v8209
  %8239 = vmatprep.subr.mxu0 0.0
  %8240 = vmatpush1.msra.mxu0 %v8210
  %8241 = vmatprep.subr.mxu0 0.0
  %8242 = vmatpush1.msra.mxu0 %v8211
  %8243 = vmatprep.subr.mxu0 0.0
  %8244 = vmatpush1.msra.mxu0 %v8212
  %8245 = vmatprep.subr.mxu0 0.0
  %8246 = vmatpush1.msra.mxu0 0.0
  %8247 = vmatprep.subr.mxu0 0.0
  %8248 = vmatpush1.msra.mxu0 0.0
  %8249 = vmatprep.subr.mxu0 0.0
  %8250 = vmatpush1.msra.mxu0 0.0
  %8251 = vmatprep.subr.mxu0 0.0
  %8252 = vmatpush1.msra.mxu0 0.0
  %8253 = vmatprep.subr.mxu0 0.0
  %8254 = vmatpush1.msra.mxu0 0.0
  %8255 = vmatprep.subr.mxu0 0.0
  %8256 = vmatpush1.msra.mxu0 0.0
  %8257 = vmatprep.subr.mxu0 0.0
  %8258 = vmatpush1.msra.mxu0 0.0
  %8259 = vmatprep.subr.mxu0 0.0
  %8260 = vmatpush1.msra.mxu0 0.0
  %8261 = vmatprep.subr.mxu0 0.0
  %8262 = vmatpush1.msra.mxu0 0.0
  %8263 = vmatprep.subr.mxu0 0.0
  %8264 = vmatpush1.msra.mxu0 0.0
  %8265 = vmatprep.subr.mxu0 0.0
  %8266 = vmatpush1.msra.mxu0 0.0
  %8267 = vmatprep.subr.mxu0 0.0
  %8268 = vmatpush1.msra.mxu0 0.0
  %8269 = vmatprep.subr.mxu0 0.0
  %8270 = vmatpush1.msra.mxu0 0.0
  %8271 = vmatprep.subr.mxu0 0.0
  %8272 = vmatpush1.msra.mxu0 0.0
  %8273 = vmatprep.subr.mxu0 0.0
  %8274 = vmatpush1.msra.mxu0 0.0
  %8275 = vmatprep.subr.mxu0 0.0
  %8276 = vmatpush1.msra.mxu0 0.0
  %8277 = vmatprep.mubr.f32.mxu0 0.0
  %8278 = vmatmul.mubr.f32.gmra.mrb[0].mxu0 %v8189
  %v8279 = vpop.f32.mrb[0].mxu0
  %v8280 = vadd.f32 0.0, %v8279
  %v8281 = vpop.f32.mrb[0].mxu0
  %8282 = vmatprep.mubr.f32.mxu0 0.0
  %8283 = vmatmul.mubr.f32.gmra.mrb[0].mxu0 %v8190
  %v8284 = vpop.f32.mrb[0].mxu0
  %v8285 = vadd.f32 0.0, %v8284
  %v8286 = vpop.f32.mrb[0].mxu0
  %8287 = vmatprep.mubr.f32.mxu0 0.0
  %8288 = vmatmul.mubr.f32.gmra.mrb[0].mxu0 %v8191
  %v8289 = vpop.f32.mrb[0].mxu0
  %v8290 = vadd.f32 0.0, %v8289
  %v8291 = vpop.f32.mrb[0].mxu0
  %8292 = vmatprep.mubr.f32.mxu0 0.0
  %8293 = vmatmul.mubr.f32.gmra.mrb[0].mxu0 %v8192
  %v8294 = vpop.f32.mrb[0].mxu0
  %v8295 = vadd.f32 0.0, %v8294
  %v8296 = vpop.f32.mrb[0].mxu0
  %8297 = vmatprep.mubr.f32.mxu0 0.0
  %8298 = vmatmul.mubr.f32.gmra.mrb[0].mxu0 %v8193
  %v8299 = vpop.f32.mrb[0].mxu0
  %v8300 = vadd.f32 0.0, %v8299
  %v8301 = vpop.f32.mrb[0].mxu0
  %8302 = vmatprep.mubr.f32.mxu0 0.0
  %8303 = vmatmul.mubr.f32.gmra.mrb[0].mxu0 %v8194
  %v8304 = vpop.f32.mrb[0].mxu0
  %v8305 = vadd.f32 0.0, %v8304
  %v8306 = vpop.f32.mrb[0].mxu0
  %8307 = vmatprep.mubr.f32.mxu0 0.0
  %8308 = vmatmul.mubr.f32.gmra.mrb[0].mxu0 %v8195
  %v8309 = vpop.f32.mrb[0].mxu0
  %v8310 = vadd.f32 0.0, %v8309
  %v8311 = vpop.f32.mrb[0].mxu0
  %8312 = vmatprep.mubr.f32.mxu0 0.0
  %8313 = vmatmul.mubr.f32.gmra.mrb[0].mxu0 %v8196
  %v8314 = vpop.f32.mrb[0].mxu0
  %v8315 = vadd.f32 0.0, %v8314
  %v8316 = vpop.f32.mrb[0].mxu0
  %8317 = vdwg.mxu0
  %v8318 = vld [vmem:[%s11] sm:$0xff]
  %v8319 = vld [vmem:[%s11 + $0x8] sm:$0xff]
  %v8320 = vld [vmem:[%s11 + $0x10] sm:$0xff]
  %v8321 = vld [vmem:[%s11 + $0x18] sm:$0xff]
  %s8322 = scalar_lea.vmem %s11, 32
  %v8323 = vld [vmem:[%s8322] sm:$0xff]
  %v8324 = vld [vmem:[%s8322 + $0x8] sm:$0xff]
  %v8325 = vld [vmem:[%s8322 + $0x10] sm:$0xff]
  %v8326 = vld [vmem:[%s8322 + $0x18] sm:$0xff]
  %8335 = vrot.lane.b32.xlu0 %v8280, 126
  %v8336 = vpop.permute.xlu0 %8335
  %8337 = vrot.lane.b32.xlu0 %v8285, 126
  %v8338 = vpop.permute.xlu0 %8337
  %8339 = vrot.lane.b32.xlu0 %v8290, 126
  %v8340 = vpop.permute.xlu0 %8339
  %8341 = vrot.lane.b32.xlu0 %v8295, 126
  %v8342 = vpop.permute.xlu0 %8341
  %8343 = vrot.lane.b32.xlu0 %v8300, 126
  %v8344 = vpop.permute.xlu0 %8343
  %8345 = vrot.lane.b32.xlu0 %v8305, 126
  %v8346 = vpop.permute.xlu0 %8345
  %8347 = vrot.lane.b32.xlu0 %v8310, 126
  %v8348 = vpop.permute.xlu0 %8347
  %8349 = vrot.lane.b32.xlu0 %v8315, 126
  %v8350 = vpop.permute.xlu0 %8349
  %v8360 = vsel %vm6636, %v8323, 0
  %v8363 = vsel %vm6636, %v8324, 0
  %v8366 = vsel %vm6636, %v8325, 0
  %v8369 = vsel %vm6636, %v8326, 0
  %8371 = vmatprep.subr.mxu0 0.0
  %8372 = vmatpush1.msra.mxu0 %v8336
  %8373 = vmatprep.subr.mxu0 0.0
  %8374 = vmatpush1.msra.mxu0 %v8338
  %8375 = vmatprep.subr.mxu0 0.0
  %8376 = vmatpush1.msra.mxu0 %v8340
  %8377 = vmatprep.subr.mxu0 0.0
  %8378 = vmatpush1.msra.mxu0 %v8342
  %8379 = vmatprep.subr.mxu0 0.0
  %8380 = vmatpush1.msra.mxu0 %v8344
  %8381 = vmatprep.subr.mxu0 0.0
  %8382 = vmatpush1.msra.mxu0 %v8346
  %8383 = vmatprep.subr.mxu0 0.0
  %8384 = vmatpush1.msra.mxu0 %v8348
  %8385 = vmatprep.subr.mxu0 0.0
  %8386 = vmatpush1.msra.mxu0 %v8350
  %8387 = vmatprep.subr.mxu0 0.0
  %8388 = vmatpush1.msra.mxu0 0.0
  %8389 = vmatprep.subr.mxu0 0.0
  %8390 = vmatpush1.msra.mxu0 0.0
  %8391 = vmatprep.subr.mxu0 0.0
  %8392 = vmatpush1.msra.mxu0 0.0
  %8393 = vmatprep.subr.mxu0 0.0
  %8394 = vmatpush1.msra.mxu0 0.0
  %8395 = vmatprep.subr.mxu0 0.0
  %8396 = vmatpush1.msra.mxu0 0.0
  %8397 = vmatprep.subr.mxu0 0.0
  %8398 = vmatpush1.msra.mxu0 0.0
  %8399 = vmatprep.subr.mxu0 0.0
  %8400 = vmatpush1.msra.mxu0 0.0
  %8401 = vmatprep.subr.mxu0 0.0
  %8402 = vmatpush1.msra.mxu0 0.0
  %8403 = vmatprep.subr.mxu0 0.0
  %8404 = vmatpush1.msra.mxu0 0.0
  %8405 = vmatprep.subr.mxu0 0.0
  %8406 = vmatpush1.msra.mxu0 0.0
  %8407 = vmatprep.subr.mxu0 0.0
  %8408 = vmatpush1.msra.mxu0 0.0
  %8409 = vmatprep.subr.mxu0 0.0
  %8410 = vmatpush1.msra.mxu0 0.0
  %8411 = vmatprep.subr.mxu0 0.0
  %8412 = vmatpush1.msra.mxu0 0.0
  %8413 = vmatprep.subr.mxu0 0.0
  %8414 = vmatpush1.msra.mxu0 0.0
  %8415 = vmatprep.subr.mxu0 0.0
  %8416 = vmatpush1.msra.mxu0 0.0
  %8417 = vmatprep.subr.mxu0 0.0
  %8418 = vmatpush1.msra.mxu0 0.0
  %8419 = vmatprep.subr.mxu0 0.0
  %8420 = vmatpush1.msra.mxu0 0.0
  %8421 = vmatprep.subr.mxu0 0.0
  %8422 = vmatpush1.msra.mxu0 0.0
  %8423 = vmatprep.subr.mxu0 0.0
  %8424 = vmatpush1.msra.mxu0 0.0
  %8425 = vmatprep.subr.mxu0 0.0
  %8426 = vmatpush1.msra.mxu0 0.0
  %8427 = vmatprep.subr.mxu0 0.0
  %8428 = vmatpush1.msra.mxu0 0.0
  %8429 = vmatprep.subr.mxu0 0.0
  %8430 = vmatpush1.msra.mxu0 0.0
  %8431 = vmatprep.subr.mxu0 0.0
  %8432 = vmatpush1.msra.mxu0 0.0
  %8433 = vmatprep.subr.mxu0 0.0
  %8434 = vmatpush1.msra.mxu0 0.0
  %8435 = vmatprep.mubr.f32.mxu0 0.0
  %8436 = vmatmul.mubr.f32.gmra.mrb[0].mxu0 %v8360
  %v8437 = vpop.f32.mrb[0].mxu0
  %v8438 = vadd.f32 0.0, %v8437
  %v8439 = vpop.f32.mrb[0].mxu0
  %8440 = vmatprep.mubr.f32.mxu0 0.0
  %8441 = vmatmul.mubr.f32.gmra.mrb[0].mxu0 %v8363
  %v8442 = vpop.f32.mrb[0].mxu0
  %v8443 = vadd.f32 0.0, %v8442
  %v8444 = vpop.f32.mrb[0].mxu0
  %8445 = vmatprep.mubr.f32.mxu0 0.0
  %8446 = vmatmul.mubr.f32.gmra.mrb[0].mxu0 %v8366
  %v8447 = vpop.f32.mrb[0].mxu0
  %v8448 = vadd.f32 0.0, %v8447
  %v8449 = vpop.f32.mrb[0].mxu0
  %8450 = vmatprep.mubr.f32.mxu0 0.0
  %8451 = vmatmul.mubr.f32.gmra.mrb[0].mxu0 %v8369
  %v8452 = vpop.f32.mrb[0].mxu0
  %v8453 = vadd.f32 0.0, %v8452
  %v8454 = vpop.f32.mrb[0].mxu0
  %8455 = vdwg.mxu0
  %v8457 = vsel %vm6636, %v8318, 0
  %v8460 = vsel %vm6636, %v8319, 0
  %v8463 = vsel %vm6636, %v8320, 0
  %v8466 = vsel %vm6636, %v8321, 0
  %8468 = vmatprep.subr.mxu0 0.0
  %8469 = vmatpush1.msra.mxu0 %v8280
  %8470 = vmatprep.subr.mxu0 0.0
  %8471 = vmatpush1.msra.mxu0 %v8285
  %8472 = vmatprep.subr.mxu0 0.0
  %8473 = vmatpush1.msra.mxu0 %v8290
  %8474 = vmatprep.subr.mxu0 0.0
  %8475 = vmatpush1.msra.mxu0 %v8295
  %8476 = vmatprep.subr.mxu0 0.0
  %8477 = vmatpush1.msra.mxu0 %v8300
  %8478 = vmatprep.subr.mxu0 0.0
  %8479 = vmatpush1.msra.mxu0 %v8305
  %8480 = vmatprep.subr.mxu0 0.0
  %8481 = vmatpush1.msra.mxu0 %v8310
  %8482 = vmatprep.subr.mxu0 0.0
  %8483 = vmatpush1.msra.mxu0 %v8315
  %8484 = vmatprep.subr.mxu0 0.0
  %8485 = vmatpush1.msra.mxu0 0.0
  %8486 = vmatprep.subr.mxu0 0.0
  %8487 = vmatpush1.msra.mxu0 0.0
  %8488 = vmatprep.subr.mxu0 0.0
  %8489 = vmatpush1.msra.mxu0 0.0
  %8490 = vmatprep.subr.mxu0 0.0
  %8491 = vmatpush1.msra.mxu0 0.0
  %8492 = vmatprep.subr.mxu0 0.0
  %8493 = vmatpush1.msra.mxu0 0.0
  %8494 = vmatprep.subr.mxu0 0.0
  %8495 = vmatpush1.msra.mxu0 0.0
  %8496 = vmatprep.subr.mxu0 0.0
  %8497 = vmatpush1.msra.mxu0 0.0
  %8498 = vmatprep.subr.mxu0 0.0
  %8499 = vmatpush1.msra.mxu0 0.0
  %8500 = vmatprep.subr.mxu0 0.0
  %8501 = vmatpush1.msra.mxu0 0.0
  %8502 = vmatprep.subr.mxu0 0.0
  %8503 = vmatpush1.msra.mxu0 0.0
  %8504 = vmatprep.subr.mxu0 0.0
  %8505 = vmatpush1.msra.mxu0 0.0
  %8506 = vmatprep.subr.mxu0 0.0
  %8507 = vmatpush1.msra.mxu0 0.0
  %8508 = vmatprep.subr.mxu0 0.0
  %8509 = vmatpush1.msra.mxu0 0.0
  %8510 = vmatprep.subr.mxu0 0.0
  %8511 = vmatpush1.msra.mxu0 0.0
  %8512 = vmatprep.subr.mxu0 0.0
  %8513 = vmatpush1.msra.mxu0 0.0
  %8514 = vmatprep.subr.mxu0 0.0
  %8515 = vmatpush1.msra.mxu0 0.0
  %8516 = vmatprep.subr.mxu0 0.0
  %8517 = vmatpush1.msra.mxu0 0.0
  %8518 = vmatprep.subr.mxu0 0.0
  %8519 = vmatpush1.msra.mxu0 0.0
  %8520 = vmatprep.subr.mxu0 0.0
  %8521 = vmatpush1.msra.mxu0 0.0
  %8522 = vmatprep.subr.mxu0 0.0
  %8523 = vmatpush1.msra.mxu0 0.0
  %8524 = vmatprep.subr.mxu0 0.0
  %8525 = vmatpush1.msra.mxu0 0.0
  %8526 = vmatprep.subr.mxu0 0.0
  %8527 = vmatpush1.msra.mxu0 0.0
  %8528 = vmatprep.subr.mxu0 0.0
  %8529 = vmatpush1.msra.mxu0 0.0
  %8530 = vmatprep.subr.mxu0 0.0
  %8531 = vmatpush1.msra.mxu0 0.0
  %8532 = vmatprep.mubr.f32.mxu0 0.0
  %8533 = vmatmul.mubr.f32.gmra.mrb[0].mxu0 %v8457
  %v8534 = vpop.f32.mrb[0].mxu0
  %v8535 = vadd.f32 %v8438, %v8534
  %v8536 = vpop.f32.mrb[0].mxu0
  %8537 = vmatprep.mubr.f32.mxu0 0.0
  %8538 = vmatmul.mubr.f32.gmra.mrb[0].mxu0 %v8460
  %v8539 = vpop.f32.mrb[0].mxu0
  %v8540 = vadd.f32 %v8443, %v8539
  %v8541 = vpop.f32.mrb[0].mxu0
  %8542 = vmatprep.mubr.f32.mxu0 0.0
  %8543 = vmatmul.mubr.f32.gmra.mrb[0].mxu0 %v8463
  %v8544 = vpop.f32.mrb[0].mxu0
  %v8545 = vadd.f32 %v8448, %v8544
  %v8546 = vpop.f32.mrb[0].mxu0
  %8547 = vmatprep.mubr.f32.mxu0 0.0
  %8548 = vmatmul.mubr.f32.gmra.mrb[0].mxu0 %v8466
  %v8549 = vpop.f32.mrb[0].mxu0
  %v8550 = vadd.f32 %v8453, %v8549
  %v8551 = vpop.f32.mrb[0].mxu0
  %8552 = vdwg.mxu0
  %s8553 = scalar_lea.vmem %s11, 64
  %v8554 = vld [vmem:[%s8553] sm:$0xff]
  %v8555 = vld [vmem:[%s8553 + $0x8] sm:$0xff]
  %v8556 = vld [vmem:[%s8553 + $0x10] sm:$0xff]
  %v8557 = vld [vmem:[%s8553 + $0x18] sm:$0xff]
  %8558 = vrot.lane.b32.xlu0 %v8280, 124
  %v8559 = vpop.permute.xlu0 %8558
  %8560 = vrot.lane.b32.xlu0 %v8285, 124
  %v8561 = vpop.permute.xlu0 %8560
  %8562 = vrot.lane.b32.xlu0 %v8290, 124
  %v8563 = vpop.permute.xlu0 %8562
  %8564 = vrot.lane.b32.xlu0 %v8295, 124
  %v8565 = vpop.permute.xlu0 %8564
  %8566 = vrot.lane.b32.xlu0 %v8300, 124
  %v8567 = vpop.permute.xlu0 %8566
  %8568 = vrot.lane.b32.xlu0 %v8305, 124
  %v8569 = vpop.permute.xlu0 %8568
  %8570 = vrot.lane.b32.xlu0 %v8310, 124
  %v8571 = vpop.permute.xlu0 %8570
  %8572 = vrot.lane.b32.xlu0 %v8315, 124
  %v8573 = vpop.permute.xlu0 %8572
  %v8583 = vsel %vm6636, %v8554, 0
  %v8586 = vsel %vm6636, %v8555, 0
  %v8589 = vsel %vm6636, %v8556, 0
  %v8592 = vsel %vm6636, %v8557, 0
  %8594 = vmatprep.subr.mxu0 0.0
  %8595 = vmatpush1.msra.mxu0 %v8559
  %8596 = vmatprep.subr.mxu0 0.0
  %8597 = vmatpush1.msra.mxu0 %v8561
  %8598 = vmatprep.subr.mxu0 0.0
  %8599 = vmatpush1.msra.mxu0 %v8563
  %8600 = vmatprep.subr.mxu0 0.0
  %8601 = vmatpush1.msra.mxu0 %v8565
  %8602 = vmatprep.subr.mxu0 0.0
  %8603 = vmatpush1.msra.mxu0 %v8567
  %8604 = vmatprep.subr.mxu0 0.0
  %8605 = vmatpush1.msra.mxu0 %v8569
  %8606 = vmatprep.subr.mxu0 0.0
  %8607 = vmatpush1.msra.mxu0 %v8571
  %8608 = vmatprep.subr.mxu0 0.0
  %8609 = vmatpush1.msra.mxu0 %v8573
  %8610 = vmatprep.subr.mxu0 0.0
  %8611 = vmatpush1.msra.mxu0 0.0
  %8612 = vmatprep.subr.mxu0 0.0
  %8613 = vmatpush1.msra.mxu0 0.0
  %8614 = vmatprep.subr.mxu0 0.0
  %8615 = vmatpush1.msra.mxu0 0.0
  %8616 = vmatprep.subr.mxu0 0.0
  %8617 = vmatpush1.msra.mxu0 0.0
  %8618 = vmatprep.subr.mxu0 0.0
  %8619 = vmatpush1.msra.mxu0 0.0
  %8620 = vmatprep.subr.mxu0 0.0
  %8621 = vmatpush1.msra.mxu0 0.0
  %8622 = vmatprep.subr.mxu0 0.0
  %8623 = vmatpush1.msra.mxu0 0.0
  %8624 = vmatprep.subr.mxu0 0.0
  %8625 = vmatpush1.msra.mxu0 0.0
  %8626 = vmatprep.subr.mxu0 0.0
  %8627 = vmatpush1.msra.mxu0 0.0
  %8628 = vmatprep.subr.mxu0 0.0
  %8629 = vmatpush1.msra.mxu0 0.0
  %8630 = vmatprep.subr.mxu0 0.0
  %8631 = vmatpush1.msra.mxu0 0.0
  %8632 = vmatprep.subr.mxu0 0.0
  %8633 = vmatpush1.msra.mxu0 0.0
  %8634 = vmatprep.subr.mxu0 0.0
  %8635 = vmatpush1.msra.mxu0 0.0
  %8636 = vmatprep.subr.mxu0 0.0
  %8637 = vmatpush1.msra.mxu0 0.0
  %8638 = vmatprep.subr.mxu0 0.0
  %8639 = vmatpush1.msra.mxu0 0.0
  %8640 = vmatprep.subr.mxu0 0.0
  %8641 = vmatpush1.msra.mxu0 0.0
  %8642 = vmatprep.subr.mxu0 0.0
  %8643 = vmatpush1.msra.mxu0 0.0
  %8644 = vmatprep.subr.mxu0 0.0
  %8645 = vmatpush1.msra.mxu0 0.0
  %8646 = vmatprep.subr.mxu0 0.0
  %8647 = vmatpush1.msra.mxu0 0.0
  %8648 = vmatprep.subr.mxu0 0.0
  %8649 = vmatpush1.msra.mxu0 0.0
  %8650 = vmatprep.subr.mxu0 0.0
  %8651 = vmatpush1.msra.mxu0 0.0
  %8652 = vmatprep.subr.mxu0 0.0
  %8653 = vmatpush1.msra.mxu0 0.0
  %8654 = vmatprep.subr.mxu0 0.0
  %8655 = vmatpush1.msra.mxu0 0.0
  %8656 = vmatprep.subr.mxu0 0.0
  %8657 = vmatpush1.msra.mxu0 0.0
  %8658 = vmatprep.mubr.f32.mxu0 0.0
  %8659 = vmatmul.mubr.f32.gmra.mrb[0].mxu0 %v8583
  %v8660 = vpop.f32.mrb[0].mxu0
  %v8661 = vadd.f32 0.0, %v8660
  %v8662 = vpop.f32.mrb[0].mxu0
  %8663 = vmatprep.mubr.f32.mxu0 0.0
  %8664 = vmatmul.mubr.f32.gmra.mrb[0].mxu0 %v8586
  %v8665 = vpop.f32.mrb[0].mxu0
  %v8666 = vadd.f32 0.0, %v8665
  %v8667 = vpop.f32.mrb[0].mxu0
  %8668 = vmatprep.mubr.f32.mxu0 0.0
  %8669 = vmatmul.mubr.f32.gmra.mrb[0].mxu0 %v8589
  %v8670 = vpop.f32.mrb[0].mxu0
  %v8671 = vadd.f32 0.0, %v8670
  %v8672 = vpop.f32.mrb[0].mxu0
  %8673 = vmatprep.mubr.f32.mxu0 0.0
  %8674 = vmatmul.mubr.f32.gmra.mrb[0].mxu0 %v8592
  %v8675 = vpop.f32.mrb[0].mxu0
  %v8676 = vadd.f32 0.0, %v8675
  %v8677 = vpop.f32.mrb[0].mxu0
  %8678 = vdwg.mxu0
  %v8679 = vadd.f32 %v8535, %v8661
  %v8680 = vadd.f32 %v8540, %v8666
  %v8681 = vadd.f32 %v8545, %v8671
  %v8682 = vadd.f32 %v8550, %v8676
  %s8683 = scalar_lea.vmem %s11, 96
  %v8684 = vld [vmem:[%s8683] sm:$0xff]
  %v8685 = vld [vmem:[%s8683 + $0x8] sm:$0xff]
  %v8686 = vld [vmem:[%s8683 + $0x10] sm:$0xff]
  %v8687 = vld [vmem:[%s8683 + $0x18] sm:$0xff]
  %8688 = vrot.lane.b32.xlu0 %v8280, 122
  %v8689 = vpop.permute.xlu0 %8688
  %8690 = vrot.lane.b32.xlu0 %v8285, 122
  %v8691 = vpop.permute.xlu0 %8690
  %8692 = vrot.lane.b32.xlu0 %v8290, 122
  %v8693 = vpop.permute.xlu0 %8692
  %8694 = vrot.lane.b32.xlu0 %v8295, 122
  %v8695 = vpop.permute.xlu0 %8694
  %8696 = vrot.lane.b32.xlu0 %v8300, 122
  %v8697 = vpop.permute.xlu0 %8696
  %8698 = vrot.lane.b32.xlu0 %v8305, 122
  %v8699 = vpop.permute.xlu0 %8698
  %8700 = vrot.lane.b32.xlu0 %v8310, 122
  %v8701 = vpop.permute.xlu0 %8700
  %8702 = vrot.lane.b32.xlu0 %v8315, 122
  %v8703 = vpop.permute.xlu0 %8702
  %v8713 = vsel %vm6636, %v8684, 0
  %v8716 = vsel %vm6636, %v8685, 0
  %v8719 = vsel %vm6636, %v8686, 0
  %v8722 = vsel %vm6636, %v8687, 0
  %8724 = vmatprep.subr.mxu0 0.0
  %8725 = vmatpush1.msra.mxu0 %v8689
  %8726 = vmatprep.subr.mxu0 0.0
  %8727 = vmatpush1.msra.mxu0 %v8691
  %8728 = vmatprep.subr.mxu0 0.0
  %8729 = vmatpush1.msra.mxu0 %v8693
  %8730 = vmatprep.subr.mxu0 0.0
  %8731 = vmatpush1.msra.mxu0 %v8695
  %8732 = vmatprep.subr.mxu0 0.0
  %8733 = vmatpush1.msra.mxu0 %v8697
  %8734 = vmatprep.subr.mxu0 0.0
  %8735 = vmatpush1.msra.mxu0 %v8699
  %8736 = vmatprep.subr.mxu0 0.0
  %8737 = vmatpush1.msra.mxu0 %v8701
  %8738 = vmatprep.subr.mxu0 0.0
  %8739 = vmatpush1.msra.mxu0 %v8703
  %8740 = vmatprep.subr.mxu0 0.0
  %8741 = vmatpush1.msra.mxu0 0.0
  %8742 = vmatprep.subr.mxu0 0.0
  %8743 = vmatpush1.msra.mxu0 0.0
  %8744 = vmatprep.subr.mxu0 0.0
  %8745 = vmatpush1.msra.mxu0 0.0
  %8746 = vmatprep.subr.mxu0 0.0
  %8747 = vmatpush1.msra.mxu0 0.0
  %8748 = vmatprep.subr.mxu0 0.0
  %8749 = vmatpush1.msra.mxu0 0.0
  %8750 = vmatprep.subr.mxu0 0.0
  %8751 = vmatpush1.msra.mxu0 0.0
  %8752 = vmatprep.subr.mxu0 0.0
  %8753 = vmatpush1.msra.mxu0 0.0
  %8754 = vmatprep.subr.mxu0 0.0
  %8755 = vmatpush1.msra.mxu0 0.0
  %8756 = vmatprep.subr.mxu0 0.0
  %8757 = vmatpush1.msra.mxu0 0.0
  %8758 = vmatprep.subr.mxu0 0.0
  %8759 = vmatpush1.msra.mxu0 0.0
  %8760 = vmatprep.subr.mxu0 0.0
  %8761 = vmatpush1.msra.mxu0 0.0
  %8762 = vmatprep.subr.mxu0 0.0
  %8763 = vmatpush1.msra.mxu0 0.0
  %8764 = vmatprep.subr.mxu0 0.0
  %8765 = vmatpush1.msra.mxu0 0.0
  %8766 = vmatprep.subr.mxu0 0.0
  %8767 = vmatpush1.msra.mxu0 0.0
  %8768 = vmatprep.subr.mxu0 0.0
  %8769 = vmatpush1.msra.mxu0 0.0
  %8770 = vmatprep.subr.mxu0 0.0
  %8771 = vmatpush1.msra.mxu0 0.0
  %8772 = vmatprep.subr.mxu0 0.0
  %8773 = vmatpush1.msra.mxu0 0.0
  %8774 = vmatprep.subr.mxu0 0.0
  %8775 = vmatpush1.msra.mxu0 0.0
  %8776 = vmatprep.subr.mxu0 0.0
  %8777 = vmatpush1.msra.mxu0 0.0
  %8778 = vmatprep.subr.mxu0 0.0
  %8779 = vmatpush1.msra.mxu0 0.0
  %8780 = vmatprep.subr.mxu0 0.0
  %8781 = vmatpush1.msra.mxu0 0.0
  %8782 = vmatprep.subr.mxu0 0.0
  %8783 = vmatpush1.msra.mxu0 0.0
  %8784 = vmatprep.subr.mxu0 0.0
  %8785 = vmatpush1.msra.mxu0 0.0
  %8786 = vmatprep.subr.mxu0 0.0
  %8787 = vmatpush1.msra.mxu0 0.0
  %8788 = vmatprep.mubr.f32.mxu0 0.0
  %8789 = vmatmul.mubr.f32.gmra.mrb[0].mxu0 %v8713
  %v8790 = vpop.f32.mrb[0].mxu0
  %v8791 = vadd.f32 0.0, %v8790
  %v8792 = vpop.f32.mrb[0].mxu0
  %8793 = vmatprep.mubr.f32.mxu0 0.0
  %8794 = vmatmul.mubr.f32.gmra.mrb[0].mxu0 %v8716
  %v8795 = vpop.f32.mrb[0].mxu0
  %v8796 = vadd.f32 0.0, %v8795
  %v8797 = vpop.f32.mrb[0].mxu0
  %8798 = vmatprep.mubr.f32.mxu0 0.0
  %8799 = vmatmul.mubr.f32.gmra.mrb[0].mxu0 %v8719
  %v8800 = vpop.f32.mrb[0].mxu0
  %v8801 = vadd.f32 0.0, %v8800
  %v8802 = vpop.f32.mrb[0].mxu0
  %8803 = vmatprep.mubr.f32.mxu0 0.0
  %8804 = vmatmul.mubr.f32.gmra.mrb[0].mxu0 %v8722
  %v8805 = vpop.f32.mrb[0].mxu0
  %v8806 = vadd.f32 0.0, %v8805
  %v8807 = vpop.f32.mrb[0].mxu0
  %8808 = vdwg.mxu0
  %v8809 = vadd.f32 %v8679, %v8791
  %v8810 = vadd.f32 %v8680, %v8796
  %v8811 = vadd.f32 %v8681, %v8801
  %v8812 = vadd.f32 %v8682, %v8806
  %s8813 = scalar_lea.vmem %s11, 128
  %v8814 = vld [vmem:[%s8813] sm:$0xff]
  %v8815 = vld [vmem:[%s8813 + $0x8] sm:$0xff]
  %v8816 = vld [vmem:[%s8813 + $0x10] sm:$0xff]
  %v8817 = vld [vmem:[%s8813 + $0x18] sm:$0xff]
  %8818 = vrot.lane.b32.xlu0 %v8280, 120
  %v8819 = vpop.permute.xlu0 %8818
  %8820 = vrot.lane.b32.xlu0 %v8285, 120
  %v8821 = vpop.permute.xlu0 %8820
  %8822 = vrot.lane.b32.xlu0 %v8290, 120
  %v8823 = vpop.permute.xlu0 %8822
  %8824 = vrot.lane.b32.xlu0 %v8295, 120
  %v8825 = vpop.permute.xlu0 %8824
  %8826 = vrot.lane.b32.xlu0 %v8300, 120
  %v8827 = vpop.permute.xlu0 %8826
  %8828 = vrot.lane.b32.xlu0 %v8305, 120
  %v8829 = vpop.permute.xlu0 %8828
  %8830 = vrot.lane.b32.xlu0 %v8310, 120
  %v8831 = vpop.permute.xlu0 %8830
  %8832 = vrot.lane.b32.xlu0 %v8315, 120
  %v8833 = vpop.permute.xlu0 %8832
  %v8843 = vsel %vm6636, %v8814, 0
  %v8846 = vsel %vm6636, %v8815, 0
  %v8849 = vsel %vm6636, %v8816, 0
  %v8852 = vsel %vm6636, %v8817, 0
  %8854 = vmatprep.subr.mxu0 0.0
  %8855 = vmatpush1.msra.mxu0 %v8819
  %8856 = vmatprep.subr.mxu0 0.0
  %8857 = vmatpush1.msra.mxu0 %v8821
  %8858 = vmatprep.subr.mxu0 0.0
  %8859 = vmatpush1.msra.mxu0 %v8823
  %8860 = vmatprep.subr.mxu0 0.0
  %8861 = vmatpush1.msra.mxu0 %v8825
  %8862 = vmatprep.subr.mxu0 0.0
  %8863 = vmatpush1.msra.mxu0 %v8827
  %8864 = vmatprep.subr.mxu0 0.0
  %8865 = vmatpush1.msra.mxu0 %v8829
  %8866 = vmatprep.subr.mxu0 0.0
  %8867 = vmatpush1.msra.mxu0 %v8831
  %8868 = vmatprep.subr.mxu0 0.0
  %8869 = vmatpush1.msra.mxu0 %v8833
  %8870 = vmatprep.subr.mxu0 0.0
  %8871 = vmatpush1.msra.mxu0 0.0
  %8872 = vmatprep.subr.mxu0 0.0
  %8873 = vmatpush1.msra.mxu0 0.0
  %8874 = vmatprep.subr.mxu0 0.0
  %8875 = vmatpush1.msra.mxu0 0.0
  %8876 = vmatprep.subr.mxu0 0.0
  %8877 = vmatpush1.msra.mxu0 0.0
  %8878 = vmatprep.subr.mxu0 0.0
  %8879 = vmatpush1.msra.mxu0 0.0
  %8880 = vmatprep.subr.mxu0 0.0
  %8881 = vmatpush1.msra.mxu0 0.0
  %8882 = vmatprep.subr.mxu0 0.0
  %8883 = vmatpush1.msra.mxu0 0.0
  %8884 = vmatprep.subr.mxu0 0.0
  %8885 = vmatpush1.msra.mxu0 0.0
  %8886 = vmatprep.subr.mxu0 0.0
  %8887 = vmatpush1.msra.mxu0 0.0
  %8888 = vmatprep.subr.mxu0 0.0
  %8889 = vmatpush1.msra.mxu0 0.0
  %8890 = vmatprep.subr.mxu0 0.0
  %8891 = vmatpush1.msra.mxu0 0.0
  %8892 = vmatprep.subr.mxu0 0.0
  %8893 = vmatpush1.msra.mxu0 0.0
  %8894 = vmatprep.subr.mxu0 0.0
  %8895 = vmatpush1.msra.mxu0 0.0
  %8896 = vmatprep.subr.mxu0 0.0
  %8897 = vmatpush1.msra.mxu0 0.0
  %8898 = vmatprep.subr.mxu0 0.0
  %8899 = vmatpush1.msra.mxu0 0.0
  %8900 = vmatprep.subr.mxu0 0.0
  %8901 = vmatpush1.msra.mxu0 0.0
  %8902 = vmatprep.subr.mxu0 0.0
  %8903 = vmatpush1.msra.mxu0 0.0
  %8904 = vmatprep.subr.mxu0 0.0
  %8905 = vmatpush1.msra.mxu0 0.0
  %8906 = vmatprep.subr.mxu0 0.0
  %8907 = vmatpush1.msra.mxu0 0.0
  %8908 = vmatprep.subr.mxu0 0.0
  %8909 = vmatpush1.msra.mxu0 0.0
  %8910 = vmatprep.subr.mxu0 0.0
  %8911 = vmatpush1.msra.mxu0 0.0
  %8912 = vmatprep.subr.mxu0 0.0
  %8913 = vmatpush1.msra.mxu0 0.0
  %8914 = vmatprep.subr.mxu0 0.0
  %8915 = vmatpush1.msra.mxu0 0.0
  %8916 = vmatprep.subr.mxu0 0.0
  %8917 = vmatpush1.msra.mxu0 0.0
  %8918 = vmatprep.mubr.f32.mxu0 0.0
  %8919 = vmatmul.mubr.f32.gmra.mrb[0].mxu0 %v8843
  %v8920 = vpop.f32.mrb[0].mxu0
  %v8921 = vadd.f32 0.0, %v8920
  %v8922 = vpop.f32.mrb[0].mxu0
  %8923 = vmatprep.mubr.f32.mxu0 0.0
  %8924 = vmatmul.mubr.f32.gmra.mrb[0].mxu0 %v8846
  %v8925 = vpop.f32.mrb[0].mxu0
  %v8926 = vadd.f32 0.0, %v8925
  %v8927 = vpop.f32.mrb[0].mxu0
  %8928 = vmatprep.mubr.f32.mxu0 0.0
  %8929 = vmatmul.mubr.f32.gmra.mrb[0].mxu0 %v8849
  %v8930 = vpop.f32.mrb[0].mxu0
  %v8931 = vadd.f32 0.0, %v8930
  %v8932 = vpop.f32.mrb[0].mxu0
  %8933 = vmatprep.mubr.f32.mxu0 0.0
  %8934 = vmatmul.mubr.f32.gmra.mrb[0].mxu0 %v8852
  %v8935 = vpop.f32.mrb[0].mxu0
  %v8936 = vadd.f32 0.0, %v8935
  %v8937 = vpop.f32.mrb[0].mxu0
  %8938 = vdwg.mxu0
  %v8939 = vadd.f32 %v8809, %v8921
  %v8940 = vadd.f32 %v8810, %v8926
  %v8941 = vadd.f32 %v8811, %v8931
  %v8942 = vadd.f32 %v8812, %v8936
  %s8943 = scalar_lea.vmem %s11, 160
  %v8944 = vld [vmem:[%s8943] sm:$0xff]
  %v8945 = vld [vmem:[%s8943 + $0x8] sm:$0xff]
  %v8946 = vld [vmem:[%s8943 + $0x10] sm:$0xff]
  %v8947 = vld [vmem:[%s8943 + $0x18] sm:$0xff]
  %8948 = vrot.lane.b32.xlu0 %v8280, 118
  %v8949 = vpop.permute.xlu0 %8948
  %8950 = vrot.lane.b32.xlu0 %v8285, 118
  %v8951 = vpop.permute.xlu0 %8950
  %8952 = vrot.lane.b32.xlu0 %v8290, 118
  %v8953 = vpop.permute.xlu0 %8952
  %8954 = vrot.lane.b32.xlu0 %v8295, 118
  %v8955 = vpop.permute.xlu0 %8954
  %8956 = vrot.lane.b32.xlu0 %v8300, 118
  %v8957 = vpop.permute.xlu0 %8956
  %8958 = vrot.lane.b32.xlu0 %v8305, 118
  %v8959 = vpop.permute.xlu0 %8958
  %8960 = vrot.lane.b32.xlu0 %v8310, 118
  %v8961 = vpop.permute.xlu0 %8960
  %8962 = vrot.lane.b32.xlu0 %v8315, 118
  %v8963 = vpop.permute.xlu0 %8962
  %v8973 = vsel %vm6636, %v8944, 0
  %v8976 = vsel %vm6636, %v8945, 0
  %v8979 = vsel %vm6636, %v8946, 0
  %v8982 = vsel %vm6636, %v8947, 0
  %8984 = vmatprep.subr.mxu0 0.0
  %8985 = vmatpush1.msra.mxu0 %v8949
  %8986 = vmatprep.subr.mxu0 0.0
  %8987 = vmatpush1.msra.mxu0 %v8951
  %8988 = vmatprep.subr.mxu0 0.0
  %8989 = vmatpush1.msra.mxu0 %v8953
  %8990 = vmatprep.subr.mxu0 0.0
  %8991 = vmatpush1.msra.mxu0 %v8955
  %8992 = vmatprep.subr.mxu0 0.0
  %8993 = vmatpush1.msra.mxu0 %v8957
  %8994 = vmatprep.subr.mxu0 0.0
  %8995 = vmatpush1.msra.mxu0 %v8959
  %8996 = vmatprep.subr.mxu0 0.0
  %8997 = vmatpush1.msra.mxu0 %v8961
  %8998 = vmatprep.subr.mxu0 0.0
  %8999 = vmatpush1.msra.mxu0 %v8963
  %9000 = vmatprep.subr.mxu0 0.0
  %9001 = vmatpush1.msra.mxu0 0.0
  %9002 = vmatprep.subr.mxu0 0.0
  %9003 = vmatpush1.msra.mxu0 0.0
  %9004 = vmatprep.subr.mxu0 0.0
  %9005 = vmatpush1.msra.mxu0 0.0
  %9006 = vmatprep.subr.mxu0 0.0
  %9007 = vmatpush1.msra.mxu0 0.0
  %9008 = vmatprep.subr.mxu0 0.0
  %9009 = vmatpush1.msra.mxu0 0.0
  %9010 = vmatprep.subr.mxu0 0.0
  %9011 = vmatpush1.msra.mxu0 0.0
  %9012 = vmatprep.subr.mxu0 0.0
  %9013 = vmatpush1.msra.mxu0 0.0
  %9014 = vmatprep.subr.mxu0 0.0
  %9015 = vmatpush1.msra.mxu0 0.0
  %9016 = vmatprep.subr.mxu0 0.0
  %9017 = vmatpush1.msra.mxu0 0.0
  %9018 = vmatprep.subr.mxu0 0.0
  %9019 = vmatpush1.msra.mxu0 0.0
  %9020 = vmatprep.subr.mxu0 0.0
  %9021 = vmatpush1.msra.mxu0 0.0
  %9022 = vmatprep.subr.mxu0 0.0
  %9023 = vmatpush1.msra.mxu0 0.0
  %9024 = vmatprep.subr.mxu0 0.0
  %9025 = vmatpush1.msra.mxu0 0.0
  %9026 = vmatprep.subr.mxu0 0.0
  %9027 = vmatpush1.msra.mxu0 0.0
  %9028 = vmatprep.subr.mxu0 0.0
  %9029 = vmatpush1.msra.mxu0 0.0
  %9030 = vmatprep.subr.mxu0 0.0
  %9031 = vmatpush1.msra.mxu0 0.0
  %9032 = vmatprep.subr.mxu0 0.0
  %9033 = vmatpush1.msra.mxu0 0.0
  %9034 = vmatprep.subr.mxu0 0.0
  %9035 = vmatpush1.msra.mxu0 0.0
  %9036 = vmatprep.subr.mxu0 0.0
  %9037 = vmatpush1.msra.mxu0 0.0
  %9038 = vmatprep.subr.mxu0 0.0
  %9039 = vmatpush1.msra.mxu0 0.0
  %9040 = vmatprep.subr.mxu0 0.0
  %9041 = vmatpush1.msra.mxu0 0.0
  %9042 = vmatprep.subr.mxu0 0.0
  %9043 = vmatpush1.msra.mxu0 0.0
  %9044 = vmatprep.subr.mxu0 0.0
  %9045 = vmatpush1.msra.mxu0 0.0
  %9046 = vmatprep.subr.mxu0 0.0
  %9047 = vmatpush1.msra.mxu0 0.0
  %9048 = vmatprep.mubr.f32.mxu0 0.0
  %9049 = vmatmul.mubr.f32.gmra.mrb[0].mxu0 %v8973
  %v9050 = vpop.f32.mrb[0].mxu0
  %v9051 = vadd.f32 0.0, %v9050
  %v9052 = vpop.f32.mrb[0].mxu0
  %9053 = vmatprep.mubr.f32.mxu0 0.0
  %9054 = vmatmul.mubr.f32.gmra.mrb[0].mxu0 %v8976
  %v9055 = vpop.f32.mrb[0].mxu0
  %v9056 = vadd.f32 0.0, %v9055
  %v9057 = vpop.f32.mrb[0].mxu0
  %9058 = vmatprep.mubr.f32.mxu0 0.0
  %9059 = vmatmul.mubr.f32.gmra.mrb[0].mxu0 %v8979
  %v9060 = vpop.f32.mrb[0].mxu0
  %v9061 = vadd.f32 0.0, %v9060
  %v9062 = vpop.f32.mrb[0].mxu0
  %9063 = vmatprep.mubr.f32.mxu0 0.0
  %9064 = vmatmul.mubr.f32.gmra.mrb[0].mxu0 %v8982
  %v9065 = vpop.f32.mrb[0].mxu0
  %v9066 = vadd.f32 0.0, %v9065
  %v9067 = vpop.f32.mrb[0].mxu0
  %9068 = vdwg.mxu0
  %v9069 = vadd.f32 %v8939, %v9051
  %v9070 = vadd.f32 %v8940, %v9056
  %v9071 = vadd.f32 %v8941, %v9061
  %v9072 = vadd.f32 %v8942, %v9066
  %s9073 = scalar_lea.vmem %s11, 192
  %v9074 = vld [vmem:[%s9073] sm:$0xff]
  %v9075 = vld [vmem:[%s9073 + $0x8] sm:$0xff]
  %v9076 = vld [vmem:[%s9073 + $0x10] sm:$0xff]
  %v9077 = vld [vmem:[%s9073 + $0x18] sm:$0xff]
  %9078 = vrot.lane.b32.xlu0 %v8280, 116
  %v9079 = vpop.permute.xlu0 %9078
  %9080 = vrot.lane.b32.xlu0 %v8285, 116
  %v9081 = vpop.permute.xlu0 %9080
  %9082 = vrot.lane.b32.xlu0 %v8290, 116
  %v9083 = vpop.permute.xlu0 %9082
  %9084 = vrot.lane.b32.xlu0 %v8295, 116
  %v9085 = vpop.permute.xlu0 %9084
  %9086 = vrot.lane.b32.xlu0 %v8300, 116
  %v9087 = vpop.permute.xlu0 %9086
  %9088 = vrot.lane.b32.xlu0 %v8305, 116
  %v9089 = vpop.permute.xlu0 %9088
  %9090 = vrot.lane.b32.xlu0 %v8310, 116
  %v9091 = vpop.permute.xlu0 %9090
  %9092 = vrot.lane.b32.xlu0 %v8315, 116
  %v9093 = vpop.permute.xlu0 %9092
  %v9103 = vsel %vm6636, %v9074, 0
  %v9106 = vsel %vm6636, %v9075, 0
  %v9109 = vsel %vm6636, %v9076, 0
  %v9112 = vsel %vm6636, %v9077, 0
  %9114 = vmatprep.subr.mxu0 0.0
  %9115 = vmatpush1.msra.mxu0 %v9079
  %9116 = vmatprep.subr.mxu0 0.0
  %9117 = vmatpush1.msra.mxu0 %v9081
  %9118 = vmatprep.subr.mxu0 0.0
  %9119 = vmatpush1.msra.mxu0 %v9083
  %9120 = vmatprep.subr.mxu0 0.0
  %9121 = vmatpush1.msra.mxu0 %v9085
  %9122 = vmatprep.subr.mxu0 0.0
  %9123 = vmatpush1.msra.mxu0 %v9087
  %9124 = vmatprep.subr.mxu0 0.0
  %9125 = vmatpush1.msra.mxu0 %v9089
  %9126 = vmatprep.subr.mxu0 0.0
  %9127 = vmatpush1.msra.mxu0 %v9091
  %9128 = vmatprep.subr.mxu0 0.0
  %9129 = vmatpush1.msra.mxu0 %v9093
  %9130 = vmatprep.subr.mxu0 0.0
  %9131 = vmatpush1.msra.mxu0 0.0
  %9132 = vmatprep.subr.mxu0 0.0
  %9133 = vmatpush1.msra.mxu0 0.0
  %9134 = vmatprep.subr.mxu0 0.0
  %9135 = vmatpush1.msra.mxu0 0.0
  %9136 = vmatprep.subr.mxu0 0.0
  %9137 = vmatpush1.msra.mxu0 0.0
  %9138 = vmatprep.subr.mxu0 0.0
  %9139 = vmatpush1.msra.mxu0 0.0
  %9140 = vmatprep.subr.mxu0 0.0
  %9141 = vmatpush1.msra.mxu0 0.0
  %9142 = vmatprep.subr.mxu0 0.0
  %9143 = vmatpush1.msra.mxu0 0.0
  %9144 = vmatprep.subr.mxu0 0.0
  %9145 = vmatpush1.msra.mxu0 0.0
  %9146 = vmatprep.subr.mxu0 0.0
  %9147 = vmatpush1.msra.mxu0 0.0
  %9148 = vmatprep.subr.mxu0 0.0
  %9149 = vmatpush1.msra.mxu0 0.0
  %9150 = vmatprep.subr.mxu0 0.0
  %9151 = vmatpush1.msra.mxu0 0.0
  %9152 = vmatprep.subr.mxu0 0.0
  %9153 = vmatpush1.msra.mxu0 0.0
  %9154 = vmatprep.subr.mxu0 0.0
  %9155 = vmatpush1.msra.mxu0 0.0
  %9156 = vmatprep.subr.mxu0 0.0
  %9157 = vmatpush1.msra.mxu0 0.0
  %9158 = vmatprep.subr.mxu0 0.0
  %9159 = vmatpush1.msra.mxu0 0.0
  %9160 = vmatprep.subr.mxu0 0.0
  %9161 = vmatpush1.msra.mxu0 0.0
  %9162 = vmatprep.subr.mxu0 0.0
  %9163 = vmatpush1.msra.mxu0 0.0
  %9164 = vmatprep.subr.mxu0 0.0
  %9165 = vmatpush1.msra.mxu0 0.0
  %9166 = vmatprep.subr.mxu0 0.0
  %9167 = vmatpush1.msra.mxu0 0.0
  %9168 = vmatprep.subr.mxu0 0.0
  %9169 = vmatpush1.msra.mxu0 0.0
  %9170 = vmatprep.subr.mxu0 0.0
  %9171 = vmatpush1.msra.mxu0 0.0
  %9172 = vmatprep.subr.mxu0 0.0
  %9173 = vmatpush1.msra.mxu0 0.0
  %9174 = vmatprep.subr.mxu0 0.0
  %9175 = vmatpush1.msra.mxu0 0.0
  %9176 = vmatprep.subr.mxu0 0.0
  %9177 = vmatpush1.msra.mxu0 0.0
  %9178 = vmatprep.mubr.f32.mxu0 0.0
  %9179 = vmatmul.mubr.f32.gmra.mrb[0].mxu0 %v9103
  %v9180 = vpop.f32.mrb[0].mxu0
  %v9181 = vadd.f32 0.0, %v9180
  %v9182 = vpop.f32.mrb[0].mxu0
  %9183 = vmatprep.mubr.f32.mxu0 0.0
  %9184 = vmatmul.mubr.f32.gmra.mrb[0].mxu0 %v9106
  %v9185 = vpop.f32.mrb[0].mxu0
  %v9186 = vadd.f32 0.0, %v9185
  %v9187 = vpop.f32.mrb[0].mxu0
  %9188 = vmatprep.mubr.f32.mxu0 0.0
  %9189 = vmatmul.mubr.f32.gmra.mrb[0].mxu0 %v9109
  %v9190 = vpop.f32.mrb[0].mxu0
  %v9191 = vadd.f32 0.0, %v9190
  %v9192 = vpop.f32.mrb[0].mxu0
  %9193 = vmatprep.mubr.f32.mxu0 0.0
  %9194 = vmatmul.mubr.f32.gmra.mrb[0].mxu0 %v9112
  %v9195 = vpop.f32.mrb[0].mxu0
  %v9196 = vadd.f32 0.0, %v9195
  %v9197 = vpop.f32.mrb[0].mxu0
  %9198 = vdwg.mxu0
  %v9199 = vadd.f32 %v9069, %v9181
  %v9200 = vadd.f32 %v9070, %v9186
  %v9201 = vadd.f32 %v9071, %v9191
  %v9202 = vadd.f32 %v9072, %v9196
  %s9203 = scalar_lea.vmem %s11, 224
  %v9204 = vld [vmem:[%s9203] sm:$0xff]
  %v9205 = vld [vmem:[%s9203 + $0x8] sm:$0xff]
  %v9206 = vld [vmem:[%s9203 + $0x10] sm:$0xff]
  %v9207 = vld [vmem:[%s9203 + $0x18] sm:$0xff]
  %9208 = vrot.lane.b32.xlu0 %v8280, 114
  %v9209 = vpop.permute.xlu0 %9208
  %9210 = vrot.lane.b32.xlu0 %v8285, 114
  %v9211 = vpop.permute.xlu0 %9210
  %9212 = vrot.lane.b32.xlu0 %v8290, 114
  %v9213 = vpop.permute.xlu0 %9212
  %9214 = vrot.lane.b32.xlu0 %v8295, 114
  %v9215 = vpop.permute.xlu0 %9214
  %9216 = vrot.lane.b32.xlu0 %v8300, 114
  %v9217 = vpop.permute.xlu0 %9216
  %9218 = vrot.lane.b32.xlu0 %v8305, 114
  %v9219 = vpop.permute.xlu0 %9218
  %9220 = vrot.lane.b32.xlu0 %v8310, 114
  %v9221 = vpop.permute.xlu0 %9220
  %9222 = vrot.lane.b32.xlu0 %v8315, 114
  %v9223 = vpop.permute.xlu0 %9222
  %v9233 = vsel %vm6636, %v9204, 0
  %v9236 = vsel %vm6636, %v9205, 0
  %v9239 = vsel %vm6636, %v9206, 0
  %v9242 = vsel %vm6636, %v9207, 0
  %9244 = vmatprep.subr.mxu0 0.0
  %9245 = vmatpush1.msra.mxu0 %v9209
  %9246 = vmatprep.subr.mxu0 0.0
  %9247 = vmatpush1.msra.mxu0 %v9211
  %9248 = vmatprep.subr.mxu0 0.0
  %9249 = vmatpush1.msra.mxu0 %v9213
  %9250 = vmatprep.subr.mxu0 0.0
  %9251 = vmatpush1.msra.mxu0 %v9215
  %9252 = vmatprep.subr.mxu0 0.0
  %9253 = vmatpush1.msra.mxu0 %v9217
  %9254 = vmatprep.subr.mxu0 0.0
  %9255 = vmatpush1.msra.mxu0 %v9219
  %9256 = vmatprep.subr.mxu0 0.0
  %9257 = vmatpush1.msra.mxu0 %v9221
  %9258 = vmatprep.subr.mxu0 0.0
  %9259 = vmatpush1.msra.mxu0 %v9223
  %9260 = vmatprep.subr.mxu0 0.0
  %9261 = vmatpush1.msra.mxu0 0.0
  %9262 = vmatprep.subr.mxu0 0.0
  %9263 = vmatpush1.msra.mxu0 0.0
  %9264 = vmatprep.subr.mxu0 0.0
  %9265 = vmatpush1.msra.mxu0 0.0
  %9266 = vmatprep.subr.mxu0 0.0
  %9267 = vmatpush1.msra.mxu0 0.0
  %9268 = vmatprep.subr.mxu0 0.0
  %9269 = vmatpush1.msra.mxu0 0.0
  %9270 = vmatprep.subr.mxu0 0.0
  %9271 = vmatpush1.msra.mxu0 0.0
  %9272 = vmatprep.subr.mxu0 0.0
  %9273 = vmatpush1.msra.mxu0 0.0
  %9274 = vmatprep.subr.mxu0 0.0
  %9275 = vmatpush1.msra.mxu0 0.0
  %9276 = vmatprep.subr.mxu0 0.0
  %9277 = vmatpush1.msra.mxu0 0.0
  %9278 = vmatprep.subr.mxu0 0.0
  %9279 = vmatpush1.msra.mxu0 0.0
  %9280 = vmatprep.subr.mxu0 0.0
  %9281 = vmatpush1.msra.mxu0 0.0
  %9282 = vmatprep.subr.mxu0 0.0
  %9283 = vmatpush1.msra.mxu0 0.0
  %9284 = vmatprep.subr.mxu0 0.0
  %9285 = vmatpush1.msra.mxu0 0.0
  %9286 = vmatprep.subr.mxu0 0.0
  %9287 = vmatpush1.msra.mxu0 0.0
  %9288 = vmatprep.subr.mxu0 0.0
  %9289 = vmatpush1.msra.mxu0 0.0
  %9290 = vmatprep.subr.mxu0 0.0
  %9291 = vmatpush1.msra.mxu0 0.0
  %9292 = vmatprep.subr.mxu0 0.0
  %9293 = vmatpush1.msra.mxu0 0.0
  %9294 = vmatprep.subr.mxu0 0.0
  %9295 = vmatpush1.msra.mxu0 0.0
  %9296 = vmatprep.subr.mxu0 0.0
  %9297 = vmatpush1.msra.mxu0 0.0
  %9298 = vmatprep.subr.mxu0 0.0
  %9299 = vmatpush1.msra.mxu0 0.0
  %9300 = vmatprep.subr.mxu0 0.0
  %9301 = vmatpush1.msra.mxu0 0.0
  %9302 = vmatprep.subr.mxu0 0.0
  %9303 = vmatpush1.msra.mxu0 0.0
  %9304 = vmatprep.subr.mxu0 0.0
  %9305 = vmatpush1.msra.mxu0 0.0
  %9306 = vmatprep.subr.mxu0 0.0
  %9307 = vmatpush1.msra.mxu0 0.0
  %9308 = vmatprep.mubr.f32.mxu0 0.0
  %9309 = vmatmul.mubr.f32.gmra.mrb[0].mxu0 %v9233
  %v9310 = vpop.f32.mrb[0].mxu0
  %v9311 = vadd.f32 0.0, %v9310
  %v9312 = vpop.f32.mrb[0].mxu0
  %9313 = vmatprep.mubr.f32.mxu0 0.0
  %9314 = vmatmul.mubr.f32.gmra.mrb[0].mxu0 %v9236
  %v9315 = vpop.f32.mrb[0].mxu0
  %v9316 = vadd.f32 0.0, %v9315
  %v9317 = vpop.f32.mrb[0].mxu0
  %9318 = vmatprep.mubr.f32.mxu0 0.0
  %9319 = vmatmul.mubr.f32.gmra.mrb[0].mxu0 %v9239
  %v9320 = vpop.f32.mrb[0].mxu0
  %v9321 = vadd.f32 0.0, %v9320
  %v9322 = vpop.f32.mrb[0].mxu0
  %9323 = vmatprep.mubr.f32.mxu0 0.0
  %9324 = vmatmul.mubr.f32.gmra.mrb[0].mxu0 %v9242
  %v9325 = vpop.f32.mrb[0].mxu0
  %v9326 = vadd.f32 0.0, %v9325
  %v9327 = vpop.f32.mrb[0].mxu0
  %9328 = vdwg.mxu0
  %v9329 = vadd.f32 %v9199, %v9311
  %v9330 = vadd.f32 %v9200, %v9316
  %v9331 = vadd.f32 %v9201, %v9321
  %v9332 = vadd.f32 %v9202, %v9326
  %s9333 = scalar_lea.vmem %s11, 256
  %v9334 = vld [vmem:[%s9333] sm:$0xff]
  %v9335 = vld [vmem:[%s9333 + $0x8] sm:$0xff]
  %v9336 = vld [vmem:[%s9333 + $0x10] sm:$0xff]
  %v9337 = vld [vmem:[%s9333 + $0x18] sm:$0xff]
  %9338 = vrot.lane.b32.xlu0 %v8280, 112
  %v9339 = vpop.permute.xlu0 %9338
  %9340 = vrot.lane.b32.xlu0 %v8285, 112
  %v9341 = vpop.permute.xlu0 %9340
  %9342 = vrot.lane.b32.xlu0 %v8290, 112
  %v9343 = vpop.permute.xlu0 %9342
  %9344 = vrot.lane.b32.xlu0 %v8295, 112
  %v9345 = vpop.permute.xlu0 %9344
  %9346 = vrot.lane.b32.xlu0 %v8300, 112
  %v9347 = vpop.permute.xlu0 %9346
  %9348 = vrot.lane.b32.xlu0 %v8305, 112
  %v9349 = vpop.permute.xlu0 %9348
  %9350 = vrot.lane.b32.xlu0 %v8310, 112
  %v9351 = vpop.permute.xlu0 %9350
  %9352 = vrot.lane.b32.xlu0 %v8315, 112
  %v9353 = vpop.permute.xlu0 %9352
  %v9363 = vsel %vm6636, %v9334, 0
  %v9366 = vsel %vm6636, %v9335, 0
  %v9369 = vsel %vm6636, %v9336, 0
  %v9372 = vsel %vm6636, %v9337, 0
  %9374 = vmatprep.subr.mxu0 0.0
  %9375 = vmatpush1.msra.mxu0 %v9339
  %9376 = vmatprep.subr.mxu0 0.0
  %9377 = vmatpush1.msra.mxu0 %v9341
  %9378 = vmatprep.subr.mxu0 0.0
  %9379 = vmatpush1.msra.mxu0 %v9343
  %9380 = vmatprep.subr.mxu0 0.0
  %9381 = vmatpush1.msra.mxu0 %v9345
  %9382 = vmatprep.subr.mxu0 0.0
  %9383 = vmatpush1.msra.mxu0 %v9347
  %9384 = vmatprep.subr.mxu0 0.0
  %9385 = vmatpush1.msra.mxu0 %v9349
  %9386 = vmatprep.subr.mxu0 0.0
  %9387 = vmatpush1.msra.mxu0 %v9351
  %9388 = vmatprep.subr.mxu0 0.0
  %9389 = vmatpush1.msra.mxu0 %v9353
  %9390 = vmatprep.subr.mxu0 0.0
  %9391 = vmatpush1.msra.mxu0 0.0
  %9392 = vmatprep.subr.mxu0 0.0
  %9393 = vmatpush1.msra.mxu0 0.0
  %9394 = vmatprep.subr.mxu0 0.0
  %9395 = vmatpush1.msra.mxu0 0.0
  %9396 = vmatprep.subr.mxu0 0.0
  %9397 = vmatpush1.msra.mxu0 0.0
  %9398 = vmatprep.subr.mxu0 0.0
  %9399 = vmatpush1.msra.mxu0 0.0
  %9400 = vmatprep.subr.mxu0 0.0
  %9401 = vmatpush1.msra.mxu0 0.0
  %9402 = vmatprep.subr.mxu0 0.0
  %9403 = vmatpush1.msra.mxu0 0.0
  %9404 = vmatprep.subr.mxu0 0.0
  %9405 = vmatpush1.msra.mxu0 0.0
  %9406 = vmatprep.subr.mxu0 0.0
  %9407 = vmatpush1.msra.mxu0 0.0
  %9408 = vmatprep.subr.mxu0 0.0
  %9409 = vmatpush1.msra.mxu0 0.0
  %9410 = vmatprep.subr.mxu0 0.0
  %9411 = vmatpush1.msra.mxu0 0.0
  %9412 = vmatprep.subr.mxu0 0.0
  %9413 = vmatpush1.msra.mxu0 0.0
  %9414 = vmatprep.subr.mxu0 0.0
  %9415 = vmatpush1.msra.mxu0 0.0
  %9416 = vmatprep.subr.mxu0 0.0
  %9417 = vmatpush1.msra.mxu0 0.0
  %9418 = vmatprep.subr.mxu0 0.0
  %9419 = vmatpush1.msra.mxu0 0.0
  %9420 = vmatprep.subr.mxu0 0.0
  %9421 = vmatpush1.msra.mxu0 0.0
  %9422 = vmatprep.subr.mxu0 0.0
  %9423 = vmatpush1.msra.mxu0 0.0
  %9424 = vmatprep.subr.mxu0 0.0
  %9425 = vmatpush1.msra.mxu0 0.0
  %9426 = vmatprep.subr.mxu0 0.0
  %9427 = vmatpush1.msra.mxu0 0.0
  %9428 = vmatprep.subr.mxu0 0.0
  %9429 = vmatpush1.msra.mxu0 0.0
  %9430 = vmatprep.subr.mxu0 0.0
  %9431 = vmatpush1.msra.mxu0 0.0
  %9432 = vmatprep.subr.mxu0 0.0
  %9433 = vmatpush1.msra.mxu0 0.0
  %9434 = vmatprep.subr.mxu0 0.0
  %9435 = vmatpush1.msra.mxu0 0.0
  %9436 = vmatprep.subr.mxu0 0.0
  %9437 = vmatpush1.msra.mxu0 0.0
  %9438 = vmatprep.mubr.f32.mxu0 0.0
  %9439 = vmatmul.mubr.f32.gmra.mrb[0].mxu0 %v9363
  %v9440 = vpop.f32.mrb[0].mxu0
  %v9441 = vadd.f32 0.0, %v9440
  %v9442 = vpop.f32.mrb[0].mxu0
  %9443 = vmatprep.mubr.f32.mxu0 0.0
  %9444 = vmatmul.mubr.f32.gmra.mrb[0].mxu0 %v9366
  %v9445 = vpop.f32.mrb[0].mxu0
  %v9446 = vadd.f32 0.0, %v9445
  %v9447 = vpop.f32.mrb[0].mxu0
  %9448 = vmatprep.mubr.f32.mxu0 0.0
  %9449 = vmatmul.mubr.f32.gmra.mrb[0].mxu0 %v9369
  %v9450 = vpop.f32.mrb[0].mxu0
  %v9451 = vadd.f32 0.0, %v9450
  %v9452 = vpop.f32.mrb[0].mxu0
  %9453 = vmatprep.mubr.f32.mxu0 0.0
  %9454 = vmatmul.mubr.f32.gmra.mrb[0].mxu0 %v9372
  %v9455 = vpop.f32.mrb[0].mxu0
  %v9456 = vadd.f32 0.0, %v9455
  %v9457 = vpop.f32.mrb[0].mxu0
  %9458 = vdwg.mxu0
  %v9459 = vadd.f32 %v9329, %v9441
  %v9460 = vadd.f32 %v9330, %v9446
  %v9461 = vadd.f32 %v9331, %v9451
  %v9462 = vadd.f32 %v9332, %v9456
  %s9463 = scalar_lea.vmem %s11, 288
  %v9464 = vld [vmem:[%s9463] sm:$0xff]
  %v9465 = vld [vmem:[%s9463 + $0x8] sm:$0xff]
  %v9466 = vld [vmem:[%s9463 + $0x10] sm:$0xff]
  %v9467 = vld [vmem:[%s9463 + $0x18] sm:$0xff]
  %9468 = vrot.lane.b32.xlu0 %v8280, 110
  %v9469 = vpop.permute.xlu0 %9468
  %9470 = vrot.lane.b32.xlu0 %v8285, 110
  %v9471 = vpop.permute.xlu0 %9470
  %9472 = vrot.lane.b32.xlu0 %v8290, 110
  %v9473 = vpop.permute.xlu0 %9472
  %9474 = vrot.lane.b32.xlu0 %v8295, 110
  %v9475 = vpop.permute.xlu0 %9474
  %9476 = vrot.lane.b32.xlu0 %v8300, 110
  %v9477 = vpop.permute.xlu0 %9476
  %9478 = vrot.lane.b32.xlu0 %v8305, 110
  %v9479 = vpop.permute.xlu0 %9478
  %9480 = vrot.lane.b32.xlu0 %v8310, 110
  %v9481 = vpop.permute.xlu0 %9480
  %9482 = vrot.lane.b32.xlu0 %v8315, 110
  %v9483 = vpop.permute.xlu0 %9482
  %v9493 = vsel %vm6636, %v9464, 0
  %v9496 = vsel %vm6636, %v9465, 0
  %v9499 = vsel %vm6636, %v9466, 0
  %v9502 = vsel %vm6636, %v9467, 0
  %9504 = vmatprep.subr.mxu0 0.0
  %9505 = vmatpush1.msra.mxu0 %v9469
  %9506 = vmatprep.subr.mxu0 0.0
  %9507 = vmatpush1.msra.mxu0 %v9471
  %9508 = vmatprep.subr.mxu0 0.0
  %9509 = vmatpush1.msra.mxu0 %v9473
  %9510 = vmatprep.subr.mxu0 0.0
  %9511 = vmatpush1.msra.mxu0 %v9475
  %9512 = vmatprep.subr.mxu0 0.0
  %9513 = vmatpush1.msra.mxu0 %v9477
  %9514 = vmatprep.subr.mxu0 0.0
  %9515 = vmatpush1.msra.mxu0 %v9479
  %9516 = vmatprep.subr.mxu0 0.0
  %9517 = vmatpush1.msra.mxu0 %v9481
  %9518 = vmatprep.subr.mxu0 0.0
  %9519 = vmatpush1.msra.mxu0 %v9483
  %9520 = vmatprep.subr.mxu0 0.0
  %9521 = vmatpush1.msra.mxu0 0.0
  %9522 = vmatprep.subr.mxu0 0.0
  %9523 = vmatpush1.msra.mxu0 0.0
  %9524 = vmatprep.subr.mxu0 0.0
  %9525 = vmatpush1.msra.mxu0 0.0
  %9526 = vmatprep.subr.mxu0 0.0
  %9527 = vmatpush1.msra.mxu0 0.0
  %9528 = vmatprep.subr.mxu0 0.0
  %9529 = vmatpush1.msra.mxu0 0.0
  %9530 = vmatprep.subr.mxu0 0.0
  %9531 = vmatpush1.msra.mxu0 0.0
  %9532 = vmatprep.subr.mxu0 0.0
  %9533 = vmatpush1.msra.mxu0 0.0
  %9534 = vmatprep.subr.mxu0 0.0
  %9535 = vmatpush1.msra.mxu0 0.0
  %9536 = vmatprep.subr.mxu0 0.0
  %9537 = vmatpush1.msra.mxu0 0.0
  %9538 = vmatprep.subr.mxu0 0.0
  %9539 = vmatpush1.msra.mxu0 0.0
  %9540 = vmatprep.subr.mxu0 0.0
  %9541 = vmatpush1.msra.mxu0 0.0
  %9542 = vmatprep.subr.mxu0 0.0
  %9543 = vmatpush1.msra.mxu0 0.0
  %9544 = vmatprep.subr.mxu0 0.0
  %9545 = vmatpush1.msra.mxu0 0.0
  %9546 = vmatprep.subr.mxu0 0.0
  %9547 = vmatpush1.msra.mxu0 0.0
  %9548 = vmatprep.subr.mxu0 0.0
  %9549 = vmatpush1.msra.mxu0 0.0
  %9550 = vmatprep.subr.mxu0 0.0
  %9551 = vmatpush1.msra.mxu0 0.0
  %9552 = vmatprep.subr.mxu0 0.0
  %9553 = vmatpush1.msra.mxu0 0.0
  %9554 = vmatprep.subr.mxu0 0.0
  %9555 = vmatpush1.msra.mxu0 0.0
  %9556 = vmatprep.subr.mxu0 0.0
  %9557 = vmatpush1.msra.mxu0 0.0
  %9558 = vmatprep.subr.mxu0 0.0
  %9559 = vmatpush1.msra.mxu0 0.0
  %9560 = vmatprep.subr.mxu0 0.0
  %9561 = vmatpush1.msra.mxu0 0.0
  %9562 = vmatprep.subr.mxu0 0.0
  %9563 = vmatpush1.msra.mxu0 0.0
  %9564 = vmatprep.subr.mxu0 0.0
  %9565 = vmatpush1.msra.mxu0 0.0
  %9566 = vmatprep.subr.mxu0 0.0
  %9567 = vmatpush1.msra.mxu0 0.0
  %9568 = vmatprep.mubr.f32.mxu0 0.0
  %9569 = vmatmul.mubr.f32.gmra.mrb[0].mxu0 %v9493
  %v9570 = vpop.f32.mrb[0].mxu0
  %v9571 = vadd.f32 0.0, %v9570
  %v9572 = vpop.f32.mrb[0].mxu0
  %9573 = vmatprep.mubr.f32.mxu0 0.0
  %9574 = vmatmul.mubr.f32.gmra.mrb[0].mxu0 %v9496
  %v9575 = vpop.f32.mrb[0].mxu0
  %v9576 = vadd.f32 0.0, %v9575
  %v9577 = vpop.f32.mrb[0].mxu0
  %9578 = vmatprep.mubr.f32.mxu0 0.0
  %9579 = vmatmul.mubr.f32.gmra.mrb[0].mxu0 %v9499
  %v9580 = vpop.f32.mrb[0].mxu0
  %v9581 = vadd.f32 0.0, %v9580
  %v9582 = vpop.f32.mrb[0].mxu0
  %9583 = vmatprep.mubr.f32.mxu0 0.0
  %9584 = vmatmul.mubr.f32.gmra.mrb[0].mxu0 %v9502
  %v9585 = vpop.f32.mrb[0].mxu0
  %v9586 = vadd.f32 0.0, %v9585
  %v9587 = vpop.f32.mrb[0].mxu0
  %9588 = vdwg.mxu0
  %v9589 = vadd.f32 %v9459, %v9571
  %v9590 = vadd.f32 %v9460, %v9576
  %v9591 = vadd.f32 %v9461, %v9581
  %v9592 = vadd.f32 %v9462, %v9586
  %s9593 = scalar_lea.vmem %s11, 320
  %v9594 = vld [vmem:[%s9593] sm:$0xff]
  %v9595 = vld [vmem:[%s9593 + $0x8] sm:$0xff]
  %v9596 = vld [vmem:[%s9593 + $0x10] sm:$0xff]
  %v9597 = vld [vmem:[%s9593 + $0x18] sm:$0xff]
  %9598 = vrot.lane.b32.xlu0 %v8280, 108
  %v9599 = vpop.permute.xlu0 %9598
  %9600 = vrot.lane.b32.xlu0 %v8285, 108
  %v9601 = vpop.permute.xlu0 %9600
  %9602 = vrot.lane.b32.xlu0 %v8290, 108
  %v9603 = vpop.permute.xlu0 %9602
  %9604 = vrot.lane.b32.xlu0 %v8295, 108
  %v9605 = vpop.permute.xlu0 %9604
  %9606 = vrot.lane.b32.xlu0 %v8300, 108
  %v9607 = vpop.permute.xlu0 %9606
  %9608 = vrot.lane.b32.xlu0 %v8305, 108
  %v9609 = vpop.permute.xlu0 %9608
  %9610 = vrot.lane.b32.xlu0 %v8310, 108
  %v9611 = vpop.permute.xlu0 %9610
  %9612 = vrot.lane.b32.xlu0 %v8315, 108
  %v9613 = vpop.permute.xlu0 %9612
  %v9623 = vsel %vm6636, %v9594, 0
  %v9626 = vsel %vm6636, %v9595, 0
  %v9629 = vsel %vm6636, %v9596, 0
  %v9632 = vsel %vm6636, %v9597, 0
  %9634 = vmatprep.subr.mxu0 0.0
  %9635 = vmatpush1.msra.mxu0 %v9599
  %9636 = vmatprep.subr.mxu0 0.0
  %9637 = vmatpush1.msra.mxu0 %v9601
  %9638 = vmatprep.subr.mxu0 0.0
  %9639 = vmatpush1.msra.mxu0 %v9603
  %9640 = vmatprep.subr.mxu0 0.0
  %9641 = vmatpush1.msra.mxu0 %v9605
  %9642 = vmatprep.subr.mxu0 0.0
  %9643 = vmatpush1.msra.mxu0 %v9607
  %9644 = vmatprep.subr.mxu0 0.0
  %9645 = vmatpush1.msra.mxu0 %v9609
  %9646 = vmatprep.subr.mxu0 0.0
  %9647 = vmatpush1.msra.mxu0 %v9611
  %9648 = vmatprep.subr.mxu0 0.0
  %9649 = vmatpush1.msra.mxu0 %v9613
  %9650 = vmatprep.subr.mxu0 0.0
  %9651 = vmatpush1.msra.mxu0 0.0
  %9652 = vmatprep.subr.mxu0 0.0
  %9653 = vmatpush1.msra.mxu0 0.0
  %9654 = vmatprep.subr.mxu0 0.0
  %9655 = vmatpush1.msra.mxu0 0.0
  %9656 = vmatprep.subr.mxu0 0.0
  %9657 = vmatpush1.msra.mxu0 0.0
  %9658 = vmatprep.subr.mxu0 0.0
  %9659 = vmatpush1.msra.mxu0 0.0
  %9660 = vmatprep.subr.mxu0 0.0
  %9661 = vmatpush1.msra.mxu0 0.0
  %9662 = vmatprep.subr.mxu0 0.0
  %9663 = vmatpush1.msra.mxu0 0.0
  %9664 = vmatprep.subr.mxu0 0.0
  %9665 = vmatpush1.msra.mxu0 0.0
  %9666 = vmatprep.subr.mxu0 0.0
  %9667 = vmatpush1.msra.mxu0 0.0
  %9668 = vmatprep.subr.mxu0 0.0
  %9669 = vmatpush1.msra.mxu0 0.0
  %9670 = vmatprep.subr.mxu0 0.0
  %9671 = vmatpush1.msra.mxu0 0.0
  %9672 = vmatprep.subr.mxu0 0.0
  %9673 = vmatpush1.msra.mxu0 0.0
  %9674 = vmatprep.subr.mxu0 0.0
  %9675 = vmatpush1.msra.mxu0 0.0
  %9676 = vmatprep.subr.mxu0 0.0
  %9677 = vmatpush1.msra.mxu0 0.0
  %9678 = vmatprep.subr.mxu0 0.0
  %9679 = vmatpush1.msra.mxu0 0.0
  %9680 = vmatprep.subr.mxu0 0.0
  %9681 = vmatpush1.msra.mxu0 0.0
  %9682 = vmatprep.subr.mxu0 0.0
  %9683 = vmatpush1.msra.mxu0 0.0
  %9684 = vmatprep.subr.mxu0 0.0
  %9685 = vmatpush1.msra.mxu0 0.0
  %9686 = vmatprep.subr.mxu0 0.0
  %9687 = vmatpush1.msra.mxu0 0.0
  %9688 = vmatprep.subr.mxu0 0.0
  %9689 = vmatpush1.msra.mxu0 0.0
  %9690 = vmatprep.subr.mxu0 0.0
  %9691 = vmatpush1.msra.mxu0 0.0
  %9692 = vmatprep.subr.mxu0 0.0
  %9693 = vmatpush1.msra.mxu0 0.0
  %9694 = vmatprep.subr.mxu0 0.0
  %9695 = vmatpush1.msra.mxu0 0.0
  %9696 = vmatprep.subr.mxu0 0.0
  %9697 = vmatpush1.msra.mxu0 0.0
  %9698 = vmatprep.mubr.f32.mxu0 0.0
  %9699 = vmatmul.mubr.f32.gmra.mrb[0].mxu0 %v9623
  %v9700 = vpop.f32.mrb[0].mxu0
  %v9701 = vadd.f32 0.0, %v9700
  %v9702 = vpop.f32.mrb[0].mxu0
  %9703 = vmatprep.mubr.f32.mxu0 0.0
  %9704 = vmatmul.mubr.f32.gmra.mrb[0].mxu0 %v9626
  %v9705 = vpop.f32.mrb[0].mxu0
  %v9706 = vadd.f32 0.0, %v9705
  %v9707 = vpop.f32.mrb[0].mxu0
  %9708 = vmatprep.mubr.f32.mxu0 0.0
  %9709 = vmatmul.mubr.f32.gmra.mrb[0].mxu0 %v9629
  %v9710 = vpop.f32.mrb[0].mxu0
  %v9711 = vadd.f32 0.0, %v9710
  %v9712 = vpop.f32.mrb[0].mxu0
  %9713 = vmatprep.mubr.f32.mxu0 0.0
  %9714 = vmatmul.mubr.f32.gmra.mrb[0].mxu0 %v9632
  %v9715 = vpop.f32.mrb[0].mxu0
  %v9716 = vadd.f32 0.0, %v9715
  %v9717 = vpop.f32.mrb[0].mxu0
  %9718 = vdwg.mxu0
  %v9719 = vadd.f32 %v9589, %v9701
  %v9720 = vadd.f32 %v9590, %v9706
  %v9721 = vadd.f32 %v9591, %v9711
  %v9722 = vadd.f32 %v9592, %v9716
  %s9723 = scalar_lea.vmem %s11, 352
  %v9724 = vld [vmem:[%s9723] sm:$0xff]
  %v9725 = vld [vmem:[%s9723 + $0x8] sm:$0xff]
  %v9726 = vld [vmem:[%s9723 + $0x10] sm:$0xff]
  %v9727 = vld [vmem:[%s9723 + $0x18] sm:$0xff]
  %9728 = vrot.lane.b32.xlu0 %v8280, 106
  %v9729 = vpop.permute.xlu0 %9728
  %9730 = vrot.lane.b32.xlu0 %v8285, 106
  %v9731 = vpop.permute.xlu0 %9730
  %9732 = vrot.lane.b32.xlu0 %v8290, 106
  %v9733 = vpop.permute.xlu0 %9732
  %9734 = vrot.lane.b32.xlu0 %v8295, 106
  %v9735 = vpop.permute.xlu0 %9734
  %9736 = vrot.lane.b32.xlu0 %v8300, 106
  %v9737 = vpop.permute.xlu0 %9736
  %9738 = vrot.lane.b32.xlu0 %v8305, 106
  %v9739 = vpop.permute.xlu0 %9738
  %9740 = vrot.lane.b32.xlu0 %v8310, 106
  %v9741 = vpop.permute.xlu0 %9740
  %9742 = vrot.lane.b32.xlu0 %v8315, 106
  %v9743 = vpop.permute.xlu0 %9742
  %v9753 = vsel %vm6636, %v9724, 0
  %v9756 = vsel %vm6636, %v9725, 0
  %v9759 = vsel %vm6636, %v9726, 0
  %v9762 = vsel %vm6636, %v9727, 0
  %9764 = vmatprep.subr.mxu0 0.0
  %9765 = vmatpush1.msra.mxu0 %v9729
  %9766 = vmatprep.subr.mxu0 0.0
  %9767 = vmatpush1.msra.mxu0 %v9731
  %9768 = vmatprep.subr.mxu0 0.0
  %9769 = vmatpush1.msra.mxu0 %v9733
  %9770 = vmatprep.subr.mxu0 0.0
  %9771 = vmatpush1.msra.mxu0 %v9735
  %9772 = vmatprep.subr.mxu0 0.0
  %9773 = vmatpush1.msra.mxu0 %v9737
  %9774 = vmatprep.subr.mxu0 0.0
  %9775 = vmatpush1.msra.mxu0 %v9739
  %9776 = vmatprep.subr.mxu0 0.0
  %9777 = vmatpush1.msra.mxu0 %v9741
  %9778 = vmatprep.subr.mxu0 0.0
  %9779 = vmatpush1.msra.mxu0 %v9743
  %9780 = vmatprep.subr.mxu0 0.0
  %9781 = vmatpush1.msra.mxu0 0.0
  %9782 = vmatprep.subr.mxu0 0.0
  %9783 = vmatpush1.msra.mxu0 0.0
  %9784 = vmatprep.subr.mxu0 0.0
  %9785 = vmatpush1.msra.mxu0 0.0
  %9786 = vmatprep.subr.mxu0 0.0
  %9787 = vmatpush1.msra.mxu0 0.0
  %9788 = vmatprep.subr.mxu0 0.0
  %9789 = vmatpush1.msra.mxu0 0.0
  %9790 = vmatprep.subr.mxu0 0.0
  %9791 = vmatpush1.msra.mxu0 0.0
  %9792 = vmatprep.subr.mxu0 0.0
  %9793 = vmatpush1.msra.mxu0 0.0
  %9794 = vmatprep.subr.mxu0 0.0
  %9795 = vmatpush1.msra.mxu0 0.0
  %9796 = vmatprep.subr.mxu0 0.0
  %9797 = vmatpush1.msra.mxu0 0.0
  %9798 = vmatprep.subr.mxu0 0.0
  %9799 = vmatpush1.msra.mxu0 0.0
  %9800 = vmatprep.subr.mxu0 0.0
  %9801 = vmatpush1.msra.mxu0 0.0
  %9802 = vmatprep.subr.mxu0 0.0
  %9803 = vmatpush1.msra.mxu0 0.0
  %9804 = vmatprep.subr.mxu0 0.0
  %9805 = vmatpush1.msra.mxu0 0.0
  %9806 = vmatprep.subr.mxu0 0.0
  %9807 = vmatpush1.msra.mxu0 0.0
  %9808 = vmatprep.subr.mxu0 0.0
  %9809 = vmatpush1.msra.mxu0 0.0
  %9810 = vmatprep.subr.mxu0 0.0
  %9811 = vmatpush1.msra.mxu0 0.0
  %9812 = vmatprep.subr.mxu0 0.0
  %9813 = vmatpush1.msra.mxu0 0.0
  %9814 = vmatprep.subr.mxu0 0.0
  %9815 = vmatpush1.msra.mxu0 0.0
  %9816 = vmatprep.subr.mxu0 0.0
  %9817 = vmatpush1.msra.mxu0 0.0
  %9818 = vmatprep.subr.mxu0 0.0
  %9819 = vmatpush1.msra.mxu0 0.0
  %9820 = vmatprep.subr.mxu0 0.0
  %9821 = vmatpush1.msra.mxu0 0.0
  %9822 = vmatprep.subr.mxu0 0.0
  %9823 = vmatpush1.msra.mxu0 0.0
  %9824 = vmatprep.subr.mxu0 0.0
  %9825 = vmatpush1.msra.mxu0 0.0
  %9826 = vmatprep.subr.mxu0 0.0
  %9827 = vmatpush1.msra.mxu0 0.0
  %9828 = vmatprep.mubr.f32.mxu0 0.0
  %9829 = vmatmul.mubr.f32.gmra.mrb[0].mxu0 %v9753
  %v9830 = vpop.f32.mrb[0].mxu0
  %v9831 = vadd.f32 0.0, %v9830
  %v9832 = vpop.f32.mrb[0].mxu0
  %9833 = vmatprep.mubr.f32.mxu0 0.0
  %9834 = vmatmul.mubr.f32.gmra.mrb[0].mxu0 %v9756
  %v9835 = vpop.f32.mrb[0].mxu0
  %v9836 = vadd.f32 0.0, %v9835
  %v9837 = vpop.f32.mrb[0].mxu0
  %9838 = vmatprep.mubr.f32.mxu0 0.0
  %9839 = vmatmul.mubr.f32.gmra.mrb[0].mxu0 %v9759
  %v9840 = vpop.f32.mrb[0].mxu0
  %v9841 = vadd.f32 0.0, %v9840
  %v9842 = vpop.f32.mrb[0].mxu0
  %9843 = vmatprep.mubr.f32.mxu0 0.0
  %9844 = vmatmul.mubr.f32.gmra.mrb[0].mxu0 %v9762
  %v9845 = vpop.f32.mrb[0].mxu0
  %v9846 = vadd.f32 0.0, %v9845
  %v9847 = vpop.f32.mrb[0].mxu0
  %9848 = vdwg.mxu0
  %v9849 = vadd.f32 %v9719, %v9831
  %v9850 = vadd.f32 %v9720, %v9836
  %v9851 = vadd.f32 %v9721, %v9841
  %v9852 = vadd.f32 %v9722, %v9846
  %s9853 = scalar_lea.vmem %s11, 384
  %v9854 = vld [vmem:[%s9853] sm:$0xff]
  %v9855 = vld [vmem:[%s9853 + $0x8] sm:$0xff]
  %v9856 = vld [vmem:[%s9853 + $0x10] sm:$0xff]
  %v9857 = vld [vmem:[%s9853 + $0x18] sm:$0xff]
  %9858 = vrot.lane.b32.xlu0 %v8280, 104
  %v9859 = vpop.permute.xlu0 %9858
  %9860 = vrot.lane.b32.xlu0 %v8285, 104
  %v9861 = vpop.permute.xlu0 %9860
  %9862 = vrot.lane.b32.xlu0 %v8290, 104
  %v9863 = vpop.permute.xlu0 %9862
  %9864 = vrot.lane.b32.xlu0 %v8295, 104
  %v9865 = vpop.permute.xlu0 %9864
  %9866 = vrot.lane.b32.xlu0 %v8300, 104
  %v9867 = vpop.permute.xlu0 %9866
  %9868 = vrot.lane.b32.xlu0 %v8305, 104
  %v9869 = vpop.permute.xlu0 %9868
  %9870 = vrot.lane.b32.xlu0 %v8310, 104
  %v9871 = vpop.permute.xlu0 %9870
  %9872 = vrot.lane.b32.xlu0 %v8315, 104
  %v9873 = vpop.permute.xlu0 %9872
  %v9883 = vsel %vm6636, %v9854, 0
  %v9886 = vsel %vm6636, %v9855, 0
  %v9889 = vsel %vm6636, %v9856, 0
  %v9892 = vsel %vm6636, %v9857, 0
  %9894 = vmatprep.subr.mxu0 0.0
  %9895 = vmatpush1.msra.mxu0 %v9859
  %9896 = vmatprep.subr.mxu0 0.0
  %9897 = vmatpush1.msra.mxu0 %v9861
  %9898 = vmatprep.subr.mxu0 0.0
  %9899 = vmatpush1.msra.mxu0 %v9863
  %9900 = vmatprep.subr.mxu0 0.0
  %9901 = vmatpush1.msra.mxu0 %v9865
  %9902 = vmatprep.subr.mxu0 0.0
  %9903 = vmatpush1.msra.mxu0 %v9867
  %9904 = vmatprep.subr.mxu0 0.0
  %9905 = vmatpush1.msra.mxu0 %v9869
  %9906 = vmatprep.subr.mxu0 0.0
  %9907 = vmatpush1.msra.mxu0 %v9871
  %9908 = vmatprep.subr.mxu0 0.0
  %9909 = vmatpush1.msra.mxu0 %v9873
  %9910 = vmatprep.subr.mxu0 0.0
  %9911 = vmatpush1.msra.mxu0 0.0
  %9912 = vmatprep.subr.mxu0 0.0
  %9913 = vmatpush1.msra.mxu0 0.0
  %9914 = vmatprep.subr.mxu0 0.0
  %9915 = vmatpush1.msra.mxu0 0.0
  %9916 = vmatprep.subr.mxu0 0.0
  %9917 = vmatpush1.msra.mxu0 0.0
  %9918 = vmatprep.subr.mxu0 0.0
  %9919 = vmatpush1.msra.mxu0 0.0
  %9920 = vmatprep.subr.mxu0 0.0
  %9921 = vmatpush1.msra.mxu0 0.0
  %9922 = vmatprep.subr.mxu0 0.0
  %9923 = vmatpush1.msra.mxu0 0.0
  %9924 = vmatprep.subr.mxu0 0.0
  %9925 = vmatpush1.msra.mxu0 0.0
  %9926 = vmatprep.subr.mxu0 0.0
  %9927 = vmatpush1.msra.mxu0 0.0
  %9928 = vmatprep.subr.mxu0 0.0
  %9929 = vmatpush1.msra.mxu0 0.0
  %9930 = vmatprep.subr.mxu0 0.0
  %9931 = vmatpush1.msra.mxu0 0.0
  %9932 = vmatprep.subr.mxu0 0.0
  %9933 = vmatpush1.msra.mxu0 0.0
  %9934 = vmatprep.subr.mxu0 0.0
  %9935 = vmatpush1.msra.mxu0 0.0
  %9936 = vmatprep.subr.mxu0 0.0
  %9937 = vmatpush1.msra.mxu0 0.0
  %9938 = vmatprep.subr.mxu0 0.0
  %9939 = vmatpush1.msra.mxu0 0.0
  %9940 = vmatprep.subr.mxu0 0.0
  %9941 = vmatpush1.msra.mxu0 0.0
  %9942 = vmatprep.subr.mxu0 0.0
  %9943 = vmatpush1.msra.mxu0 0.0
  %9944 = vmatprep.subr.mxu0 0.0
  %9945 = vmatpush1.msra.mxu0 0.0
  %9946 = vmatprep.subr.mxu0 0.0
  %9947 = vmatpush1.msra.mxu0 0.0
  %9948 = vmatprep.subr.mxu0 0.0
  %9949 = vmatpush1.msra.mxu0 0.0
  %9950 = vmatprep.subr.mxu0 0.0
  %9951 = vmatpush1.msra.mxu0 0.0
  %9952 = vmatprep.subr.mxu0 0.0
  %9953 = vmatpush1.msra.mxu0 0.0
  %9954 = vmatprep.subr.mxu0 0.0
  %9955 = vmatpush1.msra.mxu0 0.0
  %9956 = vmatprep.subr.mxu0 0.0
  %9957 = vmatpush1.msra.mxu0 0.0
  %9958 = vmatprep.mubr.f32.mxu0 0.0
  %9959 = vmatmul.mubr.f32.gmra.mrb[0].mxu0 %v9883
  %v9960 = vpop.f32.mrb[0].mxu0
  %v9961 = vadd.f32 0.0, %v9960
  %v9962 = vpop.f32.mrb[0].mxu0
  %9963 = vmatprep.mubr.f32.mxu0 0.0
  %9964 = vmatmul.mubr.f32.gmra.mrb[0].mxu0 %v9886
  %v9965 = vpop.f32.mrb[0].mxu0
  %v9966 = vadd.f32 0.0, %v9965
  %v9967 = vpop.f32.mrb[0].mxu0
  %9968 = vmatprep.mubr.f32.mxu0 0.0
  %9969 = vmatmul.mubr.f32.gmra.mrb[0].mxu0 %v9889
  %v9970 = vpop.f32.mrb[0].mxu0
  %v9971 = vadd.f32 0.0, %v9970
  %v9972 = vpop.f32.mrb[0].mxu0
  %9973 = vmatprep.mubr.f32.mxu0 0.0
  %9974 = vmatmul.mubr.f32.gmra.mrb[0].mxu0 %v9892
  %v9975 = vpop.f32.mrb[0].mxu0
  %v9976 = vadd.f32 0.0, %v9975
  %v9977 = vpop.f32.mrb[0].mxu0
  %9978 = vdwg.mxu0
  %v9979 = vadd.f32 %v9849, %v9961
  %v9980 = vadd.f32 %v9850, %v9966
  %v9981 = vadd.f32 %v9851, %v9971
  %v9982 = vadd.f32 %v9852, %v9976
  %s9983 = scalar_lea.vmem %s11, 416
  %v9984 = vld [vmem:[%s9983] sm:$0xff]
  %v9985 = vld [vmem:[%s9983 + $0x8] sm:$0xff]
  %v9986 = vld [vmem:[%s9983 + $0x10] sm:$0xff]
  %v9987 = vld [vmem:[%s9983 + $0x18] sm:$0xff]
  %9988 = vrot.lane.b32.xlu0 %v8280, 102
  %v9989 = vpop.permute.xlu0 %9988
  %9990 = vrot.lane.b32.xlu0 %v8285, 102
  %v9991 = vpop.permute.xlu0 %9990
  %9992 = vrot.lane.b32.xlu0 %v8290, 102
  %v9993 = vpop.permute.xlu0 %9992
  %9994 = vrot.lane.b32.xlu0 %v8295, 102
  %v9995 = vpop.permute.xlu0 %9994
  %9996 = vrot.lane.b32.xlu0 %v8300, 102
  %v9997 = vpop.permute.xlu0 %9996
  %9998 = vrot.lane.b32.xlu0 %v8305, 102
  %v9999 = vpop.permute.xlu0 %9998
  %10000 = vrot.lane.b32.xlu0 %v8310, 102
  %v10001 = vpop.permute.xlu0 %10000
  %10002 = vrot.lane.b32.xlu0 %v8315, 102
  %v10003 = vpop.permute.xlu0 %10002
  %v10013 = vsel %vm6636, %v9984, 0
  %v10016 = vsel %vm6636, %v9985, 0
  %v10019 = vsel %vm6636, %v9986, 0
  %v10022 = vsel %vm6636, %v9987, 0
  %10024 = vmatprep.subr.mxu0 0.0
  %10025 = vmatpush1.msra.mxu0 %v9989
  %10026 = vmatprep.subr.mxu0 0.0
  %10027 = vmatpush1.msra.mxu0 %v9991
  %10028 = vmatprep.subr.mxu0 0.0
  %10029 = vmatpush1.msra.mxu0 %v9993
  %10030 = vmatprep.subr.mxu0 0.0
  %10031 = vmatpush1.msra.mxu0 %v9995
  %10032 = vmatprep.subr.mxu0 0.0
  %10033 = vmatpush1.msra.mxu0 %v9997
  %10034 = vmatprep.subr.mxu0 0.0
  %10035 = vmatpush1.msra.mxu0 %v9999
  %10036 = vmatprep.subr.mxu0 0.0
  %10037 = vmatpush1.msra.mxu0 %v10001
  %10038 = vmatprep.subr.mxu0 0.0
  %10039 = vmatpush1.msra.mxu0 %v10003
  %10040 = vmatprep.subr.mxu0 0.0
  %10041 = vmatpush1.msra.mxu0 0.0
  %10042 = vmatprep.subr.mxu0 0.0
  %10043 = vmatpush1.msra.mxu0 0.0
  %10044 = vmatprep.subr.mxu0 0.0
  %10045 = vmatpush1.msra.mxu0 0.0
  %10046 = vmatprep.subr.mxu0 0.0
  %10047 = vmatpush1.msra.mxu0 0.0
  %10048 = vmatprep.subr.mxu0 0.0
  %10049 = vmatpush1.msra.mxu0 0.0
  %10050 = vmatprep.subr.mxu0 0.0
  %10051 = vmatpush1.msra.mxu0 0.0
  %10052 = vmatprep.subr.mxu0 0.0
  %10053 = vmatpush1.msra.mxu0 0.0
  %10054 = vmatprep.subr.mxu0 0.0
  %10055 = vmatpush1.msra.mxu0 0.0
  %10056 = vmatprep.subr.mxu0 0.0
  %10057 = vmatpush1.msra.mxu0 0.0
  %10058 = vmatprep.subr.mxu0 0.0
  %10059 = vmatpush1.msra.mxu0 0.0
  %10060 = vmatprep.subr.mxu0 0.0
  %10061 = vmatpush1.msra.mxu0 0.0
  %10062 = vmatprep.subr.mxu0 0.0
  %10063 = vmatpush1.msra.mxu0 0.0
  %10064 = vmatprep.subr.mxu0 0.0
  %10065 = vmatpush1.msra.mxu0 0.0
  %10066 = vmatprep.subr.mxu0 0.0
  %10067 = vmatpush1.msra.mxu0 0.0
  %10068 = vmatprep.subr.mxu0 0.0
  %10069 = vmatpush1.msra.mxu0 0.0
  %10070 = vmatprep.subr.mxu0 0.0
  %10071 = vmatpush1.msra.mxu0 0.0
  %10072 = vmatprep.subr.mxu0 0.0
  %10073 = vmatpush1.msra.mxu0 0.0
  %10074 = vmatprep.subr.mxu0 0.0
  %10075 = vmatpush1.msra.mxu0 0.0
  %10076 = vmatprep.subr.mxu0 0.0
  %10077 = vmatpush1.msra.mxu0 0.0
  %10078 = vmatprep.subr.mxu0 0.0
  %10079 = vmatpush1.msra.mxu0 0.0
  %10080 = vmatprep.subr.mxu0 0.0
  %10081 = vmatpush1.msra.mxu0 0.0
  %10082 = vmatprep.subr.mxu0 0.0
  %10083 = vmatpush1.msra.mxu0 0.0
  %10084 = vmatprep.subr.mxu0 0.0
  %10085 = vmatpush1.msra.mxu0 0.0
  %10086 = vmatprep.subr.mxu0 0.0
  %10087 = vmatpush1.msra.mxu0 0.0
  %10088 = vmatprep.mubr.f32.mxu0 0.0
  %10089 = vmatmul.mubr.f32.gmra.mrb[0].mxu0 %v10013
  %v10090 = vpop.f32.mrb[0].mxu0
  %v10091 = vadd.f32 0.0, %v10090
  %v10092 = vpop.f32.mrb[0].mxu0
  %10093 = vmatprep.mubr.f32.mxu0 0.0
  %10094 = vmatmul.mubr.f32.gmra.mrb[0].mxu0 %v10016
  %v10095 = vpop.f32.mrb[0].mxu0
  %v10096 = vadd.f32 0.0, %v10095
  %v10097 = vpop.f32.mrb[0].mxu0
  %10098 = vmatprep.mubr.f32.mxu0 0.0
  %10099 = vmatmul.mubr.f32.gmra.mrb[0].mxu0 %v10019
  %v10100 = vpop.f32.mrb[0].mxu0
  %v10101 = vadd.f32 0.0, %v10100
  %v10102 = vpop.f32.mrb[0].mxu0
  %10103 = vmatprep.mubr.f32.mxu0 0.0
  %10104 = vmatmul.mubr.f32.gmra.mrb[0].mxu0 %v10022
  %v10105 = vpop.f32.mrb[0].mxu0
  %v10106 = vadd.f32 0.0, %v10105
  %v10107 = vpop.f32.mrb[0].mxu0
  %10108 = vdwg.mxu0
  %v10109 = vadd.f32 %v9979, %v10091
  %v10110 = vadd.f32 %v9980, %v10096
  %v10111 = vadd.f32 %v9981, %v10101
  %v10112 = vadd.f32 %v9982, %v10106
  %s10113 = scalar_lea.vmem %s11, 448
  %v10114 = vld [vmem:[%s10113] sm:$0xff]
  %v10115 = vld [vmem:[%s10113 + $0x8] sm:$0xff]
  %v10116 = vld [vmem:[%s10113 + $0x10] sm:$0xff]
  %v10117 = vld [vmem:[%s10113 + $0x18] sm:$0xff]
  %10118 = vrot.lane.b32.xlu0 %v8280, 100
  %v10119 = vpop.permute.xlu0 %10118
  %10120 = vrot.lane.b32.xlu0 %v8285, 100
  %v10121 = vpop.permute.xlu0 %10120
  %10122 = vrot.lane.b32.xlu0 %v8290, 100
  %v10123 = vpop.permute.xlu0 %10122
  %10124 = vrot.lane.b32.xlu0 %v8295, 100
  %v10125 = vpop.permute.xlu0 %10124
  %10126 = vrot.lane.b32.xlu0 %v8300, 100
  %v10127 = vpop.permute.xlu0 %10126
  %10128 = vrot.lane.b32.xlu0 %v8305, 100
  %v10129 = vpop.permute.xlu0 %10128
  %10130 = vrot.lane.b32.xlu0 %v8310, 100
  %v10131 = vpop.permute.xlu0 %10130
  %10132 = vrot.lane.b32.xlu0 %v8315, 100
  %v10133 = vpop.permute.xlu0 %10132
  %v10143 = vsel %vm6636, %v10114, 0
  %v10146 = vsel %vm6636, %v10115, 0
  %v10149 = vsel %vm6636, %v10116, 0
  %v10152 = vsel %vm6636, %v10117, 0
  %10154 = vmatprep.subr.mxu0 0.0
  %10155 = vmatpush1.msra.mxu0 %v10119
  %10156 = vmatprep.subr.mxu0 0.0
  %10157 = vmatpush1.msra.mxu0 %v10121
  %10158 = vmatprep.subr.mxu0 0.0
  %10159 = vmatpush1.msra.mxu0 %v10123
  %10160 = vmatprep.subr.mxu0 0.0
  %10161 = vmatpush1.msra.mxu0 %v10125
  %10162 = vmatprep.subr.mxu0 0.0
  %10163 = vmatpush1.msra.mxu0 %v10127
  %10164 = vmatprep.subr.mxu0 0.0
  %10165 = vmatpush1.msra.mxu0 %v10129
  %10166 = vmatprep.subr.mxu0 0.0
  %10167 = vmatpush1.msra.mxu0 %v10131
  %10168 = vmatprep.subr.mxu0 0.0
  %10169 = vmatpush1.msra.mxu0 %v10133
  %10170 = vmatprep.subr.mxu0 0.0
  %10171 = vmatpush1.msra.mxu0 0.0
  %10172 = vmatprep.subr.mxu0 0.0
  %10173 = vmatpush1.msra.mxu0 0.0
  %10174 = vmatprep.subr.mxu0 0.0
  %10175 = vmatpush1.msra.mxu0 0.0
  %10176 = vmatprep.subr.mxu0 0.0
  %10177 = vmatpush1.msra.mxu0 0.0
  %10178 = vmatprep.subr.mxu0 0.0
  %10179 = vmatpush1.msra.mxu0 0.0
  %10180 = vmatprep.subr.mxu0 0.0
  %10181 = vmatpush1.msra.mxu0 0.0
  %10182 = vmatprep.subr.mxu0 0.0
  %10183 = vmatpush1.msra.mxu0 0.0
  %10184 = vmatprep.subr.mxu0 0.0
  %10185 = vmatpush1.msra.mxu0 0.0
  %10186 = vmatprep.subr.mxu0 0.0
  %10187 = vmatpush1.msra.mxu0 0.0
  %10188 = vmatprep.subr.mxu0 0.0
  %10189 = vmatpush1.msra.mxu0 0.0
  %10190 = vmatprep.subr.mxu0 0.0
  %10191 = vmatpush1.msra.mxu0 0.0
  %10192 = vmatprep.subr.mxu0 0.0
  %10193 = vmatpush1.msra.mxu0 0.0
  %10194 = vmatprep.subr.mxu0 0.0
  %10195 = vmatpush1.msra.mxu0 0.0
  %10196 = vmatprep.subr.mxu0 0.0
  %10197 = vmatpush1.msra.mxu0 0.0
  %10198 = vmatprep.subr.mxu0 0.0
  %10199 = vmatpush1.msra.mxu0 0.0
  %10200 = vmatprep.subr.mxu0 0.0
  %10201 = vmatpush1.msra.mxu0 0.0
  %10202 = vmatprep.subr.mxu0 0.0
  %10203 = vmatpush1.msra.mxu0 0.0
  %10204 = vmatprep.subr.mxu0 0.0
  %10205 = vmatpush1.msra.mxu0 0.0
  %10206 = vmatprep.subr.mxu0 0.0
  %10207 = vmatpush1.msra.mxu0 0.0
  %10208 = vmatprep.subr.mxu0 0.0
  %10209 = vmatpush1.msra.mxu0 0.0
  %10210 = vmatprep.subr.mxu0 0.0
  %10211 = vmatpush1.msra.mxu0 0.0
  %10212 = vmatprep.subr.mxu0 0.0
  %10213 = vmatpush1.msra.mxu0 0.0
  %10214 = vmatprep.subr.mxu0 0.0
  %10215 = vmatpush1.msra.mxu0 0.0
  %10216 = vmatprep.subr.mxu0 0.0
  %10217 = vmatpush1.msra.mxu0 0.0
  %10218 = vmatprep.mubr.f32.mxu0 0.0
  %10219 = vmatmul.mubr.f32.gmra.mrb[0].mxu0 %v10143
  %v10220 = vpop.f32.mrb[0].mxu0
  %v10221 = vadd.f32 0.0, %v10220
  %v10222 = vpop.f32.mrb[0].mxu0
  %10223 = vmatprep.mubr.f32.mxu0 0.0
  %10224 = vmatmul.mubr.f32.gmra.mrb[0].mxu0 %v10146
  %v10225 = vpop.f32.mrb[0].mxu0
  %v10226 = vadd.f32 0.0, %v10225
  %v10227 = vpop.f32.mrb[0].mxu0
  %10228 = vmatprep.mubr.f32.mxu0 0.0
  %10229 = vmatmul.mubr.f32.gmra.mrb[0].mxu0 %v10149
  %v10230 = vpop.f32.mrb[0].mxu0
  %v10231 = vadd.f32 0.0, %v10230
  %v10232 = vpop.f32.mrb[0].mxu0
  %10233 = vmatprep.mubr.f32.mxu0 0.0
  %10234 = vmatmul.mubr.f32.gmra.mrb[0].mxu0 %v10152
  %v10235 = vpop.f32.mrb[0].mxu0
  %v10236 = vadd.f32 0.0, %v10235
  %v10237 = vpop.f32.mrb[0].mxu0
  %10238 = vdwg.mxu0
  %v10239 = vadd.f32 %v10109, %v10221
  %v10240 = vadd.f32 %v10110, %v10226
  %v10241 = vadd.f32 %v10111, %v10231
  %v10242 = vadd.f32 %v10112, %v10236
  %s10243 = scalar_lea.vmem %s11, 480
  %v10244 = vld [vmem:[%s10243] sm:$0xff]
  %v10245 = vld [vmem:[%s10243 + $0x8] sm:$0xff]
  %v10246 = vld [vmem:[%s10243 + $0x10] sm:$0xff]
  %v10247 = vld [vmem:[%s10243 + $0x18] sm:$0xff]
  %10248 = vrot.lane.b32.xlu0 %v8280, 98
  %v10249 = vpop.permute.xlu0 %10248
  %10250 = vrot.lane.b32.xlu0 %v8285, 98
  %v10251 = vpop.permute.xlu0 %10250
  %10252 = vrot.lane.b32.xlu0 %v8290, 98
  %v10253 = vpop.permute.xlu0 %10252
  %10254 = vrot.lane.b32.xlu0 %v8295, 98
  %v10255 = vpop.permute.xlu0 %10254
  %10256 = vrot.lane.b32.xlu0 %v8300, 98
  %v10257 = vpop.permute.xlu0 %10256
  %10258 = vrot.lane.b32.xlu0 %v8305, 98
  %v10259 = vpop.permute.xlu0 %10258
  %10260 = vrot.lane.b32.xlu0 %v8310, 98
  %v10261 = vpop.permute.xlu0 %10260
  %10262 = vrot.lane.b32.xlu0 %v8315, 98
  %v10263 = vpop.permute.xlu0 %10262
  %v10273 = vsel %vm6636, %v10244, 0
  %v10276 = vsel %vm6636, %v10245, 0
  %v10279 = vsel %vm6636, %v10246, 0
  %v10282 = vsel %vm6636, %v10247, 0
  %10284 = vmatprep.subr.mxu0 0.0
  %10285 = vmatpush1.msra.mxu0 %v10249
  %10286 = vmatprep.subr.mxu0 0.0
  %10287 = vmatpush1.msra.mxu0 %v10251
  %10288 = vmatprep.subr.mxu0 0.0
  %10289 = vmatpush1.msra.mxu0 %v10253
  %10290 = vmatprep.subr.mxu0 0.0
  %10291 = vmatpush1.msra.mxu0 %v10255
  %10292 = vmatprep.subr.mxu0 0.0
  %10293 = vmatpush1.msra.mxu0 %v10257
  %10294 = vmatprep.subr.mxu0 0.0
  %10295 = vmatpush1.msra.mxu0 %v10259
  %10296 = vmatprep.subr.mxu0 0.0
  %10297 = vmatpush1.msra.mxu0 %v10261
  %10298 = vmatprep.subr.mxu0 0.0
  %10299 = vmatpush1.msra.mxu0 %v10263
  %10300 = vmatprep.subr.mxu0 0.0
  %10301 = vmatpush1.msra.mxu0 0.0
  %10302 = vmatprep.subr.mxu0 0.0
  %10303 = vmatpush1.msra.mxu0 0.0
  %10304 = vmatprep.subr.mxu0 0.0
  %10305 = vmatpush1.msra.mxu0 0.0
  %10306 = vmatprep.subr.mxu0 0.0
  %10307 = vmatpush1.msra.mxu0 0.0
  %10308 = vmatprep.subr.mxu0 0.0
  %10309 = vmatpush1.msra.mxu0 0.0
  %10310 = vmatprep.subr.mxu0 0.0
  %10311 = vmatpush1.msra.mxu0 0.0
  %10312 = vmatprep.subr.mxu0 0.0
  %10313 = vmatpush1.msra.mxu0 0.0
  %10314 = vmatprep.subr.mxu0 0.0
  %10315 = vmatpush1.msra.mxu0 0.0
  %10316 = vmatprep.subr.mxu0 0.0
  %10317 = vmatpush1.msra.mxu0 0.0
  %10318 = vmatprep.subr.mxu0 0.0
  %10319 = vmatpush1.msra.mxu0 0.0
  %10320 = vmatprep.subr.mxu0 0.0
  %10321 = vmatpush1.msra.mxu0 0.0
  %10322 = vmatprep.subr.mxu0 0.0
  %10323 = vmatpush1.msra.mxu0 0.0
  %10324 = vmatprep.subr.mxu0 0.0
  %10325 = vmatpush1.msra.mxu0 0.0
  %10326 = vmatprep.subr.mxu0 0.0
  %10327 = vmatpush1.msra.mxu0 0.0
  %10328 = vmatprep.subr.mxu0 0.0
  %10329 = vmatpush1.msra.mxu0 0.0
  %10330 = vmatprep.subr.mxu0 0.0
  %10331 = vmatpush1.msra.mxu0 0.0
  %10332 = vmatprep.subr.mxu0 0.0
  %10333 = vmatpush1.msra.mxu0 0.0
  %10334 = vmatprep.subr.mxu0 0.0
  %10335 = vmatpush1.msra.mxu0 0.0
  %10336 = vmatprep.subr.mxu0 0.0
  %10337 = vmatpush1.msra.mxu0 0.0
  %10338 = vmatprep.subr.mxu0 0.0
  %10339 = vmatpush1.msra.mxu0 0.0
  %10340 = vmatprep.subr.mxu0 0.0
  %10341 = vmatpush1.msra.mxu0 0.0
  %10342 = vmatprep.subr.mxu0 0.0
  %10343 = vmatpush1.msra.mxu0 0.0
  %10344 = vmatprep.subr.mxu0 0.0
  %10345 = vmatpush1.msra.mxu0 0.0
  %10346 = vmatprep.subr.mxu0 0.0
  %10347 = vmatpush1.msra.mxu0 0.0
  %10348 = vmatprep.mubr.f32.mxu0 0.0
  %10349 = vmatmul.mubr.f32.gmra.mrb[0].mxu0 %v10273
  %v10350 = vpop.f32.mrb[0].mxu0
  %v10351 = vadd.f32 0.0, %v10350
  %v10352 = vpop.f32.mrb[0].mxu0
  %10353 = vmatprep.mubr.f32.mxu0 0.0
  %10354 = vmatmul.mubr.f32.gmra.mrb[0].mxu0 %v10276
  %v10355 = vpop.f32.mrb[0].mxu0
  %v10356 = vadd.f32 0.0, %v10355
  %v10357 = vpop.f32.mrb[0].mxu0
  %10358 = vmatprep.mubr.f32.mxu0 0.0
  %10359 = vmatmul.mubr.f32.gmra.mrb[0].mxu0 %v10279
  %v10360 = vpop.f32.mrb[0].mxu0
  %v10361 = vadd.f32 0.0, %v10360
  %v10362 = vpop.f32.mrb[0].mxu0
  %10363 = vmatprep.mubr.f32.mxu0 0.0
  %10364 = vmatmul.mubr.f32.gmra.mrb[0].mxu0 %v10282
  %v10365 = vpop.f32.mrb[0].mxu0
  %v10366 = vadd.f32 0.0, %v10365
  %v10367 = vpop.f32.mrb[0].mxu0
  %10368 = vdwg.mxu0
  %v10369 = vadd.f32 %v10239, %v10351
  %v10370 = vadd.f32 %v10240, %v10356
  %v10371 = vadd.f32 %v10241, %v10361
  %v10372 = vadd.f32 %v10242, %v10366
  %v10373 = vld [vmem:[%s12] sm:$0xff]
  %v10374 = vld [vmem:[%s12 + $0x8] sm:$0xff]
  %v10375 = vld [vmem:[%s12 + $0x10] sm:$0xff]
  %v10376 = vld [vmem:[%s12 + $0x18] sm:$0xff]
  %10378 = vset.pattern.permute.xlu0 0
  %10379 = vperm.xlu0 %10378, %v10373
  %v10380 = vpop.permute.xlu0 %10379
  %10383 = vset.pattern.permute.xlu0 0
  %10384 = vperm.xlu0 %10383, %v10374
  %v10385 = vpop.permute.xlu0 %10384
  %10388 = vset.pattern.permute.xlu0 0
  %10389 = vperm.xlu0 %10388, %v10375
  %v10390 = vpop.permute.xlu0 %10389
  %10393 = vset.pattern.permute.xlu0 0
  %10394 = vperm.xlu0 %10393, %v10376
  %v10395 = vpop.permute.xlu0 %10394
  %v10397 = vadd.f32 %v10369, %v10380
  %v10398 = vadd.f32 %v10370, %v10385
  %v10399 = vadd.f32 %v10371, %v10390
  %v10400 = vadd.f32 %v10372, %v10395
  %v10401 = vmax.f32 %v10397, 0.0
  %v10402 = vmax.f32 %v10398, 0.0
  %v10403 = vmax.f32 %v10399, 0.0
  %v10404 = vmax.f32 %v10400, 0.0
  %v10405 = vld [vmem:[%s13] sm:$0x3]
  %v10406 = vld [vmem:[%s14] sm:$0x3]
  %10408 = vset.pattern.permute.xlu0 0
  %10409 = vperm.xlu0 %10408, %v10406
  %v10410 = vpop.permute.xlu0 %10409
  %v10413 = vsel %vm2363, %v10405, 0
  %10415 = vmatprep.subr.mxu0 0.0
  %10416 = vmatpush1.msra.mxu0 %v10401
  %10417 = vmatprep.subr.mxu0 0.0
  %10418 = vmatpush1.msra.mxu0 %v10402
  %10419 = vmatprep.subr.mxu0 0.0
  %10420 = vmatpush1.msra.mxu0 %v10403
  %10421 = vmatprep.subr.mxu0 0.0
  %10422 = vmatpush1.msra.mxu0 %v10404
  %10423 = vmatprep.subr.mxu0 0.0
  %10424 = vmatpush1.msra.mxu0 0.0
  %10425 = vmatprep.subr.mxu0 0.0
  %10426 = vmatpush1.msra.mxu0 0.0
  %10427 = vmatprep.subr.mxu0 0.0
  %10428 = vmatpush1.msra.mxu0 0.0
  %10429 = vmatprep.subr.mxu0 0.0
  %10430 = vmatpush1.msra.mxu0 0.0
  %10431 = vmatprep.subr.mxu0 0.0
  %10432 = vmatpush1.msra.mxu0 0.0
  %10433 = vmatprep.subr.mxu0 0.0
  %10434 = vmatpush1.msra.mxu0 0.0
  %10435 = vmatprep.subr.mxu0 0.0
  %10436 = vmatpush1.msra.mxu0 0.0
  %10437 = vmatprep.subr.mxu0 0.0
  %10438 = vmatpush1.msra.mxu0 0.0
  %10439 = vmatprep.subr.mxu0 0.0
  %10440 = vmatpush1.msra.mxu0 0.0
  %10441 = vmatprep.subr.mxu0 0.0
  %10442 = vmatpush1.msra.mxu0 0.0
  %10443 = vmatprep.subr.mxu0 0.0
  %10444 = vmatpush1.msra.mxu0 0.0
  %10445 = vmatprep.subr.mxu0 0.0
  %10446 = vmatpush1.msra.mxu0 0.0
  %10447 = vmatprep.subr.mxu0 0.0
  %10448 = vmatpush1.msra.mxu0 0.0
  %10449 = vmatprep.subr.mxu0 0.0
  %10450 = vmatpush1.msra.mxu0 0.0
  %10451 = vmatprep.subr.mxu0 0.0
  %10452 = vmatpush1.msra.mxu0 0.0
  %10453 = vmatprep.subr.mxu0 0.0
  %10454 = vmatpush1.msra.mxu0 0.0
  %10455 = vmatprep.subr.mxu0 0.0
  %10456 = vmatpush1.msra.mxu0 0.0
  %10457 = vmatprep.subr.mxu0 0.0
  %10458 = vmatpush1.msra.mxu0 0.0
  %10459 = vmatprep.subr.mxu0 0.0
  %10460 = vmatpush1.msra.mxu0 0.0
  %10461 = vmatprep.subr.mxu0 0.0
  %10462 = vmatpush1.msra.mxu0 0.0
  %10463 = vmatprep.subr.mxu0 0.0
  %10464 = vmatpush1.msra.mxu0 0.0
  %10465 = vmatprep.subr.mxu0 0.0
  %10466 = vmatpush1.msra.mxu0 0.0
  %10467 = vmatprep.subr.mxu0 0.0
  %10468 = vmatpush1.msra.mxu0 0.0
  %10469 = vmatprep.subr.mxu0 0.0
  %10470 = vmatpush1.msra.mxu0 0.0
  %10471 = vmatprep.subr.mxu0 0.0
  %10472 = vmatpush1.msra.mxu0 0.0
  %10473 = vmatprep.subr.mxu0 0.0
  %10474 = vmatpush1.msra.mxu0 0.0
  %10475 = vmatprep.subr.mxu0 0.0
  %10476 = vmatpush1.msra.mxu0 0.0
  %10477 = vmatprep.subr.mxu0 0.0
  %10478 = vmatpush1.msra.mxu0 0.0
  %10479 = vmatprep.mubr.f32.mxu0 0.0
  %10480 = vmatmul.mubr.f32.gmra.mrb[0].mxu0 %v10413
  %v10481 = vpop.f32.mrb[0].mxu0
  %v10482 = vadd.f32 %v10410, %v10481
  %v10483 = vpop.f32.mrb[0].mxu0
  %10484 = vdwg.mxu0
  %vm10485 = vcmask 9216
  %10486 = vst.msk [vmem:[%s15] sm:$0x3] %vm10485, %v10482
  // Predicated region
  $region62: #{font_identification_1flow.1} parent=0 // pred_check
    _
  $region63: #{font_identification_1flow.1} parent=0 // pred_check_branch
    %10488 = sbr.rel (0) target = $region65
  $region64: #{font_identification_1flow.1} parent=0 // pred_region
    _
  $region65: #{font_identification_1flow.1} parent=0 // pred_fallthru
    _
  // Predicated region
  $region66: #{font_identification_1flow.1} parent=0 // pred_check
    _
  $region67: #{font_identification_1flow.1} parent=0 // pred_check_branch
    %10490 = sbr.rel (0) target = $region69
  $region68: #{font_identification_1flow.1} parent=0 // pred_region
    _
  $region69: #{font_identification_1flow.1} parent=0 // pred_fallthru
    _

</llo_original>
